<compile_context>
chip_gen: v7x
topology: tpu7x:2x2x1
jax: 0.10.0
libtpu: 0.0.40
codegen_flags: <defaults>
</compile_context>

<pallas_src>
import jax
import jax.numpy as jnp
from jax.experimental import pallas as pl
from jax.experimental.pallas import tpu as pltpu

# ---- model dimensions fixed by the module -----------------------------------
NUM_LABELS = 384          # BertForSequenceClassification(num_labels=384)
D_CAT = 2 * NUM_LABELS    # 768 after torch.cat((title, url), dim=0)
D_H1, D_H2, D_OUT = 650, 600, 588

# lane-dense (multiple-of-128) padded widths used inside the kernel
D_H1P, D_H2P, D_OUTP = 768, 640, 640

# ---- small synthetic "encoder" dimensions ------------------------------------
VOCAB, SEQ, HIDDEN = 64, 8, 32

# ---- batching -----------------------------------------------------------------
BATCH = 32                # total examples per call
TM = 16                   # batch-tile (grid) size; multiple of 16 for bf16 rows

_VMEM = pltpu.MemorySpace.VMEM


# ------------------------------------------------------------------------------
# In-kernel helpers
# ------------------------------------------------------------------------------
def _leaky_relu(h):
    return jnp.where(h >= 0, h, 0.01 * h)       # nn.LeakyReLU() default slope


def _masked_layer_norm(h, gamma, beta, mask, inv_n):
    """LayerNorm(eps=1e-5) over the valid lanes of a zero-padded row.

    Padded lanes of `h` are exactly 0 (zero-padded weight columns + zero bias),
    so the mean does not need a mask; only the centered term does.
    """
    mu = jnp.sum(h, axis=-1, keepdims=True) * inv_n
    c = jnp.where(mask, h - mu, 0.0)
    var = jnp.sum(c * c, axis=-1, keepdims=True) * inv_n
    # gamma/beta are zero on padded lanes, so padded lanes stay exactly 0.
    return c * jax.lax.rsqrt(var + 1e-5) * gamma + beta


# ------------------------------------------------------------------------------
# The fused forward kernel (one batch-tile of TM samples per grid step)
# ------------------------------------------------------------------------------
def fused_forward_kernel(
    ids_ref,                                   # (TM, 2*SEQ) int32  [title|url]
    ebd_ref,                                   # (2*VOCAB, 2*HIDDEN) bf16 block-diag emb
    whd_ref, bhd_ref,                          # (2*HIDDEN, 768) bf16 / (1, 768) f32
    w1_ref, b1_ref, g1_ref, be1_ref,           # classifier layer 1 (w bf16)
    w2_ref, b2_ref, g2_ref, be2_ref,           # classifier layer 2 (w bf16)
    w3_ref, b3_ref,                            # classifier layer 3 (w bf16)
    out_ref,                                   # (TM, D_OUTP) f32
):
    ids = ids_ref[...]                         # (TM, 2*SEQ)
    tm = ids.shape[0]

    # --- "gather" as a count matmul: counts over a [title-vocab | url-vocab] axis
    lane_v = jax.lax.broadcasted_iota(jnp.int32, (tm, 2 * VOCAB), 1)   # 0..127
    counts = jnp.zeros((tm, 2 * VOCAB), jnp.float32)
    for j in range(2 * SEQ):                   # static, fully unrolled (16 iters)
        tgt = ids[:, j:j + 1] + (j // SEQ) * VOCAB
        counts = counts + (lane_v == tgt).astype(jnp.float32)
    counts = counts * (1.0 / SEQ)              # mean-pool weights (exact in bf16)

    # --- both "BERT" stand-in branches as two block-diagonal matmuls ----------
    # pooled = [mean_emb(title) | mean_emb(url)]          : (TM, 2*HIDDEN)
    pooled = jnp.dot(counts.astype(jnp.bfloat16), ebd_ref[...],
                     preferred_element_type=jnp.float32)
    # x = [title_logits | url_logits] == torch.cat(...)   : (TM, 768)
    x = jnp.dot(pooled.astype(jnp.bfloat16), whd_ref[...],
                preferred_element_type=jnp.float32) + bhd_ref[...]

    # --- classifier Sequential -------------------------------------------------
    def linear(h, w_ref, b_ref):
        return jnp.dot(h.astype(jnp.bfloat16), w_ref[...],
                       preferred_element_type=jnp.float32) + b_ref[...]

    lane_h1 = jax.lax.broadcasted_iota(jnp.int32, (tm, D_H1P), 1)
    lane_h2 = jax.lax.broadcasted_iota(jnp.int32, (tm, D_H2P), 1)   # reused 2x

    h1 = _masked_layer_norm(_leaky_relu(linear(x, w1_ref, b1_ref)),
                            g1_ref[...], be1_ref[...],
                            lane_h1 < D_H1, 1.0 / D_H1)             # (TM, 768)
    h2 = _masked_layer_norm(_leaky_relu(linear(h1, w2_ref, b2_ref)),
                            g2_ref[...], be2_ref[...],
                            lane_h2 < D_H2, 1.0 / D_H2)             # (TM, 640)
    z = linear(h2, w3_ref, b3_ref)                                  # (TM, 640)

    # Softmax over the 588 logical logits; padded lanes masked out. Exact divide.
    z = jnp.where(lane_h2 < D_OUT, z, -1e30)
    z = z - jnp.max(z, axis=-1, keepdims=True)
    e = jnp.exp(z)
    out_ref[...] = e / jnp.sum(e, axis=-1, keepdims=True)


# ------------------------------------------------------------------------------
# Parameter construction (deterministic, in-script)
# ------------------------------------------------------------------------------
def _linear_params(key, d_in, d_out, w_dtype=jnp.float32):
    kw, kb = jax.random.split(key)
    w = (jax.random.normal(kw, (d_in, d_out), jnp.float32)
         / jnp.sqrt(d_in)).astype(w_dtype)
    b = 0.01 * jax.random.normal(kb, (1, d_out), jnp.float32)
    return w, b


def make_params(key):
    keys = jax.random.split(key, 6)
    # embedding table + head weights in bf16 (matmul weights); biases f32
    emb_table = (0.1 * jax.random.normal(keys[0], (VOCAB, HIDDEN),
                                         jnp.float32)).astype(jnp.bfloat16)
    wt, bt = _linear_params(keys[1], HIDDEN, NUM_LABELS, jnp.bfloat16)  # title
    wu, bu = _linear_params(keys[2], HIDDEN, NUM_LABELS, jnp.bfloat16)  # url
    # classifier weights stored in bf16 (halves weight HBM->VMEM traffic)
    w1, b1 = _linear_params(keys[3], D_CAT, D_H1, jnp.bfloat16)
    w2, b2 = _linear_params(keys[4], D_H1, D_H2, jnp.bfloat16)
    w3, b3 = _linear_params(keys[5], D_H2, D_OUT, jnp.bfloat16)
    g1 = jnp.ones((1, D_H1), jnp.float32)
    be1 = jnp.zeros((1, D_H1), jnp.float32)
    g2 = jnp.ones((1, D_H2), jnp.float32)
    be2 = jnp.zeros((1, D_H2), jnp.float32)
    cls = (w1, b1, g1, be1, w2, b2, g2, be2, w3, b3)
    return emb_table, (wt, bt), (wu, bu), cls


def _pad_cols(a, cols):
    return jnp.pad(a, ((0, 0), (0, cols - a.shape[1])))


def _pad2(a, rows, cols):
    return jnp.pad(a, ((0, rows - a.shape[0]), (0, cols - a.shape[1])))


def pack_kernel_params(emb_table, title_head, url_head, cls):
    """Block-diagonal head weights + lane-dense zero-padded classifier weights."""
    (wt, bt), (wu, bu) = title_head, url_head
    (w1, b1, g1, be1, w2, b2, g2, be2, w3, b3) = cls

    # block-diagonal embedding: [title-vocab | url-vocab] -> [title-hid | url-hid]
    e_bd = jnp.zeros((2 * VOCAB, 2 * HIDDEN), jnp.bfloat16)
    e_bd = e_bd.at[:VOCAB, :HIDDEN].set(emb_table)
    e_bd = e_bd.at[VOCAB:, HIDDEN:].set(emb_table)

    # block-diagonal head: [title-hid | url-hid] -> [title-logits | url-logits]
    w_bd = jnp.zeros((2 * HIDDEN, D_CAT), jnp.bfloat16)
    w_bd = w_bd.at[:HIDDEN, :NUM_LABELS].set(wt)
    w_bd = w_bd.at[HIDDEN:, NUM_LABELS:].set(wu)
    b_cat = jnp.concatenate([bt, bu], axis=-1)                      # (1, 768) f32

    return (
        e_bd, w_bd, b_cat,
        _pad2(w1, D_CAT, D_H1P), _pad_cols(b1, D_H1P),
        _pad_cols(g1, D_H1P), _pad_cols(be1, D_H1P),
        _pad2(w2, D_H1P, D_H2P), _pad_cols(b2, D_H2P),
        _pad_cols(g2, D_H2P), _pad_cols(be2, D_H2P),
        _pad2(w3, D_H2P, D_OUTP), _pad_cols(b3, D_OUTP),
    )


# ------------------------------------------------------------------------------
# Forward pass (mirrors WebsiteClassifier.forward, batched) — one pallas_call
# ------------------------------------------------------------------------------
@jax.jit
def website_classifier_forward(title_ids, url_ids, kernel_params):
    ids = jnp.concatenate([title_ids, url_ids], axis=-1).astype(jnp.int32)  # (B, 2*SEQ)
    batch = ids.shape[0]
    assert batch % TM == 0, "batch must be a multiple of the tile size TM"
    grid = (batch // TM,)

    # Grid-invariant weight blocks: DMA'd once, stay resident across the grid.
    weight_specs = [pl.BlockSpec(p.shape, lambda i: (0, 0)) for p in kernel_params]

    out_pad = pl.pallas_call(
        fused_forward_kernel,
        out_shape=jax.ShapeDtypeStruct((batch, D_OUTP), jnp.float32),
        grid=grid,
        in_specs=[pl.BlockSpec((TM, 2 * SEQ), lambda i: (i, 0))] + weight_specs,
        out_specs=pl.BlockSpec((TM, D_OUTP), lambda i: (i, 0)),
        compiler_params=pltpu.CompilerParams(
            dimension_semantics=("parallel",)),      # shards batch across TCs on v7x
    )(ids, *kernel_params)
    return out_pad[:, :D_OUT]                                    # (B, 588)


# ------------------------------------------------------------------------------
# Plain-JAX reference (logical, unpadded shapes) for a numerical sanity check
# ------------------------------------------------------------------------------
def reference_forward(title_ids, url_ids, emb_table, title_head, url_head, cls):
    (wt, bt), (wu, bu) = title_head, url_head

    def head(ids, w, b):
        e = emb_table.astype(jnp.float32)[ids]                   # (B, SEQ, HIDDEN)
        pooled = jnp.mean(e, axis=1)                             # (B, HIDDEN)
        return jnp.dot(pooled.astype(jnp.bfloat16), w,
                       preferred_element_type=jnp.float32) + b   # (B, 384)

    x = jnp.concatenate([head(title_ids, wt, bt), head(url_ids, wu, bu)],
                        axis=-1)                                 # (B, 768)
    (w1, b1, g1, be1, w2, b2, g2, be2, w3, b3) = cls

    def lrelu(h):
        return jnp.where(h >= 0, h, 0.01 * h)

    def ln(h, g, b):
        mu = jnp.mean(h, axis=-1, keepdims=True)
        var = jnp.mean(jnp.square(h - mu), axis=-1, keepdims=True)
        return (h - mu) * jax.lax.rsqrt(var + 1e-5) * g + b

    def lin(h, w, b):
        return jnp.dot(h.astype(jnp.bfloat16), w,
                       preferred_element_type=jnp.float32) + b

    h1 = ln(lrelu(lin(x, w1, b1)), g1, be1)
    h2 = ln(lrelu(lin(h1, w2, b2)), g2, be2)
    z = lin(h2, w3, b3)
    return jax.nn.softmax(z, axis=-1)                            # (B, 588)


if __name__ == "__main__":
    key = jax.random.PRNGKey(0)
    k_param, k_title, k_url = jax.random.split(key, 3)

    emb_table, title_head, url_head, cls = make_params(k_param)
    kernel_params = pack_kernel_params(emb_table, title_head, url_head, cls)

    title_ids = jax.random.randint(k_title, (BATCH, SEQ), 0, VOCAB, dtype=jnp.int32)
    url_ids = jax.random.randint(k_url, (BATCH, SEQ), 0, VOCAB, dtype=jnp.int32)

    out = website_classifier_forward(title_ids, url_ids, kernel_params)
    out = jax.block_until_ready(out)

    ref = reference_forward(title_ids, url_ids, emb_table, title_head, url_head, cls)

    assert out.shape == (BATCH, D_OUT)
    assert bool(jnp.all(jnp.isfinite(out)))
    # bf16 weights/activations -> slightly loosened comparison tolerances
    assert jnp.allclose(out, ref, atol=2e-3, rtol=5e-2), \
        float(jnp.max(jnp.abs(out - ref)))
    # exact softmax divide -> rows sum to 1
    assert jnp.allclose(jnp.sum(out, axis=-1), 1.0, atol=1e-3)

    print("KERNEL_OK")
</pallas_src>

<mosaic_0001>
module attributes {stable_mosaic.version = 11 : i64} {
  func.func @fused_forward_kernel(%arg0: i32, %arg1: memref<16x16xi32, #tpu.memory_space<vmem>>, %arg2: memref<128x64xbf16, #tpu.memory_space<vmem>>, %arg3: memref<64x768xbf16, #tpu.memory_space<vmem>>, %arg4: memref<1x768xf32, #tpu.memory_space<vmem>>, %arg5: memref<768x768xbf16, #tpu.memory_space<vmem>>, %arg6: memref<1x768xf32, #tpu.memory_space<vmem>>, %arg7: memref<1x768xf32, #tpu.memory_space<vmem>>, %arg8: memref<1x768xf32, #tpu.memory_space<vmem>>, %arg9: memref<768x640xbf16, #tpu.memory_space<vmem>>, %arg10: memref<1x640xf32, #tpu.memory_space<vmem>>, %arg11: memref<1x640xf32, #tpu.memory_space<vmem>>, %arg12: memref<1x640xf32, #tpu.memory_space<vmem>>, %arg13: memref<640x640xbf16, #tpu.memory_space<vmem>>, %arg14: memref<1x640xf32, #tpu.memory_space<vmem>>, %arg15: memref<16x640xf32, #tpu.memory_space<vmem>>) attributes {dimension_semantics = [#tpu.dimension_semantics<parallel>], iteration_bounds = array<i64: 2>, scalar_prefetch = 0 : i64, scratch_operands = 0 : i64, tpu.core_type = #tpu.core_type<tc>, window_params = [{transform_indices = @transform_0, window_bounds = array<i64: 16, 16>}, {pipeline_mode = #tpu.pipeline_mode<synchronous>, transform_indices = @transform_1, window_bounds = array<i64: 128, 64>}, {pipeline_mode = #tpu.pipeline_mode<synchronous>, transform_indices = @transform_2, window_bounds = array<i64: 64, 768>}, {pipeline_mode = #tpu.pipeline_mode<synchronous>, transform_indices = @transform_3, window_bounds = array<i64: 1, 768>}, {pipeline_mode = #tpu.pipeline_mode<synchronous>, transform_indices = @transform_4, window_bounds = array<i64: 768, 768>}, {pipeline_mode = #tpu.pipeline_mode<synchronous>, transform_indices = @transform_5, window_bounds = array<i64: 1, 768>}, {pipeline_mode = #tpu.pipeline_mode<synchronous>, transform_indices = @transform_6, window_bounds = array<i64: 1, 768>}, {pipeline_mode = #tpu.pipeline_mode<synchronous>, transform_indices = @transform_7, window_bounds = array<i64: 1, 768>}, {pipeline_mode = #tpu.pipeline_mode<synchronous>, transform_indices = @transform_8, window_bounds = array<i64: 768, 640>}, {pipeline_mode = #tpu.pipeline_mode<synchronous>, transform_indices = @transform_9, window_bounds = array<i64: 1, 640>}, {pipeline_mode = #tpu.pipeline_mode<synchronous>, transform_indices = @transform_10, window_bounds = array<i64: 1, 640>}, {pipeline_mode = #tpu.pipeline_mode<synchronous>, transform_indices = @transform_11, window_bounds = array<i64: 1, 640>}, {pipeline_mode = #tpu.pipeline_mode<synchronous>, transform_indices = @transform_12, window_bounds = array<i64: 640, 640>}, {pipeline_mode = #tpu.pipeline_mode<synchronous>, transform_indices = @transform_13, window_bounds = array<i64: 1, 640>}, {transform_indices = @transform_14, window_bounds = array<i64: 16, 640>}]} {
    %c0 = arith.constant 0 : index
    %c0_0 = arith.constant 0 : index
    %0 = vector.load %arg1[%c0, %c0_0] : memref<16x16xi32, #tpu.memory_space<vmem>>, vector<16x16xi32>
    %1 = tpu.iota {dimensions = array<i32: 1>} : vector<16x128xi32>
    %cst = arith.constant 0.000000e+00 : f32
    %2 = vector.broadcast %cst : f32 to vector<16x128xf32>
    %3 = vector.extract_strided_slice %0 {offsets = [0, 0], sizes = [16, 1], strides = [1, 1]} : vector<16x16xi32> to vector<16x1xi32>
    %c0_i32 = arith.constant 0 : i32
    %4 = vector.broadcast %c0_i32 : i32 to vector<16x1xi32>
    %5 = arith.addi %3, %4 : vector<16x1xi32>
    %6 = vector.broadcast %5 : vector<16x1xi32> to vector<16x128xi32>
    %7 = arith.cmpi eq, %1, %6 : vector<16x128xi32>
    %8 = arith.extui %7 : vector<16x128xi1> to vector<16x128xi32>
    %9 = arith.sitofp %8 : vector<16x128xi32> to vector<16x128xf32>
    %10 = arith.addf %2, %9 : vector<16x128xf32>
    %11 = vector.extract_strided_slice %0 {offsets = [0, 1], sizes = [16, 1], strides = [1, 1]} : vector<16x16xi32> to vector<16x1xi32>
    %c0_i32_1 = arith.constant 0 : i32
    %12 = vector.broadcast %c0_i32_1 : i32 to vector<16x1xi32>
    %13 = arith.addi %11, %12 : vector<16x1xi32>
    %14 = vector.broadcast %13 : vector<16x1xi32> to vector<16x128xi32>
    %15 = arith.cmpi eq, %1, %14 : vector<16x128xi32>
    %16 = arith.extui %15 : vector<16x128xi1> to vector<16x128xi32>
    %17 = arith.sitofp %16 : vector<16x128xi32> to vector<16x128xf32>
    %18 = arith.addf %10, %17 : vector<16x128xf32>
    %19 = vector.extract_strided_slice %0 {offsets = [0, 2], sizes = [16, 1], strides = [1, 1]} : vector<16x16xi32> to vector<16x1xi32>
    %c0_i32_2 = arith.constant 0 : i32
    %20 = vector.broadcast %c0_i32_2 : i32 to vector<16x1xi32>
    %21 = arith.addi %19, %20 : vector<16x1xi32>
    %22 = vector.broadcast %21 : vector<16x1xi32> to vector<16x128xi32>
    %23 = arith.cmpi eq, %1, %22 : vector<16x128xi32>
    %24 = arith.extui %23 : vector<16x128xi1> to vector<16x128xi32>
    %25 = arith.sitofp %24 : vector<16x128xi32> to vector<16x128xf32>
    %26 = arith.addf %18, %25 : vector<16x128xf32>
    %27 = vector.extract_strided_slice %0 {offsets = [0, 3], sizes = [16, 1], strides = [1, 1]} : vector<16x16xi32> to vector<16x1xi32>
    %c0_i32_3 = arith.constant 0 : i32
    %28 = vector.broadcast %c0_i32_3 : i32 to vector<16x1xi32>
    %29 = arith.addi %27, %28 : vector<16x1xi32>
    %30 = vector.broadcast %29 : vector<16x1xi32> to vector<16x128xi32>
    %31 = arith.cmpi eq, %1, %30 : vector<16x128xi32>
    %32 = arith.extui %31 : vector<16x128xi1> to vector<16x128xi32>
    %33 = arith.sitofp %32 : vector<16x128xi32> to vector<16x128xf32>
    %34 = arith.addf %26, %33 : vector<16x128xf32>
    %35 = vector.extract_strided_slice %0 {offsets = [0, 4], sizes = [16, 1], strides = [1, 1]} : vector<16x16xi32> to vector<16x1xi32>
    %c0_i32_4 = arith.constant 0 : i32
    %36 = vector.broadcast %c0_i32_4 : i32 to vector<16x1xi32>
    %37 = arith.addi %35, %36 : vector<16x1xi32>
    %38 = vector.broadcast %37 : vector<16x1xi32> to vector<16x128xi32>
    %39 = arith.cmpi eq, %1, %38 : vector<16x128xi32>
    %40 = arith.extui %39 : vector<16x128xi1> to vector<16x128xi32>
    %41 = arith.sitofp %40 : vector<16x128xi32> to vector<16x128xf32>
    %42 = arith.addf %34, %41 : vector<16x128xf32>
    %43 = vector.extract_strided_slice %0 {offsets = [0, 5], sizes = [16, 1], strides = [1, 1]} : vector<16x16xi32> to vector<16x1xi32>
    %c0_i32_5 = arith.constant 0 : i32
    %44 = vector.broadcast %c0_i32_5 : i32 to vector<16x1xi32>
    %45 = arith.addi %43, %44 : vector<16x1xi32>
    %46 = vector.broadcast %45 : vector<16x1xi32> to vector<16x128xi32>
    %47 = arith.cmpi eq, %1, %46 : vector<16x128xi32>
    %48 = arith.extui %47 : vector<16x128xi1> to vector<16x128xi32>
    %49 = arith.sitofp %48 : vector<16x128xi32> to vector<16x128xf32>
    %50 = arith.addf %42, %49 : vector<16x128xf32>
    %51 = vector.extract_strided_slice %0 {offsets = [0, 6], sizes = [16, 1], strides = [1, 1]} : vector<16x16xi32> to vector<16x1xi32>
    %c0_i32_6 = arith.constant 0 : i32
    %52 = vector.broadcast %c0_i32_6 : i32 to vector<16x1xi32>
    %53 = arith.addi %51, %52 : vector<16x1xi32>
    %54 = vector.broadcast %53 : vector<16x1xi32> to vector<16x128xi32>
    %55 = arith.cmpi eq, %1, %54 : vector<16x128xi32>
    %56 = arith.extui %55 : vector<16x128xi1> to vector<16x128xi32>
    %57 = arith.sitofp %56 : vector<16x128xi32> to vector<16x128xf32>
    %58 = arith.addf %50, %57 : vector<16x128xf32>
    %59 = vector.extract_strided_slice %0 {offsets = [0, 7], sizes = [16, 1], strides = [1, 1]} : vector<16x16xi32> to vector<16x1xi32>
    %c0_i32_7 = arith.constant 0 : i32
    %60 = vector.broadcast %c0_i32_7 : i32 to vector<16x1xi32>
    %61 = arith.addi %59, %60 : vector<16x1xi32>
    %62 = vector.broadcast %61 : vector<16x1xi32> to vector<16x128xi32>
    %63 = arith.cmpi eq, %1, %62 : vector<16x128xi32>
    %64 = arith.extui %63 : vector<16x128xi1> to vector<16x128xi32>
    %65 = arith.sitofp %64 : vector<16x128xi32> to vector<16x128xf32>
    %66 = arith.addf %58, %65 : vector<16x128xf32>
    %67 = vector.extract_strided_slice %0 {offsets = [0, 8], sizes = [16, 1], strides = [1, 1]} : vector<16x16xi32> to vector<16x1xi32>
    %c64_i32 = arith.constant 64 : i32
    %68 = vector.broadcast %c64_i32 : i32 to vector<16x1xi32>
    %69 = arith.addi %67, %68 : vector<16x1xi32>
    %70 = vector.broadcast %69 : vector<16x1xi32> to vector<16x128xi32>
    %71 = arith.cmpi eq, %1, %70 : vector<16x128xi32>
    %72 = arith.extui %71 : vector<16x128xi1> to vector<16x128xi32>
    %73 = arith.sitofp %72 : vector<16x128xi32> to vector<16x128xf32>
    %74 = arith.addf %66, %73 : vector<16x128xf32>
    %75 = vector.extract_strided_slice %0 {offsets = [0, 9], sizes = [16, 1], strides = [1, 1]} : vector<16x16xi32> to vector<16x1xi32>
    %c64_i32_8 = arith.constant 64 : i32
    %76 = vector.broadcast %c64_i32_8 : i32 to vector<16x1xi32>
    %77 = arith.addi %75, %76 : vector<16x1xi32>
    %78 = vector.broadcast %77 : vector<16x1xi32> to vector<16x128xi32>
    %79 = arith.cmpi eq, %1, %78 : vector<16x128xi32>
    %80 = arith.extui %79 : vector<16x128xi1> to vector<16x128xi32>
    %81 = arith.sitofp %80 : vector<16x128xi32> to vector<16x128xf32>
    %82 = arith.addf %74, %81 : vector<16x128xf32>
    %83 = vector.extract_strided_slice %0 {offsets = [0, 10], sizes = [16, 1], strides = [1, 1]} : vector<16x16xi32> to vector<16x1xi32>
    %c64_i32_9 = arith.constant 64 : i32
    %84 = vector.broadcast %c64_i32_9 : i32 to vector<16x1xi32>
    %85 = arith.addi %83, %84 : vector<16x1xi32>
    %86 = vector.broadcast %85 : vector<16x1xi32> to vector<16x128xi32>
    %87 = arith.cmpi eq, %1, %86 : vector<16x128xi32>
    %88 = arith.extui %87 : vector<16x128xi1> to vector<16x128xi32>
    %89 = arith.sitofp %88 : vector<16x128xi32> to vector<16x128xf32>
    %90 = arith.addf %82, %89 : vector<16x128xf32>
    %91 = vector.extract_strided_slice %0 {offsets = [0, 11], sizes = [16, 1], strides = [1, 1]} : vector<16x16xi32> to vector<16x1xi32>
    %c64_i32_10 = arith.constant 64 : i32
    %92 = vector.broadcast %c64_i32_10 : i32 to vector<16x1xi32>
    %93 = arith.addi %91, %92 : vector<16x1xi32>
    %94 = vector.broadcast %93 : vector<16x1xi32> to vector<16x128xi32>
    %95 = arith.cmpi eq, %1, %94 : vector<16x128xi32>
    %96 = arith.extui %95 : vector<16x128xi1> to vector<16x128xi32>
    %97 = arith.sitofp %96 : vector<16x128xi32> to vector<16x128xf32>
    %98 = arith.addf %90, %97 : vector<16x128xf32>
    %99 = vector.extract_strided_slice %0 {offsets = [0, 12], sizes = [16, 1], strides = [1, 1]} : vector<16x16xi32> to vector<16x1xi32>
    %c64_i32_11 = arith.constant 64 : i32
    %100 = vector.broadcast %c64_i32_11 : i32 to vector<16x1xi32>
    %101 = arith.addi %99, %100 : vector<16x1xi32>
    %102 = vector.broadcast %101 : vector<16x1xi32> to vector<16x128xi32>
    %103 = arith.cmpi eq, %1, %102 : vector<16x128xi32>
    %104 = arith.extui %103 : vector<16x128xi1> to vector<16x128xi32>
    %105 = arith.sitofp %104 : vector<16x128xi32> to vector<16x128xf32>
    %106 = arith.addf %98, %105 : vector<16x128xf32>
    %107 = vector.extract_strided_slice %0 {offsets = [0, 13], sizes = [16, 1], strides = [1, 1]} : vector<16x16xi32> to vector<16x1xi32>
    %c64_i32_12 = arith.constant 64 : i32
    %108 = vector.broadcast %c64_i32_12 : i32 to vector<16x1xi32>
    %109 = arith.addi %107, %108 : vector<16x1xi32>
    %110 = vector.broadcast %109 : vector<16x1xi32> to vector<16x128xi32>
    %111 = arith.cmpi eq, %1, %110 : vector<16x128xi32>
    %112 = arith.extui %111 : vector<16x128xi1> to vector<16x128xi32>
    %113 = arith.sitofp %112 : vector<16x128xi32> to vector<16x128xf32>
    %114 = arith.addf %106, %113 : vector<16x128xf32>
    %115 = vector.extract_strided_slice %0 {offsets = [0, 14], sizes = [16, 1], strides = [1, 1]} : vector<16x16xi32> to vector<16x1xi32>
    %c64_i32_13 = arith.constant 64 : i32
    %116 = vector.broadcast %c64_i32_13 : i32 to vector<16x1xi32>
    %117 = arith.addi %115, %116 : vector<16x1xi32>
    %118 = vector.broadcast %117 : vector<16x1xi32> to vector<16x128xi32>
    %119 = arith.cmpi eq, %1, %118 : vector<16x128xi32>
    %120 = arith.extui %119 : vector<16x128xi1> to vector<16x128xi32>
    %121 = arith.sitofp %120 : vector<16x128xi32> to vector<16x128xf32>
    %122 = arith.addf %114, %121 : vector<16x128xf32>
    %123 = vector.extract_strided_slice %0 {offsets = [0, 15], sizes = [16, 1], strides = [1, 1]} : vector<16x16xi32> to vector<16x1xi32>
    %c64_i32_14 = arith.constant 64 : i32
    %124 = vector.broadcast %c64_i32_14 : i32 to vector<16x1xi32>
    %125 = arith.addi %123, %124 : vector<16x1xi32>
    %126 = vector.broadcast %125 : vector<16x1xi32> to vector<16x128xi32>
    %127 = arith.cmpi eq, %1, %126 : vector<16x128xi32>
    %128 = arith.extui %127 : vector<16x128xi1> to vector<16x128xi32>
    %129 = arith.sitofp %128 : vector<16x128xi32> to vector<16x128xf32>
    %130 = arith.addf %122, %129 : vector<16x128xf32>
    %cst_15 = arith.constant 1.250000e-01 : f32
    %131 = vector.broadcast %cst_15 : f32 to vector<16x128xf32>
    %132 = arith.mulf %130, %131 : vector<16x128xf32>
    %133 = arith.truncf %132 : vector<16x128xf32> to vector<16x128xbf16>
    %c0_16 = arith.constant 0 : index
    %c0_17 = arith.constant 0 : index
    %134 = vector.load %arg2[%c0_16, %c0_17] : memref<128x64xbf16, #tpu.memory_space<vmem>>, vector<128x64xbf16>
    %cst_18 = arith.constant dense<0.000000e+00> : vector<16x64xf32>
    %135 = tpu.matmul %133, %134, %cst_18 {dimension_numbers = #tpu.dot_dimension_numbers<[1], [0], [0], [1], [0, 0, 1, 1], [], []>} : vector<16x128xbf16>, vector<128x64xbf16>, vector<16x64xf32> -> vector<16x64xf32>
    %136 = arith.truncf %135 : vector<16x64xf32> to vector<16x64xbf16>
    %c0_19 = arith.constant 0 : index
    %c0_20 = arith.constant 0 : index
    %137 = vector.load %arg3[%c0_19, %c0_20] : memref<64x768xbf16, #tpu.memory_space<vmem>>, vector<64x768xbf16>
    %cst_21 = arith.constant dense<0.000000e+00> : vector<16x768xf32>
    %138 = tpu.matmul %136, %137, %cst_21 {dimension_numbers = #tpu.dot_dimension_numbers<[1], [0], [0], [1], [0, 0, 1, 1], [], []>} : vector<16x64xbf16>, vector<64x768xbf16>, vector<16x768xf32> -> vector<16x768xf32>
    %c0_22 = arith.constant 0 : index
    %c0_23 = arith.constant 0 : index
    %139 = vector.load %arg4[%c0_22, %c0_23] : memref<1x768xf32, #tpu.memory_space<vmem>>, vector<1x768xf32>
    %140 = vector.broadcast %139 : vector<1x768xf32> to vector<16x768xf32>
    %141 = arith.addf %138, %140 : vector<16x768xf32>
    %142 = tpu.iota {dimensions = array<i32: 1>} : vector<16x768xi32>
    %143 = tpu.iota {dimensions = array<i32: 1>} : vector<16x640xi32>
    %144 = arith.truncf %141 : vector<16x768xf32> to vector<16x768xbf16>
    %c0_24 = arith.constant 0 : index
    %c0_25 = arith.constant 0 : index
    %145 = vector.load %arg5[%c0_24, %c0_25] : memref<768x768xbf16, #tpu.memory_space<vmem>>, vector<768x768xbf16>
    %cst_26 = arith.constant dense<0.000000e+00> : vector<16x768xf32>
    %146 = tpu.matmul %144, %145, %cst_26 {dimension_numbers = #tpu.dot_dimension_numbers<[1], [0], [0], [1], [0, 0, 1, 1], [], []>} : vector<16x768xbf16>, vector<768x768xbf16>, vector<16x768xf32> -> vector<16x768xf32>
    %c0_27 = arith.constant 0 : index
    %c0_28 = arith.constant 0 : index
    %147 = vector.load %arg6[%c0_27, %c0_28] : memref<1x768xf32, #tpu.memory_space<vmem>>, vector<1x768xf32>
    %148 = vector.broadcast %147 : vector<1x768xf32> to vector<16x768xf32>
    %149 = arith.addf %146, %148 : vector<16x768xf32>
    %cst_29 = arith.constant 0.000000e+00 : f32
    %150 = vector.broadcast %cst_29 : f32 to vector<16x768xf32>
    %151 = arith.cmpf oge, %149, %150 : vector<16x768xf32>
    %cst_30 = arith.constant 0.00999999977 : f32
    %152 = vector.broadcast %cst_30 : f32 to vector<16x768xf32>
    %153 = arith.mulf %152, %149 : vector<16x768xf32>
    %154 = arith.select %151, %149, %153 : vector<16x768xi1>, vector<16x768xf32>
    %c0_31 = arith.constant 0 : index
    %c0_32 = arith.constant 0 : index
    %155 = vector.load %arg7[%c0_31, %c0_32] : memref<1x768xf32, #tpu.memory_space<vmem>>, vector<1x768xf32>
    %c0_33 = arith.constant 0 : index
    %c0_34 = arith.constant 0 : index
    %156 = vector.load %arg8[%c0_33, %c0_34] : memref<1x768xf32, #tpu.memory_space<vmem>>, vector<1x768xf32>
    %c650_i32 = arith.constant 650 : i32
    %157 = vector.broadcast %c650_i32 : i32 to vector<16x768xi32>
    %158 = arith.cmpi slt, %142, %157 : vector<16x768xi32>
    %cst_35 = arith.constant dense<0.000000e+00> : vector<16xf32>
    %159 = vector.multi_reduction <add>, %154, %cst_35 [1] : vector<16x768xf32> to vector<16xf32>
    %160 = vector.shape_cast %159 : vector<16xf32> to vector<16x1xf32>
    %cst_36 = arith.constant 0.00153846154 : f32
    %161 = vector.broadcast %cst_36 : f32 to vector<16x1xf32>
    %162 = arith.mulf %160, %161 : vector<16x1xf32>
    %163 = vector.broadcast %162 : vector<16x1xf32> to vector<16x768xf32>
    %164 = arith.subf %154, %163 : vector<16x768xf32>
    %cst_37 = arith.constant 0.000000e+00 : f32
    %165 = vector.broadcast %cst_37 : f32 to vector<16x768xf32>
    %166 = arith.select %158, %164, %165 : vector<16x768xi1>, vector<16x768xf32>
    %167 = arith.mulf %166, %166 : vector<16x768xf32>
    %cst_38 = arith.constant dense<0.000000e+00> : vector<16xf32>
    %168 = vector.multi_reduction <add>, %167, %cst_38 [1] : vector<16x768xf32> to vector<16xf32>
    %169 = vector.shape_cast %168 : vector<16xf32> to vector<16x1xf32>
    %cst_39 = arith.constant 0.00153846154 : f32
    %170 = vector.broadcast %cst_39 : f32 to vector<16x1xf32>
    %171 = arith.mulf %169, %170 : vector<16x1xf32>
    %cst_40 = arith.constant 9.99999974E-6 : f32
    %172 = vector.broadcast %cst_40 : f32 to vector<16x1xf32>
    %173 = arith.addf %171, %172 : vector<16x1xf32>
    %174 = math.rsqrt %173 : vector<16x1xf32>
    %175 = vector.broadcast %174 : vector<16x1xf32> to vector<16x768xf32>
    %176 = arith.mulf %166, %175 : vector<16x768xf32>
    %177 = vector.broadcast %155 : vector<1x768xf32> to vector<16x768xf32>
    %178 = arith.mulf %176, %177 : vector<16x768xf32>
    %179 = vector.broadcast %156 : vector<1x768xf32> to vector<16x768xf32>
    %180 = arith.addf %178, %179 : vector<16x768xf32>
    %181 = arith.truncf %180 : vector<16x768xf32> to vector<16x768xbf16>
    %c0_41 = arith.constant 0 : index
    %c0_42 = arith.constant 0 : index
    %182 = vector.load %arg9[%c0_41, %c0_42] : memref<768x640xbf16, #tpu.memory_space<vmem>>, vector<768x640xbf16>
    %cst_43 = arith.constant dense<0.000000e+00> : vector<16x640xf32>
    %183 = tpu.matmul %181, %182, %cst_43 {dimension_numbers = #tpu.dot_dimension_numbers<[1], [0], [0], [1], [0, 0, 1, 1], [], []>} : vector<16x768xbf16>, vector<768x640xbf16>, vector<16x640xf32> -> vector<16x640xf32>
    %c0_44 = arith.constant 0 : index
    %c0_45 = arith.constant 0 : index
    %184 = vector.load %arg10[%c0_44, %c0_45] : memref<1x640xf32, #tpu.memory_space<vmem>>, vector<1x640xf32>
    %185 = vector.broadcast %184 : vector<1x640xf32> to vector<16x640xf32>
    %186 = arith.addf %183, %185 : vector<16x640xf32>
    %cst_46 = arith.constant 0.000000e+00 : f32
    %187 = vector.broadcast %cst_46 : f32 to vector<16x640xf32>
    %188 = arith.cmpf oge, %186, %187 : vector<16x640xf32>
    %cst_47 = arith.constant 0.00999999977 : f32
    %189 = vector.broadcast %cst_47 : f32 to vector<16x640xf32>
    %190 = arith.mulf %189, %186 : vector<16x640xf32>
    %191 = arith.select %188, %186, %190 : vector<16x640xi1>, vector<16x640xf32>
    %c0_48 = arith.constant 0 : index
    %c0_49 = arith.constant 0 : index
    %192 = vector.load %arg11[%c0_48, %c0_49] : memref<1x640xf32, #tpu.memory_space<vmem>>, vector<1x640xf32>
    %c0_50 = arith.constant 0 : index
    %c0_51 = arith.constant 0 : index
    %193 = vector.load %arg12[%c0_50, %c0_51] : memref<1x640xf32, #tpu.memory_space<vmem>>, vector<1x640xf32>
    %c600_i32 = arith.constant 600 : i32
    %194 = vector.broadcast %c600_i32 : i32 to vector<16x640xi32>
    %195 = arith.cmpi slt, %143, %194 : vector<16x640xi32>
    %cst_52 = arith.constant dense<0.000000e+00> : vector<16xf32>
    %196 = vector.multi_reduction <add>, %191, %cst_52 [1] : vector<16x640xf32> to vector<16xf32>
    %197 = vector.shape_cast %196 : vector<16xf32> to vector<16x1xf32>
    %cst_53 = arith.constant 0.00166666671 : f32
    %198 = vector.broadcast %cst_53 : f32 to vector<16x1xf32>
    %199 = arith.mulf %197, %198 : vector<16x1xf32>
    %200 = vector.broadcast %199 : vector<16x1xf32> to vector<16x640xf32>
    %201 = arith.subf %191, %200 : vector<16x640xf32>
    %cst_54 = arith.constant 0.000000e+00 : f32
    %202 = vector.broadcast %cst_54 : f32 to vector<16x640xf32>
    %203 = arith.select %195, %201, %202 : vector<16x640xi1>, vector<16x640xf32>
    %204 = arith.mulf %203, %203 : vector<16x640xf32>
    %cst_55 = arith.constant dense<0.000000e+00> : vector<16xf32>
    %205 = vector.multi_reduction <add>, %204, %cst_55 [1] : vector<16x640xf32> to vector<16xf32>
    %206 = vector.shape_cast %205 : vector<16xf32> to vector<16x1xf32>
    %cst_56 = arith.constant 0.00166666671 : f32
    %207 = vector.broadcast %cst_56 : f32 to vector<16x1xf32>
    %208 = arith.mulf %206, %207 : vector<16x1xf32>
    %cst_57 = arith.constant 9.99999974E-6 : f32
    %209 = vector.broadcast %cst_57 : f32 to vector<16x1xf32>
    %210 = arith.addf %208, %209 : vector<16x1xf32>
    %211 = math.rsqrt %210 : vector<16x1xf32>
    %212 = vector.broadcast %211 : vector<16x1xf32> to vector<16x640xf32>
    %213 = arith.mulf %203, %212 : vector<16x640xf32>
    %214 = vector.broadcast %192 : vector<1x640xf32> to vector<16x640xf32>
    %215 = arith.mulf %213, %214 : vector<16x640xf32>
    %216 = vector.broadcast %193 : vector<1x640xf32> to vector<16x640xf32>
    %217 = arith.addf %215, %216 : vector<16x640xf32>
    %218 = arith.truncf %217 : vector<16x640xf32> to vector<16x640xbf16>
    %c0_58 = arith.constant 0 : index
    %c0_59 = arith.constant 0 : index
    %219 = vector.load %arg13[%c0_58, %c0_59] : memref<640x640xbf16, #tpu.memory_space<vmem>>, vector<640x640xbf16>
    %cst_60 = arith.constant dense<0.000000e+00> : vector<16x640xf32>
    %220 = tpu.matmul %218, %219, %cst_60 {dimension_numbers = #tpu.dot_dimension_numbers<[1], [0], [0], [1], [0, 0, 1, 1], [], []>} : vector<16x640xbf16>, vector<640x640xbf16>, vector<16x640xf32> -> vector<16x640xf32>
    %c0_61 = arith.constant 0 : index
    %c0_62 = arith.constant 0 : index
    %221 = vector.load %arg14[%c0_61, %c0_62] : memref<1x640xf32, #tpu.memory_space<vmem>>, vector<1x640xf32>
    %222 = vector.broadcast %221 : vector<1x640xf32> to vector<16x640xf32>
    %223 = arith.addf %220, %222 : vector<16x640xf32>
    %c588_i32 = arith.constant 588 : i32
    %224 = vector.broadcast %c588_i32 : i32 to vector<16x640xi32>
    %225 = arith.cmpi slt, %143, %224 : vector<16x640xi32>
    %cst_63 = arith.constant -1.000000e+30 : f32
    %226 = vector.broadcast %cst_63 : f32 to vector<16x640xf32>
    %227 = arith.select %225, %223, %226 : vector<16x640xi1>, vector<16x640xf32>
    %cst_64 = arith.constant dense<0xFF800000> : vector<16xf32>
    %228 = vector.multi_reduction <maximumf>, %227, %cst_64 [1] : vector<16x640xf32> to vector<16xf32>
    %229 = vector.shape_cast %228 : vector<16xf32> to vector<16x1xf32>
    %230 = vector.broadcast %229 : vector<16x1xf32> to vector<16x640xf32>
    %231 = arith.subf %227, %230 : vector<16x640xf32>
    %232 = math.exp %231 : vector<16x640xf32>
    %cst_65 = arith.constant dense<0.000000e+00> : vector<16xf32>
    %233 = vector.multi_reduction <add>, %232, %cst_65 [1] : vector<16x640xf32> to vector<16xf32>
    %234 = vector.shape_cast %233 : vector<16xf32> to vector<16x1xf32>
    %235 = vector.broadcast %234 : vector<16x1xf32> to vector<16x640xf32>
    %236 = arith.divf %232, %235 : vector<16x640xf32>
    %c0_66 = arith.constant 0 : index
    %c0_67 = arith.constant 0 : index
    %237 = vector.load %arg15[%c0_66, %c0_67] : memref<16x640xf32, #tpu.memory_space<vmem>>, vector<16x640xf32>
    tpu.vector_store %arg15[%c0_66, %c0_67], %236 {strides = array<i32>} : memref<16x640xf32, #tpu.memory_space<vmem>>, vector<16x640xf32>,
    return
  }
  func.func @transform_0(%arg0: i32) -> (i32, i32) {
    %c0_i32 = arith.constant 0 : i32
    %c0_i32_0 = arith.constant 0 : i32
    return %arg0, %c0_i32 : i32, i32
  }
  func.func @transform_1(%arg0: i32) -> (i32, i32) {
    %c0_i32 = arith.constant 0 : i32
    %c0_i32_0 = arith.constant 0 : i32
    %c0_i32_1 = arith.constant 0 : i32
    return %c0_i32, %c0_i32_0 : i32, i32
  }
  func.func @transform_2(%arg0: i32) -> (i32, i32) {
    %c0_i32 = arith.constant 0 : i32
    %c0_i32_0 = arith.constant 0 : i32
    %c0_i32_1 = arith.constant 0 : i32
    return %c0_i32, %c0_i32_0 : i32, i32
  }
  func.func @transform_3(%arg0: i32) -> (i32, i32) {
    %c0_i32 = arith.constant 0 : i32
    %c0_i32_0 = arith.constant 0 : i32
    %c0_i32_1 = arith.constant 0 : i32
    return %c0_i32, %c0_i32_0 : i32, i32
  }
  func.func @transform_4(%arg0: i32) -> (i32, i32) {
    %c0_i32 = arith.constant 0 : i32
    %c0_i32_0 = arith.constant 0 : i32
    %c0_i32_1 = arith.constant 0 : i32
    return %c0_i32, %c0_i32_0 : i32, i32
  }
  func.func @transform_5(%arg0: i32) -> (i32, i32) {
    %c0_i32 = arith.constant 0 : i32
    %c0_i32_0 = arith.constant 0 : i32
    %c0_i32_1 = arith.constant 0 : i32
    return %c0_i32, %c0_i32_0 : i32, i32
  }
  func.func @transform_6(%arg0: i32) -> (i32, i32) {
    %c0_i32 = arith.constant 0 : i32
    %c0_i32_0 = arith.constant 0 : i32
    %c0_i32_1 = arith.constant 0 : i32
    return %c0_i32, %c0_i32_0 : i32, i32
  }
  func.func @transform_7(%arg0: i32) -> (i32, i32) {
    %c0_i32 = arith.constant 0 : i32
    %c0_i32_0 = arith.constant 0 : i32
    %c0_i32_1 = arith.constant 0 : i32
    return %c0_i32, %c0_i32_0 : i32, i32
  }
  func.func @transform_8(%arg0: i32) -> (i32, i32) {
    %c0_i32 = arith.constant 0 : i32
    %c0_i32_0 = arith.constant 0 : i32
    %c0_i32_1 = arith.constant 0 : i32
    return %c0_i32, %c0_i32_0 : i32, i32
  }
  func.func @transform_9(%arg0: i32) -> (i32, i32) {
    %c0_i32 = arith.constant 0 : i32
    %c0_i32_0 = arith.constant 0 : i32
    %c0_i32_1 = arith.constant 0 : i32
    return %c0_i32, %c0_i32_0 : i32, i32
  }
  func.func @transform_10(%arg0: i32) -> (i32, i32) {
    %c0_i32 = arith.constant 0 : i32
    %c0_i32_0 = arith.constant 0 : i32
    %c0_i32_1 = arith.constant 0 : i32
    return %c0_i32, %c0_i32_0 : i32, i32
  }
  func.func @transform_11(%arg0: i32) -> (i32, i32) {
    %c0_i32 = arith.constant 0 : i32
    %c0_i32_0 = arith.constant 0 : i32
    %c0_i32_1 = arith.constant 0 : i32
    return %c0_i32, %c0_i32_0 : i32, i32
  }
  func.func @transform_12(%arg0: i32) -> (i32, i32) {
    %c0_i32 = arith.constant 0 : i32
    %c0_i32_0 = arith.constant 0 : i32
    %c0_i32_1 = arith.constant 0 : i32
    return %c0_i32, %c0_i32_0 : i32, i32
  }
  func.func @transform_13(%arg0: i32) -> (i32, i32) {
    %c0_i32 = arith.constant 0 : i32
    %c0_i32_0 = arith.constant 0 : i32
    %c0_i32_1 = arith.constant 0 : i32
    return %c0_i32, %c0_i32_0 : i32, i32
  }
  func.func @transform_14(%arg0: i32) -> (i32, i32) {
    %c0_i32 = arith.constant 0 : i32
    %c0_i32_0 = arith.constant 0 : i32
    return %arg0, %c0_i32 : i32, i32
  }
}

</mosaic_0001>

<llo_original>
// kernel: website_classifier_forward.1
$region0: #{website_classifier_forward.1}
  #allocation0 [shape = 'u32[]', space=smem, size = 0x4, offset = 0x4, fixed_abs, tag = 'smem constant byte address 0x4 - core index']
  #allocation1 [shape = 'u32[144,128]{1,0:T(1,128)}', space=vmem, size = 0x12000, scoped, tag = 'internal scratch']
  %s0 = inlined_call_operand.vmem [shape: s32[32,16], index: 0, kind: input, shape index: {}]
  %s1 = inlined_call_operand.vmem [shape: bf16[128,64], index: 1, kind: input, shape index: {}]
  %s2 = inlined_call_operand.hbm [shape: bf16[64,768], index: 2, kind: input, shape index: {}]
  %s3 = inlined_call_operand.hbm [shape: f32[1,768], index: 3, kind: input, shape index: {}]
  %s4 = inlined_call_operand.hbm [shape: bf16[768,768], index: 4, kind: input, shape index: {}]
  %s5 = inlined_call_operand.hbm [shape: f32[1,768], index: 5, kind: input, shape index: {}]
  %s6 = inlined_call_operand.hbm [shape: f32[1,768], index: 6, kind: input, shape index: {}]
  %s7 = inlined_call_operand.hbm [shape: f32[1,768], index: 7, kind: input, shape index: {}]
  %s8 = inlined_call_operand.hbm [shape: bf16[768,640], index: 8, kind: input, shape index: {}]
  %s9 = inlined_call_operand.hbm [shape: f32[1,640], index: 9, kind: input, shape index: {}]
  %s10 = inlined_call_operand.hbm [shape: f32[1,640], index: 10, kind: input, shape index: {}]
  %s11 = inlined_call_operand.hbm [shape: f32[1,640], index: 11, kind: input, shape index: {}]
  %s12 = inlined_call_operand.hbm [shape: bf16[640,640], index: 12, kind: input, shape index: {}]
  %s13 = inlined_call_operand.hbm [shape: f32[1,640], index: 13, kind: input, shape index: {}]
  %s14 = inlined_call_operand.hbm [shape: f32[32,640], index: 14, kind: output, shape index: {}]
  %s15 = sld [smem:[#allocation0]]
  $region137: #{website_classifier_forward.1} parent=0
    _
  %s17 = ssub.s32 1, %s15
  %s18 = scalar_select 0, %s17, %s15
  $region1: #{website_classifier_forward.1} parent=0
    #allocation2 [shape = 'u8[98304]{0}', space=vmem, size = 0x18000, scoped, tag = 'input window, operand 2, single buffered']
    #allocation3 [shape = 's32[2]{0}', space=sflag, size = 0x8, scoped, tag = 'scoped memory for website_classifier_forward.1']
    #allocation4 [shape = 's32[2]{0}', space=sflag, size = 0x8, scoped, tag = 'scoped memory for website_classifier_forward.1']
    #allocation5 [shape = 'u8[3072]{0}', space=vmem, size = 0xc00, scoped, tag = 'input window, operand 3, single buffered']
    #allocation6 [shape = 's32[1]{0}', space=sflag, size = 0x4, scoped, tag = 'scoped memory for website_classifier_forward.1']
    #allocation7 [shape = 'u8[1179648]{0}', space=vmem, size = 0x120000, scoped, tag = 'input window, operand 4, single buffered']
    #allocation8 [shape = 'u8[3072]{0}', space=vmem, size = 0xc00, scoped, tag = 'input window, operand 5, single buffered']
    #allocation9 [shape = 's32[1]{0}', space=sflag, size = 0x4, scoped, tag = 'scoped memory for website_classifier_forward.1']
    #allocation10 [shape = 'u8[3072]{0}', space=vmem, size = 0xc00, scoped, tag = 'input window, operand 6, single buffered']
    #allocation11 [shape = 'u8[3072]{0}', space=vmem, size = 0xc00, scoped, tag = 'input window, operand 7, single buffered']
    #allocation12 [shape = 's32[1]{0}', space=sflag, size = 0x4, scoped, tag = 'scoped memory for website_classifier_forward.1']
    #allocation13 [shape = 'u8[983040]{0}', space=vmem, size = 0xf0000, scoped, tag = 'input window, operand 8, single buffered']
    #allocation14 [shape = 'u8[2560]{0}', space=vmem, size = 0xc00, scoped, tag = 'input window, operand 9, single buffered']
    #allocation15 [shape = 's32[1]{0}', space=sflag, size = 0x4, scoped, tag = 'scoped memory for website_classifier_forward.1']
    #allocation16 [shape = 'u8[2560]{0}', space=vmem, size = 0xc00, scoped, tag = 'input window, operand 10, single buffered']
    #allocation17 [shape = 'u8[2560]{0}', space=vmem, size = 0xc00, scoped, tag = 'input window, operand 11, single buffered']
    #allocation18 [shape = 's32[1]{0}', space=sflag, size = 0x4, scoped, tag = 'scoped memory for website_classifier_forward.1']
    #allocation19 [shape = 'u8[819200]{0}', space=vmem, size = 0xc8000, scoped, tag = 'input window, operand 12, single buffered']
    #allocation20 [shape = 'u8[2560]{0}', space=vmem, size = 0xc00, scoped, tag = 'input window, operand 13, single buffered']
    #allocation21 [shape = 's32[1]{0}', space=sflag, size = 0x4, scoped, tag = 'scoped memory for website_classifier_forward.1']
    #allocation22 [shape = 'u8[81920]{0}', space=vmem, size = 0x14000, scoped, tag = 'output window, operand 0']
    %19 = vsyncpa [#allocation3], 0
    %20 = vsyncpa [#allocation6], 0
    %21 = vsyncpa [#allocation9], 0
    %22 = vsyncpa [#allocation12], 0
    %23 = vsyncpa [#allocation15], 0
    %24 = vsyncpa [#allocation18], 0
    %25 = vsyncpa [#allocation21], 0
    %26 = vsyncpa [#allocation4], 0
    %s27 = scalar_lea.sflag [#allocation4], 1
    %28 = vsyncpa %s27, 0
    loop: start=0, step=1, limit=4
    $region2: #{website_classifier_forward.1} parent=1 // loop_pre_header
      _
    $region3: #{website_classifier_forward.1} parent=1 // loop_header
      %s30 = sphi 0, %s34
      %p31 = scmp.ge.s32.totalorder %s30, 4
      %s40 = sphi 0, %s42
      %s43 = sphi 0, %s40
      %s44 = sphi 0, %s43
      %s60 = sphi 0, %s44
      %s64 = sphi 0, %s64
      %s66 = sphi 0, %s64
      %s67 = sphi 0, %s66
      %s81 = sphi 0, %s67
      %s85 = sphi 0, %s85
      %s87 = sphi 0, %s85
      %s88 = sphi 0, %s87
      %s102 = sphi 0, %s88
      %s106 = sphi 0, %s106
      %s108 = sphi 0, %s106
      %s109 = sphi 0, %s108
      %s123 = sphi 0, %s109
      %s127 = sphi 0, %s127
      %s129 = sphi 0, %s127
      %s130 = sphi 0, %s129
      %s144 = sphi 0, %s130
      %s148 = sphi 0, %s148
      %s150 = sphi 0, %s148
      %s151 = sphi 0, %s150
      %s165 = sphi 0, %s151
      %s169 = sphi 0, %s169
      %s171 = sphi 0, %s169
      %s172 = sphi 0, %s171
      %s186 = sphi 0, %s172
      %s190 = sphi 0, %s190
      %s192 = sphi 0, %s190
      %s193 = sphi 0, %s192
      %s207 = sphi 0, %s193
      %s211 = sphi 0, %s211
      %s213 = sphi 0, %s211
      %s214 = sphi 0, %s213
      %s228 = sphi 0, %s214
      %s232 = sphi 0, %s232
      %s234 = sphi 0, %s232
      %s235 = sphi 0, %s234
      %s249 = sphi 0, %s235
      %s253 = sphi 0, %s253
      %s255 = sphi 0, %s253
      %s256 = sphi 0, %s255
      %s270 = sphi 0, %s256
      %s274 = sphi 0, %s274
      %s276 = sphi 0, %s274
      %s277 = sphi 0, %s276
      %s291 = sphi 0, %s277
      %s295 = sphi 0, %s295
      %s297 = sphi 0, %s295
      %s298 = sphi 0, %s297
      %s312 = sphi 0, %s298
      %s316 = sphi 0, %s316
      %s318 = sphi 0, %s316
      %s319 = sphi 0, %s318
      %s333 = sphi 0, %s319
      %s339 = sphi 0, %s341
      %s342 = sphi 0, %s339
      %s343 = sphi 0, %s342
      %s359 = sphi 0, %s343
    $region4: #{website_classifier_forward.1} parent=1 // loop_header_branch
      %33 = sbr.rel (%p31) target = $region8
    $region5: #{website_classifier_forward.1} parent=1 // loop_body
      %s35 = ssub.s32 %s30, 1
      %s36 = ssub.s32 %s30, 2
      %s37 = sadd.s32 %s30, 1
      %s38 = ssub.s32 %s30, %s37
      %p39 = scmp.eq.s32.totalorder %s38, 0
      %s41 = sadd.s32 %s40, 1
      %s42 = scalar_select %p39, %s40, %s41
      %p45 = pneg %p39
      %p46 = scmp.eq.s32.totalorder %s30, 1
      %p47 = por %p45, %p46
      %p48 = scmp.ne.s32.totalorder %s40, %s43
      %p49 = scmp.eq.s32.totalorder %s30, 0
      %p50 = por %p48, %p49
      %p51 = scmp.ne.s32.totalorder %s40, %s43
      %p52 = scmp.eq.s32.totalorder %s35, 1
      %p53 = por %p51, %p52
      %p54 = scmp.ne.s32.totalorder %s43, %s44
      %p55 = scmp.eq.s32.totalorder %s35, 0
      %p56 = por %p54, %p55
      %p57 = scmp.ne.s32.totalorder %s43, %s44
      %p58 = scmp.eq.s32.totalorder %s36, 1
      %p59 = por %p57, %p58
      %p61 = scmp.ne.s32.totalorder %s44, %s60
      %p62 = scmp.eq.s32.totalorder %s36, 0
      %p63 = por %p61, %p62
      %s65 = sadd.s32 %s64, 1
      %p68 = scmp.eq.s32.totalorder %s30, 1
      %p69 = scmp.ne.s32.totalorder %s64, %s66
      %p70 = scmp.eq.s32.totalorder %s30, 0
      %p71 = por %p69, %p70
      %p72 = scmp.ne.s32.totalorder %s64, %s66
      %p73 = scmp.eq.s32.totalorder %s35, 1
      %p74 = por %p72, %p73
      %p75 = scmp.ne.s32.totalorder %s66, %s67
      %p76 = scmp.eq.s32.totalorder %s35, 0
      %p77 = por %p75, %p76
      %p78 = scmp.ne.s32.totalorder %s66, %s67
      %p79 = scmp.eq.s32.totalorder %s36, 1
      %p80 = por %p78, %p79
      %p82 = scmp.ne.s32.totalorder %s67, %s81
      %p83 = scmp.eq.s32.totalorder %s36, 0
      %p84 = por %p82, %p83
      %s86 = sadd.s32 %s85, 1
      %p89 = scmp.eq.s32.totalorder %s30, 1
      %p90 = scmp.ne.s32.totalorder %s85, %s87
      %p91 = scmp.eq.s32.totalorder %s30, 0
      %p92 = por %p90, %p91
      %p93 = scmp.ne.s32.totalorder %s85, %s87
      %p94 = scmp.eq.s32.totalorder %s35, 1
      %p95 = por %p93, %p94
      %p96 = scmp.ne.s32.totalorder %s87, %s88
      %p97 = scmp.eq.s32.totalorder %s35, 0
      %p98 = por %p96, %p97
      %p99 = scmp.ne.s32.totalorder %s87, %s88
      %p100 = scmp.eq.s32.totalorder %s36, 1
      %p101 = por %p99, %p100
      %p103 = scmp.ne.s32.totalorder %s88, %s102
      %p104 = scmp.eq.s32.totalorder %s36, 0
      %p105 = por %p103, %p104
      %s107 = sadd.s32 %s106, 1
      %p110 = scmp.eq.s32.totalorder %s30, 1
      %p111 = scmp.ne.s32.totalorder %s106, %s108
      %p112 = scmp.eq.s32.totalorder %s30, 0
      %p113 = por %p111, %p112
      %p114 = scmp.ne.s32.totalorder %s106, %s108
      %p115 = scmp.eq.s32.totalorder %s35, 1
      %p116 = por %p114, %p115
      %p117 = scmp.ne.s32.totalorder %s108, %s109
      %p118 = scmp.eq.s32.totalorder %s35, 0
      %p119 = por %p117, %p118
      %p120 = scmp.ne.s32.totalorder %s108, %s109
      %p121 = scmp.eq.s32.totalorder %s36, 1
      %p122 = por %p120, %p121
      %p124 = scmp.ne.s32.totalorder %s109, %s123
      %p125 = scmp.eq.s32.totalorder %s36, 0
      %p126 = por %p124, %p125
      %s128 = sadd.s32 %s127, 1
      %p131 = scmp.eq.s32.totalorder %s30, 1
      %p132 = scmp.ne.s32.totalorder %s127, %s129
      %p133 = scmp.eq.s32.totalorder %s30, 0
      %p134 = por %p132, %p133
      %p135 = scmp.ne.s32.totalorder %s127, %s129
      %p136 = scmp.eq.s32.totalorder %s35, 1
      %p137 = por %p135, %p136
      %p138 = scmp.ne.s32.totalorder %s129, %s130
      %p139 = scmp.eq.s32.totalorder %s35, 0
      %p140 = por %p138, %p139
      %p141 = scmp.ne.s32.totalorder %s129, %s130
      %p142 = scmp.eq.s32.totalorder %s36, 1
      %p143 = por %p141, %p142
      %p145 = scmp.ne.s32.totalorder %s130, %s144
      %p146 = scmp.eq.s32.totalorder %s36, 0
      %p147 = por %p145, %p146
      %s149 = sadd.s32 %s148, 1
      %p152 = scmp.eq.s32.totalorder %s30, 1
      %p153 = scmp.ne.s32.totalorder %s148, %s150
      %p154 = scmp.eq.s32.totalorder %s30, 0
      %p155 = por %p153, %p154
      %p156 = scmp.ne.s32.totalorder %s148, %s150
      %p157 = scmp.eq.s32.totalorder %s35, 1
      %p158 = por %p156, %p157
      %p159 = scmp.ne.s32.totalorder %s150, %s151
      %p160 = scmp.eq.s32.totalorder %s35, 0
      %p161 = por %p159, %p160
      %p162 = scmp.ne.s32.totalorder %s150, %s151
      %p163 = scmp.eq.s32.totalorder %s36, 1
      %p164 = por %p162, %p163
      %p166 = scmp.ne.s32.totalorder %s151, %s165
      %p167 = scmp.eq.s32.totalorder %s36, 0
      %p168 = por %p166, %p167
      %s170 = sadd.s32 %s169, 1
      %p173 = scmp.eq.s32.totalorder %s30, 1
      %p174 = scmp.ne.s32.totalorder %s169, %s171
      %p175 = scmp.eq.s32.totalorder %s30, 0
      %p176 = por %p174, %p175
      %p177 = scmp.ne.s32.totalorder %s169, %s171
      %p178 = scmp.eq.s32.totalorder %s35, 1
      %p179 = por %p177, %p178
      %p180 = scmp.ne.s32.totalorder %s171, %s172
      %p181 = scmp.eq.s32.totalorder %s35, 0
      %p182 = por %p180, %p181
      %p183 = scmp.ne.s32.totalorder %s171, %s172
      %p184 = scmp.eq.s32.totalorder %s36, 1
      %p185 = por %p183, %p184
      %p187 = scmp.ne.s32.totalorder %s172, %s186
      %p188 = scmp.eq.s32.totalorder %s36, 0
      %p189 = por %p187, %p188
      %s191 = sadd.s32 %s190, 1
      %p194 = scmp.eq.s32.totalorder %s30, 1
      %p195 = scmp.ne.s32.totalorder %s190, %s192
      %p196 = scmp.eq.s32.totalorder %s30, 0
      %p197 = por %p195, %p196
      %p198 = scmp.ne.s32.totalorder %s190, %s192
      %p199 = scmp.eq.s32.totalorder %s35, 1
      %p200 = por %p198, %p199
      %p201 = scmp.ne.s32.totalorder %s192, %s193
      %p202 = scmp.eq.s32.totalorder %s35, 0
      %p203 = por %p201, %p202
      %p204 = scmp.ne.s32.totalorder %s192, %s193
      %p205 = scmp.eq.s32.totalorder %s36, 1
      %p206 = por %p204, %p205
      %p208 = scmp.ne.s32.totalorder %s193, %s207
      %p209 = scmp.eq.s32.totalorder %s36, 0
      %p210 = por %p208, %p209
      %s212 = sadd.s32 %s211, 1
      %p215 = scmp.eq.s32.totalorder %s30, 1
      %p216 = scmp.ne.s32.totalorder %s211, %s213
      %p217 = scmp.eq.s32.totalorder %s30, 0
      %p218 = por %p216, %p217
      %p219 = scmp.ne.s32.totalorder %s211, %s213
      %p220 = scmp.eq.s32.totalorder %s35, 1
      %p221 = por %p219, %p220
      %p222 = scmp.ne.s32.totalorder %s213, %s214
      %p223 = scmp.eq.s32.totalorder %s35, 0
      %p224 = por %p222, %p223
      %p225 = scmp.ne.s32.totalorder %s213, %s214
      %p226 = scmp.eq.s32.totalorder %s36, 1
      %p227 = por %p225, %p226
      %p229 = scmp.ne.s32.totalorder %s214, %s228
      %p230 = scmp.eq.s32.totalorder %s36, 0
      %p231 = por %p229, %p230
      %s233 = sadd.s32 %s232, 1
      %p236 = scmp.eq.s32.totalorder %s30, 1
      %p237 = scmp.ne.s32.totalorder %s232, %s234
      %p238 = scmp.eq.s32.totalorder %s30, 0
      %p239 = por %p237, %p238
      %p240 = scmp.ne.s32.totalorder %s232, %s234
      %p241 = scmp.eq.s32.totalorder %s35, 1
      %p242 = por %p240, %p241
      %p243 = scmp.ne.s32.totalorder %s234, %s235
      %p244 = scmp.eq.s32.totalorder %s35, 0
      %p245 = por %p243, %p244
      %p246 = scmp.ne.s32.totalorder %s234, %s235
      %p247 = scmp.eq.s32.totalorder %s36, 1
      %p248 = por %p246, %p247
      %p250 = scmp.ne.s32.totalorder %s235, %s249
      %p251 = scmp.eq.s32.totalorder %s36, 0
      %p252 = por %p250, %p251
      %s254 = sadd.s32 %s253, 1
      %p257 = scmp.eq.s32.totalorder %s30, 1
      %p258 = scmp.ne.s32.totalorder %s253, %s255
      %p259 = scmp.eq.s32.totalorder %s30, 0
      %p260 = por %p258, %p259
      %p261 = scmp.ne.s32.totalorder %s253, %s255
      %p262 = scmp.eq.s32.totalorder %s35, 1
      %p263 = por %p261, %p262
      %p264 = scmp.ne.s32.totalorder %s255, %s256
      %p265 = scmp.eq.s32.totalorder %s35, 0
      %p266 = por %p264, %p265
      %p267 = scmp.ne.s32.totalorder %s255, %s256
      %p268 = scmp.eq.s32.totalorder %s36, 1
      %p269 = por %p267, %p268
      %p271 = scmp.ne.s32.totalorder %s256, %s270
      %p272 = scmp.eq.s32.totalorder %s36, 0
      %p273 = por %p271, %p272
      %s275 = sadd.s32 %s274, 1
      %p278 = scmp.eq.s32.totalorder %s30, 1
      %p279 = scmp.ne.s32.totalorder %s274, %s276
      %p280 = scmp.eq.s32.totalorder %s30, 0
      %p281 = por %p279, %p280
      %p282 = scmp.ne.s32.totalorder %s274, %s276
      %p283 = scmp.eq.s32.totalorder %s35, 1
      %p284 = por %p282, %p283
      %p285 = scmp.ne.s32.totalorder %s276, %s277
      %p286 = scmp.eq.s32.totalorder %s35, 0
      %p287 = por %p285, %p286
      %p288 = scmp.ne.s32.totalorder %s276, %s277
      %p289 = scmp.eq.s32.totalorder %s36, 1
      %p290 = por %p288, %p289
      %p292 = scmp.ne.s32.totalorder %s277, %s291
      %p293 = scmp.eq.s32.totalorder %s36, 0
      %p294 = por %p292, %p293
      %s296 = sadd.s32 %s295, 1
      %p299 = scmp.eq.s32.totalorder %s30, 1
      %p300 = scmp.ne.s32.totalorder %s295, %s297
      %p301 = scmp.eq.s32.totalorder %s30, 0
      %p302 = por %p300, %p301
      %p303 = scmp.ne.s32.totalorder %s295, %s297
      %p304 = scmp.eq.s32.totalorder %s35, 1
      %p305 = por %p303, %p304
      %p306 = scmp.ne.s32.totalorder %s297, %s298
      %p307 = scmp.eq.s32.totalorder %s35, 0
      %p308 = por %p306, %p307
      %p309 = scmp.ne.s32.totalorder %s297, %s298
      %p310 = scmp.eq.s32.totalorder %s36, 1
      %p311 = por %p309, %p310
      %p313 = scmp.ne.s32.totalorder %s298, %s312
      %p314 = scmp.eq.s32.totalorder %s36, 0
      %p315 = por %p313, %p314
      %s317 = sadd.s32 %s316, 1
      %p320 = scmp.eq.s32.totalorder %s30, 1
      %p321 = scmp.ne.s32.totalorder %s316, %s318
      %p322 = scmp.eq.s32.totalorder %s30, 0
      %p323 = por %p321, %p322
      %p324 = scmp.ne.s32.totalorder %s316, %s318
      %p325 = scmp.eq.s32.totalorder %s35, 1
      %p326 = por %p324, %p325
      %p327 = scmp.ne.s32.totalorder %s318, %s319
      %p328 = scmp.eq.s32.totalorder %s35, 0
      %p329 = por %p327, %p328
      %p330 = scmp.ne.s32.totalorder %s318, %s319
      %p331 = scmp.eq.s32.totalorder %s36, 1
      %p332 = por %p330, %p331
      %p334 = scmp.ne.s32.totalorder %s319, %s333
      %p335 = scmp.eq.s32.totalorder %s36, 0
      %p336 = por %p334, %p335
      %s337 = ssub.s32 %s30, %s37
      %p338 = scmp.eq.s32.totalorder %s337, 0
      %s340 = sadd.s32 %s339, 1
      %s341 = scalar_select %p338, %s339, %s340
      %p344 = pneg %p338
      %p345 = scmp.eq.s32.totalorder %s30, 1
      %p346 = por %p344, %p345
      %p347 = scmp.ne.s32.totalorder %s339, %s342
      %p348 = scmp.eq.s32.totalorder %s30, 0
      %p349 = por %p347, %p348
      %p350 = scmp.ne.s32.totalorder %s339, %s342
      %p351 = scmp.eq.s32.totalorder %s35, 1
      %p352 = por %p350, %p351
      %p353 = scmp.ne.s32.totalorder %s342, %s343
      %p354 = scmp.eq.s32.totalorder %s35, 0
      %p355 = por %p353, %p354
      %p356 = scmp.ne.s32.totalorder %s342, %s343
      %p357 = scmp.eq.s32.totalorder %s36, 1
      %p358 = por %p356, %p357
      %p360 = scmp.ne.s32.totalorder %s343, %s359
      %p361 = scmp.eq.s32.totalorder %s36, 0
      %p362 = por %p360, %p361
      %p363 = scmp.le.s32.totalorder 1, %s30
      %p364 = scmp.lt.s32.totalorder %s30, 3
      %p365 = pnand %p363, %p364
      %p366 = pneg %p365
      // Predicated region
      $region9: #{website_classifier_forward.1} parent=5 // pred_check
        _
      $region10: #{website_classifier_forward.1} parent=5 // pred_check_branch
        %368 = sbr.rel (%p365) target = $region12
      $region11: #{website_classifier_forward.1} parent=5 // pred_region
        %s369 = ssub.s32 %s30, 1
        // Predicated region
        $region13: #{website_classifier_forward.1} parent=11 // pred_check
          %p370 = pneg %p77
        $region14: #{website_classifier_forward.1} parent=11 // pred_check_branch
          %372 = sbr.rel (%p370) target = $region16
        $region15: #{website_classifier_forward.1} parent=11 // pred_region
          _
        $region16: #{website_classifier_forward.1} parent=11 // pred_fallthru
          _
        // Predicated region
        $region17: #{website_classifier_forward.1} parent=11 // pred_check
          %p373 = pneg %p98
        $region18: #{website_classifier_forward.1} parent=11 // pred_check_branch
          %375 = sbr.rel (%p373) target = $region20
        $region19: #{website_classifier_forward.1} parent=11 // pred_region
          %s377 = ssub.s32 3072, 3072
          %378 = vsyncadd [#allocation3], %s377
          %s379 = sshll.u32 [#allocation2], 4
          %s380 = int_to_ptr.vmem [resolvable:$true] %s379
          %385 = dma.hbm_to_vmem [thread:$0]  %s2, 3072, %s380, [#allocation3], 384, 384, 24
        $region20: #{website_classifier_forward.1} parent=11 // pred_fallthru
          _
        // Predicated region
        $region21: #{website_classifier_forward.1} parent=11 // pred_check
          %p386 = pneg %p119
        $region22: #{website_classifier_forward.1} parent=11 // pred_check_branch
          %388 = sbr.rel (%p386) target = $region24
        $region23: #{website_classifier_forward.1} parent=11 // pred_region
          %s390 = ssub.s32 96, 96
          %391 = vsyncadd [#allocation6], %s390
          %s393 = sshll.u32 [#allocation5], 4
          %s394 = int_to_ptr.vmem [resolvable:$true] %s393
          %396 = dma.hbm_to_vmem [thread:$0]  %s3, 96, %s394, [#allocation6]
        $region24: #{website_classifier_forward.1} parent=11 // pred_fallthru
          _
        // Predicated region
        $region25: #{website_classifier_forward.1} parent=11 // pred_check
          %p397 = pneg %p140
        $region26: #{website_classifier_forward.1} parent=11 // pred_check_branch
          %399 = sbr.rel (%p397) target = $region28
        $region27: #{website_classifier_forward.1} parent=11 // pred_region
          %s401 = ssub.s32 36864, 36864
          %402 = vsyncadd [#allocation6], %s401
          %s403 = sshll.u32 [#allocation7], 4
          %s404 = int_to_ptr.vmem [resolvable:$true] %s403
          %409 = dma.hbm_to_vmem [thread:$0]  %s4, 36864, %s404, [#allocation6], 384, 384, 24
        $region28: #{website_classifier_forward.1} parent=11 // pred_fallthru
          _
        // Predicated region
        $region29: #{website_classifier_forward.1} parent=11 // pred_check
          %p410 = pneg %p161
        $region30: #{website_classifier_forward.1} parent=11 // pred_check_branch
          %412 = sbr.rel (%p410) target = $region32
        $region31: #{website_classifier_forward.1} parent=11 // pred_region
          %s414 = ssub.s32 96, 96
          %415 = vsyncadd [#allocation9], %s414
          %s417 = sshll.u32 [#allocation8], 4
          %s418 = int_to_ptr.vmem [resolvable:$true] %s417
          %420 = dma.hbm_to_vmem [thread:$0]  %s5, 96, %s418, [#allocation9]
        $region32: #{website_classifier_forward.1} parent=11 // pred_fallthru
          _
        // Predicated region
        $region33: #{website_classifier_forward.1} parent=11 // pred_check
          %p421 = pneg %p182
        $region34: #{website_classifier_forward.1} parent=11 // pred_check_branch
          %423 = sbr.rel (%p421) target = $region36
        $region35: #{website_classifier_forward.1} parent=11 // pred_region
          %s425 = ssub.s32 96, 96
          %426 = vsyncadd [#allocation9], %s425
          %s428 = sshll.u32 [#allocation10], 4
          %s429 = int_to_ptr.vmem [resolvable:$true] %s428
          %431 = dma.hbm_to_vmem [thread:$0]  %s6, 96, %s429, [#allocation9]
        $region36: #{website_classifier_forward.1} parent=11 // pred_fallthru
          _
        // Predicated region
        $region37: #{website_classifier_forward.1} parent=11 // pred_check
          %p432 = pneg %p203
        $region38: #{website_classifier_forward.1} parent=11 // pred_check_branch
          %434 = sbr.rel (%p432) target = $region40
        $region39: #{website_classifier_forward.1} parent=11 // pred_region
          %s436 = ssub.s32 96, 96
          %437 = vsyncadd [#allocation12], %s436
          %s439 = sshll.u32 [#allocation11], 4
          %s440 = int_to_ptr.vmem [resolvable:$true] %s439
          %442 = dma.hbm_to_vmem [thread:$0]  %s7, 96, %s440, [#allocation12]
        $region40: #{website_classifier_forward.1} parent=11 // pred_fallthru
          _
        // Predicated region
        $region41: #{website_classifier_forward.1} parent=11 // pred_check
          %p443 = pneg %p224
        $region42: #{website_classifier_forward.1} parent=11 // pred_check_branch
          %445 = sbr.rel (%p443) target = $region44
        $region43: #{website_classifier_forward.1} parent=11 // pred_region
          %s447 = ssub.s32 30720, 30720
          %448 = vsyncadd [#allocation12], %s447
          %s449 = sshll.u32 [#allocation13], 4
          %s450 = int_to_ptr.vmem [resolvable:$true] %s449
          %455 = dma.hbm_to_vmem [thread:$0]  %s8, 30720, %s450, [#allocation12], 320, 320, 20
        $region44: #{website_classifier_forward.1} parent=11 // pred_fallthru
          _
        // Predicated region
        $region45: #{website_classifier_forward.1} parent=11 // pred_check
          %p456 = pneg %p245
        $region46: #{website_classifier_forward.1} parent=11 // pred_check_branch
          %458 = sbr.rel (%p456) target = $region48
        $region47: #{website_classifier_forward.1} parent=11 // pred_region
          %s460 = ssub.s32 80, 80
          %461 = vsyncadd [#allocation15], %s460
          %s463 = sshll.u32 [#allocation14], 4
          %s464 = int_to_ptr.vmem [resolvable:$true] %s463
          %466 = dma.hbm_to_vmem [thread:$0]  %s9, 80, %s464, [#allocation15]
        $region48: #{website_classifier_forward.1} parent=11 // pred_fallthru
          _
        // Predicated region
        $region49: #{website_classifier_forward.1} parent=11 // pred_check
          %p467 = pneg %p266
        $region50: #{website_classifier_forward.1} parent=11 // pred_check_branch
          %469 = sbr.rel (%p467) target = $region52
        $region51: #{website_classifier_forward.1} parent=11 // pred_region
          %s471 = ssub.s32 80, 80
          %472 = vsyncadd [#allocation15], %s471
          %s474 = sshll.u32 [#allocation16], 4
          %s475 = int_to_ptr.vmem [resolvable:$true] %s474
          %477 = dma.hbm_to_vmem [thread:$0]  %s10, 80, %s475, [#allocation15]
        $region52: #{website_classifier_forward.1} parent=11 // pred_fallthru
          _
        // Predicated region
        $region53: #{website_classifier_forward.1} parent=11 // pred_check
          %p478 = pneg %p287
        $region54: #{website_classifier_forward.1} parent=11 // pred_check_branch
          %480 = sbr.rel (%p478) target = $region56
        $region55: #{website_classifier_forward.1} parent=11 // pred_region
          %s482 = ssub.s32 80, 80
          %483 = vsyncadd [#allocation18], %s482
          %s485 = sshll.u32 [#allocation17], 4
          %s486 = int_to_ptr.vmem [resolvable:$true] %s485
          %488 = dma.hbm_to_vmem [thread:$0]  %s11, 80, %s486, [#allocation18]
        $region56: #{website_classifier_forward.1} parent=11 // pred_fallthru
          _
        // Predicated region
        $region57: #{website_classifier_forward.1} parent=11 // pred_check
          %p489 = pneg %p308
        $region58: #{website_classifier_forward.1} parent=11 // pred_check_branch
          %491 = sbr.rel (%p489) target = $region60
        $region59: #{website_classifier_forward.1} parent=11 // pred_region
          %s493 = ssub.s32 25600, 25600
          %494 = vsyncadd [#allocation18], %s493
          %s495 = sshll.u32 [#allocation19], 4
          %s496 = int_to_ptr.vmem [resolvable:$true] %s495
          %501 = dma.hbm_to_vmem [thread:$0]  %s12, 25600, %s496, [#allocation18], 320, 320, 20
        $region60: #{website_classifier_forward.1} parent=11 // pred_fallthru
          _
        // Predicated region
        $region61: #{website_classifier_forward.1} parent=11 // pred_check
          %p502 = pneg %p329
        $region62: #{website_classifier_forward.1} parent=11 // pred_check_branch
          %504 = sbr.rel (%p502) target = $region64
        $region63: #{website_classifier_forward.1} parent=11 // pred_region
          %s506 = ssub.s32 80, 80
          %507 = vsyncadd [#allocation21], %s506
          %s509 = sshll.u32 [#allocation20], 4
          %s510 = int_to_ptr.vmem [resolvable:$true] %s509
          %512 = dma.hbm_to_vmem [thread:$0]  %s13, 80, %s510, [#allocation21]
        $region64: #{website_classifier_forward.1} parent=11 // pred_fallthru
          _
      $region12: #{website_classifier_forward.1} parent=5 // pred_fallthru
        _
      %p513 = scmp.lt.s32.totalorder %s30, 2
      // Predicated region
      $region65: #{website_classifier_forward.1} parent=5 // pred_check
        %p514 = pneg %p513
      $region66: #{website_classifier_forward.1} parent=5 // pred_check_branch
        %516 = sbr.rel (%p514) target = $region68
      $region67: #{website_classifier_forward.1} parent=5 // pred_region
        // Predicated region
        $region69: #{website_classifier_forward.1} parent=67 // pred_check
          %p517 = pneg %p50
        $region70: #{website_classifier_forward.1} parent=67 // pred_check_branch
          %519 = sbr.rel (%p517) target = $region72
        $region71: #{website_classifier_forward.1} parent=67 // pred_region
          %s520 = smul.u32 2, %s30
          %p521 = scmp.lt.s32.totalorder %s520, 3
          %s522 = scalar_select %p521, %s520, 3
          %s523 = smul.addr %s522, 8
          %s524 = scalar_lea.vmem %s0, %s523
          %s525 = smul.u32 2, %s30
        $region72: #{website_classifier_forward.1} parent=67 // pred_fallthru
          _
      $region68: #{website_classifier_forward.1} parent=5 // pred_fallthru
        _
      %p526 = scmp.le.s32.totalorder 1, %s30
      %p527 = scmp.lt.s32.totalorder %s30, 3
      %p528 = pnand %p526, %p527
      %p529 = pneg %p528
      // Predicated region
      $region73: #{website_classifier_forward.1} parent=5 // pred_check
        _
      $region74: #{website_classifier_forward.1} parent=5 // pred_check_branch
        %531 = sbr.rel (%p528) target = $region76
      $region75: #{website_classifier_forward.1} parent=5 // pred_region
        %s532 = ssub.s32 %s30, 1
        // Predicated region
        $region77: #{website_classifier_forward.1} parent=75 // pred_check
          %p533 = pneg %p98
        $region78: #{website_classifier_forward.1} parent=75 // pred_check_branch
          %535 = sbr.rel (%p533) target = $region80
        $region79: #{website_classifier_forward.1} parent=75 // pred_region
          %536 = dma.done [#allocation3], 3072
        $region80: #{website_classifier_forward.1} parent=75 // pred_fallthru
          _
        // Predicated region
        $region81: #{website_classifier_forward.1} parent=75 // pred_check
          %p537 = pneg %p119
        $region82: #{website_classifier_forward.1} parent=75 // pred_check_branch
          %539 = sbr.rel (%p537) target = $region84
        $region83: #{website_classifier_forward.1} parent=75 // pred_region
          %540 = dma.done [#allocation6], 96
        $region84: #{website_classifier_forward.1} parent=75 // pred_fallthru
          _
        // Predicated region
        $region85: #{website_classifier_forward.1} parent=75 // pred_check
          %p541 = pneg %p140
        $region86: #{website_classifier_forward.1} parent=75 // pred_check_branch
          %543 = sbr.rel (%p541) target = $region88
        $region87: #{website_classifier_forward.1} parent=75 // pred_region
          %544 = dma.done [#allocation6], 36864
        $region88: #{website_classifier_forward.1} parent=75 // pred_fallthru
          _
        // Predicated region
        $region89: #{website_classifier_forward.1} parent=75 // pred_check
          %p545 = pneg %p161
        $region90: #{website_classifier_forward.1} parent=75 // pred_check_branch
          %547 = sbr.rel (%p545) target = $region92
        $region91: #{website_classifier_forward.1} parent=75 // pred_region
          %548 = dma.done [#allocation9], 96
        $region92: #{website_classifier_forward.1} parent=75 // pred_fallthru
          _
        // Predicated region
        $region93: #{website_classifier_forward.1} parent=75 // pred_check
          %p549 = pneg %p182
        $region94: #{website_classifier_forward.1} parent=75 // pred_check_branch
          %551 = sbr.rel (%p549) target = $region96
        $region95: #{website_classifier_forward.1} parent=75 // pred_region
          %552 = dma.done [#allocation9], 96
        $region96: #{website_classifier_forward.1} parent=75 // pred_fallthru
          _
        // Predicated region
        $region97: #{website_classifier_forward.1} parent=75 // pred_check
          %p553 = pneg %p203
        $region98: #{website_classifier_forward.1} parent=75 // pred_check_branch
          %555 = sbr.rel (%p553) target = $region100
        $region99: #{website_classifier_forward.1} parent=75 // pred_region
          %556 = dma.done [#allocation12], 96
        $region100: #{website_classifier_forward.1} parent=75 // pred_fallthru
          _
        // Predicated region
        $region101: #{website_classifier_forward.1} parent=75 // pred_check
          %p557 = pneg %p224
        $region102: #{website_classifier_forward.1} parent=75 // pred_check_branch
          %559 = sbr.rel (%p557) target = $region104
        $region103: #{website_classifier_forward.1} parent=75 // pred_region
          %560 = dma.done [#allocation12], 30720
        $region104: #{website_classifier_forward.1} parent=75 // pred_fallthru
          _
        // Predicated region
        $region105: #{website_classifier_forward.1} parent=75 // pred_check
          %p561 = pneg %p245
        $region106: #{website_classifier_forward.1} parent=75 // pred_check_branch
          %563 = sbr.rel (%p561) target = $region108
        $region107: #{website_classifier_forward.1} parent=75 // pred_region
          %564 = dma.done [#allocation15], 80
        $region108: #{website_classifier_forward.1} parent=75 // pred_fallthru
          _
        // Predicated region
        $region109: #{website_classifier_forward.1} parent=75 // pred_check
          %p565 = pneg %p266
        $region110: #{website_classifier_forward.1} parent=75 // pred_check_branch
          %567 = sbr.rel (%p565) target = $region112
        $region111: #{website_classifier_forward.1} parent=75 // pred_region
          %568 = dma.done [#allocation15], 80
        $region112: #{website_classifier_forward.1} parent=75 // pred_fallthru
          _
        // Predicated region
        $region113: #{website_classifier_forward.1} parent=75 // pred_check
          %p569 = pneg %p287
        $region114: #{website_classifier_forward.1} parent=75 // pred_check_branch
          %571 = sbr.rel (%p569) target = $region116
        $region115: #{website_classifier_forward.1} parent=75 // pred_region
          %572 = dma.done [#allocation18], 80
        $region116: #{website_classifier_forward.1} parent=75 // pred_fallthru
          _
        // Predicated region
        $region117: #{website_classifier_forward.1} parent=75 // pred_check
          %p573 = pneg %p308
        $region118: #{website_classifier_forward.1} parent=75 // pred_check_branch
          %575 = sbr.rel (%p573) target = $region120
        $region119: #{website_classifier_forward.1} parent=75 // pred_region
          %576 = dma.done [#allocation18], 25600
        $region120: #{website_classifier_forward.1} parent=75 // pred_fallthru
          _
        // Predicated region
        $region121: #{website_classifier_forward.1} parent=75 // pred_check
          %p577 = pneg %p329
        $region122: #{website_classifier_forward.1} parent=75 // pred_check_branch
          %579 = sbr.rel (%p577) target = $region124
        $region123: #{website_classifier_forward.1} parent=75 // pred_region
          %580 = dma.done [#allocation21], 80
        $region124: #{website_classifier_forward.1} parent=75 // pred_fallthru
          _
        %s581 = smul.u32 2, %s35
        %p582 = scmp.lt.s32.totalorder %s581, 3
        %s583 = scalar_select %p582, %s581, 3
        %s584 = smul.addr %s583, 8
        %s585 = scalar_lea.vmem %s0, %s584
        %p586 = pneg %p56
        %p587 = pneg %p53
        %p588 = pneg %p77
        %p589 = pneg %p74
        %p590 = pneg %p98
        %p591 = pneg %p95
        %p592 = pneg %p119
        %p593 = pneg %p116
        %p594 = pneg %p140
        %p595 = pneg %p137
        %p596 = pneg %p161
        %p597 = pneg %p158
        %p598 = pneg %p182
        %p599 = pneg %p179
        %p600 = pneg %p203
        %p601 = pneg %p200
        %p602 = pneg %p224
        %p603 = pneg %p221
        %p604 = pneg %p245
        %p605 = pneg %p242
        %p606 = pneg %p266
        %p607 = pneg %p263
        %p608 = pneg %p287
        %p609 = pneg %p284
        %p610 = pneg %p308
        %p611 = pneg %p305
        %p612 = pneg %p329
        %p613 = pneg %p326
        %p614 = pneg %p355
        %p615 = pneg %p352
        %s616 = sand.u32 %s342, 1
        %s617 = scalar_lea.sflag [#allocation4], %s616
        %s618 = sand.u32 %s342, 1
        %s619 = smul.addr %s618, 80
        %s620 = scalar_lea.vmem [#allocation22], %s619
        %s621 = smul.u32 2, %s35
        %p622 = scmp.lt.s32.totalorder %s621, 3
        %s623 = scalar_select %p622, %s621, 3
        %s624 = smul.addr %s623, 8
        %s625 = scalar_lea.vmem %s0, %s624
        %s626 = smul.u32 2, %s35
        %s627 = smul.u32 2, %s35
        %v629 = vld [vmem:[%s625] sm:$0xff]
        %v630 = vld [vmem:[%s625 + $0x8] sm:$0xff]
        %v631 = vlaneseq
        %v632 = vand.u32 %v631, 127
        %633 = vset.pattern.permute.xlu0 0
        %634 = vperm.xlu0 %633, %v629
        %v635 = vpop.permute.xlu0 %634
        %636 = vset.pattern.permute.xlu0 0
        %637 = vperm.xlu0 %636, %v630
        %v638 = vpop.permute.xlu0 %637
        %vm639 = vcmp.eq.s32.totalorder %v632, %v635
        %vm640 = vcmp.eq.s32.totalorder %v632, %v638
        %v641 = vsel %vm639, 1, 0
        %v642 = vsel %vm640, 1, 0
        %v643 = vcvt.s32.f32 %v641
        %v644 = vcvt.s32.f32 %v642
        %v645 = vadd.f32 %v643, 0.0
        %v646 = vadd.f32 %v644, 0.0
        %647 = vset.pattern.permute.xlu0 1
        %648 = vperm.xlu0 %647, %v629
        %v649 = vpop.permute.xlu0 %648
        %650 = vset.pattern.permute.xlu0 1
        %651 = vperm.xlu0 %650, %v630
        %v652 = vpop.permute.xlu0 %651
        %vm653 = vcmp.eq.s32.totalorder %v632, %v649
        %vm654 = vcmp.eq.s32.totalorder %v632, %v652
        %v655 = vsel %vm653, 1, 0
        %v656 = vsel %vm654, 1, 0
        %v657 = vcvt.s32.f32 %v655
        %v658 = vcvt.s32.f32 %v656
        %v659 = vadd.f32 %v645, %v657
        %v660 = vadd.f32 %v646, %v658
        %661 = vset.pattern.permute.xlu0 2
        %662 = vperm.xlu0 %661, %v629
        %v663 = vpop.permute.xlu0 %662
        %664 = vset.pattern.permute.xlu0 2
        %665 = vperm.xlu0 %664, %v630
        %v666 = vpop.permute.xlu0 %665
        %vm667 = vcmp.eq.s32.totalorder %v632, %v663
        %vm668 = vcmp.eq.s32.totalorder %v632, %v666
        %v669 = vsel %vm667, 1, 0
        %v670 = vsel %vm668, 1, 0
        %v671 = vcvt.s32.f32 %v669
        %v672 = vcvt.s32.f32 %v670
        %v673 = vadd.f32 %v659, %v671
        %v674 = vadd.f32 %v660, %v672
        %675 = vset.pattern.permute.xlu0 3
        %676 = vperm.xlu0 %675, %v629
        %v677 = vpop.permute.xlu0 %676
        %678 = vset.pattern.permute.xlu0 3
        %679 = vperm.xlu0 %678, %v630
        %v680 = vpop.permute.xlu0 %679
        %vm681 = vcmp.eq.s32.totalorder %v632, %v677
        %vm682 = vcmp.eq.s32.totalorder %v632, %v680
        %v683 = vsel %vm681, 1, 0
        %v684 = vsel %vm682, 1, 0
        %v685 = vcvt.s32.f32 %v683
        %v686 = vcvt.s32.f32 %v684
        %v687 = vadd.f32 %v673, %v685
        %v688 = vadd.f32 %v674, %v686
        %689 = vset.pattern.permute.xlu0 4
        %690 = vperm.xlu0 %689, %v629
        %v691 = vpop.permute.xlu0 %690
        %692 = vset.pattern.permute.xlu0 4
        %693 = vperm.xlu0 %692, %v630
        %v694 = vpop.permute.xlu0 %693
        %vm695 = vcmp.eq.s32.totalorder %v632, %v691
        %vm696 = vcmp.eq.s32.totalorder %v632, %v694
        %v697 = vsel %vm695, 1, 0
        %v698 = vsel %vm696, 1, 0
        %v699 = vcvt.s32.f32 %v697
        %v700 = vcvt.s32.f32 %v698
        %v701 = vadd.f32 %v687, %v699
        %v702 = vadd.f32 %v688, %v700
        %703 = vset.pattern.permute.xlu0 5
        %704 = vperm.xlu0 %703, %v629
        %v705 = vpop.permute.xlu0 %704
        %706 = vset.pattern.permute.xlu0 5
        %707 = vperm.xlu0 %706, %v630
        %v708 = vpop.permute.xlu0 %707
        %vm709 = vcmp.eq.s32.totalorder %v632, %v705
        %vm710 = vcmp.eq.s32.totalorder %v632, %v708
        %v711 = vsel %vm709, 1, 0
        %v712 = vsel %vm710, 1, 0
        %v713 = vcvt.s32.f32 %v711
        %v714 = vcvt.s32.f32 %v712
        %v715 = vadd.f32 %v701, %v713
        %v716 = vadd.f32 %v702, %v714
        %717 = vset.pattern.permute.xlu0 6
        %718 = vperm.xlu0 %717, %v629
        %v719 = vpop.permute.xlu0 %718
        %720 = vset.pattern.permute.xlu0 6
        %721 = vperm.xlu0 %720, %v630
        %v722 = vpop.permute.xlu0 %721
        %vm723 = vcmp.eq.s32.totalorder %v632, %v719
        %vm724 = vcmp.eq.s32.totalorder %v632, %v722
        %v725 = vsel %vm723, 1, 0
        %v726 = vsel %vm724, 1, 0
        %v727 = vcvt.s32.f32 %v725
        %v728 = vcvt.s32.f32 %v726
        %v729 = vadd.f32 %v715, %v727
        %v730 = vadd.f32 %v716, %v728
        %731 = vset.pattern.permute.xlu0 7
        %732 = vperm.xlu0 %731, %v629
        %v733 = vpop.permute.xlu0 %732
        %734 = vset.pattern.permute.xlu0 7
        %735 = vperm.xlu0 %734, %v630
        %v736 = vpop.permute.xlu0 %735
        %vm737 = vcmp.eq.s32.totalorder %v632, %v733
        %vm738 = vcmp.eq.s32.totalorder %v632, %v736
        %v739 = vsel %vm737, 1, 0
        %v740 = vsel %vm738, 1, 0
        %v741 = vcvt.s32.f32 %v739
        %v742 = vcvt.s32.f32 %v740
        %v743 = vadd.f32 %v729, %v741
        %v744 = vadd.f32 %v730, %v742
        %v745 = vadd.s32 %v629, 64
        %v746 = vadd.s32 %v630, 64
        %747 = vset.pattern.permute.xlu0 8
        %748 = vperm.xlu0 %747, %v745
        %v749 = vpop.permute.xlu0 %748
        %750 = vset.pattern.permute.xlu0 8
        %751 = vperm.xlu0 %750, %v746
        %v752 = vpop.permute.xlu0 %751
        %vm753 = vcmp.eq.s32.totalorder %v632, %v749
        %vm754 = vcmp.eq.s32.totalorder %v632, %v752
        %v755 = vsel %vm753, 1, 0
        %v756 = vsel %vm754, 1, 0
        %v757 = vcvt.s32.f32 %v755
        %v758 = vcvt.s32.f32 %v756
        %v759 = vadd.f32 %v743, %v757
        %v760 = vadd.f32 %v744, %v758
        %761 = vset.pattern.permute.xlu0 9
        %762 = vperm.xlu0 %761, %v745
        %v763 = vpop.permute.xlu0 %762
        %764 = vset.pattern.permute.xlu0 9
        %765 = vperm.xlu0 %764, %v746
        %v766 = vpop.permute.xlu0 %765
        %vm767 = vcmp.eq.s32.totalorder %v632, %v763
        %vm768 = vcmp.eq.s32.totalorder %v632, %v766
        %v769 = vsel %vm767, 1, 0
        %v770 = vsel %vm768, 1, 0
        %v771 = vcvt.s32.f32 %v769
        %v772 = vcvt.s32.f32 %v770
        %v773 = vadd.f32 %v759, %v771
        %v774 = vadd.f32 %v760, %v772
        %775 = vset.pattern.permute.xlu0 10
        %776 = vperm.xlu0 %775, %v745
        %v777 = vpop.permute.xlu0 %776
        %778 = vset.pattern.permute.xlu0 10
        %779 = vperm.xlu0 %778, %v746
        %v780 = vpop.permute.xlu0 %779
        %vm781 = vcmp.eq.s32.totalorder %v632, %v777
        %vm782 = vcmp.eq.s32.totalorder %v632, %v780
        %v783 = vsel %vm781, 1, 0
        %v784 = vsel %vm782, 1, 0
        %v785 = vcvt.s32.f32 %v783
        %v786 = vcvt.s32.f32 %v784
        %v787 = vadd.f32 %v773, %v785
        %v788 = vadd.f32 %v774, %v786
        %789 = vset.pattern.permute.xlu0 11
        %790 = vperm.xlu0 %789, %v745
        %v791 = vpop.permute.xlu0 %790
        %792 = vset.pattern.permute.xlu0 11
        %793 = vperm.xlu0 %792, %v746
        %v794 = vpop.permute.xlu0 %793
        %vm795 = vcmp.eq.s32.totalorder %v632, %v791
        %vm796 = vcmp.eq.s32.totalorder %v632, %v794
        %v797 = vsel %vm795, 1, 0
        %v798 = vsel %vm796, 1, 0
        %v799 = vcvt.s32.f32 %v797
        %v800 = vcvt.s32.f32 %v798
        %v801 = vadd.f32 %v787, %v799
        %v802 = vadd.f32 %v788, %v800
        %803 = vset.pattern.permute.xlu0 12
        %804 = vperm.xlu0 %803, %v745
        %v805 = vpop.permute.xlu0 %804
        %806 = vset.pattern.permute.xlu0 12
        %807 = vperm.xlu0 %806, %v746
        %v808 = vpop.permute.xlu0 %807
        %vm809 = vcmp.eq.s32.totalorder %v632, %v805
        %vm810 = vcmp.eq.s32.totalorder %v632, %v808
        %v811 = vsel %vm809, 1, 0
        %v812 = vsel %vm810, 1, 0
        %v813 = vcvt.s32.f32 %v811
        %v814 = vcvt.s32.f32 %v812
        %v815 = vadd.f32 %v801, %v813
        %v816 = vadd.f32 %v802, %v814
        %817 = vset.pattern.permute.xlu0 13
        %818 = vperm.xlu0 %817, %v745
        %v819 = vpop.permute.xlu0 %818
        %820 = vset.pattern.permute.xlu0 13
        %821 = vperm.xlu0 %820, %v746
        %v822 = vpop.permute.xlu0 %821
        %vm823 = vcmp.eq.s32.totalorder %v632, %v819
        %vm824 = vcmp.eq.s32.totalorder %v632, %v822
        %v825 = vsel %vm823, 1, 0
        %v826 = vsel %vm824, 1, 0
        %v827 = vcvt.s32.f32 %v825
        %v828 = vcvt.s32.f32 %v826
        %v829 = vadd.f32 %v815, %v827
        %v830 = vadd.f32 %v816, %v828
        %831 = vset.pattern.permute.xlu0 14
        %832 = vperm.xlu0 %831, %v745
        %v833 = vpop.permute.xlu0 %832
        %834 = vset.pattern.permute.xlu0 14
        %835 = vperm.xlu0 %834, %v746
        %v836 = vpop.permute.xlu0 %835
        %vm837 = vcmp.eq.s32.totalorder %v632, %v833
        %vm838 = vcmp.eq.s32.totalorder %v632, %v836
        %v839 = vsel %vm837, 1, 0
        %v840 = vsel %vm838, 1, 0
        %v841 = vcvt.s32.f32 %v839
        %v842 = vcvt.s32.f32 %v840
        %v843 = vadd.f32 %v829, %v841
        %v844 = vadd.f32 %v830, %v842
        %845 = vset.pattern.permute.xlu0 15
        %846 = vperm.xlu0 %845, %v745
        %v847 = vpop.permute.xlu0 %846
        %848 = vset.pattern.permute.xlu0 15
        %849 = vperm.xlu0 %848, %v746
        %v850 = vpop.permute.xlu0 %849
        %vm851 = vcmp.eq.s32.totalorder %v632, %v847
        %vm852 = vcmp.eq.s32.totalorder %v632, %v850
        %v853 = vsel %vm851, 1, 0
        %v854 = vsel %vm852, 1, 0
        %v855 = vcvt.s32.f32 %v853
        %v856 = vcvt.s32.f32 %v854
        %v857 = vadd.f32 %v843, %v855
        %v858 = vadd.f32 %v844, %v856
        %v859 = vmul.f32 %v857, 0.125
        %v860 = vmul.f32 %v858, 0.125
        %v861 = vpack.c.bf16 %v860, %v859
        %v862 = vld [vmem:[%s1] sm:$0xf]
        %v863 = vld [vmem:[%s1 + $0x4] sm:$0xf]
        %v864 = vld [vmem:[%s1 + $0x8] sm:$0xf]
        %v865 = vld [vmem:[%s1 + $0xc] sm:$0xf]
        %v866 = vld [vmem:[%s1 + $0x10] sm:$0xf]
        %v867 = vld [vmem:[%s1 + $0x14] sm:$0xf]
        %v868 = vld [vmem:[%s1 + $0x18] sm:$0xf]
        %v869 = vld [vmem:[%s1 + $0x1c] sm:$0xf]
        %v870 = vld [vmem:[%s1 + $0x20] sm:$0xf]
        %v871 = vld [vmem:[%s1 + $0x24] sm:$0xf]
        %v872 = vld [vmem:[%s1 + $0x28] sm:$0xf]
        %v873 = vld [vmem:[%s1 + $0x2c] sm:$0xf]
        %v874 = vld [vmem:[%s1 + $0x30] sm:$0xf]
        %v875 = vld [vmem:[%s1 + $0x34] sm:$0xf]
        %v876 = vld [vmem:[%s1 + $0x38] sm:$0xf]
        %v877 = vld [vmem:[%s1 + $0x3c] sm:$0xf]
        %v894 = vunpack.c.l.b16 %v862
        %v895 = vunpack.c.l.b16 %v863
        %v896 = vunpack.c.l.b16 %v864
        %v897 = vunpack.c.l.b16 %v865
        %v898 = vunpack.c.l.b16 %v866
        %v899 = vunpack.c.l.b16 %v867
        %v900 = vunpack.c.l.b16 %v868
        %v901 = vunpack.c.l.b16 %v869
        %v902 = vunpack.c.l.b16 %v870
        %v903 = vunpack.c.l.b16 %v871
        %v904 = vunpack.c.l.b16 %v872
        %v905 = vunpack.c.l.b16 %v873
        %v906 = vunpack.c.l.b16 %v874
        %v907 = vunpack.c.l.b16 %v875
        %v908 = vunpack.c.l.b16 %v876
        %v909 = vunpack.c.l.b16 %v877
        %v910 = vpack.c.b16 %v895, %v894
        %v911 = vpack.c.b16 %v897, %v896
        %v912 = vpack.c.b16 %v899, %v898
        %v913 = vpack.c.b16 %v901, %v900
        %v914 = vpack.c.b16 %v903, %v902
        %v915 = vpack.c.b16 %v905, %v904
        %v916 = vpack.c.b16 %v907, %v906
        %v917 = vpack.c.b16 %v909, %v908
        %926 = vmatprep.subr.bf16.mxu0 0
        %927 = vmatpush1.bf16.msra.mxu0 %v910
        %928 = vmatprep.subr.bf16.mxu0 0
        %929 = vmatpush1.bf16.msra.mxu0 %v911
        %930 = vmatprep.subr.bf16.mxu0 0
        %931 = vmatpush1.bf16.msra.mxu0 %v912
        %932 = vmatprep.subr.bf16.mxu0 0
        %933 = vmatpush1.bf16.msra.mxu0 %v913
        %934 = vmatprep.subr.bf16.mxu0 0
        %935 = vmatpush1.bf16.msra.mxu0 %v914
        %936 = vmatprep.subr.bf16.mxu0 0
        %937 = vmatpush1.bf16.msra.mxu0 %v915
        %938 = vmatprep.subr.bf16.mxu0 0
        %939 = vmatpush1.bf16.msra.mxu0 %v916
        %940 = vmatprep.subr.bf16.mxu0 0
        %941 = vmatpush1.bf16.msra.mxu0 %v917
        %942 = vmatprep.subr.bf16.mxu0 0
        %943 = vmatpush1.bf16.msra.mxu0 0
        %944 = vmatprep.subr.bf16.mxu0 0
        %945 = vmatpush1.bf16.msra.mxu0 0
        %946 = vmatprep.subr.bf16.mxu0 0
        %947 = vmatpush1.bf16.msra.mxu0 0
        %948 = vmatprep.subr.bf16.mxu0 0
        %949 = vmatpush1.bf16.msra.mxu0 0
        %950 = vmatprep.subr.bf16.mxu0 0
        %951 = vmatpush1.bf16.msra.mxu0 0
        %952 = vmatprep.subr.bf16.mxu0 0
        %953 = vmatpush1.bf16.msra.mxu0 0
        %954 = vmatprep.subr.bf16.mxu0 0
        %955 = vmatpush1.bf16.msra.mxu0 0
        %956 = vmatprep.subr.bf16.mxu0 0
        %957 = vmatpush1.bf16.msra.mxu0 0
        %958 = vmatprep.mubr.bf16.mxu0 0
        %959 = vmatmul.mubr.bf16.gmra.mrb[0].mxu0 %v861
        %v960 = vpop.f32.mrb[0].mxu0
        %v961 = vadd.f32 0.0, %v960
        %v962 = vpop.f32.mrb[0].mxu0
        %v963 = vpop.f32.mrb[0].mxu0
        %v964 = vadd.f32 0.0, %v963
        %v965 = vpop.f32.mrb[0].mxu0
        %966 = vdwg.mxu0
        %v967 = vpack.c.bf16 %v964, %v961
        %v968 = vld [vmem:[#allocation2] sm:$0xff]
        %v969 = vld [vmem:[#allocation2 + $0x8] sm:$0xff]
        %v970 = vld [vmem:[#allocation2 + $0x10] sm:$0xff]
        %v971 = vld [vmem:[#allocation2 + $0x18] sm:$0xff]
        %v972 = vld [vmem:[#allocation2 + $0x20] sm:$0xff]
        %v973 = vld [vmem:[#allocation2 + $0x28] sm:$0xff]
        %v974 = vld [vmem:[#allocation2 + $0x30] sm:$0xff]
        %v975 = vld [vmem:[#allocation2 + $0x38] sm:$0xff]
        %v976 = vld [vmem:[#allocation2 + $0x40] sm:$0xff]
        %v977 = vld [vmem:[#allocation2 + $0x48] sm:$0xff]
        %v978 = vld [vmem:[#allocation2 + $0x50] sm:$0xff]
        %v979 = vld [vmem:[#allocation2 + $0x58] sm:$0xff]
        %v980 = vld [vmem:[#allocation2 + $0x60] sm:$0xff]
        %v981 = vld [vmem:[#allocation2 + $0x68] sm:$0xff]
        %v982 = vld [vmem:[#allocation2 + $0x70] sm:$0xff]
        %v983 = vld [vmem:[#allocation2 + $0x78] sm:$0xff]
        %v984 = vld [vmem:[#allocation2 + $0x80] sm:$0xff]
        %v985 = vld [vmem:[#allocation2 + $0x88] sm:$0xff]
        %v986 = vld [vmem:[#allocation2 + $0x90] sm:$0xff]
        %v987 = vld [vmem:[#allocation2 + $0x98] sm:$0xff]
        %v988 = vld [vmem:[#allocation2 + $0xa0] sm:$0xff]
        %v989 = vld [vmem:[#allocation2 + $0xa8] sm:$0xff]
        %v990 = vld [vmem:[#allocation2 + $0xb0] sm:$0xff]
        %v991 = vld [vmem:[#allocation2 + $0xb8] sm:$0xff]
        %v992 = vld [vmem:[#allocation5] sm:$0x3f]
        %v994 = vlaneseq
        %v995 = vshrl.u32 %v994, 7
        %v996 = vsub.s32 0, %v995
        %v997 = vrot.slane %v992, %v996
        %v998 = vlaneseq
        %v999 = vshrl.u32 %v998, 7
        %v1000 = vsub.s32 1, %v999
        %v1001 = vrot.slane %v992, %v1000
        %v1002 = vlaneseq
        %v1003 = vshrl.u32 %v1002, 7
        %v1004 = vsub.s32 2, %v1003
        %v1005 = vrot.slane %v992, %v1004
        %v1006 = vlaneseq
        %v1007 = vshrl.u32 %v1006, 7
        %v1008 = vsub.s32 3, %v1007
        %v1009 = vrot.slane %v992, %v1008
        %v1010 = vlaneseq
        %v1011 = vshrl.u32 %v1010, 7
        %v1012 = vsub.s32 4, %v1011
        %v1013 = vrot.slane %v992, %v1012
        %v1014 = vlaneseq
        %v1015 = vshrl.u32 %v1014, 7
        %v1016 = vsub.s32 5, %v1015
        %v1017 = vrot.slane %v992, %v1016
        %v1048 = vunpack.c.l.b16 %v968
        %v1049 = vunpack.c.h.b16 %v968
        %v1050 = vunpack.c.l.b16 %v969
        %v1051 = vunpack.c.h.b16 %v969
        %v1052 = vunpack.c.l.b16 %v970
        %v1053 = vunpack.c.h.b16 %v970
        %v1054 = vunpack.c.l.b16 %v971
        %v1055 = vunpack.c.h.b16 %v971
        %v1056 = vunpack.c.l.b16 %v972
        %v1057 = vunpack.c.h.b16 %v972
        %v1058 = vunpack.c.l.b16 %v973
        %v1059 = vunpack.c.h.b16 %v973
        %v1060 = vunpack.c.l.b16 %v974
        %v1061 = vunpack.c.h.b16 %v974
        %v1062 = vunpack.c.l.b16 %v975
        %v1063 = vunpack.c.h.b16 %v975
        %v1064 = vunpack.c.l.b16 %v976
        %v1065 = vunpack.c.h.b16 %v976
        %v1066 = vunpack.c.l.b16 %v977
        %v1067 = vunpack.c.h.b16 %v977
        %v1068 = vunpack.c.l.b16 %v978
        %v1069 = vunpack.c.h.b16 %v978
        %v1070 = vunpack.c.l.b16 %v979
        %v1071 = vunpack.c.h.b16 %v979
        %v1072 = vunpack.c.l.b16 %v980
        %v1073 = vunpack.c.h.b16 %v980
        %v1074 = vunpack.c.l.b16 %v981
        %v1075 = vunpack.c.h.b16 %v981
        %v1076 = vunpack.c.l.b16 %v982
        %v1077 = vunpack.c.h.b16 %v982
        %v1078 = vunpack.c.l.b16 %v983
        %v1079 = vunpack.c.h.b16 %v983
        %v1080 = vunpack.c.l.b16 %v984
        %v1081 = vunpack.c.h.b16 %v984
        %v1082 = vunpack.c.l.b16 %v985
        %v1083 = vunpack.c.h.b16 %v985
        %v1084 = vunpack.c.l.b16 %v986
        %v1085 = vunpack.c.h.b16 %v986
        %v1086 = vunpack.c.l.b16 %v987
        %v1087 = vunpack.c.h.b16 %v987
        %v1088 = vunpack.c.l.b16 %v988
        %v1089 = vunpack.c.h.b16 %v988
        %v1090 = vunpack.c.l.b16 %v989
        %v1091 = vunpack.c.h.b16 %v989
        %v1092 = vunpack.c.l.b16 %v990
        %v1093 = vunpack.c.h.b16 %v990
        %v1094 = vunpack.c.l.b16 %v991
        %v1095 = vunpack.c.h.b16 %v991
        %v1096 = vpack.c.b16 %v1054, %v1048
        %v1097 = vpack.c.b16 %v1055, %v1049
        %v1098 = vpack.c.b16 %v1056, %v1050
        %v1099 = vpack.c.b16 %v1057, %v1051
        %v1100 = vpack.c.b16 %v1058, %v1052
        %v1101 = vpack.c.b16 %v1059, %v1053
        %v1102 = vpack.c.b16 %v1066, %v1060
        %v1103 = vpack.c.b16 %v1067, %v1061
        %v1104 = vpack.c.b16 %v1068, %v1062
        %v1105 = vpack.c.b16 %v1069, %v1063
        %v1106 = vpack.c.b16 %v1070, %v1064
        %v1107 = vpack.c.b16 %v1071, %v1065
        %v1108 = vpack.c.b16 %v1078, %v1072
        %v1109 = vpack.c.b16 %v1079, %v1073
        %v1110 = vpack.c.b16 %v1080, %v1074
        %v1111 = vpack.c.b16 %v1081, %v1075
        %v1112 = vpack.c.b16 %v1082, %v1076
        %v1113 = vpack.c.b16 %v1083, %v1077
        %v1114 = vpack.c.b16 %v1090, %v1084
        %v1115 = vpack.c.b16 %v1091, %v1085
        %v1116 = vpack.c.b16 %v1092, %v1086
        %v1117 = vpack.c.b16 %v1093, %v1087
        %v1118 = vpack.c.b16 %v1094, %v1088
        %v1119 = vpack.c.b16 %v1095, %v1089
        %vm1144 = vcmask 523264
        %v1146 = vsel %vm1144, %v967, 0
        %1148 = vmatprep.subr.bf16.mxu0 %v1097
        %1149 = vmatpush1.bf16.msra.mxu0 %v1096
        %1150 = vmatprep.subr.bf16.mxu0 %v1103
        %1151 = vmatpush1.bf16.msra.mxu0 %v1102
        %1152 = vmatprep.subr.bf16.mxu0 %v1109
        %1153 = vmatpush1.bf16.msra.mxu0 %v1108
        %1154 = vmatprep.subr.bf16.mxu0 %v1115
        %1155 = vmatpush1.bf16.msra.mxu0 %v1114
        %1156 = vmatprep.subr.bf16.mxu0 0
        %1157 = vmatpush1.bf16.msra.mxu0 0
        %1158 = vmatprep.subr.bf16.mxu0 0
        %1159 = vmatpush1.bf16.msra.mxu0 0
        %1160 = vmatprep.subr.bf16.mxu0 0
        %1161 = vmatpush1.bf16.msra.mxu0 0
        %1162 = vmatprep.subr.bf16.mxu0 0
        %1163 = vmatpush1.bf16.msra.mxu0 0
        %1164 = vmatprep.subr.bf16.mxu0 0
        %1165 = vmatpush1.bf16.msra.mxu0 0
        %1166 = vmatprep.subr.bf16.mxu0 0
        %1167 = vmatpush1.bf16.msra.mxu0 0
        %1168 = vmatprep.subr.bf16.mxu0 0
        %1169 = vmatpush1.bf16.msra.mxu0 0
        %1170 = vmatprep.subr.bf16.mxu0 0
        %1171 = vmatpush1.bf16.msra.mxu0 0
        %1172 = vmatprep.subr.bf16.mxu0 0
        %1173 = vmatpush1.bf16.msra.mxu0 0
        %1174 = vmatprep.subr.bf16.mxu0 0
        %1175 = vmatpush1.bf16.msra.mxu0 0
        %1176 = vmatprep.subr.bf16.mxu0 0
        %1177 = vmatpush1.bf16.msra.mxu0 0
        %1178 = vmatprep.subr.bf16.mxu0 0
        %1179 = vmatpush1.bf16.msra.mxu0 0
        %1180 = vmatprep.mubr.bf16.mxu0 0
        %1181 = vmatmul.mubr.bf16.gmra.mrb[0].mxu0 %v1146
        %v1182 = vpop.f32.mrb[0].mxu0
        %v1183 = vadd.f32 %v997, %v1182
        %v1184 = vpop.f32.mrb[0].mxu0
        %v1185 = vadd.f32 %v1001, %v1184
        %v1186 = vpop.f32.mrb[0].mxu0
        %v1187 = vadd.f32 %v997, %v1186
        %v1188 = vpop.f32.mrb[0].mxu0
        %v1189 = vadd.f32 %v1001, %v1188
        %1190 = vdwg.mxu0
        %1191 = vmatprep.subr.bf16.mxu0 %v1099
        %1192 = vmatpush1.bf16.msra.mxu0 %v1098
        %1193 = vmatprep.subr.bf16.mxu0 %v1105
        %1194 = vmatpush1.bf16.msra.mxu0 %v1104
        %1195 = vmatprep.subr.bf16.mxu0 %v1111
        %1196 = vmatpush1.bf16.msra.mxu0 %v1110
        %1197 = vmatprep.subr.bf16.mxu0 %v1117
        %1198 = vmatpush1.bf16.msra.mxu0 %v1116
        %1199 = vmatprep.subr.bf16.mxu0 0
        %1200 = vmatpush1.bf16.msra.mxu0 0
        %1201 = vmatprep.subr.bf16.mxu0 0
        %1202 = vmatpush1.bf16.msra.mxu0 0
        %1203 = vmatprep.subr.bf16.mxu0 0
        %1204 = vmatpush1.bf16.msra.mxu0 0
        %1205 = vmatprep.subr.bf16.mxu0 0
        %1206 = vmatpush1.bf16.msra.mxu0 0
        %1207 = vmatprep.subr.bf16.mxu0 0
        %1208 = vmatpush1.bf16.msra.mxu0 0
        %1209 = vmatprep.subr.bf16.mxu0 0
        %1210 = vmatpush1.bf16.msra.mxu0 0
        %1211 = vmatprep.subr.bf16.mxu0 0
        %1212 = vmatpush1.bf16.msra.mxu0 0
        %1213 = vmatprep.subr.bf16.mxu0 0
        %1214 = vmatpush1.bf16.msra.mxu0 0
        %1215 = vmatprep.subr.bf16.mxu0 0
        %1216 = vmatpush1.bf16.msra.mxu0 0
        %1217 = vmatprep.subr.bf16.mxu0 0
        %1218 = vmatpush1.bf16.msra.mxu0 0
        %1219 = vmatprep.subr.bf16.mxu0 0
        %1220 = vmatpush1.bf16.msra.mxu0 0
        %1221 = vmatprep.subr.bf16.mxu0 0
        %1222 = vmatpush1.bf16.msra.mxu0 0
        %1223 = vmatprep.mubr.bf16.mxu0 0
        %1224 = vmatmul.mubr.bf16.gmra.mrb[0].mxu0 %v1146
        %v1225 = vpop.f32.mrb[0].mxu0
        %v1226 = vadd.f32 %v1005, %v1225
        %v1227 = vpop.f32.mrb[0].mxu0
        %v1228 = vadd.f32 %v1009, %v1227
        %v1229 = vpop.f32.mrb[0].mxu0
        %v1230 = vadd.f32 %v1005, %v1229
        %v1231 = vpop.f32.mrb[0].mxu0
        %v1232 = vadd.f32 %v1009, %v1231
        %1233 = vdwg.mxu0
        %1234 = vmatprep.subr.bf16.mxu0 %v1101
        %1235 = vmatpush1.bf16.msra.mxu0 %v1100
        %1236 = vmatprep.subr.bf16.mxu0 %v1107
        %1237 = vmatpush1.bf16.msra.mxu0 %v1106
        %1238 = vmatprep.subr.bf16.mxu0 %v1113
        %1239 = vmatpush1.bf16.msra.mxu0 %v1112
        %1240 = vmatprep.subr.bf16.mxu0 %v1119
        %1241 = vmatpush1.bf16.msra.mxu0 %v1118
        %1242 = vmatprep.subr.bf16.mxu0 0
        %1243 = vmatpush1.bf16.msra.mxu0 0
        %1244 = vmatprep.subr.bf16.mxu0 0
        %1245 = vmatpush1.bf16.msra.mxu0 0
        %1246 = vmatprep.subr.bf16.mxu0 0
        %1247 = vmatpush1.bf16.msra.mxu0 0
        %1248 = vmatprep.subr.bf16.mxu0 0
        %1249 = vmatpush1.bf16.msra.mxu0 0
        %1250 = vmatprep.subr.bf16.mxu0 0
        %1251 = vmatpush1.bf16.msra.mxu0 0
        %1252 = vmatprep.subr.bf16.mxu0 0
        %1253 = vmatpush1.bf16.msra.mxu0 0
        %1254 = vmatprep.subr.bf16.mxu0 0
        %1255 = vmatpush1.bf16.msra.mxu0 0
        %1256 = vmatprep.subr.bf16.mxu0 0
        %1257 = vmatpush1.bf16.msra.mxu0 0
        %1258 = vmatprep.subr.bf16.mxu0 0
        %1259 = vmatpush1.bf16.msra.mxu0 0
        %1260 = vmatprep.subr.bf16.mxu0 0
        %1261 = vmatpush1.bf16.msra.mxu0 0
        %1262 = vmatprep.subr.bf16.mxu0 0
        %1263 = vmatpush1.bf16.msra.mxu0 0
        %1264 = vmatprep.subr.bf16.mxu0 0
        %1265 = vmatpush1.bf16.msra.mxu0 0
        %1266 = vmatprep.mubr.bf16.mxu0 0
        %1267 = vmatmul.mubr.bf16.gmra.mrb[0].mxu0 %v1146
        %v1268 = vpop.f32.mrb[0].mxu0
        %v1269 = vadd.f32 %v1013, %v1268
        %v1270 = vpop.f32.mrb[0].mxu0
        %v1271 = vadd.f32 %v1017, %v1270
        %v1272 = vpop.f32.mrb[0].mxu0
        %v1273 = vadd.f32 %v1013, %v1272
        %v1274 = vpop.f32.mrb[0].mxu0
        %v1275 = vadd.f32 %v1017, %v1274
        %1276 = vdwg.mxu0
        %v1277 = vadd.s32 %v632, 128
        %v1278 = vadd.s32 %v632, 256
        %v1279 = vadd.s32 %v632, 384
        %v1280 = vadd.s32 %v632, 512
        %v1281 = vadd.s32 %v632, 640
        %v1282 = vpack.c.bf16 %v1187, %v1183
        %v1283 = vpack.c.bf16 %v1189, %v1185
        %v1284 = vpack.c.bf16 %v1230, %v1226
        %v1285 = vpack.c.bf16 %v1232, %v1228
        %v1286 = vpack.c.bf16 %v1273, %v1269
        %v1287 = vpack.c.bf16 %v1275, %v1271
        %v1288 = vld [vmem:[#allocation7] sm:$0xff]
        %v1289 = vld [vmem:[#allocation7 + $0x8] sm:$0xff]
        %v1290 = vld [vmem:[#allocation7 + $0x10] sm:$0xff]
        %v1291 = vld [vmem:[#allocation7 + $0x18] sm:$0xff]
        %v1292 = vld [vmem:[#allocation7 + $0x20] sm:$0xff]
        %v1293 = vld [vmem:[#allocation7 + $0x28] sm:$0xff]
        %v1294 = vld [vmem:[#allocation7 + $0x30] sm:$0xff]
        %v1295 = vld [vmem:[#allocation7 + $0x38] sm:$0xff]
        %v1296 = vld [vmem:[#allocation7 + $0x40] sm:$0xff]
        %v1297 = vld [vmem:[#allocation7 + $0x48] sm:$0xff]
        %v1298 = vld [vmem:[#allocation7 + $0x50] sm:$0xff]
        %v1299 = vld [vmem:[#allocation7 + $0x58] sm:$0xff]
        %v1300 = vld [vmem:[#allocation7 + $0x60] sm:$0xff]
        %v1301 = vld [vmem:[#allocation7 + $0x68] sm:$0xff]
        %v1302 = vld [vmem:[#allocation7 + $0x70] sm:$0xff]
        %v1303 = vld [vmem:[#allocation7 + $0x78] sm:$0xff]
        %v1304 = vld [vmem:[#allocation7 + $0x80] sm:$0xff]
        %v1305 = vld [vmem:[#allocation7 + $0x88] sm:$0xff]
        %v1306 = vld [vmem:[#allocation7 + $0x90] sm:$0xff]
        %v1307 = vld [vmem:[#allocation7 + $0x98] sm:$0xff]
        %v1308 = vld [vmem:[#allocation7 + $0xa0] sm:$0xff]
        %v1309 = vld [vmem:[#allocation7 + $0xa8] sm:$0xff]
        %v1310 = vld [vmem:[#allocation7 + $0xb0] sm:$0xff]
        %v1311 = vld [vmem:[#allocation7 + $0xb8] sm:$0xff]
        %v1312 = vld [vmem:[#allocation7 + $0xc0] sm:$0xff]
        %v1313 = vld [vmem:[#allocation7 + $0xc8] sm:$0xff]
        %v1314 = vld [vmem:[#allocation7 + $0xd0] sm:$0xff]
        %v1315 = vld [vmem:[#allocation7 + $0xd8] sm:$0xff]
        %v1316 = vld [vmem:[#allocation7 + $0xe0] sm:$0xff]
        %v1317 = vld [vmem:[#allocation7 + $0xe8] sm:$0xff]
        %v1318 = vld [vmem:[#allocation7 + $0xf0] sm:$0xff]
        %v1319 = vld [vmem:[#allocation7 + $0xf8] sm:$0xff]
        %v1320 = vld [vmem:[#allocation7 + $0x100] sm:$0xff]
        %v1321 = vld [vmem:[#allocation7 + $0x108] sm:$0xff]
        %v1322 = vld [vmem:[#allocation7 + $0x110] sm:$0xff]
        %v1323 = vld [vmem:[#allocation7 + $0x118] sm:$0xff]
        %v1324 = vld [vmem:[#allocation7 + $0x120] sm:$0xff]
        %v1325 = vld [vmem:[#allocation7 + $0x128] sm:$0xff]
        %v1326 = vld [vmem:[#allocation7 + $0x130] sm:$0xff]
        %v1327 = vld [vmem:[#allocation7 + $0x138] sm:$0xff]
        %v1328 = vld [vmem:[#allocation7 + $0x140] sm:$0xff]
        %v1329 = vld [vmem:[#allocation7 + $0x148] sm:$0xff]
        %v1330 = vld [vmem:[#allocation7 + $0x150] sm:$0xff]
        %v1331 = vld [vmem:[#allocation7 + $0x158] sm:$0xff]
        %v1332 = vld [vmem:[#allocation7 + $0x160] sm:$0xff]
        %v1333 = vld [vmem:[#allocation7 + $0x168] sm:$0xff]
        %v1334 = vld [vmem:[#allocation7 + $0x170] sm:$0xff]
        %v1335 = vld [vmem:[#allocation7 + $0x178] sm:$0xff]
        %v1336 = vld [vmem:[#allocation7 + $0x180] sm:$0xff]
        %v1337 = vld [vmem:[#allocation7 + $0x188] sm:$0xff]
        %v1338 = vld [vmem:[#allocation7 + $0x190] sm:$0xff]
        %v1339 = vld [vmem:[#allocation7 + $0x198] sm:$0xff]
        %v1340 = vld [vmem:[#allocation7 + $0x1a0] sm:$0xff]
        %v1341 = vld [vmem:[#allocation7 + $0x1a8] sm:$0xff]
        %v1342 = vld [vmem:[#allocation7 + $0x1b0] sm:$0xff]
        %v1343 = vld [vmem:[#allocation7 + $0x1b8] sm:$0xff]
        %v1344 = vld [vmem:[#allocation7 + $0x1c0] sm:$0xff]
        %v1345 = vld [vmem:[#allocation7 + $0x1c8] sm:$0xff]
        %v1346 = vld [vmem:[#allocation7 + $0x1d0] sm:$0xff]
        %v1347 = vld [vmem:[#allocation7 + $0x1d8] sm:$0xff]
        %v1348 = vld [vmem:[#allocation7 + $0x1e0] sm:$0xff]
        %v1349 = vld [vmem:[#allocation7 + $0x1e8] sm:$0xff]
        %v1350 = vld [vmem:[#allocation7 + $0x1f0] sm:$0xff]
        %v1351 = vld [vmem:[#allocation7 + $0x1f8] sm:$0xff]
        %v1352 = vld [vmem:[#allocation7 + $0x200] sm:$0xff]
        %v1353 = vld [vmem:[#allocation7 + $0x208] sm:$0xff]
        %v1354 = vld [vmem:[#allocation7 + $0x210] sm:$0xff]
        %v1355 = vld [vmem:[#allocation7 + $0x218] sm:$0xff]
        %v1356 = vld [vmem:[#allocation7 + $0x220] sm:$0xff]
        %v1357 = vld [vmem:[#allocation7 + $0x228] sm:$0xff]
        %v1358 = vld [vmem:[#allocation7 + $0x230] sm:$0xff]
        %v1359 = vld [vmem:[#allocation7 + $0x238] sm:$0xff]
        %v1360 = vld [vmem:[#allocation7 + $0x240] sm:$0xff]
        %v1361 = vld [vmem:[#allocation7 + $0x248] sm:$0xff]
        %v1362 = vld [vmem:[#allocation7 + $0x250] sm:$0xff]
        %v1363 = vld [vmem:[#allocation7 + $0x258] sm:$0xff]
        %v1364 = vld [vmem:[#allocation7 + $0x260] sm:$0xff]
        %v1365 = vld [vmem:[#allocation7 + $0x268] sm:$0xff]
        %v1366 = vld [vmem:[#allocation7 + $0x270] sm:$0xff]
        %v1367 = vld [vmem:[#allocation7 + $0x278] sm:$0xff]
        %v1368 = vld [vmem:[#allocation7 + $0x280] sm:$0xff]
        %v1369 = vld [vmem:[#allocation7 + $0x288] sm:$0xff]
        %v1370 = vld [vmem:[#allocation7 + $0x290] sm:$0xff]
        %v1371 = vld [vmem:[#allocation7 + $0x298] sm:$0xff]
        %v1372 = vld [vmem:[#allocation7 + $0x2a0] sm:$0xff]
        %v1373 = vld [vmem:[#allocation7 + $0x2a8] sm:$0xff]
        %v1374 = vld [vmem:[#allocation7 + $0x2b0] sm:$0xff]
        %v1375 = vld [vmem:[#allocation7 + $0x2b8] sm:$0xff]
        %v1376 = vld [vmem:[#allocation7 + $0x2c0] sm:$0xff]
        %v1377 = vld [vmem:[#allocation7 + $0x2c8] sm:$0xff]
        %v1378 = vld [vmem:[#allocation7 + $0x2d0] sm:$0xff]
        %v1379 = vld [vmem:[#allocation7 + $0x2d8] sm:$0xff]
        %v1380 = vld [vmem:[#allocation7 + $0x2e0] sm:$0xff]
        %v1381 = vld [vmem:[#allocation7 + $0x2e8] sm:$0xff]
        %v1382 = vld [vmem:[#allocation7 + $0x2f0] sm:$0xff]
        %v1383 = vld [vmem:[#allocation7 + $0x2f8] sm:$0xff]
        %v1384 = vld [vmem:[#allocation7 + $0x300] sm:$0xff]
        %v1385 = vld [vmem:[#allocation7 + $0x308] sm:$0xff]
        %v1386 = vld [vmem:[#allocation7 + $0x310] sm:$0xff]
        %v1387 = vld [vmem:[#allocation7 + $0x318] sm:$0xff]
        %v1388 = vld [vmem:[#allocation7 + $0x320] sm:$0xff]
        %v1389 = vld [vmem:[#allocation7 + $0x328] sm:$0xff]
        %v1390 = vld [vmem:[#allocation7 + $0x330] sm:$0xff]
        %v1391 = vld [vmem:[#allocation7 + $0x338] sm:$0xff]
        %v1392 = vld [vmem:[#allocation7 + $0x340] sm:$0xff]
        %v1393 = vld [vmem:[#allocation7 + $0x348] sm:$0xff]
        %v1394 = vld [vmem:[#allocation7 + $0x350] sm:$0xff]
        %v1395 = vld [vmem:[#allocation7 + $0x358] sm:$0xff]
        %v1396 = vld [vmem:[#allocation7 + $0x360] sm:$0xff]
        %v1397 = vld [vmem:[#allocation7 + $0x368] sm:$0xff]
        %v1398 = vld [vmem:[#allocation7 + $0x370] sm:$0xff]
        %v1399 = vld [vmem:[#allocation7 + $0x378] sm:$0xff]
        %v1400 = vld [vmem:[#allocation7 + $0x380] sm:$0xff]
        %v1401 = vld [vmem:[#allocation7 + $0x388] sm:$0xff]
        %v1402 = vld [vmem:[#allocation7 + $0x390] sm:$0xff]
        %v1403 = vld [vmem:[#allocation7 + $0x398] sm:$0xff]
        %v1404 = vld [vmem:[#allocation7 + $0x3a0] sm:$0xff]
        %v1405 = vld [vmem:[#allocation7 + $0x3a8] sm:$0xff]
        %v1406 = vld [vmem:[#allocation7 + $0x3b0] sm:$0xff]
        %v1407 = vld [vmem:[#allocation7 + $0x3b8] sm:$0xff]
        %v1408 = vld [vmem:[#allocation7 + $0x3c0] sm:$0xff]
        %v1409 = vld [vmem:[#allocation7 + $0x3c8] sm:$0xff]
        %v1410 = vld [vmem:[#allocation7 + $0x3d0] sm:$0xff]
        %v1411 = vld [vmem:[#allocation7 + $0x3d8] sm:$0xff]
        %v1412 = vld [vmem:[#allocation7 + $0x3e0] sm:$0xff]
        %v1413 = vld [vmem:[#allocation7 + $0x3e8] sm:$0xff]
        %v1414 = vld [vmem:[#allocation7 + $0x3f0] sm:$0xff]
        %v1415 = vld [vmem:[#allocation7 + $0x3f8] sm:$0xff]
        %v1416 = vld [vmem:[#allocation7 + $0x400] sm:$0xff]
        %v1417 = vld [vmem:[#allocation7 + $0x408] sm:$0xff]
        %v1418 = vld [vmem:[#allocation7 + $0x410] sm:$0xff]
        %v1419 = vld [vmem:[#allocation7 + $0x418] sm:$0xff]
        %v1420 = vld [vmem:[#allocation7 + $0x420] sm:$0xff]
        %v1421 = vld [vmem:[#allocation7 + $0x428] sm:$0xff]
        %v1422 = vld [vmem:[#allocation7 + $0x430] sm:$0xff]
        %v1423 = vld [vmem:[#allocation7 + $0x438] sm:$0xff]
        %v1424 = vld [vmem:[#allocation7 + $0x440] sm:$0xff]
        %v1425 = vld [vmem:[#allocation7 + $0x448] sm:$0xff]
        %v1426 = vld [vmem:[#allocation7 + $0x450] sm:$0xff]
        %v1427 = vld [vmem:[#allocation7 + $0x458] sm:$0xff]
        %v1428 = vld [vmem:[#allocation7 + $0x460] sm:$0xff]
        %v1429 = vld [vmem:[#allocation7 + $0x468] sm:$0xff]
        %v1430 = vld [vmem:[#allocation7 + $0x470] sm:$0xff]
        %v1431 = vld [vmem:[#allocation7 + $0x478] sm:$0xff]
        %v1432 = vld [vmem:[#allocation7 + $0x480] sm:$0xff]
        %v1433 = vld [vmem:[#allocation7 + $0x488] sm:$0xff]
        %v1434 = vld [vmem:[#allocation7 + $0x490] sm:$0xff]
        %v1435 = vld [vmem:[#allocation7 + $0x498] sm:$0xff]
        %v1436 = vld [vmem:[#allocation7 + $0x4a0] sm:$0xff]
        %v1437 = vld [vmem:[#allocation7 + $0x4a8] sm:$0xff]
        %v1438 = vld [vmem:[#allocation7 + $0x4b0] sm:$0xff]
        %v1439 = vld [vmem:[#allocation7 + $0x4b8] sm:$0xff]
        %v1440 = vld [vmem:[#allocation7 + $0x4c0] sm:$0xff]
        %v1441 = vld [vmem:[#allocation7 + $0x4c8] sm:$0xff]
        %v1442 = vld [vmem:[#allocation7 + $0x4d0] sm:$0xff]
        %v1443 = vld [vmem:[#allocation7 + $0x4d8] sm:$0xff]
        %v1444 = vld [vmem:[#allocation7 + $0x4e0] sm:$0xff]
        %v1445 = vld [vmem:[#allocation7 + $0x4e8] sm:$0xff]
        %v1446 = vld [vmem:[#allocation7 + $0x4f0] sm:$0xff]
        %v1447 = vld [vmem:[#allocation7 + $0x4f8] sm:$0xff]
        %v1448 = vld [vmem:[#allocation7 + $0x500] sm:$0xff]
        %v1449 = vld [vmem:[#allocation7 + $0x508] sm:$0xff]
        %v1450 = vld [vmem:[#allocation7 + $0x510] sm:$0xff]
        %v1451 = vld [vmem:[#allocation7 + $0x518] sm:$0xff]
        %v1452 = vld [vmem:[#allocation7 + $0x520] sm:$0xff]
        %v1453 = vld [vmem:[#allocation7 + $0x528] sm:$0xff]
        %v1454 = vld [vmem:[#allocation7 + $0x530] sm:$0xff]
        %v1455 = vld [vmem:[#allocation7 + $0x538] sm:$0xff]
        %v1456 = vld [vmem:[#allocation7 + $0x540] sm:$0xff]
        %v1457 = vld [vmem:[#allocation7 + $0x548] sm:$0xff]
        %v1458 = vld [vmem:[#allocation7 + $0x550] sm:$0xff]
        %v1459 = vld [vmem:[#allocation7 + $0x558] sm:$0xff]
        %v1460 = vld [vmem:[#allocation7 + $0x560] sm:$0xff]
        %v1461 = vld [vmem:[#allocation7 + $0x568] sm:$0xff]
        %v1462 = vld [vmem:[#allocation7 + $0x570] sm:$0xff]
        %v1463 = vld [vmem:[#allocation7 + $0x578] sm:$0xff]
        %v1464 = vld [vmem:[#allocation7 + $0x580] sm:$0xff]
        %v1465 = vld [vmem:[#allocation7 + $0x588] sm:$0xff]
        %v1466 = vld [vmem:[#allocation7 + $0x590] sm:$0xff]
        %v1467 = vld [vmem:[#allocation7 + $0x598] sm:$0xff]
        %v1468 = vld [vmem:[#allocation7 + $0x5a0] sm:$0xff]
        %v1469 = vld [vmem:[#allocation7 + $0x5a8] sm:$0xff]
        %v1470 = vld [vmem:[#allocation7 + $0x5b0] sm:$0xff]
        %v1471 = vld [vmem:[#allocation7 + $0x5b8] sm:$0xff]
        %v1472 = vld [vmem:[#allocation7 + $0x5c0] sm:$0xff]
        %v1473 = vld [vmem:[#allocation7 + $0x5c8] sm:$0xff]
        %v1474 = vld [vmem:[#allocation7 + $0x5d0] sm:$0xff]
        %v1475 = vld [vmem:[#allocation7 + $0x5d8] sm:$0xff]
        %v1476 = vld [vmem:[#allocation7 + $0x5e0] sm:$0xff]
        %v1477 = vld [vmem:[#allocation7 + $0x5e8] sm:$0xff]
        %v1478 = vld [vmem:[#allocation7 + $0x5f0] sm:$0xff]
        %v1479 = vld [vmem:[#allocation7 + $0x5f8] sm:$0xff]
        %v1480 = vld [vmem:[#allocation7 + $0x600] sm:$0xff]
        %v1481 = vld [vmem:[#allocation7 + $0x608] sm:$0xff]
        %v1482 = vld [vmem:[#allocation7 + $0x610] sm:$0xff]
        %v1483 = vld [vmem:[#allocation7 + $0x618] sm:$0xff]
        %v1484 = vld [vmem:[#allocation7 + $0x620] sm:$0xff]
        %v1485 = vld [vmem:[#allocation7 + $0x628] sm:$0xff]
        %v1486 = vld [vmem:[#allocation7 + $0x630] sm:$0xff]
        %v1487 = vld [vmem:[#allocation7 + $0x638] sm:$0xff]
        %v1488 = vld [vmem:[#allocation7 + $0x640] sm:$0xff]
        %v1489 = vld [vmem:[#allocation7 + $0x648] sm:$0xff]
        %v1490 = vld [vmem:[#allocation7 + $0x650] sm:$0xff]
        %v1491 = vld [vmem:[#allocation7 + $0x658] sm:$0xff]
        %v1492 = vld [vmem:[#allocation7 + $0x660] sm:$0xff]
        %v1493 = vld [vmem:[#allocation7 + $0x668] sm:$0xff]
        %v1494 = vld [vmem:[#allocation7 + $0x670] sm:$0xff]
        %v1495 = vld [vmem:[#allocation7 + $0x678] sm:$0xff]
        %v1496 = vld [vmem:[#allocation7 + $0x680] sm:$0xff]
        %v1497 = vld [vmem:[#allocation7 + $0x688] sm:$0xff]
        %v1498 = vld [vmem:[#allocation7 + $0x690] sm:$0xff]
        %v1499 = vld [vmem:[#allocation7 + $0x698] sm:$0xff]
        %v1500 = vld [vmem:[#allocation7 + $0x6a0] sm:$0xff]
        %v1501 = vld [vmem:[#allocation7 + $0x6a8] sm:$0xff]
        %v1502 = vld [vmem:[#allocation7 + $0x6b0] sm:$0xff]
        %v1503 = vld [vmem:[#allocation7 + $0x6b8] sm:$0xff]
        %v1504 = vld [vmem:[#allocation7 + $0x6c0] sm:$0xff]
        %v1505 = vld [vmem:[#allocation7 + $0x6c8] sm:$0xff]
        %v1506 = vld [vmem:[#allocation7 + $0x6d0] sm:$0xff]
        %v1507 = vld [vmem:[#allocation7 + $0x6d8] sm:$0xff]
        %v1508 = vld [vmem:[#allocation7 + $0x6e0] sm:$0xff]
        %v1509 = vld [vmem:[#allocation7 + $0x6e8] sm:$0xff]
        %v1510 = vld [vmem:[#allocation7 + $0x6f0] sm:$0xff]
        %v1511 = vld [vmem:[#allocation7 + $0x6f8] sm:$0xff]
        %v1512 = vld [vmem:[#allocation7 + $0x700] sm:$0xff]
        %v1513 = vld [vmem:[#allocation7 + $0x708] sm:$0xff]
        %v1514 = vld [vmem:[#allocation7 + $0x710] sm:$0xff]
        %v1515 = vld [vmem:[#allocation7 + $0x718] sm:$0xff]
        %v1516 = vld [vmem:[#allocation7 + $0x720] sm:$0xff]
        %v1517 = vld [vmem:[#allocation7 + $0x728] sm:$0xff]
        %v1518 = vld [vmem:[#allocation7 + $0x730] sm:$0xff]
        %v1519 = vld [vmem:[#allocation7 + $0x738] sm:$0xff]
        %v1520 = vld [vmem:[#allocation7 + $0x740] sm:$0xff]
        %v1521 = vld [vmem:[#allocation7 + $0x748] sm:$0xff]
        %v1522 = vld [vmem:[#allocation7 + $0x750] sm:$0xff]
        %v1523 = vld [vmem:[#allocation7 + $0x758] sm:$0xff]
        %v1524 = vld [vmem:[#allocation7 + $0x760] sm:$0xff]
        %v1525 = vld [vmem:[#allocation7 + $0x768] sm:$0xff]
        %v1526 = vld [vmem:[#allocation7 + $0x770] sm:$0xff]
        %v1527 = vld [vmem:[#allocation7 + $0x778] sm:$0xff]
        %v1528 = vld [vmem:[#allocation7 + $0x780] sm:$0xff]
        %v1529 = vld [vmem:[#allocation7 + $0x788] sm:$0xff]
        %v1530 = vld [vmem:[#allocation7 + $0x790] sm:$0xff]
        %v1531 = vld [vmem:[#allocation7 + $0x798] sm:$0xff]
        %v1532 = vld [vmem:[#allocation7 + $0x7a0] sm:$0xff]
        %v1533 = vld [vmem:[#allocation7 + $0x7a8] sm:$0xff]
        %v1534 = vld [vmem:[#allocation7 + $0x7b0] sm:$0xff]
        %v1535 = vld [vmem:[#allocation7 + $0x7b8] sm:$0xff]
        %v1536 = vld [vmem:[#allocation7 + $0x7c0] sm:$0xff]
        %v1537 = vld [vmem:[#allocation7 + $0x7c8] sm:$0xff]
        %v1538 = vld [vmem:[#allocation7 + $0x7d0] sm:$0xff]
        %v1539 = vld [vmem:[#allocation7 + $0x7d8] sm:$0xff]
        %v1540 = vld [vmem:[#allocation7 + $0x7e0] sm:$0xff]
        %v1541 = vld [vmem:[#allocation7 + $0x7e8] sm:$0xff]
        %v1542 = vld [vmem:[#allocation7 + $0x7f0] sm:$0xff]
        %v1543 = vld [vmem:[#allocation7 + $0x7f8] sm:$0xff]
        %v1544 = vld [vmem:[#allocation7 + $0x800] sm:$0xff]
        %v1545 = vld [vmem:[#allocation7 + $0x808] sm:$0xff]
        %v1546 = vld [vmem:[#allocation7 + $0x810] sm:$0xff]
        %v1547 = vld [vmem:[#allocation7 + $0x818] sm:$0xff]
        %v1548 = vld [vmem:[#allocation7 + $0x820] sm:$0xff]
        %v1549 = vld [vmem:[#allocation7 + $0x828] sm:$0xff]
        %v1550 = vld [vmem:[#allocation7 + $0x830] sm:$0xff]
        %v1551 = vld [vmem:[#allocation7 + $0x838] sm:$0xff]
        %v1552 = vld [vmem:[#allocation7 + $0x840] sm:$0xff]
        %v1553 = vld [vmem:[#allocation7 + $0x848] sm:$0xff]
        %v1554 = vld [vmem:[#allocation7 + $0x850] sm:$0xff]
        %v1555 = vld [vmem:[#allocation7 + $0x858] sm:$0xff]
        %v1556 = vld [vmem:[#allocation7 + $0x860] sm:$0xff]
        %v1557 = vld [vmem:[#allocation7 + $0x868] sm:$0xff]
        %v1558 = vld [vmem:[#allocation7 + $0x870] sm:$0xff]
        %v1559 = vld [vmem:[#allocation7 + $0x878] sm:$0xff]
        %v1560 = vld [vmem:[#allocation7 + $0x880] sm:$0xff]
        %v1561 = vld [vmem:[#allocation7 + $0x888] sm:$0xff]
        %v1562 = vld [vmem:[#allocation7 + $0x890] sm:$0xff]
        %v1563 = vld [vmem:[#allocation7 + $0x898] sm:$0xff]
        %v1564 = vld [vmem:[#allocation7 + $0x8a0] sm:$0xff]
        %v1565 = vld [vmem:[#allocation7 + $0x8a8] sm:$0xff]
        %v1566 = vld [vmem:[#allocation7 + $0x8b0] sm:$0xff]
        %v1567 = vld [vmem:[#allocation7 + $0x8b8] sm:$0xff]
        %v1568 = vld [vmem:[#allocation7 + $0x8c0] sm:$0xff]
        %v1569 = vld [vmem:[#allocation7 + $0x8c8] sm:$0xff]
        %v1570 = vld [vmem:[#allocation7 + $0x8d0] sm:$0xff]
        %v1571 = vld [vmem:[#allocation7 + $0x8d8] sm:$0xff]
        %v1572 = vld [vmem:[#allocation7 + $0x8e0] sm:$0xff]
        %v1573 = vld [vmem:[#allocation7 + $0x8e8] sm:$0xff]
        %v1574 = vld [vmem:[#allocation7 + $0x8f0] sm:$0xff]
        %v1575 = vld [vmem:[#allocation7 + $0x8f8] sm:$0xff]
        %v1576 = vld [vmem:[#allocation8] sm:$0x3f]
        %v1578 = vlaneseq
        %v1579 = vshrl.u32 %v1578, 7
        %v1580 = vsub.s32 0, %v1579
        %v1581 = vrot.slane %v1576, %v1580
        %v1582 = vlaneseq
        %v1583 = vshrl.u32 %v1582, 7
        %v1584 = vsub.s32 1, %v1583
        %v1585 = vrot.slane %v1576, %v1584
        %v1586 = vlaneseq
        %v1587 = vshrl.u32 %v1586, 7
        %v1588 = vsub.s32 2, %v1587
        %v1589 = vrot.slane %v1576, %v1588
        %v1590 = vlaneseq
        %v1591 = vshrl.u32 %v1590, 7
        %v1592 = vsub.s32 3, %v1591
        %v1593 = vrot.slane %v1576, %v1592
        %v1594 = vlaneseq
        %v1595 = vshrl.u32 %v1594, 7
        %v1596 = vsub.s32 4, %v1595
        %v1597 = vrot.slane %v1576, %v1596
        %v1598 = vlaneseq
        %v1599 = vshrl.u32 %v1598, 7
        %v1600 = vsub.s32 5, %v1599
        %v1601 = vrot.slane %v1576, %v1600
        %v1896 = vunpack.c.l.b16 %v1288
        %v1897 = vunpack.c.h.b16 %v1288
        %v1898 = vunpack.c.l.b16 %v1289
        %v1899 = vunpack.c.h.b16 %v1289
        %v1900 = vunpack.c.l.b16 %v1290
        %v1901 = vunpack.c.h.b16 %v1290
        %v1902 = vunpack.c.l.b16 %v1291
        %v1903 = vunpack.c.h.b16 %v1291
        %v1904 = vunpack.c.l.b16 %v1292
        %v1905 = vunpack.c.h.b16 %v1292
        %v1906 = vunpack.c.l.b16 %v1293
        %v1907 = vunpack.c.h.b16 %v1293
        %v1908 = vunpack.c.l.b16 %v1294
        %v1909 = vunpack.c.h.b16 %v1294
        %v1910 = vunpack.c.l.b16 %v1295
        %v1911 = vunpack.c.h.b16 %v1295
        %v1912 = vunpack.c.l.b16 %v1296
        %v1913 = vunpack.c.h.b16 %v1296
        %v1914 = vunpack.c.l.b16 %v1297
        %v1915 = vunpack.c.h.b16 %v1297
        %v1916 = vunpack.c.l.b16 %v1298
        %v1917 = vunpack.c.h.b16 %v1298
        %v1918 = vunpack.c.l.b16 %v1299
        %v1919 = vunpack.c.h.b16 %v1299
        %v1920 = vunpack.c.l.b16 %v1300
        %v1921 = vunpack.c.h.b16 %v1300
        %v1922 = vunpack.c.l.b16 %v1301
        %v1923 = vunpack.c.h.b16 %v1301
        %v1924 = vunpack.c.l.b16 %v1302
        %v1925 = vunpack.c.h.b16 %v1302
        %v1926 = vunpack.c.l.b16 %v1303
        %v1927 = vunpack.c.h.b16 %v1303
        %v1928 = vunpack.c.l.b16 %v1304
        %v1929 = vunpack.c.h.b16 %v1304
        %v1930 = vunpack.c.l.b16 %v1305
        %v1931 = vunpack.c.h.b16 %v1305
        %v1932 = vunpack.c.l.b16 %v1306
        %v1933 = vunpack.c.h.b16 %v1306
        %v1934 = vunpack.c.l.b16 %v1307
        %v1935 = vunpack.c.h.b16 %v1307
        %v1936 = vunpack.c.l.b16 %v1308
        %v1937 = vunpack.c.h.b16 %v1308
        %v1938 = vunpack.c.l.b16 %v1309
        %v1939 = vunpack.c.h.b16 %v1309
        %v1940 = vunpack.c.l.b16 %v1310
        %v1941 = vunpack.c.h.b16 %v1310
        %v1942 = vunpack.c.l.b16 %v1311
        %v1943 = vunpack.c.h.b16 %v1311
        %v1944 = vunpack.c.l.b16 %v1312
        %v1945 = vunpack.c.h.b16 %v1312
        %v1946 = vunpack.c.l.b16 %v1313
        %v1947 = vunpack.c.h.b16 %v1313
        %v1948 = vunpack.c.l.b16 %v1314
        %v1949 = vunpack.c.h.b16 %v1314
        %v1950 = vunpack.c.l.b16 %v1315
        %v1951 = vunpack.c.h.b16 %v1315
        %v1952 = vunpack.c.l.b16 %v1316
        %v1953 = vunpack.c.h.b16 %v1316
        %v1954 = vunpack.c.l.b16 %v1317
        %v1955 = vunpack.c.h.b16 %v1317
        %v1956 = vunpack.c.l.b16 %v1318
        %v1957 = vunpack.c.h.b16 %v1318
        %v1958 = vunpack.c.l.b16 %v1319
        %v1959 = vunpack.c.h.b16 %v1319
        %v1960 = vunpack.c.l.b16 %v1320
        %v1961 = vunpack.c.h.b16 %v1320
        %v1962 = vunpack.c.l.b16 %v1321
        %v1963 = vunpack.c.h.b16 %v1321
        %v1964 = vunpack.c.l.b16 %v1322
        %v1965 = vunpack.c.h.b16 %v1322
        %v1966 = vunpack.c.l.b16 %v1323
        %v1967 = vunpack.c.h.b16 %v1323
        %v1968 = vunpack.c.l.b16 %v1324
        %v1969 = vunpack.c.h.b16 %v1324
        %v1970 = vunpack.c.l.b16 %v1325
        %v1971 = vunpack.c.h.b16 %v1325
        %v1972 = vunpack.c.l.b16 %v1326
        %v1973 = vunpack.c.h.b16 %v1326
        %v1974 = vunpack.c.l.b16 %v1327
        %v1975 = vunpack.c.h.b16 %v1327
        %v1976 = vunpack.c.l.b16 %v1328
        %v1977 = vunpack.c.h.b16 %v1328
        %v1978 = vunpack.c.l.b16 %v1329
        %v1979 = vunpack.c.h.b16 %v1329
        %v1980 = vunpack.c.l.b16 %v1330
        %v1981 = vunpack.c.h.b16 %v1330
        %v1982 = vunpack.c.l.b16 %v1331
        %v1983 = vunpack.c.h.b16 %v1331
        %v1984 = vunpack.c.l.b16 %v1332
        %v1985 = vunpack.c.h.b16 %v1332
        %v1986 = vunpack.c.l.b16 %v1333
        %v1987 = vunpack.c.h.b16 %v1333
        %v1988 = vunpack.c.l.b16 %v1334
        %v1989 = vunpack.c.h.b16 %v1334
        %v1990 = vunpack.c.l.b16 %v1335
        %v1991 = vunpack.c.h.b16 %v1335
        %v1992 = vunpack.c.l.b16 %v1336
        %v1993 = vunpack.c.h.b16 %v1336
        %v1994 = vunpack.c.l.b16 %v1337
        %v1995 = vunpack.c.h.b16 %v1337
        %v1996 = vunpack.c.l.b16 %v1338
        %v1997 = vunpack.c.h.b16 %v1338
        %v1998 = vunpack.c.l.b16 %v1339
        %v1999 = vunpack.c.h.b16 %v1339
        %v2000 = vunpack.c.l.b16 %v1340
        %v2001 = vunpack.c.h.b16 %v1340
        %v2002 = vunpack.c.l.b16 %v1341
        %v2003 = vunpack.c.h.b16 %v1341
        %v2004 = vunpack.c.l.b16 %v1342
        %v2005 = vunpack.c.h.b16 %v1342
        %v2006 = vunpack.c.l.b16 %v1343
        %v2007 = vunpack.c.h.b16 %v1343
        %v2008 = vunpack.c.l.b16 %v1344
        %v2009 = vunpack.c.h.b16 %v1344
        %v2010 = vunpack.c.l.b16 %v1345
        %v2011 = vunpack.c.h.b16 %v1345
        %v2012 = vunpack.c.l.b16 %v1346
        %v2013 = vunpack.c.h.b16 %v1346
        %v2014 = vunpack.c.l.b16 %v1347
        %v2015 = vunpack.c.h.b16 %v1347
        %v2016 = vunpack.c.l.b16 %v1348
        %v2017 = vunpack.c.h.b16 %v1348
        %v2018 = vunpack.c.l.b16 %v1349
        %v2019 = vunpack.c.h.b16 %v1349
        %v2020 = vunpack.c.l.b16 %v1350
        %v2021 = vunpack.c.h.b16 %v1350
        %v2022 = vunpack.c.l.b16 %v1351
        %v2023 = vunpack.c.h.b16 %v1351
        %v2024 = vunpack.c.l.b16 %v1352
        %v2025 = vunpack.c.h.b16 %v1352
        %v2026 = vunpack.c.l.b16 %v1353
        %v2027 = vunpack.c.h.b16 %v1353
        %v2028 = vunpack.c.l.b16 %v1354
        %v2029 = vunpack.c.h.b16 %v1354
        %v2030 = vunpack.c.l.b16 %v1355
        %v2031 = vunpack.c.h.b16 %v1355
        %v2032 = vunpack.c.l.b16 %v1356
        %v2033 = vunpack.c.h.b16 %v1356
        %v2034 = vunpack.c.l.b16 %v1357
        %v2035 = vunpack.c.h.b16 %v1357
        %v2036 = vunpack.c.l.b16 %v1358
        %v2037 = vunpack.c.h.b16 %v1358
        %v2038 = vunpack.c.l.b16 %v1359
        %v2039 = vunpack.c.h.b16 %v1359
        %v2040 = vunpack.c.l.b16 %v1360
        %v2041 = vunpack.c.h.b16 %v1360
        %v2042 = vunpack.c.l.b16 %v1361
        %v2043 = vunpack.c.h.b16 %v1361
        %v2044 = vunpack.c.l.b16 %v1362
        %v2045 = vunpack.c.h.b16 %v1362
        %v2046 = vunpack.c.l.b16 %v1363
        %v2047 = vunpack.c.h.b16 %v1363
        %v2048 = vunpack.c.l.b16 %v1364
        %v2049 = vunpack.c.h.b16 %v1364
        %v2050 = vunpack.c.l.b16 %v1365
        %v2051 = vunpack.c.h.b16 %v1365
        %v2052 = vunpack.c.l.b16 %v1366
        %v2053 = vunpack.c.h.b16 %v1366
        %v2054 = vunpack.c.l.b16 %v1367
        %v2055 = vunpack.c.h.b16 %v1367
        %v2056 = vunpack.c.l.b16 %v1368
        %v2057 = vunpack.c.h.b16 %v1368
        %v2058 = vunpack.c.l.b16 %v1369
        %v2059 = vunpack.c.h.b16 %v1369
        %v2060 = vunpack.c.l.b16 %v1370
        %v2061 = vunpack.c.h.b16 %v1370
        %v2062 = vunpack.c.l.b16 %v1371
        %v2063 = vunpack.c.h.b16 %v1371
        %v2064 = vunpack.c.l.b16 %v1372
        %v2065 = vunpack.c.h.b16 %v1372
        %v2066 = vunpack.c.l.b16 %v1373
        %v2067 = vunpack.c.h.b16 %v1373
        %v2068 = vunpack.c.l.b16 %v1374
        %v2069 = vunpack.c.h.b16 %v1374
        %v2070 = vunpack.c.l.b16 %v1375
        %v2071 = vunpack.c.h.b16 %v1375
        %v2072 = vunpack.c.l.b16 %v1376
        %v2073 = vunpack.c.h.b16 %v1376
        %v2074 = vunpack.c.l.b16 %v1377
        %v2075 = vunpack.c.h.b16 %v1377
        %v2076 = vunpack.c.l.b16 %v1378
        %v2077 = vunpack.c.h.b16 %v1378
        %v2078 = vunpack.c.l.b16 %v1379
        %v2079 = vunpack.c.h.b16 %v1379
        %v2080 = vunpack.c.l.b16 %v1380
        %v2081 = vunpack.c.h.b16 %v1380
        %v2082 = vunpack.c.l.b16 %v1381
        %v2083 = vunpack.c.h.b16 %v1381
        %v2084 = vunpack.c.l.b16 %v1382
        %v2085 = vunpack.c.h.b16 %v1382
        %v2086 = vunpack.c.l.b16 %v1383
        %v2087 = vunpack.c.h.b16 %v1383
        %v2088 = vunpack.c.l.b16 %v1384
        %v2089 = vunpack.c.h.b16 %v1384
        %v2090 = vunpack.c.l.b16 %v1385
        %v2091 = vunpack.c.h.b16 %v1385
        %v2092 = vunpack.c.l.b16 %v1386
        %v2093 = vunpack.c.h.b16 %v1386
        %v2094 = vunpack.c.l.b16 %v1387
        %v2095 = vunpack.c.h.b16 %v1387
        %v2096 = vunpack.c.l.b16 %v1388
        %v2097 = vunpack.c.h.b16 %v1388
        %v2098 = vunpack.c.l.b16 %v1389
        %v2099 = vunpack.c.h.b16 %v1389
        %v2100 = vunpack.c.l.b16 %v1390
        %v2101 = vunpack.c.h.b16 %v1390
        %v2102 = vunpack.c.l.b16 %v1391
        %v2103 = vunpack.c.h.b16 %v1391
        %v2104 = vunpack.c.l.b16 %v1392
        %v2105 = vunpack.c.h.b16 %v1392
        %v2106 = vunpack.c.l.b16 %v1393
        %v2107 = vunpack.c.h.b16 %v1393
        %v2108 = vunpack.c.l.b16 %v1394
        %v2109 = vunpack.c.h.b16 %v1394
        %v2110 = vunpack.c.l.b16 %v1395
        %v2111 = vunpack.c.h.b16 %v1395
        %v2112 = vunpack.c.l.b16 %v1396
        %v2113 = vunpack.c.h.b16 %v1396
        %v2114 = vunpack.c.l.b16 %v1397
        %v2115 = vunpack.c.h.b16 %v1397
        %v2116 = vunpack.c.l.b16 %v1398
        %v2117 = vunpack.c.h.b16 %v1398
        %v2118 = vunpack.c.l.b16 %v1399
        %v2119 = vunpack.c.h.b16 %v1399
        %v2120 = vunpack.c.l.b16 %v1400
        %v2121 = vunpack.c.h.b16 %v1400
        %v2122 = vunpack.c.l.b16 %v1401
        %v2123 = vunpack.c.h.b16 %v1401
        %v2124 = vunpack.c.l.b16 %v1402
        %v2125 = vunpack.c.h.b16 %v1402
        %v2126 = vunpack.c.l.b16 %v1403
        %v2127 = vunpack.c.h.b16 %v1403
        %v2128 = vunpack.c.l.b16 %v1404
        %v2129 = vunpack.c.h.b16 %v1404
        %v2130 = vunpack.c.l.b16 %v1405
        %v2131 = vunpack.c.h.b16 %v1405
        %v2132 = vunpack.c.l.b16 %v1406
        %v2133 = vunpack.c.h.b16 %v1406
        %v2134 = vunpack.c.l.b16 %v1407
        %v2135 = vunpack.c.h.b16 %v1407
        %v2136 = vunpack.c.l.b16 %v1408
        %v2137 = vunpack.c.h.b16 %v1408
        %v2138 = vunpack.c.l.b16 %v1409
        %v2139 = vunpack.c.h.b16 %v1409
        %v2140 = vunpack.c.l.b16 %v1410
        %v2141 = vunpack.c.h.b16 %v1410
        %v2142 = vunpack.c.l.b16 %v1411
        %v2143 = vunpack.c.h.b16 %v1411
        %v2144 = vunpack.c.l.b16 %v1412
        %v2145 = vunpack.c.h.b16 %v1412
        %v2146 = vunpack.c.l.b16 %v1413
        %v2147 = vunpack.c.h.b16 %v1413
        %v2148 = vunpack.c.l.b16 %v1414
        %v2149 = vunpack.c.h.b16 %v1414
        %v2150 = vunpack.c.l.b16 %v1415
        %v2151 = vunpack.c.h.b16 %v1415
        %v2152 = vunpack.c.l.b16 %v1416
        %v2153 = vunpack.c.h.b16 %v1416
        %v2154 = vunpack.c.l.b16 %v1417
        %v2155 = vunpack.c.h.b16 %v1417
        %v2156 = vunpack.c.l.b16 %v1418
        %v2157 = vunpack.c.h.b16 %v1418
        %v2158 = vunpack.c.l.b16 %v1419
        %v2159 = vunpack.c.h.b16 %v1419
        %v2160 = vunpack.c.l.b16 %v1420
        %v2161 = vunpack.c.h.b16 %v1420
        %v2162 = vunpack.c.l.b16 %v1421
        %v2163 = vunpack.c.h.b16 %v1421
        %v2164 = vunpack.c.l.b16 %v1422
        %v2165 = vunpack.c.h.b16 %v1422
        %v2166 = vunpack.c.l.b16 %v1423
        %v2167 = vunpack.c.h.b16 %v1423
        %v2168 = vunpack.c.l.b16 %v1424
        %v2169 = vunpack.c.h.b16 %v1424
        %v2170 = vunpack.c.l.b16 %v1425
        %v2171 = vunpack.c.h.b16 %v1425
        %v2172 = vunpack.c.l.b16 %v1426
        %v2173 = vunpack.c.h.b16 %v1426
        %v2174 = vunpack.c.l.b16 %v1427
        %v2175 = vunpack.c.h.b16 %v1427
        %v2176 = vunpack.c.l.b16 %v1428
        %v2177 = vunpack.c.h.b16 %v1428
        %v2178 = vunpack.c.l.b16 %v1429
        %v2179 = vunpack.c.h.b16 %v1429
        %v2180 = vunpack.c.l.b16 %v1430
        %v2181 = vunpack.c.h.b16 %v1430
        %v2182 = vunpack.c.l.b16 %v1431
        %v2183 = vunpack.c.h.b16 %v1431
        %v2184 = vunpack.c.l.b16 %v1432
        %v2185 = vunpack.c.h.b16 %v1432
        %v2186 = vunpack.c.l.b16 %v1433
        %v2187 = vunpack.c.h.b16 %v1433
        %v2188 = vunpack.c.l.b16 %v1434
        %v2189 = vunpack.c.h.b16 %v1434
        %v2190 = vunpack.c.l.b16 %v1435
        %v2191 = vunpack.c.h.b16 %v1435
        %v2192 = vunpack.c.l.b16 %v1436
        %v2193 = vunpack.c.h.b16 %v1436
        %v2194 = vunpack.c.l.b16 %v1437
        %v2195 = vunpack.c.h.b16 %v1437
        %v2196 = vunpack.c.l.b16 %v1438
        %v2197 = vunpack.c.h.b16 %v1438
        %v2198 = vunpack.c.l.b16 %v1439
        %v2199 = vunpack.c.h.b16 %v1439
        %v2200 = vunpack.c.l.b16 %v1440
        %v2201 = vunpack.c.h.b16 %v1440
        %v2202 = vunpack.c.l.b16 %v1441
        %v2203 = vunpack.c.h.b16 %v1441
        %v2204 = vunpack.c.l.b16 %v1442
        %v2205 = vunpack.c.h.b16 %v1442
        %v2206 = vunpack.c.l.b16 %v1443
        %v2207 = vunpack.c.h.b16 %v1443
        %v2208 = vunpack.c.l.b16 %v1444
        %v2209 = vunpack.c.h.b16 %v1444
        %v2210 = vunpack.c.l.b16 %v1445
        %v2211 = vunpack.c.h.b16 %v1445
        %v2212 = vunpack.c.l.b16 %v1446
        %v2213 = vunpack.c.h.b16 %v1446
        %v2214 = vunpack.c.l.b16 %v1447
        %v2215 = vunpack.c.h.b16 %v1447
        %v2216 = vunpack.c.l.b16 %v1448
        %v2217 = vunpack.c.h.b16 %v1448
        %v2218 = vunpack.c.l.b16 %v1449
        %v2219 = vunpack.c.h.b16 %v1449
        %v2220 = vunpack.c.l.b16 %v1450
        %v2221 = vunpack.c.h.b16 %v1450
        %v2222 = vunpack.c.l.b16 %v1451
        %v2223 = vunpack.c.h.b16 %v1451
        %v2224 = vunpack.c.l.b16 %v1452
        %v2225 = vunpack.c.h.b16 %v1452
        %v2226 = vunpack.c.l.b16 %v1453
        %v2227 = vunpack.c.h.b16 %v1453
        %v2228 = vunpack.c.l.b16 %v1454
        %v2229 = vunpack.c.h.b16 %v1454
        %v2230 = vunpack.c.l.b16 %v1455
        %v2231 = vunpack.c.h.b16 %v1455
        %v2232 = vunpack.c.l.b16 %v1456
        %v2233 = vunpack.c.h.b16 %v1456
        %v2234 = vunpack.c.l.b16 %v1457
        %v2235 = vunpack.c.h.b16 %v1457
        %v2236 = vunpack.c.l.b16 %v1458
        %v2237 = vunpack.c.h.b16 %v1458
        %v2238 = vunpack.c.l.b16 %v1459
        %v2239 = vunpack.c.h.b16 %v1459
        %v2240 = vunpack.c.l.b16 %v1460
        %v2241 = vunpack.c.h.b16 %v1460
        %v2242 = vunpack.c.l.b16 %v1461
        %v2243 = vunpack.c.h.b16 %v1461
        %v2244 = vunpack.c.l.b16 %v1462
        %v2245 = vunpack.c.h.b16 %v1462
        %v2246 = vunpack.c.l.b16 %v1463
        %v2247 = vunpack.c.h.b16 %v1463
        %v2248 = vunpack.c.l.b16 %v1464
        %v2249 = vunpack.c.h.b16 %v1464
        %v2250 = vunpack.c.l.b16 %v1465
        %v2251 = vunpack.c.h.b16 %v1465
        %v2252 = vunpack.c.l.b16 %v1466
        %v2253 = vunpack.c.h.b16 %v1466
        %v2254 = vunpack.c.l.b16 %v1467
        %v2255 = vunpack.c.h.b16 %v1467
        %v2256 = vunpack.c.l.b16 %v1468
        %v2257 = vunpack.c.h.b16 %v1468
        %v2258 = vunpack.c.l.b16 %v1469
        %v2259 = vunpack.c.h.b16 %v1469
        %v2260 = vunpack.c.l.b16 %v1470
        %v2261 = vunpack.c.h.b16 %v1470
        %v2262 = vunpack.c.l.b16 %v1471
        %v2263 = vunpack.c.h.b16 %v1471
        %v2264 = vunpack.c.l.b16 %v1472
        %v2265 = vunpack.c.h.b16 %v1472
        %v2266 = vunpack.c.l.b16 %v1473
        %v2267 = vunpack.c.h.b16 %v1473
        %v2268 = vunpack.c.l.b16 %v1474
        %v2269 = vunpack.c.h.b16 %v1474
        %v2270 = vunpack.c.l.b16 %v1475
        %v2271 = vunpack.c.h.b16 %v1475
        %v2272 = vunpack.c.l.b16 %v1476
        %v2273 = vunpack.c.h.b16 %v1476
        %v2274 = vunpack.c.l.b16 %v1477
        %v2275 = vunpack.c.h.b16 %v1477
        %v2276 = vunpack.c.l.b16 %v1478
        %v2277 = vunpack.c.h.b16 %v1478
        %v2278 = vunpack.c.l.b16 %v1479
        %v2279 = vunpack.c.h.b16 %v1479
        %v2280 = vunpack.c.l.b16 %v1480
        %v2281 = vunpack.c.h.b16 %v1480
        %v2282 = vunpack.c.l.b16 %v1481
        %v2283 = vunpack.c.h.b16 %v1481
        %v2284 = vunpack.c.l.b16 %v1482
        %v2285 = vunpack.c.h.b16 %v1482
        %v2286 = vunpack.c.l.b16 %v1483
        %v2287 = vunpack.c.h.b16 %v1483
        %v2288 = vunpack.c.l.b16 %v1484
        %v2289 = vunpack.c.h.b16 %v1484
        %v2290 = vunpack.c.l.b16 %v1485
        %v2291 = vunpack.c.h.b16 %v1485
        %v2292 = vunpack.c.l.b16 %v1486
        %v2293 = vunpack.c.h.b16 %v1486
        %v2294 = vunpack.c.l.b16 %v1487
        %v2295 = vunpack.c.h.b16 %v1487
        %v2296 = vunpack.c.l.b16 %v1488
        %v2297 = vunpack.c.h.b16 %v1488
        %v2298 = vunpack.c.l.b16 %v1489
        %v2299 = vunpack.c.h.b16 %v1489
        %v2300 = vunpack.c.l.b16 %v1490
        %v2301 = vunpack.c.h.b16 %v1490
        %v2302 = vunpack.c.l.b16 %v1491
        %v2303 = vunpack.c.h.b16 %v1491
        %v2304 = vunpack.c.l.b16 %v1492
        %v2305 = vunpack.c.h.b16 %v1492
        %v2306 = vunpack.c.l.b16 %v1493
        %v2307 = vunpack.c.h.b16 %v1493
        %v2308 = vunpack.c.l.b16 %v1494
        %v2309 = vunpack.c.h.b16 %v1494
        %v2310 = vunpack.c.l.b16 %v1495
        %v2311 = vunpack.c.h.b16 %v1495
        %v2312 = vunpack.c.l.b16 %v1496
        %v2313 = vunpack.c.h.b16 %v1496
        %v2314 = vunpack.c.l.b16 %v1497
        %v2315 = vunpack.c.h.b16 %v1497
        %v2316 = vunpack.c.l.b16 %v1498
        %v2317 = vunpack.c.h.b16 %v1498
        %v2318 = vunpack.c.l.b16 %v1499
        %v2319 = vunpack.c.h.b16 %v1499
        %v2320 = vunpack.c.l.b16 %v1500
        %v2321 = vunpack.c.h.b16 %v1500
        %v2322 = vunpack.c.l.b16 %v1501
        %v2323 = vunpack.c.h.b16 %v1501
        %v2324 = vunpack.c.l.b16 %v1502
        %v2325 = vunpack.c.h.b16 %v1502
        %v2326 = vunpack.c.l.b16 %v1503
        %v2327 = vunpack.c.h.b16 %v1503
        %v2328 = vunpack.c.l.b16 %v1504
        %v2329 = vunpack.c.h.b16 %v1504
        %v2330 = vunpack.c.l.b16 %v1505
        %v2331 = vunpack.c.h.b16 %v1505
        %v2332 = vunpack.c.l.b16 %v1506
        %v2333 = vunpack.c.h.b16 %v1506
        %v2334 = vunpack.c.l.b16 %v1507
        %v2335 = vunpack.c.h.b16 %v1507
        %v2336 = vunpack.c.l.b16 %v1508
        %v2337 = vunpack.c.h.b16 %v1508
        %v2338 = vunpack.c.l.b16 %v1509
        %v2339 = vunpack.c.h.b16 %v1509
        %v2340 = vunpack.c.l.b16 %v1510
        %v2341 = vunpack.c.h.b16 %v1510
        %v2342 = vunpack.c.l.b16 %v1511
        %v2343 = vunpack.c.h.b16 %v1511
        %v2344 = vunpack.c.l.b16 %v1512
        %v2345 = vunpack.c.h.b16 %v1512
        %v2346 = vunpack.c.l.b16 %v1513
        %v2347 = vunpack.c.h.b16 %v1513
        %v2348 = vunpack.c.l.b16 %v1514
        %v2349 = vunpack.c.h.b16 %v1514
        %v2350 = vunpack.c.l.b16 %v1515
        %v2351 = vunpack.c.h.b16 %v1515
        %v2352 = vunpack.c.l.b16 %v1516
        %v2353 = vunpack.c.h.b16 %v1516
        %v2354 = vunpack.c.l.b16 %v1517
        %v2355 = vunpack.c.h.b16 %v1517
        %v2356 = vunpack.c.l.b16 %v1518
        %v2357 = vunpack.c.h.b16 %v1518
        %v2358 = vunpack.c.l.b16 %v1519
        %v2359 = vunpack.c.h.b16 %v1519
        %v2360 = vunpack.c.l.b16 %v1520
        %v2361 = vunpack.c.h.b16 %v1520
        %v2362 = vunpack.c.l.b16 %v1521
        %v2363 = vunpack.c.h.b16 %v1521
        %v2364 = vunpack.c.l.b16 %v1522
        %v2365 = vunpack.c.h.b16 %v1522
        %v2366 = vunpack.c.l.b16 %v1523
        %v2367 = vunpack.c.h.b16 %v1523
        %v2368 = vunpack.c.l.b16 %v1524
        %v2369 = vunpack.c.h.b16 %v1524
        %v2370 = vunpack.c.l.b16 %v1525
        %v2371 = vunpack.c.h.b16 %v1525
        %v2372 = vunpack.c.l.b16 %v1526
        %v2373 = vunpack.c.h.b16 %v1526
        %v2374 = vunpack.c.l.b16 %v1527
        %v2375 = vunpack.c.h.b16 %v1527
        %v2376 = vunpack.c.l.b16 %v1528
        %v2377 = vunpack.c.h.b16 %v1528
        %v2378 = vunpack.c.l.b16 %v1529
        %v2379 = vunpack.c.h.b16 %v1529
        %v2380 = vunpack.c.l.b16 %v1530
        %v2381 = vunpack.c.h.b16 %v1530
        %v2382 = vunpack.c.l.b16 %v1531
        %v2383 = vunpack.c.h.b16 %v1531
        %v2384 = vunpack.c.l.b16 %v1532
        %v2385 = vunpack.c.h.b16 %v1532
        %v2386 = vunpack.c.l.b16 %v1533
        %v2387 = vunpack.c.h.b16 %v1533
        %v2388 = vunpack.c.l.b16 %v1534
        %v2389 = vunpack.c.h.b16 %v1534
        %v2390 = vunpack.c.l.b16 %v1535
        %v2391 = vunpack.c.h.b16 %v1535
        %v2392 = vunpack.c.l.b16 %v1536
        %v2393 = vunpack.c.h.b16 %v1536
        %v2394 = vunpack.c.l.b16 %v1537
        %v2395 = vunpack.c.h.b16 %v1537
        %v2396 = vunpack.c.l.b16 %v1538
        %v2397 = vunpack.c.h.b16 %v1538
        %v2398 = vunpack.c.l.b16 %v1539
        %v2399 = vunpack.c.h.b16 %v1539
        %v2400 = vunpack.c.l.b16 %v1540
        %v2401 = vunpack.c.h.b16 %v1540
        %v2402 = vunpack.c.l.b16 %v1541
        %v2403 = vunpack.c.h.b16 %v1541
        %v2404 = vunpack.c.l.b16 %v1542
        %v2405 = vunpack.c.h.b16 %v1542
        %v2406 = vunpack.c.l.b16 %v1543
        %v2407 = vunpack.c.h.b16 %v1543
        %v2408 = vunpack.c.l.b16 %v1544
        %v2409 = vunpack.c.h.b16 %v1544
        %v2410 = vunpack.c.l.b16 %v1545
        %v2411 = vunpack.c.h.b16 %v1545
        %v2412 = vunpack.c.l.b16 %v1546
        %v2413 = vunpack.c.h.b16 %v1546
        %v2414 = vunpack.c.l.b16 %v1547
        %v2415 = vunpack.c.h.b16 %v1547
        %v2416 = vunpack.c.l.b16 %v1548
        %v2417 = vunpack.c.h.b16 %v1548
        %v2418 = vunpack.c.l.b16 %v1549
        %v2419 = vunpack.c.h.b16 %v1549
        %v2420 = vunpack.c.l.b16 %v1550
        %v2421 = vunpack.c.h.b16 %v1550
        %v2422 = vunpack.c.l.b16 %v1551
        %v2423 = vunpack.c.h.b16 %v1551
        %v2424 = vunpack.c.l.b16 %v1552
        %v2425 = vunpack.c.h.b16 %v1552
        %v2426 = vunpack.c.l.b16 %v1553
        %v2427 = vunpack.c.h.b16 %v1553
        %v2428 = vunpack.c.l.b16 %v1554
        %v2429 = vunpack.c.h.b16 %v1554
        %v2430 = vunpack.c.l.b16 %v1555
        %v2431 = vunpack.c.h.b16 %v1555
        %v2432 = vunpack.c.l.b16 %v1556
        %v2433 = vunpack.c.h.b16 %v1556
        %v2434 = vunpack.c.l.b16 %v1557
        %v2435 = vunpack.c.h.b16 %v1557
        %v2436 = vunpack.c.l.b16 %v1558
        %v2437 = vunpack.c.h.b16 %v1558
        %v2438 = vunpack.c.l.b16 %v1559
        %v2439 = vunpack.c.h.b16 %v1559
        %v2440 = vunpack.c.l.b16 %v1560
        %v2441 = vunpack.c.h.b16 %v1560
        %v2442 = vunpack.c.l.b16 %v1561
        %v2443 = vunpack.c.h.b16 %v1561
        %v2444 = vunpack.c.l.b16 %v1562
        %v2445 = vunpack.c.h.b16 %v1562
        %v2446 = vunpack.c.l.b16 %v1563
        %v2447 = vunpack.c.h.b16 %v1563
        %v2448 = vunpack.c.l.b16 %v1564
        %v2449 = vunpack.c.h.b16 %v1564
        %v2450 = vunpack.c.l.b16 %v1565
        %v2451 = vunpack.c.h.b16 %v1565
        %v2452 = vunpack.c.l.b16 %v1566
        %v2453 = vunpack.c.h.b16 %v1566
        %v2454 = vunpack.c.l.b16 %v1567
        %v2455 = vunpack.c.h.b16 %v1567
        %v2456 = vunpack.c.l.b16 %v1568
        %v2457 = vunpack.c.h.b16 %v1568
        %v2458 = vunpack.c.l.b16 %v1569
        %v2459 = vunpack.c.h.b16 %v1569
        %v2460 = vunpack.c.l.b16 %v1570
        %v2461 = vunpack.c.h.b16 %v1570
        %v2462 = vunpack.c.l.b16 %v1571
        %v2463 = vunpack.c.h.b16 %v1571
        %v2464 = vunpack.c.l.b16 %v1572
        %v2465 = vunpack.c.h.b16 %v1572
        %v2466 = vunpack.c.l.b16 %v1573
        %v2467 = vunpack.c.h.b16 %v1573
        %v2468 = vunpack.c.l.b16 %v1574
        %v2469 = vunpack.c.h.b16 %v1574
        %v2470 = vunpack.c.l.b16 %v1575
        %v2471 = vunpack.c.h.b16 %v1575
        %v2472 = vpack.c.b16 %v1902, %v1896
        %v2473 = vpack.c.b16 %v1903, %v1897
        %v2474 = vpack.c.b16 %v1904, %v1898
        %v2475 = vpack.c.b16 %v1905, %v1899
        %v2476 = vpack.c.b16 %v1906, %v1900
        %v2477 = vpack.c.b16 %v1907, %v1901
        %v2478 = vpack.c.b16 %v1914, %v1908
        %v2479 = vpack.c.b16 %v1915, %v1909
        %v2480 = vpack.c.b16 %v1916, %v1910
        %v2481 = vpack.c.b16 %v1917, %v1911
        %v2482 = vpack.c.b16 %v1918, %v1912
        %v2483 = vpack.c.b16 %v1919, %v1913
        %v2484 = vpack.c.b16 %v1926, %v1920
        %v2485 = vpack.c.b16 %v1927, %v1921
        %v2486 = vpack.c.b16 %v1928, %v1922
        %v2487 = vpack.c.b16 %v1929, %v1923
        %v2488 = vpack.c.b16 %v1930, %v1924
        %v2489 = vpack.c.b16 %v1931, %v1925
        %v2490 = vpack.c.b16 %v1938, %v1932
        %v2491 = vpack.c.b16 %v1939, %v1933
        %v2492 = vpack.c.b16 %v1940, %v1934
        %v2493 = vpack.c.b16 %v1941, %v1935
        %v2494 = vpack.c.b16 %v1942, %v1936
        %v2495 = vpack.c.b16 %v1943, %v1937
        %v2496 = vpack.c.b16 %v1950, %v1944
        %v2497 = vpack.c.b16 %v1951, %v1945
        %v2498 = vpack.c.b16 %v1952, %v1946
        %v2499 = vpack.c.b16 %v1953, %v1947
        %v2500 = vpack.c.b16 %v1954, %v1948
        %v2501 = vpack.c.b16 %v1955, %v1949
        %v2502 = vpack.c.b16 %v1962, %v1956
        %v2503 = vpack.c.b16 %v1963, %v1957
        %v2504 = vpack.c.b16 %v1964, %v1958
        %v2505 = vpack.c.b16 %v1965, %v1959
        %v2506 = vpack.c.b16 %v1966, %v1960
        %v2507 = vpack.c.b16 %v1967, %v1961
        %v2508 = vpack.c.b16 %v1974, %v1968
        %v2509 = vpack.c.b16 %v1975, %v1969
        %v2510 = vpack.c.b16 %v1976, %v1970
        %v2511 = vpack.c.b16 %v1977, %v1971
        %v2512 = vpack.c.b16 %v1978, %v1972
        %v2513 = vpack.c.b16 %v1979, %v1973
        %v2514 = vpack.c.b16 %v1986, %v1980
        %v2515 = vpack.c.b16 %v1987, %v1981
        %v2516 = vpack.c.b16 %v1988, %v1982
        %v2517 = vpack.c.b16 %v1989, %v1983
        %v2518 = vpack.c.b16 %v1990, %v1984
        %v2519 = vpack.c.b16 %v1991, %v1985
        %v2520 = vpack.c.b16 %v1998, %v1992
        %v2521 = vpack.c.b16 %v1999, %v1993
        %v2522 = vpack.c.b16 %v2000, %v1994
        %v2523 = vpack.c.b16 %v2001, %v1995
        %v2524 = vpack.c.b16 %v2002, %v1996
        %v2525 = vpack.c.b16 %v2003, %v1997
        %v2526 = vpack.c.b16 %v2010, %v2004
        %v2527 = vpack.c.b16 %v2011, %v2005
        %v2528 = vpack.c.b16 %v2012, %v2006
        %v2529 = vpack.c.b16 %v2013, %v2007
        %v2530 = vpack.c.b16 %v2014, %v2008
        %v2531 = vpack.c.b16 %v2015, %v2009
        %v2532 = vpack.c.b16 %v2022, %v2016
        %v2533 = vpack.c.b16 %v2023, %v2017
        %v2534 = vpack.c.b16 %v2024, %v2018
        %v2535 = vpack.c.b16 %v2025, %v2019
        %v2536 = vpack.c.b16 %v2026, %v2020
        %v2537 = vpack.c.b16 %v2027, %v2021
        %v2538 = vpack.c.b16 %v2034, %v2028
        %v2539 = vpack.c.b16 %v2035, %v2029
        %v2540 = vpack.c.b16 %v2036, %v2030
        %v2541 = vpack.c.b16 %v2037, %v2031
        %v2542 = vpack.c.b16 %v2038, %v2032
        %v2543 = vpack.c.b16 %v2039, %v2033
        %v2544 = vpack.c.b16 %v2046, %v2040
        %v2545 = vpack.c.b16 %v2047, %v2041
        %v2546 = vpack.c.b16 %v2048, %v2042
        %v2547 = vpack.c.b16 %v2049, %v2043
        %v2548 = vpack.c.b16 %v2050, %v2044
        %v2549 = vpack.c.b16 %v2051, %v2045
        %v2550 = vpack.c.b16 %v2058, %v2052
        %v2551 = vpack.c.b16 %v2059, %v2053
        %v2552 = vpack.c.b16 %v2060, %v2054
        %v2553 = vpack.c.b16 %v2061, %v2055
        %v2554 = vpack.c.b16 %v2062, %v2056
        %v2555 = vpack.c.b16 %v2063, %v2057
        %v2556 = vpack.c.b16 %v2070, %v2064
        %v2557 = vpack.c.b16 %v2071, %v2065
        %v2558 = vpack.c.b16 %v2072, %v2066
        %v2559 = vpack.c.b16 %v2073, %v2067
        %v2560 = vpack.c.b16 %v2074, %v2068
        %v2561 = vpack.c.b16 %v2075, %v2069
        %v2562 = vpack.c.b16 %v2082, %v2076
        %v2563 = vpack.c.b16 %v2083, %v2077
        %v2564 = vpack.c.b16 %v2084, %v2078
        %v2565 = vpack.c.b16 %v2085, %v2079
        %v2566 = vpack.c.b16 %v2086, %v2080
        %v2567 = vpack.c.b16 %v2087, %v2081
        %v2568 = vpack.c.b16 %v2094, %v2088
        %v2569 = vpack.c.b16 %v2095, %v2089
        %v2570 = vpack.c.b16 %v2096, %v2090
        %v2571 = vpack.c.b16 %v2097, %v2091
        %v2572 = vpack.c.b16 %v2098, %v2092
        %v2573 = vpack.c.b16 %v2099, %v2093
        %v2574 = vpack.c.b16 %v2106, %v2100
        %v2575 = vpack.c.b16 %v2107, %v2101
        %v2576 = vpack.c.b16 %v2108, %v2102
        %v2577 = vpack.c.b16 %v2109, %v2103
        %v2578 = vpack.c.b16 %v2110, %v2104
        %v2579 = vpack.c.b16 %v2111, %v2105
        %v2580 = vpack.c.b16 %v2118, %v2112
        %v2581 = vpack.c.b16 %v2119, %v2113
        %v2582 = vpack.c.b16 %v2120, %v2114
        %v2583 = vpack.c.b16 %v2121, %v2115
        %v2584 = vpack.c.b16 %v2122, %v2116
        %v2585 = vpack.c.b16 %v2123, %v2117
        %v2586 = vpack.c.b16 %v2130, %v2124
        %v2587 = vpack.c.b16 %v2131, %v2125
        %v2588 = vpack.c.b16 %v2132, %v2126
        %v2589 = vpack.c.b16 %v2133, %v2127
        %v2590 = vpack.c.b16 %v2134, %v2128
        %v2591 = vpack.c.b16 %v2135, %v2129
        %v2592 = vpack.c.b16 %v2142, %v2136
        %v2593 = vpack.c.b16 %v2143, %v2137
        %v2594 = vpack.c.b16 %v2144, %v2138
        %v2595 = vpack.c.b16 %v2145, %v2139
        %v2596 = vpack.c.b16 %v2146, %v2140
        %v2597 = vpack.c.b16 %v2147, %v2141
        %v2598 = vpack.c.b16 %v2154, %v2148
        %v2599 = vpack.c.b16 %v2155, %v2149
        %v2600 = vpack.c.b16 %v2156, %v2150
        %v2601 = vpack.c.b16 %v2157, %v2151
        %v2602 = vpack.c.b16 %v2158, %v2152
        %v2603 = vpack.c.b16 %v2159, %v2153
        %v2604 = vpack.c.b16 %v2166, %v2160
        %v2605 = vpack.c.b16 %v2167, %v2161
        %v2606 = vpack.c.b16 %v2168, %v2162
        %v2607 = vpack.c.b16 %v2169, %v2163
        %v2608 = vpack.c.b16 %v2170, %v2164
        %v2609 = vpack.c.b16 %v2171, %v2165
        %v2610 = vpack.c.b16 %v2178, %v2172
        %v2611 = vpack.c.b16 %v2179, %v2173
        %v2612 = vpack.c.b16 %v2180, %v2174
        %v2613 = vpack.c.b16 %v2181, %v2175
        %v2614 = vpack.c.b16 %v2182, %v2176
        %v2615 = vpack.c.b16 %v2183, %v2177
        %v2616 = vpack.c.b16 %v2190, %v2184
        %v2617 = vpack.c.b16 %v2191, %v2185
        %v2618 = vpack.c.b16 %v2192, %v2186
        %v2619 = vpack.c.b16 %v2193, %v2187
        %v2620 = vpack.c.b16 %v2194, %v2188
        %v2621 = vpack.c.b16 %v2195, %v2189
        %v2622 = vpack.c.b16 %v2202, %v2196
        %v2623 = vpack.c.b16 %v2203, %v2197
        %v2624 = vpack.c.b16 %v2204, %v2198
        %v2625 = vpack.c.b16 %v2205, %v2199
        %v2626 = vpack.c.b16 %v2206, %v2200
        %v2627 = vpack.c.b16 %v2207, %v2201
        %v2628 = vpack.c.b16 %v2214, %v2208
        %v2629 = vpack.c.b16 %v2215, %v2209
        %v2630 = vpack.c.b16 %v2216, %v2210
        %v2631 = vpack.c.b16 %v2217, %v2211
        %v2632 = vpack.c.b16 %v2218, %v2212
        %v2633 = vpack.c.b16 %v2219, %v2213
        %v2634 = vpack.c.b16 %v2226, %v2220
        %v2635 = vpack.c.b16 %v2227, %v2221
        %v2636 = vpack.c.b16 %v2228, %v2222
        %v2637 = vpack.c.b16 %v2229, %v2223
        %v2638 = vpack.c.b16 %v2230, %v2224
        %v2639 = vpack.c.b16 %v2231, %v2225
        %v2640 = vpack.c.b16 %v2238, %v2232
        %v2641 = vpack.c.b16 %v2239, %v2233
        %v2642 = vpack.c.b16 %v2240, %v2234
        %v2643 = vpack.c.b16 %v2241, %v2235
        %v2644 = vpack.c.b16 %v2242, %v2236
        %v2645 = vpack.c.b16 %v2243, %v2237
        %v2646 = vpack.c.b16 %v2250, %v2244
        %v2647 = vpack.c.b16 %v2251, %v2245
        %v2648 = vpack.c.b16 %v2252, %v2246
        %v2649 = vpack.c.b16 %v2253, %v2247
        %v2650 = vpack.c.b16 %v2254, %v2248
        %v2651 = vpack.c.b16 %v2255, %v2249
        %v2652 = vpack.c.b16 %v2262, %v2256
        %v2653 = vpack.c.b16 %v2263, %v2257
        %v2654 = vpack.c.b16 %v2264, %v2258
        %v2655 = vpack.c.b16 %v2265, %v2259
        %v2656 = vpack.c.b16 %v2266, %v2260
        %v2657 = vpack.c.b16 %v2267, %v2261
        %v2658 = vpack.c.b16 %v2274, %v2268
        %v2659 = vpack.c.b16 %v2275, %v2269
        %v2660 = vpack.c.b16 %v2276, %v2270
        %v2661 = vpack.c.b16 %v2277, %v2271
        %v2662 = vpack.c.b16 %v2278, %v2272
        %v2663 = vpack.c.b16 %v2279, %v2273
        %v2664 = vpack.c.b16 %v2286, %v2280
        %v2665 = vpack.c.b16 %v2287, %v2281
        %v2666 = vpack.c.b16 %v2288, %v2282
        %v2667 = vpack.c.b16 %v2289, %v2283
        %v2668 = vpack.c.b16 %v2290, %v2284
        %v2669 = vpack.c.b16 %v2291, %v2285
        %v2670 = vpack.c.b16 %v2298, %v2292
        %v2671 = vpack.c.b16 %v2299, %v2293
        %v2672 = vpack.c.b16 %v2300, %v2294
        %v2673 = vpack.c.b16 %v2301, %v2295
        %v2674 = vpack.c.b16 %v2302, %v2296
        %v2675 = vpack.c.b16 %v2303, %v2297
        %v2676 = vpack.c.b16 %v2310, %v2304
        %v2677 = vpack.c.b16 %v2311, %v2305
        %v2678 = vpack.c.b16 %v2312, %v2306
        %v2679 = vpack.c.b16 %v2313, %v2307
        %v2680 = vpack.c.b16 %v2314, %v2308
        %v2681 = vpack.c.b16 %v2315, %v2309
        %v2682 = vpack.c.b16 %v2322, %v2316
        %v2683 = vpack.c.b16 %v2323, %v2317
        %v2684 = vpack.c.b16 %v2324, %v2318
        %v2685 = vpack.c.b16 %v2325, %v2319
        %v2686 = vpack.c.b16 %v2326, %v2320
        %v2687 = vpack.c.b16 %v2327, %v2321
        %v2688 = vpack.c.b16 %v2334, %v2328
        %v2689 = vpack.c.b16 %v2335, %v2329
        %v2690 = vpack.c.b16 %v2336, %v2330
        %v2691 = vpack.c.b16 %v2337, %v2331
        %v2692 = vpack.c.b16 %v2338, %v2332
        %v2693 = vpack.c.b16 %v2339, %v2333
        %v2694 = vpack.c.b16 %v2346, %v2340
        %v2695 = vpack.c.b16 %v2347, %v2341
        %v2696 = vpack.c.b16 %v2348, %v2342
        %v2697 = vpack.c.b16 %v2349, %v2343
        %v2698 = vpack.c.b16 %v2350, %v2344
        %v2699 = vpack.c.b16 %v2351, %v2345
        %v2700 = vpack.c.b16 %v2358, %v2352
        %v2701 = vpack.c.b16 %v2359, %v2353
        %v2702 = vpack.c.b16 %v2360, %v2354
        %v2703 = vpack.c.b16 %v2361, %v2355
        %v2704 = vpack.c.b16 %v2362, %v2356
        %v2705 = vpack.c.b16 %v2363, %v2357
        %v2706 = vpack.c.b16 %v2370, %v2364
        %v2707 = vpack.c.b16 %v2371, %v2365
        %v2708 = vpack.c.b16 %v2372, %v2366
        %v2709 = vpack.c.b16 %v2373, %v2367
        %v2710 = vpack.c.b16 %v2374, %v2368
        %v2711 = vpack.c.b16 %v2375, %v2369
        %v2712 = vpack.c.b16 %v2382, %v2376
        %v2713 = vpack.c.b16 %v2383, %v2377
        %v2714 = vpack.c.b16 %v2384, %v2378
        %v2715 = vpack.c.b16 %v2385, %v2379
        %v2716 = vpack.c.b16 %v2386, %v2380
        %v2717 = vpack.c.b16 %v2387, %v2381
        %v2718 = vpack.c.b16 %v2394, %v2388
        %v2719 = vpack.c.b16 %v2395, %v2389
        %v2720 = vpack.c.b16 %v2396, %v2390
        %v2721 = vpack.c.b16 %v2397, %v2391
        %v2722 = vpack.c.b16 %v2398, %v2392
        %v2723 = vpack.c.b16 %v2399, %v2393
        %v2724 = vpack.c.b16 %v2406, %v2400
        %v2725 = vpack.c.b16 %v2407, %v2401
        %v2726 = vpack.c.b16 %v2408, %v2402
        %v2727 = vpack.c.b16 %v2409, %v2403
        %v2728 = vpack.c.b16 %v2410, %v2404
        %v2729 = vpack.c.b16 %v2411, %v2405
        %v2730 = vpack.c.b16 %v2418, %v2412
        %v2731 = vpack.c.b16 %v2419, %v2413
        %v2732 = vpack.c.b16 %v2420, %v2414
        %v2733 = vpack.c.b16 %v2421, %v2415
        %v2734 = vpack.c.b16 %v2422, %v2416
        %v2735 = vpack.c.b16 %v2423, %v2417
        %v2736 = vpack.c.b16 %v2430, %v2424
        %v2737 = vpack.c.b16 %v2431, %v2425
        %v2738 = vpack.c.b16 %v2432, %v2426
        %v2739 = vpack.c.b16 %v2433, %v2427
        %v2740 = vpack.c.b16 %v2434, %v2428
        %v2741 = vpack.c.b16 %v2435, %v2429
        %v2742 = vpack.c.b16 %v2442, %v2436
        %v2743 = vpack.c.b16 %v2443, %v2437
        %v2744 = vpack.c.b16 %v2444, %v2438
        %v2745 = vpack.c.b16 %v2445, %v2439
        %v2746 = vpack.c.b16 %v2446, %v2440
        %v2747 = vpack.c.b16 %v2447, %v2441
        %v2748 = vpack.c.b16 %v2454, %v2448
        %v2749 = vpack.c.b16 %v2455, %v2449
        %v2750 = vpack.c.b16 %v2456, %v2450
        %v2751 = vpack.c.b16 %v2457, %v2451
        %v2752 = vpack.c.b16 %v2458, %v2452
        %v2753 = vpack.c.b16 %v2459, %v2453
        %v2754 = vpack.c.b16 %v2466, %v2460
        %v2755 = vpack.c.b16 %v2467, %v2461
        %v2756 = vpack.c.b16 %v2468, %v2462
        %v2757 = vpack.c.b16 %v2469, %v2463
        %v2758 = vpack.c.b16 %v2470, %v2464
        %v2759 = vpack.c.b16 %v2471, %v2465
        %3048 = vmatprep.subr.bf16.mxu0 %v2473
        %3049 = vmatpush1.bf16.msra.mxu0 %v2472
        %3050 = vmatprep.subr.bf16.mxu0 %v2479
        %3051 = vmatpush1.bf16.msra.mxu0 %v2478
        %3052 = vmatprep.subr.bf16.mxu0 %v2485
        %3053 = vmatpush1.bf16.msra.mxu0 %v2484
        %3054 = vmatprep.subr.bf16.mxu0 %v2491
        %3055 = vmatpush1.bf16.msra.mxu0 %v2490
        %3056 = vmatprep.subr.bf16.mxu0 %v2497
        %3057 = vmatpush1.bf16.msra.mxu0 %v2496
        %3058 = vmatprep.subr.bf16.mxu0 %v2503
        %3059 = vmatpush1.bf16.msra.mxu0 %v2502
        %3060 = vmatprep.subr.bf16.mxu0 %v2509
        %3061 = vmatpush1.bf16.msra.mxu0 %v2508
        %3062 = vmatprep.subr.bf16.mxu0 %v2515
        %3063 = vmatpush1.bf16.msra.mxu0 %v2514
        %3064 = vmatprep.subr.bf16.mxu0 %v2521
        %3065 = vmatpush1.bf16.msra.mxu0 %v2520
        %3066 = vmatprep.subr.bf16.mxu0 %v2527
        %3067 = vmatpush1.bf16.msra.mxu0 %v2526
        %3068 = vmatprep.subr.bf16.mxu0 %v2533
        %3069 = vmatpush1.bf16.msra.mxu0 %v2532
        %3070 = vmatprep.subr.bf16.mxu0 %v2539
        %3071 = vmatpush1.bf16.msra.mxu0 %v2538
        %3072 = vmatprep.subr.bf16.mxu0 %v2545
        %3073 = vmatpush1.bf16.msra.mxu0 %v2544
        %3074 = vmatprep.subr.bf16.mxu0 %v2551
        %3075 = vmatpush1.bf16.msra.mxu0 %v2550
        %3076 = vmatprep.subr.bf16.mxu0 %v2557
        %3077 = vmatpush1.bf16.msra.mxu0 %v2556
        %3078 = vmatprep.subr.bf16.mxu0 %v2563
        %3079 = vmatpush1.bf16.msra.mxu0 %v2562
        %3080 = vmatprep.mubr.bf16.mxu0 %v1283
        %3081 = vmatmul.mubr.bf16.gmra.mrb[0].mxu0 %v1282
        %v3082 = vpop.f32.mrb[0].mxu0
        %v3083 = vadd.f32 %v1581, %v3082
        %v3084 = vpop.f32.mrb[0].mxu0
        %v3085 = vadd.f32 %v1585, %v3084
        %v3086 = vpop.f32.mrb[0].mxu0
        %v3087 = vadd.f32 %v1581, %v3086
        %v3088 = vpop.f32.mrb[0].mxu0
        %v3089 = vadd.f32 %v1585, %v3088
        %3090 = vdwg.mxu0
        %3091 = vmatprep.subr.bf16.mxu0 %v2569
        %3092 = vmatpush1.bf16.msra.mxu0 %v2568
        %3093 = vmatprep.subr.bf16.mxu0 %v2575
        %3094 = vmatpush1.bf16.msra.mxu0 %v2574
        %3095 = vmatprep.subr.bf16.mxu0 %v2581
        %3096 = vmatpush1.bf16.msra.mxu0 %v2580
        %3097 = vmatprep.subr.bf16.mxu0 %v2587
        %3098 = vmatpush1.bf16.msra.mxu0 %v2586
        %3099 = vmatprep.subr.bf16.mxu0 %v2593
        %3100 = vmatpush1.bf16.msra.mxu0 %v2592
        %3101 = vmatprep.subr.bf16.mxu0 %v2599
        %3102 = vmatpush1.bf16.msra.mxu0 %v2598
        %3103 = vmatprep.subr.bf16.mxu0 %v2605
        %3104 = vmatpush1.bf16.msra.mxu0 %v2604
        %3105 = vmatprep.subr.bf16.mxu0 %v2611
        %3106 = vmatpush1.bf16.msra.mxu0 %v2610
        %3107 = vmatprep.subr.bf16.mxu0 %v2617
        %3108 = vmatpush1.bf16.msra.mxu0 %v2616
        %3109 = vmatprep.subr.bf16.mxu0 %v2623
        %3110 = vmatpush1.bf16.msra.mxu0 %v2622
        %3111 = vmatprep.subr.bf16.mxu0 %v2629
        %3112 = vmatpush1.bf16.msra.mxu0 %v2628
        %3113 = vmatprep.subr.bf16.mxu0 %v2635
        %3114 = vmatpush1.bf16.msra.mxu0 %v2634
        %3115 = vmatprep.subr.bf16.mxu0 %v2641
        %3116 = vmatpush1.bf16.msra.mxu0 %v2640
        %3117 = vmatprep.subr.bf16.mxu0 %v2647
        %3118 = vmatpush1.bf16.msra.mxu0 %v2646
        %3119 = vmatprep.subr.bf16.mxu0 %v2653
        %3120 = vmatpush1.bf16.msra.mxu0 %v2652
        %3121 = vmatprep.subr.bf16.mxu0 %v2659
        %3122 = vmatpush1.bf16.msra.mxu0 %v2658
        %3123 = vmatprep.mubr.bf16.mxu0 %v1285
        %3124 = vmatmul.mubr.bf16.gmra.mrb[0].mxu0 %v1284
        %v3125 = vpop.f32.mrb[0].mxu0
        %v3126 = vadd.f32 %v3083, %v3125
        %v3127 = vpop.f32.mrb[0].mxu0
        %v3128 = vadd.f32 %v3085, %v3127
        %v3129 = vpop.f32.mrb[0].mxu0
        %v3130 = vadd.f32 %v3087, %v3129
        %v3131 = vpop.f32.mrb[0].mxu0
        %v3132 = vadd.f32 %v3089, %v3131
        %3133 = vdwg.mxu0
        %3134 = vmatprep.subr.bf16.mxu0 %v2665
        %3135 = vmatpush1.bf16.msra.mxu0 %v2664
        %3136 = vmatprep.subr.bf16.mxu0 %v2671
        %3137 = vmatpush1.bf16.msra.mxu0 %v2670
        %3138 = vmatprep.subr.bf16.mxu0 %v2677
        %3139 = vmatpush1.bf16.msra.mxu0 %v2676
        %3140 = vmatprep.subr.bf16.mxu0 %v2683
        %3141 = vmatpush1.bf16.msra.mxu0 %v2682
        %3142 = vmatprep.subr.bf16.mxu0 %v2689
        %3143 = vmatpush1.bf16.msra.mxu0 %v2688
        %3144 = vmatprep.subr.bf16.mxu0 %v2695
        %3145 = vmatpush1.bf16.msra.mxu0 %v2694
        %3146 = vmatprep.subr.bf16.mxu0 %v2701
        %3147 = vmatpush1.bf16.msra.mxu0 %v2700
        %3148 = vmatprep.subr.bf16.mxu0 %v2707
        %3149 = vmatpush1.bf16.msra.mxu0 %v2706
        %3150 = vmatprep.subr.bf16.mxu0 %v2713
        %3151 = vmatpush1.bf16.msra.mxu0 %v2712
        %3152 = vmatprep.subr.bf16.mxu0 %v2719
        %3153 = vmatpush1.bf16.msra.mxu0 %v2718
        %3154 = vmatprep.subr.bf16.mxu0 %v2725
        %3155 = vmatpush1.bf16.msra.mxu0 %v2724
        %3156 = vmatprep.subr.bf16.mxu0 %v2731
        %3157 = vmatpush1.bf16.msra.mxu0 %v2730
        %3158 = vmatprep.subr.bf16.mxu0 %v2737
        %3159 = vmatpush1.bf16.msra.mxu0 %v2736
        %3160 = vmatprep.subr.bf16.mxu0 %v2743
        %3161 = vmatpush1.bf16.msra.mxu0 %v2742
        %3162 = vmatprep.subr.bf16.mxu0 %v2749
        %3163 = vmatpush1.bf16.msra.mxu0 %v2748
        %3164 = vmatprep.subr.bf16.mxu0 %v2755
        %3165 = vmatpush1.bf16.msra.mxu0 %v2754
        %3166 = vmatprep.mubr.bf16.mxu0 %v1287
        %3167 = vmatmul.mubr.bf16.gmra.mrb[0].mxu0 %v1286
        %v3168 = vpop.f32.mrb[0].mxu0
        %v3169 = vadd.f32 %v3126, %v3168
        %v3170 = vpop.f32.mrb[0].mxu0
        %v3171 = vadd.f32 %v3128, %v3170
        %v3172 = vpop.f32.mrb[0].mxu0
        %v3173 = vadd.f32 %v3130, %v3172
        %v3174 = vpop.f32.mrb[0].mxu0
        %v3175 = vadd.f32 %v3132, %v3174
        %3176 = vdwg.mxu0
        %3177 = vmatprep.subr.bf16.mxu0 %v2475
        %3178 = vmatpush1.bf16.msra.mxu0 %v2474
        %3179 = vmatprep.subr.bf16.mxu0 %v2481
        %3180 = vmatpush1.bf16.msra.mxu0 %v2480
        %3181 = vmatprep.subr.bf16.mxu0 %v2487
        %3182 = vmatpush1.bf16.msra.mxu0 %v2486
        %3183 = vmatprep.subr.bf16.mxu0 %v2493
        %3184 = vmatpush1.bf16.msra.mxu0 %v2492
        %3185 = vmatprep.subr.bf16.mxu0 %v2499
        %3186 = vmatpush1.bf16.msra.mxu0 %v2498
        %3187 = vmatprep.subr.bf16.mxu0 %v2505
        %3188 = vmatpush1.bf16.msra.mxu0 %v2504
        %3189 = vmatprep.subr.bf16.mxu0 %v2511
        %3190 = vmatpush1.bf16.msra.mxu0 %v2510
        %3191 = vmatprep.subr.bf16.mxu0 %v2517
        %3192 = vmatpush1.bf16.msra.mxu0 %v2516
        %3193 = vmatprep.subr.bf16.mxu0 %v2523
        %3194 = vmatpush1.bf16.msra.mxu0 %v2522
        %3195 = vmatprep.subr.bf16.mxu0 %v2529
        %3196 = vmatpush1.bf16.msra.mxu0 %v2528
        %3197 = vmatprep.subr.bf16.mxu0 %v2535
        %3198 = vmatpush1.bf16.msra.mxu0 %v2534
        %3199 = vmatprep.subr.bf16.mxu0 %v2541
        %3200 = vmatpush1.bf16.msra.mxu0 %v2540
        %3201 = vmatprep.subr.bf16.mxu0 %v2547
        %3202 = vmatpush1.bf16.msra.mxu0 %v2546
        %3203 = vmatprep.subr.bf16.mxu0 %v2553
        %3204 = vmatpush1.bf16.msra.mxu0 %v2552
        %3205 = vmatprep.subr.bf16.mxu0 %v2559
        %3206 = vmatpush1.bf16.msra.mxu0 %v2558
        %3207 = vmatprep.subr.bf16.mxu0 %v2565
        %3208 = vmatpush1.bf16.msra.mxu0 %v2564
        %3209 = vmatprep.mubr.bf16.mxu0 %v1283
        %3210 = vmatmul.mubr.bf16.gmra.mrb[0].mxu0 %v1282
        %v3211 = vpop.f32.mrb[0].mxu0
        %v3212 = vadd.f32 %v1589, %v3211
        %v3213 = vpop.f32.mrb[0].mxu0
        %v3214 = vadd.f32 %v1593, %v3213
        %v3215 = vpop.f32.mrb[0].mxu0
        %v3216 = vadd.f32 %v1589, %v3215
        %v3217 = vpop.f32.mrb[0].mxu0
        %v3218 = vadd.f32 %v1593, %v3217
        %3219 = vdwg.mxu0
        %3220 = vmatprep.subr.bf16.mxu0 %v2571
        %3221 = vmatpush1.bf16.msra.mxu0 %v2570
        %3222 = vmatprep.subr.bf16.mxu0 %v2577
        %3223 = vmatpush1.bf16.msra.mxu0 %v2576
        %3224 = vmatprep.subr.bf16.mxu0 %v2583
        %3225 = vmatpush1.bf16.msra.mxu0 %v2582
        %3226 = vmatprep.subr.bf16.mxu0 %v2589
        %3227 = vmatpush1.bf16.msra.mxu0 %v2588
        %3228 = vmatprep.subr.bf16.mxu0 %v2595
        %3229 = vmatpush1.bf16.msra.mxu0 %v2594
        %3230 = vmatprep.subr.bf16.mxu0 %v2601
        %3231 = vmatpush1.bf16.msra.mxu0 %v2600
        %3232 = vmatprep.subr.bf16.mxu0 %v2607
        %3233 = vmatpush1.bf16.msra.mxu0 %v2606
        %3234 = vmatprep.subr.bf16.mxu0 %v2613
        %3235 = vmatpush1.bf16.msra.mxu0 %v2612
        %3236 = vmatprep.subr.bf16.mxu0 %v2619
        %3237 = vmatpush1.bf16.msra.mxu0 %v2618
        %3238 = vmatprep.subr.bf16.mxu0 %v2625
        %3239 = vmatpush1.bf16.msra.mxu0 %v2624
        %3240 = vmatprep.subr.bf16.mxu0 %v2631
        %3241 = vmatpush1.bf16.msra.mxu0 %v2630
        %3242 = vmatprep.subr.bf16.mxu0 %v2637
        %3243 = vmatpush1.bf16.msra.mxu0 %v2636
        %3244 = vmatprep.subr.bf16.mxu0 %v2643
        %3245 = vmatpush1.bf16.msra.mxu0 %v2642
        %3246 = vmatprep.subr.bf16.mxu0 %v2649
        %3247 = vmatpush1.bf16.msra.mxu0 %v2648
        %3248 = vmatprep.subr.bf16.mxu0 %v2655
        %3249 = vmatpush1.bf16.msra.mxu0 %v2654
        %3250 = vmatprep.subr.bf16.mxu0 %v2661
        %3251 = vmatpush1.bf16.msra.mxu0 %v2660
        %3252 = vmatprep.mubr.bf16.mxu0 %v1285
        %3253 = vmatmul.mubr.bf16.gmra.mrb[0].mxu0 %v1284
        %v3254 = vpop.f32.mrb[0].mxu0
        %v3255 = vadd.f32 %v3212, %v3254
        %v3256 = vpop.f32.mrb[0].mxu0
        %v3257 = vadd.f32 %v3214, %v3256
        %v3258 = vpop.f32.mrb[0].mxu0
        %v3259 = vadd.f32 %v3216, %v3258
        %v3260 = vpop.f32.mrb[0].mxu0
        %v3261 = vadd.f32 %v3218, %v3260
        %3262 = vdwg.mxu0
        %3263 = vmatprep.subr.bf16.mxu0 %v2667
        %3264 = vmatpush1.bf16.msra.mxu0 %v2666
        %3265 = vmatprep.subr.bf16.mxu0 %v2673
        %3266 = vmatpush1.bf16.msra.mxu0 %v2672
        %3267 = vmatprep.subr.bf16.mxu0 %v2679
        %3268 = vmatpush1.bf16.msra.mxu0 %v2678
        %3269 = vmatprep.subr.bf16.mxu0 %v2685
        %3270 = vmatpush1.bf16.msra.mxu0 %v2684
        %3271 = vmatprep.subr.bf16.mxu0 %v2691
        %3272 = vmatpush1.bf16.msra.mxu0 %v2690
        %3273 = vmatprep.subr.bf16.mxu0 %v2697
        %3274 = vmatpush1.bf16.msra.mxu0 %v2696
        %3275 = vmatprep.subr.bf16.mxu0 %v2703
        %3276 = vmatpush1.bf16.msra.mxu0 %v2702
        %3277 = vmatprep.subr.bf16.mxu0 %v2709
        %3278 = vmatpush1.bf16.msra.mxu0 %v2708
        %3279 = vmatprep.subr.bf16.mxu0 %v2715
        %3280 = vmatpush1.bf16.msra.mxu0 %v2714
        %3281 = vmatprep.subr.bf16.mxu0 %v2721
        %3282 = vmatpush1.bf16.msra.mxu0 %v2720
        %3283 = vmatprep.subr.bf16.mxu0 %v2727
        %3284 = vmatpush1.bf16.msra.mxu0 %v2726
        %3285 = vmatprep.subr.bf16.mxu0 %v2733
        %3286 = vmatpush1.bf16.msra.mxu0 %v2732
        %3287 = vmatprep.subr.bf16.mxu0 %v2739
        %3288 = vmatpush1.bf16.msra.mxu0 %v2738
        %3289 = vmatprep.subr.bf16.mxu0 %v2745
        %3290 = vmatpush1.bf16.msra.mxu0 %v2744
        %3291 = vmatprep.subr.bf16.mxu0 %v2751
        %3292 = vmatpush1.bf16.msra.mxu0 %v2750
        %3293 = vmatprep.subr.bf16.mxu0 %v2757
        %3294 = vmatpush1.bf16.msra.mxu0 %v2756
        %3295 = vmatprep.mubr.bf16.mxu0 %v1287
        %3296 = vmatmul.mubr.bf16.gmra.mrb[0].mxu0 %v1286
        %v3297 = vpop.f32.mrb[0].mxu0
        %v3298 = vadd.f32 %v3255, %v3297
        %v3299 = vpop.f32.mrb[0].mxu0
        %v3300 = vadd.f32 %v3257, %v3299
        %v3301 = vpop.f32.mrb[0].mxu0
        %v3302 = vadd.f32 %v3259, %v3301
        %v3303 = vpop.f32.mrb[0].mxu0
        %v3304 = vadd.f32 %v3261, %v3303
        %3305 = vdwg.mxu0
        %3306 = vmatprep.subr.bf16.mxu0 %v2477
        %3307 = vmatpush1.bf16.msra.mxu0 %v2476
        %3308 = vmatprep.subr.bf16.mxu0 %v2483
        %3309 = vmatpush1.bf16.msra.mxu0 %v2482
        %3310 = vmatprep.subr.bf16.mxu0 %v2489
        %3311 = vmatpush1.bf16.msra.mxu0 %v2488
        %3312 = vmatprep.subr.bf16.mxu0 %v2495
        %3313 = vmatpush1.bf16.msra.mxu0 %v2494
        %3314 = vmatprep.subr.bf16.mxu0 %v2501
        %3315 = vmatpush1.bf16.msra.mxu0 %v2500
        %3316 = vmatprep.subr.bf16.mxu0 %v2507
        %3317 = vmatpush1.bf16.msra.mxu0 %v2506
        %3318 = vmatprep.subr.bf16.mxu0 %v2513
        %3319 = vmatpush1.bf16.msra.mxu0 %v2512
        %3320 = vmatprep.subr.bf16.mxu0 %v2519
        %3321 = vmatpush1.bf16.msra.mxu0 %v2518
        %3322 = vmatprep.subr.bf16.mxu0 %v2525
        %3323 = vmatpush1.bf16.msra.mxu0 %v2524
        %3324 = vmatprep.subr.bf16.mxu0 %v2531
        %3325 = vmatpush1.bf16.msra.mxu0 %v2530
        %3326 = vmatprep.subr.bf16.mxu0 %v2537
        %3327 = vmatpush1.bf16.msra.mxu0 %v2536
        %3328 = vmatprep.subr.bf16.mxu0 %v2543
        %3329 = vmatpush1.bf16.msra.mxu0 %v2542
        %3330 = vmatprep.subr.bf16.mxu0 %v2549
        %3331 = vmatpush1.bf16.msra.mxu0 %v2548
        %3332 = vmatprep.subr.bf16.mxu0 %v2555
        %3333 = vmatpush1.bf16.msra.mxu0 %v2554
        %3334 = vmatprep.subr.bf16.mxu0 %v2561
        %3335 = vmatpush1.bf16.msra.mxu0 %v2560
        %3336 = vmatprep.subr.bf16.mxu0 %v2567
        %3337 = vmatpush1.bf16.msra.mxu0 %v2566
        %3338 = vmatprep.mubr.bf16.mxu0 %v1283
        %3339 = vmatmul.mubr.bf16.gmra.mrb[0].mxu0 %v1282
        %v3340 = vpop.f32.mrb[0].mxu0
        %v3341 = vadd.f32 %v1597, %v3340
        %v3342 = vpop.f32.mrb[0].mxu0
        %v3343 = vadd.f32 %v1601, %v3342
        %v3344 = vpop.f32.mrb[0].mxu0
        %v3345 = vadd.f32 %v1597, %v3344
        %v3346 = vpop.f32.mrb[0].mxu0
        %v3347 = vadd.f32 %v1601, %v3346
        %3348 = vdwg.mxu0
        %3349 = vmatprep.subr.bf16.mxu0 %v2573
        %3350 = vmatpush1.bf16.msra.mxu0 %v2572
        %3351 = vmatprep.subr.bf16.mxu0 %v2579
        %3352 = vmatpush1.bf16.msra.mxu0 %v2578
        %3353 = vmatprep.subr.bf16.mxu0 %v2585
        %3354 = vmatpush1.bf16.msra.mxu0 %v2584
        %3355 = vmatprep.subr.bf16.mxu0 %v2591
        %3356 = vmatpush1.bf16.msra.mxu0 %v2590
        %3357 = vmatprep.subr.bf16.mxu0 %v2597
        %3358 = vmatpush1.bf16.msra.mxu0 %v2596
        %3359 = vmatprep.subr.bf16.mxu0 %v2603
        %3360 = vmatpush1.bf16.msra.mxu0 %v2602
        %3361 = vmatprep.subr.bf16.mxu0 %v2609
        %3362 = vmatpush1.bf16.msra.mxu0 %v2608
        %3363 = vmatprep.subr.bf16.mxu0 %v2615
        %3364 = vmatpush1.bf16.msra.mxu0 %v2614
        %3365 = vmatprep.subr.bf16.mxu0 %v2621
        %3366 = vmatpush1.bf16.msra.mxu0 %v2620
        %3367 = vmatprep.subr.bf16.mxu0 %v2627
        %3368 = vmatpush1.bf16.msra.mxu0 %v2626
        %3369 = vmatprep.subr.bf16.mxu0 %v2633
        %3370 = vmatpush1.bf16.msra.mxu0 %v2632
        %3371 = vmatprep.subr.bf16.mxu0 %v2639
        %3372 = vmatpush1.bf16.msra.mxu0 %v2638
        %3373 = vmatprep.subr.bf16.mxu0 %v2645
        %3374 = vmatpush1.bf16.msra.mxu0 %v2644
        %3375 = vmatprep.subr.bf16.mxu0 %v2651
        %3376 = vmatpush1.bf16.msra.mxu0 %v2650
        %3377 = vmatprep.subr.bf16.mxu0 %v2657
        %3378 = vmatpush1.bf16.msra.mxu0 %v2656
        %3379 = vmatprep.subr.bf16.mxu0 %v2663
        %3380 = vmatpush1.bf16.msra.mxu0 %v2662
        %3381 = vmatprep.mubr.bf16.mxu0 %v1285
        %3382 = vmatmul.mubr.bf16.gmra.mrb[0].mxu0 %v1284
        %v3383 = vpop.f32.mrb[0].mxu0
        %v3384 = vadd.f32 %v3341, %v3383
        %v3385 = vpop.f32.mrb[0].mxu0
        %v3386 = vadd.f32 %v3343, %v3385
        %v3387 = vpop.f32.mrb[0].mxu0
        %v3388 = vadd.f32 %v3345, %v3387
        %v3389 = vpop.f32.mrb[0].mxu0
        %v3390 = vadd.f32 %v3347, %v3389
        %3391 = vdwg.mxu0
        %3392 = vmatprep.subr.bf16.mxu0 %v2669
        %3393 = vmatpush1.bf16.msra.mxu0 %v2668
        %3394 = vmatprep.subr.bf16.mxu0 %v2675
        %3395 = vmatpush1.bf16.msra.mxu0 %v2674
        %3396 = vmatprep.subr.bf16.mxu0 %v2681
        %3397 = vmatpush1.bf16.msra.mxu0 %v2680
        %3398 = vmatprep.subr.bf16.mxu0 %v2687
        %3399 = vmatpush1.bf16.msra.mxu0 %v2686
        %3400 = vmatprep.subr.bf16.mxu0 %v2693
        %3401 = vmatpush1.bf16.msra.mxu0 %v2692
        %3402 = vmatprep.subr.bf16.mxu0 %v2699
        %3403 = vmatpush1.bf16.msra.mxu0 %v2698
        %3404 = vmatprep.subr.bf16.mxu0 %v2705
        %3405 = vmatpush1.bf16.msra.mxu0 %v2704
        %3406 = vmatprep.subr.bf16.mxu0 %v2711
        %3407 = vmatpush1.bf16.msra.mxu0 %v2710
        %3408 = vmatprep.subr.bf16.mxu0 %v2717
        %3409 = vmatpush1.bf16.msra.mxu0 %v2716
        %3410 = vmatprep.subr.bf16.mxu0 %v2723
        %3411 = vmatpush1.bf16.msra.mxu0 %v2722
        %3412 = vmatprep.subr.bf16.mxu0 %v2729
        %3413 = vmatpush1.bf16.msra.mxu0 %v2728
        %3414 = vmatprep.subr.bf16.mxu0 %v2735
        %3415 = vmatpush1.bf16.msra.mxu0 %v2734
        %3416 = vmatprep.subr.bf16.mxu0 %v2741
        %3417 = vmatpush1.bf16.msra.mxu0 %v2740
        %3418 = vmatprep.subr.bf16.mxu0 %v2747
        %3419 = vmatpush1.bf16.msra.mxu0 %v2746
        %3420 = vmatprep.subr.bf16.mxu0 %v2753
        %3421 = vmatpush1.bf16.msra.mxu0 %v2752
        %3422 = vmatprep.subr.bf16.mxu0 %v2759
        %3423 = vmatpush1.bf16.msra.mxu0 %v2758
        %3424 = vmatprep.mubr.bf16.mxu0 %v1287
        %3425 = vmatmul.mubr.bf16.gmra.mrb[0].mxu0 %v1286
        %v3426 = vpop.f32.mrb[0].mxu0
        %v3427 = vadd.f32 %v3384, %v3426
        %v3428 = vpop.f32.mrb[0].mxu0
        %v3429 = vadd.f32 %v3386, %v3428
        %v3430 = vpop.f32.mrb[0].mxu0
        %v3431 = vadd.f32 %v3388, %v3430
        %v3432 = vpop.f32.mrb[0].mxu0
        %v3433 = vadd.f32 %v3390, %v3432
        %3434 = vdwg.mxu0
        %vm3435 = vcmp.ge.f32.partialorder %v3169, 0.0
        %vm3436 = vcmp.ge.f32.partialorder %v3171, 0.0
        %vm3437 = vcmp.ge.f32.partialorder %v3298, 0.0
        %vm3438 = vcmp.ge.f32.partialorder %v3300, 0.0
        %vm3439 = vcmp.ge.f32.partialorder %v3427, 0.0
        %vm3440 = vcmp.ge.f32.partialorder %v3429, 0.0
        %vm3441 = vcmp.ge.f32.partialorder %v3173, 0.0
        %vm3442 = vcmp.ge.f32.partialorder %v3175, 0.0
        %vm3443 = vcmp.ge.f32.partialorder %v3302, 0.0
        %vm3444 = vcmp.ge.f32.partialorder %v3304, 0.0
        %vm3445 = vcmp.ge.f32.partialorder %v3431, 0.0
        %vm3446 = vcmp.ge.f32.partialorder %v3433, 0.0
        %v3447 = vmul.f32 %v3169, 0.01
        %v3448 = vmul.f32 %v3171, 0.01
        %v3449 = vmul.f32 %v3298, 0.01
        %v3450 = vmul.f32 %v3300, 0.01
        %v3451 = vmul.f32 %v3427, 0.01
        %v3452 = vmul.f32 %v3429, 0.01
        %v3453 = vmul.f32 %v3173, 0.01
        %v3454 = vmul.f32 %v3175, 0.01
        %v3455 = vmul.f32 %v3302, 0.01
        %v3456 = vmul.f32 %v3304, 0.01
        %v3457 = vmul.f32 %v3431, 0.01
        %v3458 = vmul.f32 %v3433, 0.01
        %v3459 = vsel %vm3435, %v3169, %v3447
        %v3460 = vsel %vm3436, %v3171, %v3448
        %v3461 = vsel %vm3437, %v3298, %v3449
        %v3462 = vsel %vm3438, %v3300, %v3450
        %v3463 = vsel %vm3439, %v3427, %v3451
        %v3464 = vsel %vm3440, %v3429, %v3452
        %v3465 = vsel %vm3441, %v3173, %v3453
        %v3466 = vsel %vm3442, %v3175, %v3454
        %v3467 = vsel %vm3443, %v3302, %v3455
        %v3468 = vsel %vm3444, %v3304, %v3456
        %v3469 = vsel %vm3445, %v3431, %v3457
        %v3470 = vsel %vm3446, %v3433, %v3458
        %v3471 = vld [vmem:[#allocation10] sm:$0x3f]
        %v3472 = vld [vmem:[#allocation11] sm:$0x3f]
        %vm3473 = vcmp.lt.s32.totalorder %v632, 650
        %vm3474 = vcmp.lt.s32.totalorder %v1277, 650
        %vm3475 = vcmp.lt.s32.totalorder %v1278, 650
        %vm3476 = vcmp.lt.s32.totalorder %v1279, 650
        %vm3477 = vcmp.lt.s32.totalorder %v1280, 650
        %vm3478 = vcmp.lt.s32.totalorder %v1281, 650
        %v3479 = vadd.f32 %v3459, %v3460
        %v3480 = vadd.f32 %v3479, %v3461
        %v3481 = vadd.f32 %v3480, %v3462
        %v3482 = vadd.f32 %v3481, %v3463
        %v3483 = vadd.f32 %v3482, %v3464
        %3484 = vadd.xlane.f32.xlu0 %v3483
        %v3485 = vpop.xlane.xlu0 %3484
        %v3486 = vadd.f32 %v3465, %v3466
        %v3487 = vadd.f32 %v3486, %v3467
        %v3488 = vadd.f32 %v3487, %v3468
        %v3489 = vadd.f32 %v3488, %v3469
        %v3490 = vadd.f32 %v3489, %v3470
        %3491 = vadd.xlane.f32.xlu0 %v3490
        %v3492 = vpop.xlane.xlu0 %3491
        %v3493 = vmul.f32 %v3485, 0.0015384615
        %v3494 = vmul.f32 %v3492, 0.0015384615
        %v3495 = vsub.f32 %v3459, %v3493
        %v3496 = vsub.f32 %v3460, %v3493
        %v3497 = vsub.f32 %v3461, %v3493
        %v3498 = vsub.f32 %v3462, %v3493
        %v3499 = vsub.f32 %v3463, %v3493
        %v3500 = vsub.f32 %v3464, %v3493
        %v3501 = vsub.f32 %v3465, %v3494
        %v3502 = vsub.f32 %v3466, %v3494
        %v3503 = vsub.f32 %v3467, %v3494
        %v3504 = vsub.f32 %v3468, %v3494
        %v3505 = vsub.f32 %v3469, %v3494
        %v3506 = vsub.f32 %v3470, %v3494
        %v3507 = vsel %vm3473, %v3495, 0.0
        %v3508 = vsel %vm3474, %v3496, 0.0
        %v3509 = vsel %vm3475, %v3497, 0.0
        %v3510 = vsel %vm3476, %v3498, 0.0
        %v3511 = vsel %vm3477, %v3499, 0.0
        %v3512 = vsel %vm3478, %v3500, 0.0
        %v3513 = vsel %vm3473, %v3501, 0.0
        %v3514 = vsel %vm3474, %v3502, 0.0
        %v3515 = vsel %vm3475, %v3503, 0.0
        %v3516 = vsel %vm3476, %v3504, 0.0
        %v3517 = vsel %vm3477, %v3505, 0.0
        %v3518 = vsel %vm3478, %v3506, 0.0
        %v3519 = vmul.f32 %v3507, %v3507
        %v3520 = vmul.f32 %v3508, %v3508
        %v3521 = vmul.f32 %v3509, %v3509
        %v3522 = vmul.f32 %v3510, %v3510
        %v3523 = vmul.f32 %v3511, %v3511
        %v3524 = vmul.f32 %v3512, %v3512
        %v3525 = vmul.f32 %v3513, %v3513
        %v3526 = vmul.f32 %v3514, %v3514
        %v3527 = vmul.f32 %v3515, %v3515
        %v3528 = vmul.f32 %v3516, %v3516
        %v3529 = vmul.f32 %v3517, %v3517
        %v3530 = vmul.f32 %v3518, %v3518
        %v3531 = vadd.f32 %v3519, %v3520
        %v3532 = vadd.f32 %v3531, %v3521
        %v3533 = vadd.f32 %v3532, %v3522
        %v3534 = vadd.f32 %v3533, %v3523
        %v3535 = vadd.f32 %v3534, %v3524
        %3536 = vadd.xlane.f32.xlu0 %v3535
        %v3537 = vpop.xlane.xlu0 %3536
        %v3538 = vadd.f32 %v3525, %v3526
        %v3539 = vadd.f32 %v3538, %v3527
        %v3540 = vadd.f32 %v3539, %v3528
        %v3541 = vadd.f32 %v3540, %v3529
        %v3542 = vadd.f32 %v3541, %v3530
        %3543 = vadd.xlane.f32.xlu0 %v3542
        %v3544 = vpop.xlane.xlu0 %3543
        %v3545 = vmul.f32 %v3537, 0.0015384615
        %v3546 = vmul.f32 %v3544, 0.0015384615
        %v3547 = vadd.f32 %v3545, 1e-05
        %v3548 = vadd.f32 %v3546, 1e-05
        %v3549 = vrsqrt.pop %v3547
        %v3550 = vrsqrt.pop %v3548
        %v3551 = vmul.f32 %v3507, %v3549
        %v3552 = vmul.f32 %v3508, %v3549
        %v3553 = vmul.f32 %v3509, %v3549
        %v3554 = vmul.f32 %v3510, %v3549
        %v3555 = vmul.f32 %v3511, %v3549
        %v3556 = vmul.f32 %v3512, %v3549
        %v3557 = vmul.f32 %v3513, %v3550
        %v3558 = vmul.f32 %v3514, %v3550
        %v3559 = vmul.f32 %v3515, %v3550
        %v3560 = vmul.f32 %v3516, %v3550
        %v3561 = vmul.f32 %v3517, %v3550
        %v3562 = vmul.f32 %v3518, %v3550
        %v3564 = vlaneseq
        %v3565 = vshrl.u32 %v3564, 7
        %v3566 = vsub.s32 0, %v3565
        %v3567 = vrot.slane %v3471, %v3566
        %v3568 = vlaneseq
        %v3569 = vshrl.u32 %v3568, 7
        %v3570 = vsub.s32 1, %v3569
        %v3571 = vrot.slane %v3471, %v3570
        %v3572 = vlaneseq
        %v3573 = vshrl.u32 %v3572, 7
        %v3574 = vsub.s32 2, %v3573
        %v3575 = vrot.slane %v3471, %v3574
        %v3576 = vlaneseq
        %v3577 = vshrl.u32 %v3576, 7
        %v3578 = vsub.s32 3, %v3577
        %v3579 = vrot.slane %v3471, %v3578
        %v3580 = vlaneseq
        %v3581 = vshrl.u32 %v3580, 7
        %v3582 = vsub.s32 4, %v3581
        %v3583 = vrot.slane %v3471, %v3582
        %v3584 = vlaneseq
        %v3585 = vshrl.u32 %v3584, 7
        %v3586 = vsub.s32 5, %v3585
        %v3587 = vrot.slane %v3471, %v3586
        %v3594 = vmul.f32 %v3551, %v3567
        %v3595 = vmul.f32 %v3552, %v3571
        %v3596 = vmul.f32 %v3553, %v3575
        %v3597 = vmul.f32 %v3554, %v3579
        %v3598 = vmul.f32 %v3555, %v3583
        %v3599 = vmul.f32 %v3556, %v3587
        %v3600 = vmul.f32 %v3557, %v3567
        %v3601 = vmul.f32 %v3558, %v3571
        %v3602 = vmul.f32 %v3559, %v3575
        %v3603 = vmul.f32 %v3560, %v3579
        %v3604 = vmul.f32 %v3561, %v3583
        %v3605 = vmul.f32 %v3562, %v3587
        %v3607 = vlaneseq
        %v3608 = vshrl.u32 %v3607, 7
        %v3609 = vsub.s32 0, %v3608
        %v3610 = vrot.slane %v3472, %v3609
        %v3611 = vlaneseq
        %v3612 = vshrl.u32 %v3611, 7
        %v3613 = vsub.s32 1, %v3612
        %v3614 = vrot.slane %v3472, %v3613
        %v3615 = vlaneseq
        %v3616 = vshrl.u32 %v3615, 7
        %v3617 = vsub.s32 2, %v3616
        %v3618 = vrot.slane %v3472, %v3617
        %v3619 = vlaneseq
        %v3620 = vshrl.u32 %v3619, 7
        %v3621 = vsub.s32 3, %v3620
        %v3622 = vrot.slane %v3472, %v3621
        %v3623 = vlaneseq
        %v3624 = vshrl.u32 %v3623, 7
        %v3625 = vsub.s32 4, %v3624
        %v3626 = vrot.slane %v3472, %v3625
        %v3627 = vlaneseq
        %v3628 = vshrl.u32 %v3627, 7
        %v3629 = vsub.s32 5, %v3628
        %v3630 = vrot.slane %v3472, %v3629
        %v3637 = vadd.f32 %v3594, %v3610
        %v3638 = vadd.f32 %v3595, %v3614
        %v3639 = vadd.f32 %v3596, %v3618
        %v3640 = vadd.f32 %v3597, %v3622
        %v3641 = vadd.f32 %v3598, %v3626
        %v3642 = vadd.f32 %v3599, %v3630
        %v3643 = vadd.f32 %v3600, %v3610
        %v3644 = vadd.f32 %v3601, %v3614
        %v3645 = vadd.f32 %v3602, %v3618
        %v3646 = vadd.f32 %v3603, %v3622
        %v3647 = vadd.f32 %v3604, %v3626
        %v3648 = vadd.f32 %v3605, %v3630
        %v3649 = vpack.c.bf16 %v3643, %v3637
        %v3650 = vpack.c.bf16 %v3644, %v3638
        %v3651 = vpack.c.bf16 %v3645, %v3639
        %v3652 = vpack.c.bf16 %v3646, %v3640
        %v3653 = vpack.c.bf16 %v3647, %v3641
        %v3654 = vpack.c.bf16 %v3648, %v3642
        %v3655 = vld [vmem:[#allocation13] sm:$0xff]
        %v3656 = vld [vmem:[#allocation13 + $0x8] sm:$0xff]
        %v3657 = vld [vmem:[#allocation13 + $0x10] sm:$0xf]
        %v3658 = vld [vmem:[#allocation13 + $0x14] sm:$0xff]
        %v3659 = vld [vmem:[#allocation13 + $0x1c] sm:$0xff]
        %v3660 = vld [vmem:[#allocation13 + $0x24] sm:$0xf]
        %v3661 = vld [vmem:[#allocation13 + $0x28] sm:$0xff]
        %v3662 = vld [vmem:[#allocation13 + $0x30] sm:$0xff]
        %v3663 = vld [vmem:[#allocation13 + $0x38] sm:$0xf]
        %v3664 = vld [vmem:[#allocation13 + $0x3c] sm:$0xff]
        %v3665 = vld [vmem:[#allocation13 + $0x44] sm:$0xff]
        %v3666 = vld [vmem:[#allocation13 + $0x4c] sm:$0xf]
        %v3667 = vld [vmem:[#allocation13 + $0x50] sm:$0xff]
        %v3668 = vld [vmem:[#allocation13 + $0x58] sm:$0xff]
        %v3669 = vld [vmem:[#allocation13 + $0x60] sm:$0xf]
        %v3670 = vld [vmem:[#allocation13 + $0x64] sm:$0xff]
        %v3671 = vld [vmem:[#allocation13 + $0x6c] sm:$0xff]
        %v3672 = vld [vmem:[#allocation13 + $0x74] sm:$0xf]
        %v3673 = vld [vmem:[#allocation13 + $0x78] sm:$0xff]
        %v3674 = vld [vmem:[#allocation13 + $0x80] sm:$0xff]
        %v3675 = vld [vmem:[#allocation13 + $0x88] sm:$0xf]
        %v3676 = vld [vmem:[#allocation13 + $0x8c] sm:$0xff]
        %v3677 = vld [vmem:[#allocation13 + $0x94] sm:$0xff]
        %v3678 = vld [vmem:[#allocation13 + $0x9c] sm:$0xf]
        %v3679 = vld [vmem:[#allocation13 + $0xa0] sm:$0xff]
        %v3680 = vld [vmem:[#allocation13 + $0xa8] sm:$0xff]
        %v3681 = vld [vmem:[#allocation13 + $0xb0] sm:$0xf]
        %v3682 = vld [vmem:[#allocation13 + $0xb4] sm:$0xff]
        %v3683 = vld [vmem:[#allocation13 + $0xbc] sm:$0xff]
        %v3684 = vld [vmem:[#allocation13 + $0xc4] sm:$0xf]
        %v3685 = vld [vmem:[#allocation13 + $0xc8] sm:$0xff]
        %v3686 = vld [vmem:[#allocation13 + $0xd0] sm:$0xff]
        %v3687 = vld [vmem:[#allocation13 + $0xd8] sm:$0xf]
        %v3688 = vld [vmem:[#allocation13 + $0xdc] sm:$0xff]
        %v3689 = vld [vmem:[#allocation13 + $0xe4] sm:$0xff]
        %v3690 = vld [vmem:[#allocation13 + $0xec] sm:$0xf]
        %v3691 = vld [vmem:[#allocation13 + $0xf0] sm:$0xff]
        %v3692 = vld [vmem:[#allocation13 + $0xf8] sm:$0xff]
        %v3693 = vld [vmem:[#allocation13 + $0x100] sm:$0xf]
        %v3694 = vld [vmem:[#allocation13 + $0x104] sm:$0xff]
        %v3695 = vld [vmem:[#allocation13 + $0x10c] sm:$0xff]
        %v3696 = vld [vmem:[#allocation13 + $0x114] sm:$0xf]
        %v3697 = vld [vmem:[#allocation13 + $0x118] sm:$0xff]
        %v3698 = vld [vmem:[#allocation13 + $0x120] sm:$0xff]
        %v3699 = vld [vmem:[#allocation13 + $0x128] sm:$0xf]
        %v3700 = vld [vmem:[#allocation13 + $0x12c] sm:$0xff]
        %v3701 = vld [vmem:[#allocation13 + $0x134] sm:$0xff]
        %v3702 = vld [vmem:[#allocation13 + $0x13c] sm:$0xf]
        %v3703 = vld [vmem:[#allocation13 + $0x140] sm:$0xff]
        %v3704 = vld [vmem:[#allocation13 + $0x148] sm:$0xff]
        %v3705 = vld [vmem:[#allocation13 + $0x150] sm:$0xf]
        %v3706 = vld [vmem:[#allocation13 + $0x154] sm:$0xff]
        %v3707 = vld [vmem:[#allocation13 + $0x15c] sm:$0xff]
        %v3708 = vld [vmem:[#allocation13 + $0x164] sm:$0xf]
        %v3709 = vld [vmem:[#allocation13 + $0x168] sm:$0xff]
        %v3710 = vld [vmem:[#allocation13 + $0x170] sm:$0xff]
        %v3711 = vld [vmem:[#allocation13 + $0x178] sm:$0xf]
        %v3712 = vld [vmem:[#allocation13 + $0x17c] sm:$0xff]
        %v3713 = vld [vmem:[#allocation13 + $0x184] sm:$0xff]
        %v3714 = vld [vmem:[#allocation13 + $0x18c] sm:$0xf]
        %v3715 = vld [vmem:[#allocation13 + $0x190] sm:$0xff]
        %v3716 = vld [vmem:[#allocation13 + $0x198] sm:$0xff]
        %v3717 = vld [vmem:[#allocation13 + $0x1a0] sm:$0xf]
        %v3718 = vld [vmem:[#allocation13 + $0x1a4] sm:$0xff]
        %v3719 = vld [vmem:[#allocation13 + $0x1ac] sm:$0xff]
        %v3720 = vld [vmem:[#allocation13 + $0x1b4] sm:$0xf]
        %v3721 = vld [vmem:[#allocation13 + $0x1b8] sm:$0xff]
        %v3722 = vld [vmem:[#allocation13 + $0x1c0] sm:$0xff]
        %v3723 = vld [vmem:[#allocation13 + $0x1c8] sm:$0xf]
        %v3724 = vld [vmem:[#allocation13 + $0x1cc] sm:$0xff]
        %v3725 = vld [vmem:[#allocation13 + $0x1d4] sm:$0xff]
        %v3726 = vld [vmem:[#allocation13 + $0x1dc] sm:$0xf]
        %v3727 = vld [vmem:[#allocation13 + $0x1e0] sm:$0xff]
        %v3728 = vld [vmem:[#allocation13 + $0x1e8] sm:$0xff]
        %v3729 = vld [vmem:[#allocation13 + $0x1f0] sm:$0xf]
        %v3730 = vld [vmem:[#allocation13 + $0x1f4] sm:$0xff]
        %v3731 = vld [vmem:[#allocation13 + $0x1fc] sm:$0xff]
        %v3732 = vld [vmem:[#allocation13 + $0x204] sm:$0xf]
        %v3733 = vld [vmem:[#allocation13 + $0x208] sm:$0xff]
        %v3734 = vld [vmem:[#allocation13 + $0x210] sm:$0xff]
        %v3735 = vld [vmem:[#allocation13 + $0x218] sm:$0xf]
        %v3736 = vld [vmem:[#allocation13 + $0x21c] sm:$0xff]
        %v3737 = vld [vmem:[#allocation13 + $0x224] sm:$0xff]
        %v3738 = vld [vmem:[#allocation13 + $0x22c] sm:$0xf]
        %v3739 = vld [vmem:[#allocation13 + $0x230] sm:$0xff]
        %v3740 = vld [vmem:[#allocation13 + $0x238] sm:$0xff]
        %v3741 = vld [vmem:[#allocation13 + $0x240] sm:$0xf]
        %v3742 = vld [vmem:[#allocation13 + $0x244] sm:$0xff]
        %v3743 = vld [vmem:[#allocation13 + $0x24c] sm:$0xff]
        %v3744 = vld [vmem:[#allocation13 + $0x254] sm:$0xf]
        %v3745 = vld [vmem:[#allocation13 + $0x258] sm:$0xff]
        %v3746 = vld [vmem:[#allocation13 + $0x260] sm:$0xff]
        %v3747 = vld [vmem:[#allocation13 + $0x268] sm:$0xf]
        %v3748 = vld [vmem:[#allocation13 + $0x26c] sm:$0xff]
        %v3749 = vld [vmem:[#allocation13 + $0x274] sm:$0xff]
        %v3750 = vld [vmem:[#allocation13 + $0x27c] sm:$0xf]
        %v3751 = vld [vmem:[#allocation13 + $0x280] sm:$0xff]
        %v3752 = vld [vmem:[#allocation13 + $0x288] sm:$0xff]
        %v3753 = vld [vmem:[#allocation13 + $0x290] sm:$0xf]
        %v3754 = vld [vmem:[#allocation13 + $0x294] sm:$0xff]
        %v3755 = vld [vmem:[#allocation13 + $0x29c] sm:$0xff]
        %v3756 = vld [vmem:[#allocation13 + $0x2a4] sm:$0xf]
        %v3757 = vld [vmem:[#allocation13 + $0x2a8] sm:$0xff]
        %v3758 = vld [vmem:[#allocation13 + $0x2b0] sm:$0xff]
        %v3759 = vld [vmem:[#allocation13 + $0x2b8] sm:$0xf]
        %v3760 = vld [vmem:[#allocation13 + $0x2bc] sm:$0xff]
        %v3761 = vld [vmem:[#allocation13 + $0x2c4] sm:$0xff]
        %v3762 = vld [vmem:[#allocation13 + $0x2cc] sm:$0xf]
        %v3763 = vld [vmem:[#allocation13 + $0x2d0] sm:$0xff]
        %v3764 = vld [vmem:[#allocation13 + $0x2d8] sm:$0xff]
        %v3765 = vld [vmem:[#allocation13 + $0x2e0] sm:$0xf]
        %v3766 = vld [vmem:[#allocation13 + $0x2e4] sm:$0xff]
        %v3767 = vld [vmem:[#allocation13 + $0x2ec] sm:$0xff]
        %v3768 = vld [vmem:[#allocation13 + $0x2f4] sm:$0xf]
        %v3769 = vld [vmem:[#allocation13 + $0x2f8] sm:$0xff]
        %v3770 = vld [vmem:[#allocation13 + $0x300] sm:$0xff]
        %v3771 = vld [vmem:[#allocation13 + $0x308] sm:$0xf]
        %v3772 = vld [vmem:[#allocation13 + $0x30c] sm:$0xff]
        %v3773 = vld [vmem:[#allocation13 + $0x314] sm:$0xff]
        %v3774 = vld [vmem:[#allocation13 + $0x31c] sm:$0xf]
        %v3775 = vld [vmem:[#allocation13 + $0x320] sm:$0xff]
        %v3776 = vld [vmem:[#allocation13 + $0x328] sm:$0xff]
        %v3777 = vld [vmem:[#allocation13 + $0x330] sm:$0xf]
        %v3778 = vld [vmem:[#allocation13 + $0x334] sm:$0xff]
        %v3779 = vld [vmem:[#allocation13 + $0x33c] sm:$0xff]
        %v3780 = vld [vmem:[#allocation13 + $0x344] sm:$0xf]
        %v3781 = vld [vmem:[#allocation13 + $0x348] sm:$0xff]
        %v3782 = vld [vmem:[#allocation13 + $0x350] sm:$0xff]
        %v3783 = vld [vmem:[#allocation13 + $0x358] sm:$0xf]
        %v3784 = vld [vmem:[#allocation13 + $0x35c] sm:$0xff]
        %v3785 = vld [vmem:[#allocation13 + $0x364] sm:$0xff]
        %v3786 = vld [vmem:[#allocation13 + $0x36c] sm:$0xf]
        %v3787 = vld [vmem:[#allocation13 + $0x370] sm:$0xff]
        %v3788 = vld [vmem:[#allocation13 + $0x378] sm:$0xff]
        %v3789 = vld [vmem:[#allocation13 + $0x380] sm:$0xf]
        %v3790 = vld [vmem:[#allocation13 + $0x384] sm:$0xff]
        %v3791 = vld [vmem:[#allocation13 + $0x38c] sm:$0xff]
        %v3792 = vld [vmem:[#allocation13 + $0x394] sm:$0xf]
        %v3793 = vld [vmem:[#allocation13 + $0x398] sm:$0xff]
        %v3794 = vld [vmem:[#allocation13 + $0x3a0] sm:$0xff]
        %v3795 = vld [vmem:[#allocation13 + $0x3a8] sm:$0xf]
        %v3796 = vld [vmem:[#allocation13 + $0x3ac] sm:$0xff]
        %v3797 = vld [vmem:[#allocation13 + $0x3b4] sm:$0xff]
        %v3798 = vld [vmem:[#allocation13 + $0x3bc] sm:$0xf]
        %v3799 = vld [vmem:[#allocation13 + $0x3c0] sm:$0xff]
        %v3800 = vld [vmem:[#allocation13 + $0x3c8] sm:$0xff]
        %v3801 = vld [vmem:[#allocation13 + $0x3d0] sm:$0xf]
        %v3802 = vld [vmem:[#allocation13 + $0x3d4] sm:$0xff]
        %v3803 = vld [vmem:[#allocation13 + $0x3dc] sm:$0xff]
        %v3804 = vld [vmem:[#allocation13 + $0x3e4] sm:$0xf]
        %v3805 = vld [vmem:[#allocation13 + $0x3e8] sm:$0xff]
        %v3806 = vld [vmem:[#allocation13 + $0x3f0] sm:$0xff]
        %v3807 = vld [vmem:[#allocation13 + $0x3f8] sm:$0xf]
        %v3808 = vld [vmem:[#allocation13 + $0x3fc] sm:$0xff]
        %v3809 = vld [vmem:[#allocation13 + $0x404] sm:$0xff]
        %v3810 = vld [vmem:[#allocation13 + $0x40c] sm:$0xf]
        %v3811 = vld [vmem:[#allocation13 + $0x410] sm:$0xff]
        %v3812 = vld [vmem:[#allocation13 + $0x418] sm:$0xff]
        %v3813 = vld [vmem:[#allocation13 + $0x420] sm:$0xf]
        %v3814 = vld [vmem:[#allocation13 + $0x424] sm:$0xff]
        %v3815 = vld [vmem:[#allocation13 + $0x42c] sm:$0xff]
        %v3816 = vld [vmem:[#allocation13 + $0x434] sm:$0xf]
        %v3817 = vld [vmem:[#allocation13 + $0x438] sm:$0xff]
        %v3818 = vld [vmem:[#allocation13 + $0x440] sm:$0xff]
        %v3819 = vld [vmem:[#allocation13 + $0x448] sm:$0xf]
        %v3820 = vld [vmem:[#allocation13 + $0x44c] sm:$0xff]
        %v3821 = vld [vmem:[#allocation13 + $0x454] sm:$0xff]
        %v3822 = vld [vmem:[#allocation13 + $0x45c] sm:$0xf]
        %v3823 = vld [vmem:[#allocation13 + $0x460] sm:$0xff]
        %v3824 = vld [vmem:[#allocation13 + $0x468] sm:$0xff]
        %v3825 = vld [vmem:[#allocation13 + $0x470] sm:$0xf]
        %v3826 = vld [vmem:[#allocation13 + $0x474] sm:$0xff]
        %v3827 = vld [vmem:[#allocation13 + $0x47c] sm:$0xff]
        %v3828 = vld [vmem:[#allocation13 + $0x484] sm:$0xf]
        %v3829 = vld [vmem:[#allocation13 + $0x488] sm:$0xff]
        %v3830 = vld [vmem:[#allocation13 + $0x490] sm:$0xff]
        %v3831 = vld [vmem:[#allocation13 + $0x498] sm:$0xf]
        %v3832 = vld [vmem:[#allocation13 + $0x49c] sm:$0xff]
        %v3833 = vld [vmem:[#allocation13 + $0x4a4] sm:$0xff]
        %v3834 = vld [vmem:[#allocation13 + $0x4ac] sm:$0xf]
        %v3835 = vld [vmem:[#allocation13 + $0x4b0] sm:$0xff]
        %v3836 = vld [vmem:[#allocation13 + $0x4b8] sm:$0xff]
        %v3837 = vld [vmem:[#allocation13 + $0x4c0] sm:$0xf]
        %v3838 = vld [vmem:[#allocation13 + $0x4c4] sm:$0xff]
        %v3839 = vld [vmem:[#allocation13 + $0x4cc] sm:$0xff]
        %v3840 = vld [vmem:[#allocation13 + $0x4d4] sm:$0xf]
        %v3841 = vld [vmem:[#allocation13 + $0x4d8] sm:$0xff]
        %v3842 = vld [vmem:[#allocation13 + $0x4e0] sm:$0xff]
        %v3843 = vld [vmem:[#allocation13 + $0x4e8] sm:$0xf]
        %v3844 = vld [vmem:[#allocation13 + $0x4ec] sm:$0xff]
        %v3845 = vld [vmem:[#allocation13 + $0x4f4] sm:$0xff]
        %v3846 = vld [vmem:[#allocation13 + $0x4fc] sm:$0xf]
        %v3847 = vld [vmem:[#allocation13 + $0x500] sm:$0xff]
        %v3848 = vld [vmem:[#allocation13 + $0x508] sm:$0xff]
        %v3849 = vld [vmem:[#allocation13 + $0x510] sm:$0xf]
        %v3850 = vld [vmem:[#allocation13 + $0x514] sm:$0xff]
        %v3851 = vld [vmem:[#allocation13 + $0x51c] sm:$0xff]
        %v3852 = vld [vmem:[#allocation13 + $0x524] sm:$0xf]
        %v3853 = vld [vmem:[#allocation13 + $0x528] sm:$0xff]
        %v3854 = vld [vmem:[#allocation13 + $0x530] sm:$0xff]
        %v3855 = vld [vmem:[#allocation13 + $0x538] sm:$0xf]
        %v3856 = vld [vmem:[#allocation13 + $0x53c] sm:$0xff]
        %v3857 = vld [vmem:[#allocation13 + $0x544] sm:$0xff]
        %v3858 = vld [vmem:[#allocation13 + $0x54c] sm:$0xf]
        %v3859 = vld [vmem:[#allocation13 + $0x550] sm:$0xff]
        %v3860 = vld [vmem:[#allocation13 + $0x558] sm:$0xff]
        %v3861 = vld [vmem:[#allocation13 + $0x560] sm:$0xf]
        %v3862 = vld [vmem:[#allocation13 + $0x564] sm:$0xff]
        %v3863 = vld [vmem:[#allocation13 + $0x56c] sm:$0xff]
        %v3864 = vld [vmem:[#allocation13 + $0x574] sm:$0xf]
        %v3865 = vld [vmem:[#allocation13 + $0x578] sm:$0xff]
        %v3866 = vld [vmem:[#allocation13 + $0x580] sm:$0xff]
        %v3867 = vld [vmem:[#allocation13 + $0x588] sm:$0xf]
        %v3868 = vld [vmem:[#allocation13 + $0x58c] sm:$0xff]
        %v3869 = vld [vmem:[#allocation13 + $0x594] sm:$0xff]
        %v3870 = vld [vmem:[#allocation13 + $0x59c] sm:$0xf]
        %v3871 = vld [vmem:[#allocation13 + $0x5a0] sm:$0xff]
        %v3872 = vld [vmem:[#allocation13 + $0x5a8] sm:$0xff]
        %v3873 = vld [vmem:[#allocation13 + $0x5b0] sm:$0xf]
        %v3874 = vld [vmem:[#allocation13 + $0x5b4] sm:$0xff]
        %v3875 = vld [vmem:[#allocation13 + $0x5bc] sm:$0xff]
        %v3876 = vld [vmem:[#allocation13 + $0x5c4] sm:$0xf]
        %v3877 = vld [vmem:[#allocation13 + $0x5c8] sm:$0xff]
        %v3878 = vld [vmem:[#allocation13 + $0x5d0] sm:$0xff]
        %v3879 = vld [vmem:[#allocation13 + $0x5d8] sm:$0xf]
        %v3880 = vld [vmem:[#allocation13 + $0x5dc] sm:$0xff]
        %v3881 = vld [vmem:[#allocation13 + $0x5e4] sm:$0xff]
        %v3882 = vld [vmem:[#allocation13 + $0x5ec] sm:$0xf]
        %v3883 = vld [vmem:[#allocation13 + $0x5f0] sm:$0xff]
        %v3884 = vld [vmem:[#allocation13 + $0x5f8] sm:$0xff]
        %v3885 = vld [vmem:[#allocation13 + $0x600] sm:$0xf]
        %v3886 = vld [vmem:[#allocation13 + $0x604] sm:$0xff]
        %v3887 = vld [vmem:[#allocation13 + $0x60c] sm:$0xff]
        %v3888 = vld [vmem:[#allocation13 + $0x614] sm:$0xf]
        %v3889 = vld [vmem:[#allocation13 + $0x618] sm:$0xff]
        %v3890 = vld [vmem:[#allocation13 + $0x620] sm:$0xff]
        %v3891 = vld [vmem:[#allocation13 + $0x628] sm:$0xf]
        %v3892 = vld [vmem:[#allocation13 + $0x62c] sm:$0xff]
        %v3893 = vld [vmem:[#allocation13 + $0x634] sm:$0xff]
        %v3894 = vld [vmem:[#allocation13 + $0x63c] sm:$0xf]
        %v3895 = vld [vmem:[#allocation13 + $0x640] sm:$0xff]
        %v3896 = vld [vmem:[#allocation13 + $0x648] sm:$0xff]
        %v3897 = vld [vmem:[#allocation13 + $0x650] sm:$0xf]
        %v3898 = vld [vmem:[#allocation13 + $0x654] sm:$0xff]
        %v3899 = vld [vmem:[#allocation13 + $0x65c] sm:$0xff]
        %v3900 = vld [vmem:[#allocation13 + $0x664] sm:$0xf]
        %v3901 = vld [vmem:[#allocation13 + $0x668] sm:$0xff]
        %v3902 = vld [vmem:[#allocation13 + $0x670] sm:$0xff]
        %v3903 = vld [vmem:[#allocation13 + $0x678] sm:$0xf]
        %v3904 = vld [vmem:[#allocation13 + $0x67c] sm:$0xff]
        %v3905 = vld [vmem:[#allocation13 + $0x684] sm:$0xff]
        %v3906 = vld [vmem:[#allocation13 + $0x68c] sm:$0xf]
        %v3907 = vld [vmem:[#allocation13 + $0x690] sm:$0xff]
        %v3908 = vld [vmem:[#allocation13 + $0x698] sm:$0xff]
        %v3909 = vld [vmem:[#allocation13 + $0x6a0] sm:$0xf]
        %v3910 = vld [vmem:[#allocation13 + $0x6a4] sm:$0xff]
        %v3911 = vld [vmem:[#allocation13 + $0x6ac] sm:$0xff]
        %v3912 = vld [vmem:[#allocation13 + $0x6b4] sm:$0xf]
        %v3913 = vld [vmem:[#allocation13 + $0x6b8] sm:$0xff]
        %v3914 = vld [vmem:[#allocation13 + $0x6c0] sm:$0xff]
        %v3915 = vld [vmem:[#allocation13 + $0x6c8] sm:$0xf]
        %v3916 = vld [vmem:[#allocation13 + $0x6cc] sm:$0xff]
        %v3917 = vld [vmem:[#allocation13 + $0x6d4] sm:$0xff]
        %v3918 = vld [vmem:[#allocation13 + $0x6dc] sm:$0xf]
        %v3919 = vld [vmem:[#allocation13 + $0x6e0] sm:$0xff]
        %v3920 = vld [vmem:[#allocation13 + $0x6e8] sm:$0xff]
        %v3921 = vld [vmem:[#allocation13 + $0x6f0] sm:$0xf]
        %v3922 = vld [vmem:[#allocation13 + $0x6f4] sm:$0xff]
        %v3923 = vld [vmem:[#allocation13 + $0x6fc] sm:$0xff]
        %v3924 = vld [vmem:[#allocation13 + $0x704] sm:$0xf]
        %v3925 = vld [vmem:[#allocation13 + $0x708] sm:$0xff]
        %v3926 = vld [vmem:[#allocation13 + $0x710] sm:$0xff]
        %v3927 = vld [vmem:[#allocation13 + $0x718] sm:$0xf]
        %v3928 = vld [vmem:[#allocation13 + $0x71c] sm:$0xff]
        %v3929 = vld [vmem:[#allocation13 + $0x724] sm:$0xff]
        %v3930 = vld [vmem:[#allocation13 + $0x72c] sm:$0xf]
        %v3931 = vld [vmem:[#allocation13 + $0x730] sm:$0xff]
        %v3932 = vld [vmem:[#allocation13 + $0x738] sm:$0xff]
        %v3933 = vld [vmem:[#allocation13 + $0x740] sm:$0xf]
        %v3934 = vld [vmem:[#allocation13 + $0x744] sm:$0xff]
        %v3935 = vld [vmem:[#allocation13 + $0x74c] sm:$0xff]
        %v3936 = vld [vmem:[#allocation13 + $0x754] sm:$0xf]
        %v3937 = vld [vmem:[#allocation13 + $0x758] sm:$0xff]
        %v3938 = vld [vmem:[#allocation13 + $0x760] sm:$0xff]
        %v3939 = vld [vmem:[#allocation13 + $0x768] sm:$0xf]
        %v3940 = vld [vmem:[#allocation13 + $0x76c] sm:$0xff]
        %v3941 = vld [vmem:[#allocation13 + $0x774] sm:$0xff]
        %v3942 = vld [vmem:[#allocation13 + $0x77c] sm:$0xf]
        %v3943 = vld [vmem:[#allocation14] sm:$0x1f]
        %v3945 = vlaneseq
        %v3946 = vshrl.u32 %v3945, 7
        %v3947 = vsub.s32 0, %v3946
        %v3948 = vrot.slane %v3943, %v3947
        %v3949 = vlaneseq
        %v3950 = vshrl.u32 %v3949, 7
        %v3951 = vsub.s32 1, %v3950
        %v3952 = vrot.slane %v3943, %v3951
        %v3953 = vlaneseq
        %v3954 = vshrl.u32 %v3953, 7
        %v3955 = vsub.s32 2, %v3954
        %v3956 = vrot.slane %v3943, %v3955
        %v3957 = vlaneseq
        %v3958 = vshrl.u32 %v3957, 7
        %v3959 = vsub.s32 3, %v3958
        %v3960 = vrot.slane %v3943, %v3959
        %v3961 = vlaneseq
        %v3962 = vshrl.u32 %v3961, 7
        %v3963 = vsub.s32 4, %v3962
        %v3964 = vrot.slane %v3943, %v3963
        %v4258 = vunpack.c.l.b16 %v3655
        %v4259 = vunpack.c.h.b16 %v3655
        %v4260 = vunpack.c.l.b16 %v3656
        %v4261 = vunpack.c.h.b16 %v3656
        %v4262 = vunpack.c.l.b16 %v3657
        %v4263 = vunpack.c.l.b16 %v3658
        %v4264 = vunpack.c.h.b16 %v3658
        %v4265 = vunpack.c.l.b16 %v3659
        %v4266 = vunpack.c.h.b16 %v3659
        %v4267 = vunpack.c.l.b16 %v3660
        %v4268 = vunpack.c.l.b16 %v3661
        %v4269 = vunpack.c.h.b16 %v3661
        %v4270 = vunpack.c.l.b16 %v3662
        %v4271 = vunpack.c.h.b16 %v3662
        %v4272 = vunpack.c.l.b16 %v3663
        %v4273 = vunpack.c.l.b16 %v3664
        %v4274 = vunpack.c.h.b16 %v3664
        %v4275 = vunpack.c.l.b16 %v3665
        %v4276 = vunpack.c.h.b16 %v3665
        %v4277 = vunpack.c.l.b16 %v3666
        %v4278 = vunpack.c.l.b16 %v3667
        %v4279 = vunpack.c.h.b16 %v3667
        %v4280 = vunpack.c.l.b16 %v3668
        %v4281 = vunpack.c.h.b16 %v3668
        %v4282 = vunpack.c.l.b16 %v3669
        %v4283 = vunpack.c.l.b16 %v3670
        %v4284 = vunpack.c.h.b16 %v3670
        %v4285 = vunpack.c.l.b16 %v3671
        %v4286 = vunpack.c.h.b16 %v3671
        %v4287 = vunpack.c.l.b16 %v3672
        %v4288 = vunpack.c.l.b16 %v3673
        %v4289 = vunpack.c.h.b16 %v3673
        %v4290 = vunpack.c.l.b16 %v3674
        %v4291 = vunpack.c.h.b16 %v3674
        %v4292 = vunpack.c.l.b16 %v3675
        %v4293 = vunpack.c.l.b16 %v3676
        %v4294 = vunpack.c.h.b16 %v3676
        %v4295 = vunpack.c.l.b16 %v3677
        %v4296 = vunpack.c.h.b16 %v3677
        %v4297 = vunpack.c.l.b16 %v3678
        %v4298 = vunpack.c.l.b16 %v3679
        %v4299 = vunpack.c.h.b16 %v3679
        %v4300 = vunpack.c.l.b16 %v3680
        %v4301 = vunpack.c.h.b16 %v3680
        %v4302 = vunpack.c.l.b16 %v3681
        %v4303 = vunpack.c.l.b16 %v3682
        %v4304 = vunpack.c.h.b16 %v3682
        %v4305 = vunpack.c.l.b16 %v3683
        %v4306 = vunpack.c.h.b16 %v3683
        %v4307 = vunpack.c.l.b16 %v3684
        %v4308 = vunpack.c.l.b16 %v3685
        %v4309 = vunpack.c.h.b16 %v3685
        %v4310 = vunpack.c.l.b16 %v3686
        %v4311 = vunpack.c.h.b16 %v3686
        %v4312 = vunpack.c.l.b16 %v3687
        %v4313 = vunpack.c.l.b16 %v3688
        %v4314 = vunpack.c.h.b16 %v3688
        %v4315 = vunpack.c.l.b16 %v3689
        %v4316 = vunpack.c.h.b16 %v3689
        %v4317 = vunpack.c.l.b16 %v3690
        %v4318 = vunpack.c.l.b16 %v3691
        %v4319 = vunpack.c.h.b16 %v3691
        %v4320 = vunpack.c.l.b16 %v3692
        %v4321 = vunpack.c.h.b16 %v3692
        %v4322 = vunpack.c.l.b16 %v3693
        %v4323 = vunpack.c.l.b16 %v3694
        %v4324 = vunpack.c.h.b16 %v3694
        %v4325 = vunpack.c.l.b16 %v3695
        %v4326 = vunpack.c.h.b16 %v3695
        %v4327 = vunpack.c.l.b16 %v3696
        %v4328 = vunpack.c.l.b16 %v3697
        %v4329 = vunpack.c.h.b16 %v3697
        %v4330 = vunpack.c.l.b16 %v3698
        %v4331 = vunpack.c.h.b16 %v3698
        %v4332 = vunpack.c.l.b16 %v3699
        %v4333 = vunpack.c.l.b16 %v3700
        %v4334 = vunpack.c.h.b16 %v3700
        %v4335 = vunpack.c.l.b16 %v3701
        %v4336 = vunpack.c.h.b16 %v3701
        %v4337 = vunpack.c.l.b16 %v3702
        %v4338 = vunpack.c.l.b16 %v3703
        %v4339 = vunpack.c.h.b16 %v3703
        %v4340 = vunpack.c.l.b16 %v3704
        %v4341 = vunpack.c.h.b16 %v3704
        %v4342 = vunpack.c.l.b16 %v3705
        %v4343 = vunpack.c.l.b16 %v3706
        %v4344 = vunpack.c.h.b16 %v3706
        %v4345 = vunpack.c.l.b16 %v3707
        %v4346 = vunpack.c.h.b16 %v3707
        %v4347 = vunpack.c.l.b16 %v3708
        %v4348 = vunpack.c.l.b16 %v3709
        %v4349 = vunpack.c.h.b16 %v3709
        %v4350 = vunpack.c.l.b16 %v3710
        %v4351 = vunpack.c.h.b16 %v3710
        %v4352 = vunpack.c.l.b16 %v3711
        %v4353 = vunpack.c.l.b16 %v3712
        %v4354 = vunpack.c.h.b16 %v3712
        %v4355 = vunpack.c.l.b16 %v3713
        %v4356 = vunpack.c.h.b16 %v3713
        %v4357 = vunpack.c.l.b16 %v3714
        %v4358 = vunpack.c.l.b16 %v3715
        %v4359 = vunpack.c.h.b16 %v3715
        %v4360 = vunpack.c.l.b16 %v3716
        %v4361 = vunpack.c.h.b16 %v3716
        %v4362 = vunpack.c.l.b16 %v3717
        %v4363 = vunpack.c.l.b16 %v3718
        %v4364 = vunpack.c.h.b16 %v3718
        %v4365 = vunpack.c.l.b16 %v3719
        %v4366 = vunpack.c.h.b16 %v3719
        %v4367 = vunpack.c.l.b16 %v3720
        %v4368 = vunpack.c.l.b16 %v3721
        %v4369 = vunpack.c.h.b16 %v3721
        %v4370 = vunpack.c.l.b16 %v3722
        %v4371 = vunpack.c.h.b16 %v3722
        %v4372 = vunpack.c.l.b16 %v3723
        %v4373 = vunpack.c.l.b16 %v3724
        %v4374 = vunpack.c.h.b16 %v3724
        %v4375 = vunpack.c.l.b16 %v3725
        %v4376 = vunpack.c.h.b16 %v3725
        %v4377 = vunpack.c.l.b16 %v3726
        %v4378 = vunpack.c.l.b16 %v3727
        %v4379 = vunpack.c.h.b16 %v3727
        %v4380 = vunpack.c.l.b16 %v3728
        %v4381 = vunpack.c.h.b16 %v3728
        %v4382 = vunpack.c.l.b16 %v3729
        %v4383 = vunpack.c.l.b16 %v3730
        %v4384 = vunpack.c.h.b16 %v3730
        %v4385 = vunpack.c.l.b16 %v3731
        %v4386 = vunpack.c.h.b16 %v3731
        %v4387 = vunpack.c.l.b16 %v3732
        %v4388 = vunpack.c.l.b16 %v3733
        %v4389 = vunpack.c.h.b16 %v3733
        %v4390 = vunpack.c.l.b16 %v3734
        %v4391 = vunpack.c.h.b16 %v3734
        %v4392 = vunpack.c.l.b16 %v3735
        %v4393 = vunpack.c.l.b16 %v3736
        %v4394 = vunpack.c.h.b16 %v3736
        %v4395 = vunpack.c.l.b16 %v3737
        %v4396 = vunpack.c.h.b16 %v3737
        %v4397 = vunpack.c.l.b16 %v3738
        %v4398 = vunpack.c.l.b16 %v3739
        %v4399 = vunpack.c.h.b16 %v3739
        %v4400 = vunpack.c.l.b16 %v3740
        %v4401 = vunpack.c.h.b16 %v3740
        %v4402 = vunpack.c.l.b16 %v3741
        %v4403 = vunpack.c.l.b16 %v3742
        %v4404 = vunpack.c.h.b16 %v3742
        %v4405 = vunpack.c.l.b16 %v3743
        %v4406 = vunpack.c.h.b16 %v3743
        %v4407 = vunpack.c.l.b16 %v3744
        %v4408 = vunpack.c.l.b16 %v3745
        %v4409 = vunpack.c.h.b16 %v3745
        %v4410 = vunpack.c.l.b16 %v3746
        %v4411 = vunpack.c.h.b16 %v3746
        %v4412 = vunpack.c.l.b16 %v3747
        %v4413 = vunpack.c.l.b16 %v3748
        %v4414 = vunpack.c.h.b16 %v3748
        %v4415 = vunpack.c.l.b16 %v3749
        %v4416 = vunpack.c.h.b16 %v3749
        %v4417 = vunpack.c.l.b16 %v3750
        %v4418 = vunpack.c.l.b16 %v3751
        %v4419 = vunpack.c.h.b16 %v3751
        %v4420 = vunpack.c.l.b16 %v3752
        %v4421 = vunpack.c.h.b16 %v3752
        %v4422 = vunpack.c.l.b16 %v3753
        %v4423 = vunpack.c.l.b16 %v3754
        %v4424 = vunpack.c.h.b16 %v3754
        %v4425 = vunpack.c.l.b16 %v3755
        %v4426 = vunpack.c.h.b16 %v3755
        %v4427 = vunpack.c.l.b16 %v3756
        %v4428 = vunpack.c.l.b16 %v3757
        %v4429 = vunpack.c.h.b16 %v3757
        %v4430 = vunpack.c.l.b16 %v3758
        %v4431 = vunpack.c.h.b16 %v3758
        %v4432 = vunpack.c.l.b16 %v3759
        %v4433 = vunpack.c.l.b16 %v3760
        %v4434 = vunpack.c.h.b16 %v3760
        %v4435 = vunpack.c.l.b16 %v3761
        %v4436 = vunpack.c.h.b16 %v3761
        %v4437 = vunpack.c.l.b16 %v3762
        %v4438 = vunpack.c.l.b16 %v3763
        %v4439 = vunpack.c.h.b16 %v3763
        %v4440 = vunpack.c.l.b16 %v3764
        %v4441 = vunpack.c.h.b16 %v3764
        %v4442 = vunpack.c.l.b16 %v3765
        %v4443 = vunpack.c.l.b16 %v3766
        %v4444 = vunpack.c.h.b16 %v3766
        %v4445 = vunpack.c.l.b16 %v3767
        %v4446 = vunpack.c.h.b16 %v3767
        %v4447 = vunpack.c.l.b16 %v3768
        %v4448 = vunpack.c.l.b16 %v3769
        %v4449 = vunpack.c.h.b16 %v3769
        %v4450 = vunpack.c.l.b16 %v3770
        %v4451 = vunpack.c.h.b16 %v3770
        %v4452 = vunpack.c.l.b16 %v3771
        %v4453 = vunpack.c.l.b16 %v3772
        %v4454 = vunpack.c.h.b16 %v3772
        %v4455 = vunpack.c.l.b16 %v3773
        %v4456 = vunpack.c.h.b16 %v3773
        %v4457 = vunpack.c.l.b16 %v3774
        %v4458 = vunpack.c.l.b16 %v3775
        %v4459 = vunpack.c.h.b16 %v3775
        %v4460 = vunpack.c.l.b16 %v3776
        %v4461 = vunpack.c.h.b16 %v3776
        %v4462 = vunpack.c.l.b16 %v3777
        %v4463 = vunpack.c.l.b16 %v3778
        %v4464 = vunpack.c.h.b16 %v3778
        %v4465 = vunpack.c.l.b16 %v3779
        %v4466 = vunpack.c.h.b16 %v3779
        %v4467 = vunpack.c.l.b16 %v3780
        %v4468 = vunpack.c.l.b16 %v3781
        %v4469 = vunpack.c.h.b16 %v3781
        %v4470 = vunpack.c.l.b16 %v3782
        %v4471 = vunpack.c.h.b16 %v3782
        %v4472 = vunpack.c.l.b16 %v3783
        %v4473 = vunpack.c.l.b16 %v3784
        %v4474 = vunpack.c.h.b16 %v3784
        %v4475 = vunpack.c.l.b16 %v3785
        %v4476 = vunpack.c.h.b16 %v3785
        %v4477 = vunpack.c.l.b16 %v3786
        %v4478 = vunpack.c.l.b16 %v3787
        %v4479 = vunpack.c.h.b16 %v3787
        %v4480 = vunpack.c.l.b16 %v3788
        %v4481 = vunpack.c.h.b16 %v3788
        %v4482 = vunpack.c.l.b16 %v3789
        %v4483 = vunpack.c.l.b16 %v3790
        %v4484 = vunpack.c.h.b16 %v3790
        %v4485 = vunpack.c.l.b16 %v3791
        %v4486 = vunpack.c.h.b16 %v3791
        %v4487 = vunpack.c.l.b16 %v3792
        %v4488 = vunpack.c.l.b16 %v3793
        %v4489 = vunpack.c.h.b16 %v3793
        %v4490 = vunpack.c.l.b16 %v3794
        %v4491 = vunpack.c.h.b16 %v3794
        %v4492 = vunpack.c.l.b16 %v3795
        %v4493 = vunpack.c.l.b16 %v3796
        %v4494 = vunpack.c.h.b16 %v3796
        %v4495 = vunpack.c.l.b16 %v3797
        %v4496 = vunpack.c.h.b16 %v3797
        %v4497 = vunpack.c.l.b16 %v3798
        %v4498 = vunpack.c.l.b16 %v3799
        %v4499 = vunpack.c.h.b16 %v3799
        %v4500 = vunpack.c.l.b16 %v3800
        %v4501 = vunpack.c.h.b16 %v3800
        %v4502 = vunpack.c.l.b16 %v3801
        %v4503 = vunpack.c.l.b16 %v3802
        %v4504 = vunpack.c.h.b16 %v3802
        %v4505 = vunpack.c.l.b16 %v3803
        %v4506 = vunpack.c.h.b16 %v3803
        %v4507 = vunpack.c.l.b16 %v3804
        %v4508 = vunpack.c.l.b16 %v3805
        %v4509 = vunpack.c.h.b16 %v3805
        %v4510 = vunpack.c.l.b16 %v3806
        %v4511 = vunpack.c.h.b16 %v3806
        %v4512 = vunpack.c.l.b16 %v3807
        %v4513 = vunpack.c.l.b16 %v3808
        %v4514 = vunpack.c.h.b16 %v3808
        %v4515 = vunpack.c.l.b16 %v3809
        %v4516 = vunpack.c.h.b16 %v3809
        %v4517 = vunpack.c.l.b16 %v3810
        %v4518 = vunpack.c.l.b16 %v3811
        %v4519 = vunpack.c.h.b16 %v3811
        %v4520 = vunpack.c.l.b16 %v3812
        %v4521 = vunpack.c.h.b16 %v3812
        %v4522 = vunpack.c.l.b16 %v3813
        %v4523 = vunpack.c.l.b16 %v3814
        %v4524 = vunpack.c.h.b16 %v3814
        %v4525 = vunpack.c.l.b16 %v3815
        %v4526 = vunpack.c.h.b16 %v3815
        %v4527 = vunpack.c.l.b16 %v3816
        %v4528 = vunpack.c.l.b16 %v3817
        %v4529 = vunpack.c.h.b16 %v3817
        %v4530 = vunpack.c.l.b16 %v3818
        %v4531 = vunpack.c.h.b16 %v3818
        %v4532 = vunpack.c.l.b16 %v3819
        %v4533 = vunpack.c.l.b16 %v3820
        %v4534 = vunpack.c.h.b16 %v3820
        %v4535 = vunpack.c.l.b16 %v3821
        %v4536 = vunpack.c.h.b16 %v3821
        %v4537 = vunpack.c.l.b16 %v3822
        %v4538 = vunpack.c.l.b16 %v3823
        %v4539 = vunpack.c.h.b16 %v3823
        %v4540 = vunpack.c.l.b16 %v3824
        %v4541 = vunpack.c.h.b16 %v3824
        %v4542 = vunpack.c.l.b16 %v3825
        %v4543 = vunpack.c.l.b16 %v3826
        %v4544 = vunpack.c.h.b16 %v3826
        %v4545 = vunpack.c.l.b16 %v3827
        %v4546 = vunpack.c.h.b16 %v3827
        %v4547 = vunpack.c.l.b16 %v3828
        %v4548 = vunpack.c.l.b16 %v3829
        %v4549 = vunpack.c.h.b16 %v3829
        %v4550 = vunpack.c.l.b16 %v3830
        %v4551 = vunpack.c.h.b16 %v3830
        %v4552 = vunpack.c.l.b16 %v3831
        %v4553 = vunpack.c.l.b16 %v3832
        %v4554 = vunpack.c.h.b16 %v3832
        %v4555 = vunpack.c.l.b16 %v3833
        %v4556 = vunpack.c.h.b16 %v3833
        %v4557 = vunpack.c.l.b16 %v3834
        %v4558 = vunpack.c.l.b16 %v3835
        %v4559 = vunpack.c.h.b16 %v3835
        %v4560 = vunpack.c.l.b16 %v3836
        %v4561 = vunpack.c.h.b16 %v3836
        %v4562 = vunpack.c.l.b16 %v3837
        %v4563 = vunpack.c.l.b16 %v3838
        %v4564 = vunpack.c.h.b16 %v3838
        %v4565 = vunpack.c.l.b16 %v3839
        %v4566 = vunpack.c.h.b16 %v3839
        %v4567 = vunpack.c.l.b16 %v3840
        %v4568 = vunpack.c.l.b16 %v3841
        %v4569 = vunpack.c.h.b16 %v3841
        %v4570 = vunpack.c.l.b16 %v3842
        %v4571 = vunpack.c.h.b16 %v3842
        %v4572 = vunpack.c.l.b16 %v3843
        %v4573 = vunpack.c.l.b16 %v3844
        %v4574 = vunpack.c.h.b16 %v3844
        %v4575 = vunpack.c.l.b16 %v3845
        %v4576 = vunpack.c.h.b16 %v3845
        %v4577 = vunpack.c.l.b16 %v3846
        %v4578 = vunpack.c.l.b16 %v3847
        %v4579 = vunpack.c.h.b16 %v3847
        %v4580 = vunpack.c.l.b16 %v3848
        %v4581 = vunpack.c.h.b16 %v3848
        %v4582 = vunpack.c.l.b16 %v3849
        %v4583 = vunpack.c.l.b16 %v3850
        %v4584 = vunpack.c.h.b16 %v3850
        %v4585 = vunpack.c.l.b16 %v3851
        %v4586 = vunpack.c.h.b16 %v3851
        %v4587 = vunpack.c.l.b16 %v3852
        %v4588 = vunpack.c.l.b16 %v3853
        %v4589 = vunpack.c.h.b16 %v3853
        %v4590 = vunpack.c.l.b16 %v3854
        %v4591 = vunpack.c.h.b16 %v3854
        %v4592 = vunpack.c.l.b16 %v3855
        %v4593 = vunpack.c.l.b16 %v3856
        %v4594 = vunpack.c.h.b16 %v3856
        %v4595 = vunpack.c.l.b16 %v3857
        %v4596 = vunpack.c.h.b16 %v3857
        %v4597 = vunpack.c.l.b16 %v3858
        %v4598 = vunpack.c.l.b16 %v3859
        %v4599 = vunpack.c.h.b16 %v3859
        %v4600 = vunpack.c.l.b16 %v3860
        %v4601 = vunpack.c.h.b16 %v3860
        %v4602 = vunpack.c.l.b16 %v3861
        %v4603 = vunpack.c.l.b16 %v3862
        %v4604 = vunpack.c.h.b16 %v3862
        %v4605 = vunpack.c.l.b16 %v3863
        %v4606 = vunpack.c.h.b16 %v3863
        %v4607 = vunpack.c.l.b16 %v3864
        %v4608 = vunpack.c.l.b16 %v3865
        %v4609 = vunpack.c.h.b16 %v3865
        %v4610 = vunpack.c.l.b16 %v3866
        %v4611 = vunpack.c.h.b16 %v3866
        %v4612 = vunpack.c.l.b16 %v3867
        %v4613 = vunpack.c.l.b16 %v3868
        %v4614 = vunpack.c.h.b16 %v3868
        %v4615 = vunpack.c.l.b16 %v3869
        %v4616 = vunpack.c.h.b16 %v3869
        %v4617 = vunpack.c.l.b16 %v3870
        %v4618 = vunpack.c.l.b16 %v3871
        %v4619 = vunpack.c.h.b16 %v3871
        %v4620 = vunpack.c.l.b16 %v3872
        %v4621 = vunpack.c.h.b16 %v3872
        %v4622 = vunpack.c.l.b16 %v3873
        %v4623 = vunpack.c.l.b16 %v3874
        %v4624 = vunpack.c.h.b16 %v3874
        %v4625 = vunpack.c.l.b16 %v3875
        %v4626 = vunpack.c.h.b16 %v3875
        %v4627 = vunpack.c.l.b16 %v3876
        %v4628 = vunpack.c.l.b16 %v3877
        %v4629 = vunpack.c.h.b16 %v3877
        %v4630 = vunpack.c.l.b16 %v3878
        %v4631 = vunpack.c.h.b16 %v3878
        %v4632 = vunpack.c.l.b16 %v3879
        %v4633 = vunpack.c.l.b16 %v3880
        %v4634 = vunpack.c.h.b16 %v3880
        %v4635 = vunpack.c.l.b16 %v3881
        %v4636 = vunpack.c.h.b16 %v3881
        %v4637 = vunpack.c.l.b16 %v3882
        %v4638 = vunpack.c.l.b16 %v3883
        %v4639 = vunpack.c.h.b16 %v3883
        %v4640 = vunpack.c.l.b16 %v3884
        %v4641 = vunpack.c.h.b16 %v3884
        %v4642 = vunpack.c.l.b16 %v3885
        %v4643 = vunpack.c.l.b16 %v3886
        %v4644 = vunpack.c.h.b16 %v3886
        %v4645 = vunpack.c.l.b16 %v3887
        %v4646 = vunpack.c.h.b16 %v3887
        %v4647 = vunpack.c.l.b16 %v3888
        %v4648 = vunpack.c.l.b16 %v3889
        %v4649 = vunpack.c.h.b16 %v3889
        %v4650 = vunpack.c.l.b16 %v3890
        %v4651 = vunpack.c.h.b16 %v3890
        %v4652 = vunpack.c.l.b16 %v3891
        %v4653 = vunpack.c.l.b16 %v3892
        %v4654 = vunpack.c.h.b16 %v3892
        %v4655 = vunpack.c.l.b16 %v3893
        %v4656 = vunpack.c.h.b16 %v3893
        %v4657 = vunpack.c.l.b16 %v3894
        %v4658 = vunpack.c.l.b16 %v3895
        %v4659 = vunpack.c.h.b16 %v3895
        %v4660 = vunpack.c.l.b16 %v3896
        %v4661 = vunpack.c.h.b16 %v3896
        %v4662 = vunpack.c.l.b16 %v3897
        %v4663 = vunpack.c.l.b16 %v3898
        %v4664 = vunpack.c.h.b16 %v3898
        %v4665 = vunpack.c.l.b16 %v3899
        %v4666 = vunpack.c.h.b16 %v3899
        %v4667 = vunpack.c.l.b16 %v3900
        %v4668 = vunpack.c.l.b16 %v3901
        %v4669 = vunpack.c.h.b16 %v3901
        %v4670 = vunpack.c.l.b16 %v3902
        %v4671 = vunpack.c.h.b16 %v3902
        %v4672 = vunpack.c.l.b16 %v3903
        %v4673 = vunpack.c.l.b16 %v3904
        %v4674 = vunpack.c.h.b16 %v3904
        %v4675 = vunpack.c.l.b16 %v3905
        %v4676 = vunpack.c.h.b16 %v3905
        %v4677 = vunpack.c.l.b16 %v3906
        %v4678 = vunpack.c.l.b16 %v3907
        %v4679 = vunpack.c.h.b16 %v3907
        %v4680 = vunpack.c.l.b16 %v3908
        %v4681 = vunpack.c.h.b16 %v3908
        %v4682 = vunpack.c.l.b16 %v3909
        %v4683 = vunpack.c.l.b16 %v3910
        %v4684 = vunpack.c.h.b16 %v3910
        %v4685 = vunpack.c.l.b16 %v3911
        %v4686 = vunpack.c.h.b16 %v3911
        %v4687 = vunpack.c.l.b16 %v3912
        %v4688 = vunpack.c.l.b16 %v3913
        %v4689 = vunpack.c.h.b16 %v3913
        %v4690 = vunpack.c.l.b16 %v3914
        %v4691 = vunpack.c.h.b16 %v3914
        %v4692 = vunpack.c.l.b16 %v3915
        %v4693 = vunpack.c.l.b16 %v3916
        %v4694 = vunpack.c.h.b16 %v3916
        %v4695 = vunpack.c.l.b16 %v3917
        %v4696 = vunpack.c.h.b16 %v3917
        %v4697 = vunpack.c.l.b16 %v3918
        %v4698 = vunpack.c.l.b16 %v3919
        %v4699 = vunpack.c.h.b16 %v3919
        %v4700 = vunpack.c.l.b16 %v3920
        %v4701 = vunpack.c.h.b16 %v3920
        %v4702 = vunpack.c.l.b16 %v3921
        %v4703 = vunpack.c.l.b16 %v3922
        %v4704 = vunpack.c.h.b16 %v3922
        %v4705 = vunpack.c.l.b16 %v3923
        %v4706 = vunpack.c.h.b16 %v3923
        %v4707 = vunpack.c.l.b16 %v3924
        %v4708 = vunpack.c.l.b16 %v3925
        %v4709 = vunpack.c.h.b16 %v3925
        %v4710 = vunpack.c.l.b16 %v3926
        %v4711 = vunpack.c.h.b16 %v3926
        %v4712 = vunpack.c.l.b16 %v3927
        %v4713 = vunpack.c.l.b16 %v3928
        %v4714 = vunpack.c.h.b16 %v3928
        %v4715 = vunpack.c.l.b16 %v3929
        %v4716 = vunpack.c.h.b16 %v3929
        %v4717 = vunpack.c.l.b16 %v3930
        %v4718 = vunpack.c.l.b16 %v3931
        %v4719 = vunpack.c.h.b16 %v3931
        %v4720 = vunpack.c.l.b16 %v3932
        %v4721 = vunpack.c.h.b16 %v3932
        %v4722 = vunpack.c.l.b16 %v3933
        %v4723 = vunpack.c.l.b16 %v3934
        %v4724 = vunpack.c.h.b16 %v3934
        %v4725 = vunpack.c.l.b16 %v3935
        %v4726 = vunpack.c.h.b16 %v3935
        %v4727 = vunpack.c.l.b16 %v3936
        %v4728 = vunpack.c.l.b16 %v3937
        %v4729 = vunpack.c.h.b16 %v3937
        %v4730 = vunpack.c.l.b16 %v3938
        %v4731 = vunpack.c.h.b16 %v3938
        %v4732 = vunpack.c.l.b16 %v3939
        %v4733 = vunpack.c.l.b16 %v3940
        %v4734 = vunpack.c.h.b16 %v3940
        %v4735 = vunpack.c.l.b16 %v3941
        %v4736 = vunpack.c.h.b16 %v3941
        %v4737 = vunpack.c.l.b16 %v3942
        %v4738 = vpack.c.b16 %v4263, %v4258
        %v4739 = vpack.c.b16 %v4264, %v4259
        %v4740 = vpack.c.b16 %v4265, %v4260
        %v4741 = vpack.c.b16 %v4266, %v4261
        %v4742 = vpack.c.b16 %v4267, %v4262
        %v4743 = vpack.c.b16 %v4273, %v4268
        %v4744 = vpack.c.b16 %v4274, %v4269
        %v4745 = vpack.c.b16 %v4275, %v4270
        %v4746 = vpack.c.b16 %v4276, %v4271
        %v4747 = vpack.c.b16 %v4277, %v4272
        %v4748 = vpack.c.b16 %v4283, %v4278
        %v4749 = vpack.c.b16 %v4284, %v4279
        %v4750 = vpack.c.b16 %v4285, %v4280
        %v4751 = vpack.c.b16 %v4286, %v4281
        %v4752 = vpack.c.b16 %v4287, %v4282
        %v4753 = vpack.c.b16 %v4293, %v4288
        %v4754 = vpack.c.b16 %v4294, %v4289
        %v4755 = vpack.c.b16 %v4295, %v4290
        %v4756 = vpack.c.b16 %v4296, %v4291
        %v4757 = vpack.c.b16 %v4297, %v4292
        %v4758 = vpack.c.b16 %v4303, %v4298
        %v4759 = vpack.c.b16 %v4304, %v4299
        %v4760 = vpack.c.b16 %v4305, %v4300
        %v4761 = vpack.c.b16 %v4306, %v4301
        %v4762 = vpack.c.b16 %v4307, %v4302
        %v4763 = vpack.c.b16 %v4313, %v4308
        %v4764 = vpack.c.b16 %v4314, %v4309
        %v4765 = vpack.c.b16 %v4315, %v4310
        %v4766 = vpack.c.b16 %v4316, %v4311
        %v4767 = vpack.c.b16 %v4317, %v4312
        %v4768 = vpack.c.b16 %v4323, %v4318
        %v4769 = vpack.c.b16 %v4324, %v4319
        %v4770 = vpack.c.b16 %v4325, %v4320
        %v4771 = vpack.c.b16 %v4326, %v4321
        %v4772 = vpack.c.b16 %v4327, %v4322
        %v4773 = vpack.c.b16 %v4333, %v4328
        %v4774 = vpack.c.b16 %v4334, %v4329
        %v4775 = vpack.c.b16 %v4335, %v4330
        %v4776 = vpack.c.b16 %v4336, %v4331
        %v4777 = vpack.c.b16 %v4337, %v4332
        %v4778 = vpack.c.b16 %v4343, %v4338
        %v4779 = vpack.c.b16 %v4344, %v4339
        %v4780 = vpack.c.b16 %v4345, %v4340
        %v4781 = vpack.c.b16 %v4346, %v4341
        %v4782 = vpack.c.b16 %v4347, %v4342
        %v4783 = vpack.c.b16 %v4353, %v4348
        %v4784 = vpack.c.b16 %v4354, %v4349
        %v4785 = vpack.c.b16 %v4355, %v4350
        %v4786 = vpack.c.b16 %v4356, %v4351
        %v4787 = vpack.c.b16 %v4357, %v4352
        %v4788 = vpack.c.b16 %v4363, %v4358
        %v4789 = vpack.c.b16 %v4364, %v4359
        %v4790 = vpack.c.b16 %v4365, %v4360
        %v4791 = vpack.c.b16 %v4366, %v4361
        %v4792 = vpack.c.b16 %v4367, %v4362
        %v4793 = vpack.c.b16 %v4373, %v4368
        %v4794 = vpack.c.b16 %v4374, %v4369
        %v4795 = vpack.c.b16 %v4375, %v4370
        %v4796 = vpack.c.b16 %v4376, %v4371
        %v4797 = vpack.c.b16 %v4377, %v4372
        %v4798 = vpack.c.b16 %v4383, %v4378
        %v4799 = vpack.c.b16 %v4384, %v4379
        %v4800 = vpack.c.b16 %v4385, %v4380
        %v4801 = vpack.c.b16 %v4386, %v4381
        %v4802 = vpack.c.b16 %v4387, %v4382
        %v4803 = vpack.c.b16 %v4393, %v4388
        %v4804 = vpack.c.b16 %v4394, %v4389
        %v4805 = vpack.c.b16 %v4395, %v4390
        %v4806 = vpack.c.b16 %v4396, %v4391
        %v4807 = vpack.c.b16 %v4397, %v4392
        %v4808 = vpack.c.b16 %v4403, %v4398
        %v4809 = vpack.c.b16 %v4404, %v4399
        %v4810 = vpack.c.b16 %v4405, %v4400
        %v4811 = vpack.c.b16 %v4406, %v4401
        %v4812 = vpack.c.b16 %v4407, %v4402
        %v4813 = vpack.c.b16 %v4413, %v4408
        %v4814 = vpack.c.b16 %v4414, %v4409
        %v4815 = vpack.c.b16 %v4415, %v4410
        %v4816 = vpack.c.b16 %v4416, %v4411
        %v4817 = vpack.c.b16 %v4417, %v4412
        %v4818 = vpack.c.b16 %v4423, %v4418
        %v4819 = vpack.c.b16 %v4424, %v4419
        %v4820 = vpack.c.b16 %v4425, %v4420
        %v4821 = vpack.c.b16 %v4426, %v4421
        %v4822 = vpack.c.b16 %v4427, %v4422
        %v4823 = vpack.c.b16 %v4433, %v4428
        %v4824 = vpack.c.b16 %v4434, %v4429
        %v4825 = vpack.c.b16 %v4435, %v4430
        %v4826 = vpack.c.b16 %v4436, %v4431
        %v4827 = vpack.c.b16 %v4437, %v4432
        %v4828 = vpack.c.b16 %v4443, %v4438
        %v4829 = vpack.c.b16 %v4444, %v4439
        %v4830 = vpack.c.b16 %v4445, %v4440
        %v4831 = vpack.c.b16 %v4446, %v4441
        %v4832 = vpack.c.b16 %v4447, %v4442
        %v4833 = vpack.c.b16 %v4453, %v4448
        %v4834 = vpack.c.b16 %v4454, %v4449
        %v4835 = vpack.c.b16 %v4455, %v4450
        %v4836 = vpack.c.b16 %v4456, %v4451
        %v4837 = vpack.c.b16 %v4457, %v4452
        %v4838 = vpack.c.b16 %v4463, %v4458
        %v4839 = vpack.c.b16 %v4464, %v4459
        %v4840 = vpack.c.b16 %v4465, %v4460
        %v4841 = vpack.c.b16 %v4466, %v4461
        %v4842 = vpack.c.b16 %v4467, %v4462
        %v4843 = vpack.c.b16 %v4473, %v4468
        %v4844 = vpack.c.b16 %v4474, %v4469
        %v4845 = vpack.c.b16 %v4475, %v4470
        %v4846 = vpack.c.b16 %v4476, %v4471
        %v4847 = vpack.c.b16 %v4477, %v4472
        %v4848 = vpack.c.b16 %v4483, %v4478
        %v4849 = vpack.c.b16 %v4484, %v4479
        %v4850 = vpack.c.b16 %v4485, %v4480
        %v4851 = vpack.c.b16 %v4486, %v4481
        %v4852 = vpack.c.b16 %v4487, %v4482
        %v4853 = vpack.c.b16 %v4493, %v4488
        %v4854 = vpack.c.b16 %v4494, %v4489
        %v4855 = vpack.c.b16 %v4495, %v4490
        %v4856 = vpack.c.b16 %v4496, %v4491
        %v4857 = vpack.c.b16 %v4497, %v4492
        %v4858 = vpack.c.b16 %v4503, %v4498
        %v4859 = vpack.c.b16 %v4504, %v4499
        %v4860 = vpack.c.b16 %v4505, %v4500
        %v4861 = vpack.c.b16 %v4506, %v4501
        %v4862 = vpack.c.b16 %v4507, %v4502
        %v4863 = vpack.c.b16 %v4513, %v4508
        %v4864 = vpack.c.b16 %v4514, %v4509
        %v4865 = vpack.c.b16 %v4515, %v4510
        %v4866 = vpack.c.b16 %v4516, %v4511
        %v4867 = vpack.c.b16 %v4517, %v4512
        %v4868 = vpack.c.b16 %v4523, %v4518
        %v4869 = vpack.c.b16 %v4524, %v4519
        %v4870 = vpack.c.b16 %v4525, %v4520
        %v4871 = vpack.c.b16 %v4526, %v4521
        %v4872 = vpack.c.b16 %v4527, %v4522
        %v4873 = vpack.c.b16 %v4533, %v4528
        %v4874 = vpack.c.b16 %v4534, %v4529
        %v4875 = vpack.c.b16 %v4535, %v4530
        %v4876 = vpack.c.b16 %v4536, %v4531
        %v4877 = vpack.c.b16 %v4537, %v4532
        %v4878 = vpack.c.b16 %v4543, %v4538
        %v4879 = vpack.c.b16 %v4544, %v4539
        %v4880 = vpack.c.b16 %v4545, %v4540
        %v4881 = vpack.c.b16 %v4546, %v4541
        %v4882 = vpack.c.b16 %v4547, %v4542
        %v4883 = vpack.c.b16 %v4553, %v4548
        %v4884 = vpack.c.b16 %v4554, %v4549
        %v4885 = vpack.c.b16 %v4555, %v4550
        %v4886 = vpack.c.b16 %v4556, %v4551
        %v4887 = vpack.c.b16 %v4557, %v4552
        %v4888 = vpack.c.b16 %v4563, %v4558
        %v4889 = vpack.c.b16 %v4564, %v4559
        %v4890 = vpack.c.b16 %v4565, %v4560
        %v4891 = vpack.c.b16 %v4566, %v4561
        %v4892 = vpack.c.b16 %v4567, %v4562
        %v4893 = vpack.c.b16 %v4573, %v4568
        %v4894 = vpack.c.b16 %v4574, %v4569
        %v4895 = vpack.c.b16 %v4575, %v4570
        %v4896 = vpack.c.b16 %v4576, %v4571
        %v4897 = vpack.c.b16 %v4577, %v4572
        %v4898 = vpack.c.b16 %v4583, %v4578
        %v4899 = vpack.c.b16 %v4584, %v4579
        %v4900 = vpack.c.b16 %v4585, %v4580
        %v4901 = vpack.c.b16 %v4586, %v4581
        %v4902 = vpack.c.b16 %v4587, %v4582
        %v4903 = vpack.c.b16 %v4593, %v4588
        %v4904 = vpack.c.b16 %v4594, %v4589
        %v4905 = vpack.c.b16 %v4595, %v4590
        %v4906 = vpack.c.b16 %v4596, %v4591
        %v4907 = vpack.c.b16 %v4597, %v4592
        %v4908 = vpack.c.b16 %v4603, %v4598
        %v4909 = vpack.c.b16 %v4604, %v4599
        %v4910 = vpack.c.b16 %v4605, %v4600
        %v4911 = vpack.c.b16 %v4606, %v4601
        %v4912 = vpack.c.b16 %v4607, %v4602
        %v4913 = vpack.c.b16 %v4613, %v4608
        %v4914 = vpack.c.b16 %v4614, %v4609
        %v4915 = vpack.c.b16 %v4615, %v4610
        %v4916 = vpack.c.b16 %v4616, %v4611
        %v4917 = vpack.c.b16 %v4617, %v4612
        %v4918 = vpack.c.b16 %v4623, %v4618
        %v4919 = vpack.c.b16 %v4624, %v4619
        %v4920 = vpack.c.b16 %v4625, %v4620
        %v4921 = vpack.c.b16 %v4626, %v4621
        %v4922 = vpack.c.b16 %v4627, %v4622
        %v4923 = vpack.c.b16 %v4633, %v4628
        %v4924 = vpack.c.b16 %v4634, %v4629
        %v4925 = vpack.c.b16 %v4635, %v4630
        %v4926 = vpack.c.b16 %v4636, %v4631
        %v4927 = vpack.c.b16 %v4637, %v4632
        %v4928 = vpack.c.b16 %v4643, %v4638
        %v4929 = vpack.c.b16 %v4644, %v4639
        %v4930 = vpack.c.b16 %v4645, %v4640
        %v4931 = vpack.c.b16 %v4646, %v4641
        %v4932 = vpack.c.b16 %v4647, %v4642
        %v4933 = vpack.c.b16 %v4653, %v4648
        %v4934 = vpack.c.b16 %v4654, %v4649
        %v4935 = vpack.c.b16 %v4655, %v4650
        %v4936 = vpack.c.b16 %v4656, %v4651
        %v4937 = vpack.c.b16 %v4657, %v4652
        %v4938 = vpack.c.b16 %v4663, %v4658
        %v4939 = vpack.c.b16 %v4664, %v4659
        %v4940 = vpack.c.b16 %v4665, %v4660
        %v4941 = vpack.c.b16 %v4666, %v4661
        %v4942 = vpack.c.b16 %v4667, %v4662
        %v4943 = vpack.c.b16 %v4673, %v4668
        %v4944 = vpack.c.b16 %v4674, %v4669
        %v4945 = vpack.c.b16 %v4675, %v4670
        %v4946 = vpack.c.b16 %v4676, %v4671
        %v4947 = vpack.c.b16 %v4677, %v4672
        %v4948 = vpack.c.b16 %v4683, %v4678
        %v4949 = vpack.c.b16 %v4684, %v4679
        %v4950 = vpack.c.b16 %v4685, %v4680
        %v4951 = vpack.c.b16 %v4686, %v4681
        %v4952 = vpack.c.b16 %v4687, %v4682
        %v4953 = vpack.c.b16 %v4693, %v4688
        %v4954 = vpack.c.b16 %v4694, %v4689
        %v4955 = vpack.c.b16 %v4695, %v4690
        %v4956 = vpack.c.b16 %v4696, %v4691
        %v4957 = vpack.c.b16 %v4697, %v4692
        %v4958 = vpack.c.b16 %v4703, %v4698
        %v4959 = vpack.c.b16 %v4704, %v4699
        %v4960 = vpack.c.b16 %v4705, %v4700
        %v4961 = vpack.c.b16 %v4706, %v4701
        %v4962 = vpack.c.b16 %v4707, %v4702
        %v4963 = vpack.c.b16 %v4713, %v4708
        %v4964 = vpack.c.b16 %v4714, %v4709
        %v4965 = vpack.c.b16 %v4715, %v4710
        %v4966 = vpack.c.b16 %v4716, %v4711
        %v4967 = vpack.c.b16 %v4717, %v4712
        %v4968 = vpack.c.b16 %v4723, %v4718
        %v4969 = vpack.c.b16 %v4724, %v4719
        %v4970 = vpack.c.b16 %v4725, %v4720
        %v4971 = vpack.c.b16 %v4726, %v4721
        %v4972 = vpack.c.b16 %v4727, %v4722
        %v4973 = vpack.c.b16 %v4733, %v4728
        %v4974 = vpack.c.b16 %v4734, %v4729
        %v4975 = vpack.c.b16 %v4735, %v4730
        %v4976 = vpack.c.b16 %v4736, %v4731
        %v4977 = vpack.c.b16 %v4737, %v4732
        %5218 = vmatprep.subr.bf16.mxu0 %v4739
        %5219 = vmatpush1.bf16.msra.mxu0 %v4738
        %5220 = vmatprep.subr.bf16.mxu0 %v4744
        %5221 = vmatpush1.bf16.msra.mxu0 %v4743
        %5222 = vmatprep.subr.bf16.mxu0 %v4749
        %5223 = vmatpush1.bf16.msra.mxu0 %v4748
        %5224 = vmatprep.subr.bf16.mxu0 %v4754
        %5225 = vmatpush1.bf16.msra.mxu0 %v4753
        %5226 = vmatprep.subr.bf16.mxu0 %v4759
        %5227 = vmatpush1.bf16.msra.mxu0 %v4758
        %5228 = vmatprep.subr.bf16.mxu0 %v4764
        %5229 = vmatpush1.bf16.msra.mxu0 %v4763
        %5230 = vmatprep.subr.bf16.mxu0 %v4769
        %5231 = vmatpush1.bf16.msra.mxu0 %v4768
        %5232 = vmatprep.subr.bf16.mxu0 %v4774
        %5233 = vmatpush1.bf16.msra.mxu0 %v4773
        %5234 = vmatprep.subr.bf16.mxu0 %v4779
        %5235 = vmatpush1.bf16.msra.mxu0 %v4778
        %5236 = vmatprep.subr.bf16.mxu0 %v4784
        %5237 = vmatpush1.bf16.msra.mxu0 %v4783
        %5238 = vmatprep.subr.bf16.mxu0 %v4789
        %5239 = vmatpush1.bf16.msra.mxu0 %v4788
        %5240 = vmatprep.subr.bf16.mxu0 %v4794
        %5241 = vmatpush1.bf16.msra.mxu0 %v4793
        %5242 = vmatprep.subr.bf16.mxu0 %v4799
        %5243 = vmatpush1.bf16.msra.mxu0 %v4798
        %5244 = vmatprep.subr.bf16.mxu0 %v4804
        %5245 = vmatpush1.bf16.msra.mxu0 %v4803
        %5246 = vmatprep.subr.bf16.mxu0 %v4809
        %5247 = vmatpush1.bf16.msra.mxu0 %v4808
        %5248 = vmatprep.subr.bf16.mxu0 %v4814
        %5249 = vmatpush1.bf16.msra.mxu0 %v4813
        %5250 = vmatprep.mubr.bf16.mxu0 %v3650
        %5251 = vmatmul.mubr.bf16.gmra.mrb[0].mxu0 %v3649
        %v5252 = vpop.f32.mrb[0].mxu0
        %v5253 = vadd.f32 %v3948, %v5252
        %v5254 = vpop.f32.mrb[0].mxu0
        %v5255 = vadd.f32 %v3952, %v5254
        %v5256 = vpop.f32.mrb[0].mxu0
        %v5257 = vadd.f32 %v3948, %v5256
        %v5258 = vpop.f32.mrb[0].mxu0
        %v5259 = vadd.f32 %v3952, %v5258
        %5260 = vdwg.mxu0
        %5261 = vmatprep.subr.bf16.mxu0 %v4819
        %5262 = vmatpush1.bf16.msra.mxu0 %v4818
        %5263 = vmatprep.subr.bf16.mxu0 %v4824
        %5264 = vmatpush1.bf16.msra.mxu0 %v4823
        %5265 = vmatprep.subr.bf16.mxu0 %v4829
        %5266 = vmatpush1.bf16.msra.mxu0 %v4828
        %5267 = vmatprep.subr.bf16.mxu0 %v4834
        %5268 = vmatpush1.bf16.msra.mxu0 %v4833
        %5269 = vmatprep.subr.bf16.mxu0 %v4839
        %5270 = vmatpush1.bf16.msra.mxu0 %v4838
        %5271 = vmatprep.subr.bf16.mxu0 %v4844
        %5272 = vmatpush1.bf16.msra.mxu0 %v4843
        %5273 = vmatprep.subr.bf16.mxu0 %v4849
        %5274 = vmatpush1.bf16.msra.mxu0 %v4848
        %5275 = vmatprep.subr.bf16.mxu0 %v4854
        %5276 = vmatpush1.bf16.msra.mxu0 %v4853
        %5277 = vmatprep.subr.bf16.mxu0 %v4859
        %5278 = vmatpush1.bf16.msra.mxu0 %v4858
        %5279 = vmatprep.subr.bf16.mxu0 %v4864
        %5280 = vmatpush1.bf16.msra.mxu0 %v4863
        %5281 = vmatprep.subr.bf16.mxu0 %v4869
        %5282 = vmatpush1.bf16.msra.mxu0 %v4868
        %5283 = vmatprep.subr.bf16.mxu0 %v4874
        %5284 = vmatpush1.bf16.msra.mxu0 %v4873
        %5285 = vmatprep.subr.bf16.mxu0 %v4879
        %5286 = vmatpush1.bf16.msra.mxu0 %v4878
        %5287 = vmatprep.subr.bf16.mxu0 %v4884
        %5288 = vmatpush1.bf16.msra.mxu0 %v4883
        %5289 = vmatprep.subr.bf16.mxu0 %v4889
        %5290 = vmatpush1.bf16.msra.mxu0 %v4888
        %5291 = vmatprep.subr.bf16.mxu0 %v4894
        %5292 = vmatpush1.bf16.msra.mxu0 %v4893
        %5293 = vmatprep.mubr.bf16.mxu0 %v3652
        %5294 = vmatmul.mubr.bf16.gmra.mrb[0].mxu0 %v3651
        %v5295 = vpop.f32.mrb[0].mxu0
        %v5296 = vadd.f32 %v5253, %v5295
        %v5297 = vpop.f32.mrb[0].mxu0
        %v5298 = vadd.f32 %v5255, %v5297
        %v5299 = vpop.f32.mrb[0].mxu0
        %v5300 = vadd.f32 %v5257, %v5299
        %v5301 = vpop.f32.mrb[0].mxu0
        %v5302 = vadd.f32 %v5259, %v5301
        %5303 = vdwg.mxu0
        %5304 = vmatprep.subr.bf16.mxu0 %v4899
        %5305 = vmatpush1.bf16.msra.mxu0 %v4898
        %5306 = vmatprep.subr.bf16.mxu0 %v4904
        %5307 = vmatpush1.bf16.msra.mxu0 %v4903
        %5308 = vmatprep.subr.bf16.mxu0 %v4909
        %5309 = vmatpush1.bf16.msra.mxu0 %v4908
        %5310 = vmatprep.subr.bf16.mxu0 %v4914
        %5311 = vmatpush1.bf16.msra.mxu0 %v4913
        %5312 = vmatprep.subr.bf16.mxu0 %v4919
        %5313 = vmatpush1.bf16.msra.mxu0 %v4918
        %5314 = vmatprep.subr.bf16.mxu0 %v4924
        %5315 = vmatpush1.bf16.msra.mxu0 %v4923
        %5316 = vmatprep.subr.bf16.mxu0 %v4929
        %5317 = vmatpush1.bf16.msra.mxu0 %v4928
        %5318 = vmatprep.subr.bf16.mxu0 %v4934
        %5319 = vmatpush1.bf16.msra.mxu0 %v4933
        %5320 = vmatprep.subr.bf16.mxu0 %v4939
        %5321 = vmatpush1.bf16.msra.mxu0 %v4938
        %5322 = vmatprep.subr.bf16.mxu0 %v4944
        %5323 = vmatpush1.bf16.msra.mxu0 %v4943
        %5324 = vmatprep.subr.bf16.mxu0 %v4949
        %5325 = vmatpush1.bf16.msra.mxu0 %v4948
        %5326 = vmatprep.subr.bf16.mxu0 %v4954
        %5327 = vmatpush1.bf16.msra.mxu0 %v4953
        %5328 = vmatprep.subr.bf16.mxu0 %v4959
        %5329 = vmatpush1.bf16.msra.mxu0 %v4958
        %5330 = vmatprep.subr.bf16.mxu0 %v4964
        %5331 = vmatpush1.bf16.msra.mxu0 %v4963
        %5332 = vmatprep.subr.bf16.mxu0 %v4969
        %5333 = vmatpush1.bf16.msra.mxu0 %v4968
        %5334 = vmatprep.subr.bf16.mxu0 %v4974
        %5335 = vmatpush1.bf16.msra.mxu0 %v4973
        %5336 = vmatprep.mubr.bf16.mxu0 %v3654
        %5337 = vmatmul.mubr.bf16.gmra.mrb[0].mxu0 %v3653
        %v5338 = vpop.f32.mrb[0].mxu0
        %v5339 = vadd.f32 %v5296, %v5338
        %v5340 = vpop.f32.mrb[0].mxu0
        %v5341 = vadd.f32 %v5298, %v5340
        %v5342 = vpop.f32.mrb[0].mxu0
        %v5343 = vadd.f32 %v5300, %v5342
        %v5344 = vpop.f32.mrb[0].mxu0
        %v5345 = vadd.f32 %v5302, %v5344
        %5346 = vdwg.mxu0
        %5347 = vmatprep.subr.bf16.mxu0 %v4741
        %5348 = vmatpush1.bf16.msra.mxu0 %v4740
        %5349 = vmatprep.subr.bf16.mxu0 %v4746
        %5350 = vmatpush1.bf16.msra.mxu0 %v4745
        %5351 = vmatprep.subr.bf16.mxu0 %v4751
        %5352 = vmatpush1.bf16.msra.mxu0 %v4750
        %5353 = vmatprep.subr.bf16.mxu0 %v4756
        %5354 = vmatpush1.bf16.msra.mxu0 %v4755
        %5355 = vmatprep.subr.bf16.mxu0 %v4761
        %5356 = vmatpush1.bf16.msra.mxu0 %v4760
        %5357 = vmatprep.subr.bf16.mxu0 %v4766
        %5358 = vmatpush1.bf16.msra.mxu0 %v4765
        %5359 = vmatprep.subr.bf16.mxu0 %v4771
        %5360 = vmatpush1.bf16.msra.mxu0 %v4770
        %5361 = vmatprep.subr.bf16.mxu0 %v4776
        %5362 = vmatpush1.bf16.msra.mxu0 %v4775
        %5363 = vmatprep.subr.bf16.mxu0 %v4781
        %5364 = vmatpush1.bf16.msra.mxu0 %v4780
        %5365 = vmatprep.subr.bf16.mxu0 %v4786
        %5366 = vmatpush1.bf16.msra.mxu0 %v4785
        %5367 = vmatprep.subr.bf16.mxu0 %v4791
        %5368 = vmatpush1.bf16.msra.mxu0 %v4790
        %5369 = vmatprep.subr.bf16.mxu0 %v4796
        %5370 = vmatpush1.bf16.msra.mxu0 %v4795
        %5371 = vmatprep.subr.bf16.mxu0 %v4801
        %5372 = vmatpush1.bf16.msra.mxu0 %v4800
        %5373 = vmatprep.subr.bf16.mxu0 %v4806
        %5374 = vmatpush1.bf16.msra.mxu0 %v4805
        %5375 = vmatprep.subr.bf16.mxu0 %v4811
        %5376 = vmatpush1.bf16.msra.mxu0 %v4810
        %5377 = vmatprep.subr.bf16.mxu0 %v4816
        %5378 = vmatpush1.bf16.msra.mxu0 %v4815
        %5379 = vmatprep.mubr.bf16.mxu0 %v3650
        %5380 = vmatmul.mubr.bf16.gmra.mrb[0].mxu0 %v3649
        %v5381 = vpop.f32.mrb[0].mxu0
        %v5382 = vadd.f32 %v3956, %v5381
        %v5383 = vpop.f32.mrb[0].mxu0
        %v5384 = vadd.f32 %v3960, %v5383
        %v5385 = vpop.f32.mrb[0].mxu0
        %v5386 = vadd.f32 %v3956, %v5385
        %v5387 = vpop.f32.mrb[0].mxu0
        %v5388 = vadd.f32 %v3960, %v5387
        %5389 = vdwg.mxu0
        %5390 = vmatprep.subr.bf16.mxu0 %v4821
        %5391 = vmatpush1.bf16.msra.mxu0 %v4820
        %5392 = vmatprep.subr.bf16.mxu0 %v4826
        %5393 = vmatpush1.bf16.msra.mxu0 %v4825
        %5394 = vmatprep.subr.bf16.mxu0 %v4831
        %5395 = vmatpush1.bf16.msra.mxu0 %v4830
        %5396 = vmatprep.subr.bf16.mxu0 %v4836
        %5397 = vmatpush1.bf16.msra.mxu0 %v4835
        %5398 = vmatprep.subr.bf16.mxu0 %v4841
        %5399 = vmatpush1.bf16.msra.mxu0 %v4840
        %5400 = vmatprep.subr.bf16.mxu0 %v4846
        %5401 = vmatpush1.bf16.msra.mxu0 %v4845
        %5402 = vmatprep.subr.bf16.mxu0 %v4851
        %5403 = vmatpush1.bf16.msra.mxu0 %v4850
        %5404 = vmatprep.subr.bf16.mxu0 %v4856
        %5405 = vmatpush1.bf16.msra.mxu0 %v4855
        %5406 = vmatprep.subr.bf16.mxu0 %v4861
        %5407 = vmatpush1.bf16.msra.mxu0 %v4860
        %5408 = vmatprep.subr.bf16.mxu0 %v4866
        %5409 = vmatpush1.bf16.msra.mxu0 %v4865
        %5410 = vmatprep.subr.bf16.mxu0 %v4871
        %5411 = vmatpush1.bf16.msra.mxu0 %v4870
        %5412 = vmatprep.subr.bf16.mxu0 %v4876
        %5413 = vmatpush1.bf16.msra.mxu0 %v4875
        %5414 = vmatprep.subr.bf16.mxu0 %v4881
        %5415 = vmatpush1.bf16.msra.mxu0 %v4880
        %5416 = vmatprep.subr.bf16.mxu0 %v4886
        %5417 = vmatpush1.bf16.msra.mxu0 %v4885
        %5418 = vmatprep.subr.bf16.mxu0 %v4891
        %5419 = vmatpush1.bf16.msra.mxu0 %v4890
        %5420 = vmatprep.subr.bf16.mxu0 %v4896
        %5421 = vmatpush1.bf16.msra.mxu0 %v4895
        %5422 = vmatprep.mubr.bf16.mxu0 %v3652
        %5423 = vmatmul.mubr.bf16.gmra.mrb[0].mxu0 %v3651
        %v5424 = vpop.f32.mrb[0].mxu0
        %v5425 = vadd.f32 %v5382, %v5424
        %v5426 = vpop.f32.mrb[0].mxu0
        %v5427 = vadd.f32 %v5384, %v5426
        %v5428 = vpop.f32.mrb[0].mxu0
        %v5429 = vadd.f32 %v5386, %v5428
        %v5430 = vpop.f32.mrb[0].mxu0
        %v5431 = vadd.f32 %v5388, %v5430
        %5432 = vdwg.mxu0
        %5433 = vmatprep.subr.bf16.mxu0 %v4901
        %5434 = vmatpush1.bf16.msra.mxu0 %v4900
        %5435 = vmatprep.subr.bf16.mxu0 %v4906
        %5436 = vmatpush1.bf16.msra.mxu0 %v4905
        %5437 = vmatprep.subr.bf16.mxu0 %v4911
        %5438 = vmatpush1.bf16.msra.mxu0 %v4910
        %5439 = vmatprep.subr.bf16.mxu0 %v4916
        %5440 = vmatpush1.bf16.msra.mxu0 %v4915
        %5441 = vmatprep.subr.bf16.mxu0 %v4921
        %5442 = vmatpush1.bf16.msra.mxu0 %v4920
        %5443 = vmatprep.subr.bf16.mxu0 %v4926
        %5444 = vmatpush1.bf16.msra.mxu0 %v4925
        %5445 = vmatprep.subr.bf16.mxu0 %v4931
        %5446 = vmatpush1.bf16.msra.mxu0 %v4930
        %5447 = vmatprep.subr.bf16.mxu0 %v4936
        %5448 = vmatpush1.bf16.msra.mxu0 %v4935
        %5449 = vmatprep.subr.bf16.mxu0 %v4941
        %5450 = vmatpush1.bf16.msra.mxu0 %v4940
        %5451 = vmatprep.subr.bf16.mxu0 %v4946
        %5452 = vmatpush1.bf16.msra.mxu0 %v4945
        %5453 = vmatprep.subr.bf16.mxu0 %v4951
        %5454 = vmatpush1.bf16.msra.mxu0 %v4950
        %5455 = vmatprep.subr.bf16.mxu0 %v4956
        %5456 = vmatpush1.bf16.msra.mxu0 %v4955
        %5457 = vmatprep.subr.bf16.mxu0 %v4961
        %5458 = vmatpush1.bf16.msra.mxu0 %v4960
        %5459 = vmatprep.subr.bf16.mxu0 %v4966
        %5460 = vmatpush1.bf16.msra.mxu0 %v4965
        %5461 = vmatprep.subr.bf16.mxu0 %v4971
        %5462 = vmatpush1.bf16.msra.mxu0 %v4970
        %5463 = vmatprep.subr.bf16.mxu0 %v4976
        %5464 = vmatpush1.bf16.msra.mxu0 %v4975
        %5465 = vmatprep.mubr.bf16.mxu0 %v3654
        %5466 = vmatmul.mubr.bf16.gmra.mrb[0].mxu0 %v3653
        %v5467 = vpop.f32.mrb[0].mxu0
        %v5468 = vadd.f32 %v5425, %v5467
        %v5469 = vpop.f32.mrb[0].mxu0
        %v5470 = vadd.f32 %v5427, %v5469
        %v5471 = vpop.f32.mrb[0].mxu0
        %v5472 = vadd.f32 %v5429, %v5471
        %v5473 = vpop.f32.mrb[0].mxu0
        %v5474 = vadd.f32 %v5431, %v5473
        %5475 = vdwg.mxu0
        %5476 = vmatprep.subr.bf16.mxu0 0
        %5477 = vmatpush1.bf16.msra.mxu0 %v4742
        %5478 = vmatprep.subr.bf16.mxu0 0
        %5479 = vmatpush1.bf16.msra.mxu0 %v4747
        %5480 = vmatprep.subr.bf16.mxu0 0
        %5481 = vmatpush1.bf16.msra.mxu0 %v4752
        %5482 = vmatprep.subr.bf16.mxu0 0
        %5483 = vmatpush1.bf16.msra.mxu0 %v4757
        %5484 = vmatprep.subr.bf16.mxu0 0
        %5485 = vmatpush1.bf16.msra.mxu0 %v4762
        %5486 = vmatprep.subr.bf16.mxu0 0
        %5487 = vmatpush1.bf16.msra.mxu0 %v4767
        %5488 = vmatprep.subr.bf16.mxu0 0
        %5489 = vmatpush1.bf16.msra.mxu0 %v4772
        %5490 = vmatprep.subr.bf16.mxu0 0
        %5491 = vmatpush1.bf16.msra.mxu0 %v4777
        %5492 = vmatprep.subr.bf16.mxu0 0
        %5493 = vmatpush1.bf16.msra.mxu0 %v4782
        %5494 = vmatprep.subr.bf16.mxu0 0
        %5495 = vmatpush1.bf16.msra.mxu0 %v4787
        %5496 = vmatprep.subr.bf16.mxu0 0
        %5497 = vmatpush1.bf16.msra.mxu0 %v4792
        %5498 = vmatprep.subr.bf16.mxu0 0
        %5499 = vmatpush1.bf16.msra.mxu0 %v4797
        %5500 = vmatprep.subr.bf16.mxu0 0
        %5501 = vmatpush1.bf16.msra.mxu0 %v4802
        %5502 = vmatprep.subr.bf16.mxu0 0
        %5503 = vmatpush1.bf16.msra.mxu0 %v4807
        %5504 = vmatprep.subr.bf16.mxu0 0
        %5505 = vmatpush1.bf16.msra.mxu0 %v4812
        %5506 = vmatprep.subr.bf16.mxu0 0
        %5507 = vmatpush1.bf16.msra.mxu0 %v4817
        %5508 = vmatprep.mubr.bf16.mxu0 %v3650
        %5509 = vmatmul.mubr.bf16.gmra.mrb[0].mxu0 %v3649
        %v5510 = vpop.f32.mrb[0].mxu0
        %v5511 = vadd.f32 %v3964, %v5510
        %v5512 = vpop.f32.mrb[0].mxu0
        %v5513 = vpop.f32.mrb[0].mxu0
        %v5514 = vadd.f32 %v3964, %v5513
        %v5515 = vpop.f32.mrb[0].mxu0
        %5516 = vdwg.mxu0
        %5517 = vmatprep.subr.bf16.mxu0 0
        %5518 = vmatpush1.bf16.msra.mxu0 %v4822
        %5519 = vmatprep.subr.bf16.mxu0 0
        %5520 = vmatpush1.bf16.msra.mxu0 %v4827
        %5521 = vmatprep.subr.bf16.mxu0 0
        %5522 = vmatpush1.bf16.msra.mxu0 %v4832
        %5523 = vmatprep.subr.bf16.mxu0 0
        %5524 = vmatpush1.bf16.msra.mxu0 %v4837
        %5525 = vmatprep.subr.bf16.mxu0 0
        %5526 = vmatpush1.bf16.msra.mxu0 %v4842
        %5527 = vmatprep.subr.bf16.mxu0 0
        %5528 = vmatpush1.bf16.msra.mxu0 %v4847
        %5529 = vmatprep.subr.bf16.mxu0 0
        %5530 = vmatpush1.bf16.msra.mxu0 %v4852
        %5531 = vmatprep.subr.bf16.mxu0 0
        %5532 = vmatpush1.bf16.msra.mxu0 %v4857
        %5533 = vmatprep.subr.bf16.mxu0 0
        %5534 = vmatpush1.bf16.msra.mxu0 %v4862
        %5535 = vmatprep.subr.bf16.mxu0 0
        %5536 = vmatpush1.bf16.msra.mxu0 %v4867
        %5537 = vmatprep.subr.bf16.mxu0 0
        %5538 = vmatpush1.bf16.msra.mxu0 %v4872
        %5539 = vmatprep.subr.bf16.mxu0 0
        %5540 = vmatpush1.bf16.msra.mxu0 %v4877
        %5541 = vmatprep.subr.bf16.mxu0 0
        %5542 = vmatpush1.bf16.msra.mxu0 %v4882
        %5543 = vmatprep.subr.bf16.mxu0 0
        %5544 = vmatpush1.bf16.msra.mxu0 %v4887
        %5545 = vmatprep.subr.bf16.mxu0 0
        %5546 = vmatpush1.bf16.msra.mxu0 %v4892
        %5547 = vmatprep.subr.bf16.mxu0 0
        %5548 = vmatpush1.bf16.msra.mxu0 %v4897
        %5549 = vmatprep.mubr.bf16.mxu0 %v3652
        %5550 = vmatmul.mubr.bf16.gmra.mrb[0].mxu0 %v3651
        %v5551 = vpop.f32.mrb[0].mxu0
        %v5552 = vadd.f32 %v5511, %v5551
        %v5553 = vpop.f32.mrb[0].mxu0
        %v5554 = vpop.f32.mrb[0].mxu0
        %v5555 = vadd.f32 %v5514, %v5554
        %v5556 = vpop.f32.mrb[0].mxu0
        %5557 = vdwg.mxu0
        %5558 = vmatprep.subr.bf16.mxu0 0
        %5559 = vmatpush1.bf16.msra.mxu0 %v4902
        %5560 = vmatprep.subr.bf16.mxu0 0
        %5561 = vmatpush1.bf16.msra.mxu0 %v4907
        %5562 = vmatprep.subr.bf16.mxu0 0
        %5563 = vmatpush1.bf16.msra.mxu0 %v4912
        %5564 = vmatprep.subr.bf16.mxu0 0
        %5565 = vmatpush1.bf16.msra.mxu0 %v4917
        %5566 = vmatprep.subr.bf16.mxu0 0
        %5567 = vmatpush1.bf16.msra.mxu0 %v4922
        %5568 = vmatprep.subr.bf16.mxu0 0
        %5569 = vmatpush1.bf16.msra.mxu0 %v4927
        %5570 = vmatprep.subr.bf16.mxu0 0
        %5571 = vmatpush1.bf16.msra.mxu0 %v4932
        %5572 = vmatprep.subr.bf16.mxu0 0
        %5573 = vmatpush1.bf16.msra.mxu0 %v4937
        %5574 = vmatprep.subr.bf16.mxu0 0
        %5575 = vmatpush1.bf16.msra.mxu0 %v4942
        %5576 = vmatprep.subr.bf16.mxu0 0
        %5577 = vmatpush1.bf16.msra.mxu0 %v4947
        %5578 = vmatprep.subr.bf16.mxu0 0
        %5579 = vmatpush1.bf16.msra.mxu0 %v4952
        %5580 = vmatprep.subr.bf16.mxu0 0
        %5581 = vmatpush1.bf16.msra.mxu0 %v4957
        %5582 = vmatprep.subr.bf16.mxu0 0
        %5583 = vmatpush1.bf16.msra.mxu0 %v4962
        %5584 = vmatprep.subr.bf16.mxu0 0
        %5585 = vmatpush1.bf16.msra.mxu0 %v4967
        %5586 = vmatprep.subr.bf16.mxu0 0
        %5587 = vmatpush1.bf16.msra.mxu0 %v4972
        %5588 = vmatprep.subr.bf16.mxu0 0
        %5589 = vmatpush1.bf16.msra.mxu0 %v4977
        %5590 = vmatprep.mubr.bf16.mxu0 %v3654
        %5591 = vmatmul.mubr.bf16.gmra.mrb[0].mxu0 %v3653
        %v5592 = vpop.f32.mrb[0].mxu0
        %v5593 = vadd.f32 %v5552, %v5592
        %v5594 = vpop.f32.mrb[0].mxu0
        %v5595 = vpop.f32.mrb[0].mxu0
        %v5596 = vadd.f32 %v5555, %v5595
        %v5597 = vpop.f32.mrb[0].mxu0
        %5598 = vdwg.mxu0
        %vm5599 = vcmp.ge.f32.partialorder %v5339, 0.0
        %vm5600 = vcmp.ge.f32.partialorder %v5341, 0.0
        %vm5601 = vcmp.ge.f32.partialorder %v5468, 0.0
        %vm5602 = vcmp.ge.f32.partialorder %v5470, 0.0
        %vm5603 = vcmp.ge.f32.partialorder %v5593, 0.0
        %vm5604 = vcmp.ge.f32.partialorder %v5343, 0.0
        %vm5605 = vcmp.ge.f32.partialorder %v5345, 0.0
        %vm5606 = vcmp.ge.f32.partialorder %v5472, 0.0
        %vm5607 = vcmp.ge.f32.partialorder %v5474, 0.0
        %vm5608 = vcmp.ge.f32.partialorder %v5596, 0.0
        %v5609 = vmul.f32 %v5339, 0.01
        %v5610 = vmul.f32 %v5341, 0.01
        %v5611 = vmul.f32 %v5468, 0.01
        %v5612 = vmul.f32 %v5470, 0.01
        %v5613 = vmul.f32 %v5593, 0.01
        %v5614 = vmul.f32 %v5343, 0.01
        %v5615 = vmul.f32 %v5345, 0.01
        %v5616 = vmul.f32 %v5472, 0.01
        %v5617 = vmul.f32 %v5474, 0.01
        %v5618 = vmul.f32 %v5596, 0.01
        %v5619 = vsel %vm5599, %v5339, %v5609
        %v5620 = vsel %vm5600, %v5341, %v5610
        %v5621 = vsel %vm5601, %v5468, %v5611
        %v5622 = vsel %vm5602, %v5470, %v5612
        %v5623 = vsel %vm5603, %v5593, %v5613
        %v5624 = vsel %vm5604, %v5343, %v5614
        %v5625 = vsel %vm5605, %v5345, %v5615
        %v5626 = vsel %vm5606, %v5472, %v5616
        %v5627 = vsel %vm5607, %v5474, %v5617
        %v5628 = vsel %vm5608, %v5596, %v5618
        %v5629 = vld [vmem:[#allocation16] sm:$0x1f]
        %v5630 = vld [vmem:[#allocation17] sm:$0x1f]
        %vm5631 = vcmp.lt.s32.totalorder %v632, 600
        %vm5632 = vcmp.lt.s32.totalorder %v1277, 600
        %vm5633 = vcmp.lt.s32.totalorder %v1278, 600
        %vm5634 = vcmp.lt.s32.totalorder %v1279, 600
        %vm5635 = vcmp.lt.s32.totalorder %v1280, 600
        %v5636 = vadd.f32 %v5619, %v5620
        %v5637 = vadd.f32 %v5636, %v5621
        %v5638 = vadd.f32 %v5637, %v5622
        %v5639 = vadd.f32 %v5638, %v5623
        %5640 = vadd.xlane.f32.xlu0 %v5639
        %v5641 = vpop.xlane.xlu0 %5640
        %v5642 = vadd.f32 %v5624, %v5625
        %v5643 = vadd.f32 %v5642, %v5626
        %v5644 = vadd.f32 %v5643, %v5627
        %v5645 = vadd.f32 %v5644, %v5628
        %5646 = vadd.xlane.f32.xlu0 %v5645
        %v5647 = vpop.xlane.xlu0 %5646
        %v5648 = vmul.f32 %v5641, 0.0016666667
        %v5649 = vmul.f32 %v5647, 0.0016666667
        %v5650 = vsub.f32 %v5619, %v5648
        %v5651 = vsub.f32 %v5620, %v5648
        %v5652 = vsub.f32 %v5621, %v5648
        %v5653 = vsub.f32 %v5622, %v5648
        %v5654 = vsub.f32 %v5623, %v5648
        %v5655 = vsub.f32 %v5624, %v5649
        %v5656 = vsub.f32 %v5625, %v5649
        %v5657 = vsub.f32 %v5626, %v5649
        %v5658 = vsub.f32 %v5627, %v5649
        %v5659 = vsub.f32 %v5628, %v5649
        %v5660 = vsel %vm5631, %v5650, 0.0
        %v5661 = vsel %vm5632, %v5651, 0.0
        %v5662 = vsel %vm5633, %v5652, 0.0
        %v5663 = vsel %vm5634, %v5653, 0.0
        %v5664 = vsel %vm5635, %v5654, 0.0
        %v5665 = vsel %vm5631, %v5655, 0.0
        %v5666 = vsel %vm5632, %v5656, 0.0
        %v5667 = vsel %vm5633, %v5657, 0.0
        %v5668 = vsel %vm5634, %v5658, 0.0
        %v5669 = vsel %vm5635, %v5659, 0.0
        %v5670 = vmul.f32 %v5660, %v5660
        %v5671 = vmul.f32 %v5661, %v5661
        %v5672 = vmul.f32 %v5662, %v5662
        %v5673 = vmul.f32 %v5663, %v5663
        %v5674 = vmul.f32 %v5664, %v5664
        %v5675 = vmul.f32 %v5665, %v5665
        %v5676 = vmul.f32 %v5666, %v5666
        %v5677 = vmul.f32 %v5667, %v5667
        %v5678 = vmul.f32 %v5668, %v5668
        %v5679 = vmul.f32 %v5669, %v5669
        %v5680 = vadd.f32 %v5670, %v5671
        %v5681 = vadd.f32 %v5680, %v5672
        %v5682 = vadd.f32 %v5681, %v5673
        %v5683 = vadd.f32 %v5682, %v5674
        %5684 = vadd.xlane.f32.xlu0 %v5683
        %v5685 = vpop.xlane.xlu0 %5684
        %v5686 = vadd.f32 %v5675, %v5676
        %v5687 = vadd.f32 %v5686, %v5677
        %v5688 = vadd.f32 %v5687, %v5678
        %v5689 = vadd.f32 %v5688, %v5679
        %5690 = vadd.xlane.f32.xlu0 %v5689
        %v5691 = vpop.xlane.xlu0 %5690
        %v5692 = vmul.f32 %v5685, 0.0016666667
        %v5693 = vmul.f32 %v5691, 0.0016666667
        %v5694 = vadd.f32 %v5692, 1e-05
        %v5695 = vadd.f32 %v5693, 1e-05
        %v5696 = vrsqrt.pop %v5694
        %v5697 = vrsqrt.pop %v5695
        %v5698 = vmul.f32 %v5660, %v5696
        %v5699 = vmul.f32 %v5661, %v5696
        %v5700 = vmul.f32 %v5662, %v5696
        %v5701 = vmul.f32 %v5663, %v5696
        %v5702 = vmul.f32 %v5664, %v5696
        %v5703 = vmul.f32 %v5665, %v5697
        %v5704 = vmul.f32 %v5666, %v5697
        %v5705 = vmul.f32 %v5667, %v5697
        %v5706 = vmul.f32 %v5668, %v5697
        %v5707 = vmul.f32 %v5669, %v5697
        %v5709 = vlaneseq
        %v5710 = vshrl.u32 %v5709, 7
        %v5711 = vsub.s32 0, %v5710
        %v5712 = vrot.slane %v5629, %v5711
        %v5713 = vlaneseq
        %v5714 = vshrl.u32 %v5713, 7
        %v5715 = vsub.s32 1, %v5714
        %v5716 = vrot.slane %v5629, %v5715
        %v5717 = vlaneseq
        %v5718 = vshrl.u32 %v5717, 7
        %v5719 = vsub.s32 2, %v5718
        %v5720 = vrot.slane %v5629, %v5719
        %v5721 = vlaneseq
        %v5722 = vshrl.u32 %v5721, 7
        %v5723 = vsub.s32 3, %v5722
        %v5724 = vrot.slane %v5629, %v5723
        %v5725 = vlaneseq
        %v5726 = vshrl.u32 %v5725, 7
        %v5727 = vsub.s32 4, %v5726
        %v5728 = vrot.slane %v5629, %v5727
        %v5734 = vmul.f32 %v5698, %v5712
        %v5735 = vmul.f32 %v5699, %v5716
        %v5736 = vmul.f32 %v5700, %v5720
        %v5737 = vmul.f32 %v5701, %v5724
        %v5738 = vmul.f32 %v5702, %v5728
        %v5739 = vmul.f32 %v5703, %v5712
        %v5740 = vmul.f32 %v5704, %v5716
        %v5741 = vmul.f32 %v5705, %v5720
        %v5742 = vmul.f32 %v5706, %v5724
        %v5743 = vmul.f32 %v5707, %v5728
        %v5745 = vlaneseq
        %v5746 = vshrl.u32 %v5745, 7
        %v5747 = vsub.s32 0, %v5746
        %v5748 = vrot.slane %v5630, %v5747
        %v5749 = vlaneseq
        %v5750 = vshrl.u32 %v5749, 7
        %v5751 = vsub.s32 1, %v5750
        %v5752 = vrot.slane %v5630, %v5751
        %v5753 = vlaneseq
        %v5754 = vshrl.u32 %v5753, 7
        %v5755 = vsub.s32 2, %v5754
        %v5756 = vrot.slane %v5630, %v5755
        %v5757 = vlaneseq
        %v5758 = vshrl.u32 %v5757, 7
        %v5759 = vsub.s32 3, %v5758
        %v5760 = vrot.slane %v5630, %v5759
        %v5761 = vlaneseq
        %v5762 = vshrl.u32 %v5761, 7
        %v5763 = vsub.s32 4, %v5762
        %v5764 = vrot.slane %v5630, %v5763
        %v5770 = vadd.f32 %v5734, %v5748
        %v5771 = vadd.f32 %v5735, %v5752
        %v5772 = vadd.f32 %v5736, %v5756
        %v5773 = vadd.f32 %v5737, %v5760
        %v5774 = vadd.f32 %v5738, %v5764
        %v5775 = vadd.f32 %v5739, %v5748
        %v5776 = vadd.f32 %v5740, %v5752
        %v5777 = vadd.f32 %v5741, %v5756
        %v5778 = vadd.f32 %v5742, %v5760
        %v5779 = vadd.f32 %v5743, %v5764
        %v5780 = vpack.c.bf16 %v5775, %v5770
        %v5781 = vpack.c.bf16 %v5776, %v5771
        %v5782 = vpack.c.bf16 %v5777, %v5772
        %v5783 = vpack.c.bf16 %v5778, %v5773
        %v5784 = vpack.c.bf16 %v5779, %v5774
        %v5785 = vld [vmem:[#allocation19] sm:$0xff]
        %v5786 = vld [vmem:[#allocation19 + $0x8] sm:$0xff]
        %v5787 = vld [vmem:[#allocation19 + $0x10] sm:$0xf]
        %v5788 = vld [vmem:[#allocation19 + $0x14] sm:$0xff]
        %v5789 = vld [vmem:[#allocation19 + $0x1c] sm:$0xff]
        %v5790 = vld [vmem:[#allocation19 + $0x24] sm:$0xf]
        %v5791 = vld [vmem:[#allocation19 + $0x28] sm:$0xff]
        %v5792 = vld [vmem:[#allocation19 + $0x30] sm:$0xff]
        %v5793 = vld [vmem:[#allocation19 + $0x38] sm:$0xf]
        %v5794 = vld [vmem:[#allocation19 + $0x3c] sm:$0xff]
        %v5795 = vld [vmem:[#allocation19 + $0x44] sm:$0xff]
        %v5796 = vld [vmem:[#allocation19 + $0x4c] sm:$0xf]
        %v5797 = vld [vmem:[#allocation19 + $0x50] sm:$0xff]
        %v5798 = vld [vmem:[#allocation19 + $0x58] sm:$0xff]
        %v5799 = vld [vmem:[#allocation19 + $0x60] sm:$0xf]
        %v5800 = vld [vmem:[#allocation19 + $0x64] sm:$0xff]
        %v5801 = vld [vmem:[#allocation19 + $0x6c] sm:$0xff]
        %v5802 = vld [vmem:[#allocation19 + $0x74] sm:$0xf]
        %v5803 = vld [vmem:[#allocation19 + $0x78] sm:$0xff]
        %v5804 = vld [vmem:[#allocation19 + $0x80] sm:$0xff]
        %v5805 = vld [vmem:[#allocation19 + $0x88] sm:$0xf]
        %v5806 = vld [vmem:[#allocation19 + $0x8c] sm:$0xff]
        %v5807 = vld [vmem:[#allocation19 + $0x94] sm:$0xff]
        %v5808 = vld [vmem:[#allocation19 + $0x9c] sm:$0xf]
        %v5809 = vld [vmem:[#allocation19 + $0xa0] sm:$0xff]
        %v5810 = vld [vmem:[#allocation19 + $0xa8] sm:$0xff]
        %v5811 = vld [vmem:[#allocation19 + $0xb0] sm:$0xf]
        %v5812 = vld [vmem:[#allocation19 + $0xb4] sm:$0xff]
        %v5813 = vld [vmem:[#allocation19 + $0xbc] sm:$0xff]
        %v5814 = vld [vmem:[#allocation19 + $0xc4] sm:$0xf]
        %v5815 = vld [vmem:[#allocation19 + $0xc8] sm:$0xff]
        %v5816 = vld [vmem:[#allocation19 + $0xd0] sm:$0xff]
        %v5817 = vld [vmem:[#allocation19 + $0xd8] sm:$0xf]
        %v5818 = vld [vmem:[#allocation19 + $0xdc] sm:$0xff]
        %v5819 = vld [vmem:[#allocation19 + $0xe4] sm:$0xff]
        %v5820 = vld [vmem:[#allocation19 + $0xec] sm:$0xf]
        %v5821 = vld [vmem:[#allocation19 + $0xf0] sm:$0xff]
        %v5822 = vld [vmem:[#allocation19 + $0xf8] sm:$0xff]
        %v5823 = vld [vmem:[#allocation19 + $0x100] sm:$0xf]
        %v5824 = vld [vmem:[#allocation19 + $0x104] sm:$0xff]
        %v5825 = vld [vmem:[#allocation19 + $0x10c] sm:$0xff]
        %v5826 = vld [vmem:[#allocation19 + $0x114] sm:$0xf]
        %v5827 = vld [vmem:[#allocation19 + $0x118] sm:$0xff]
        %v5828 = vld [vmem:[#allocation19 + $0x120] sm:$0xff]
        %v5829 = vld [vmem:[#allocation19 + $0x128] sm:$0xf]
        %v5830 = vld [vmem:[#allocation19 + $0x12c] sm:$0xff]
        %v5831 = vld [vmem:[#allocation19 + $0x134] sm:$0xff]
        %v5832 = vld [vmem:[#allocation19 + $0x13c] sm:$0xf]
        %v5833 = vld [vmem:[#allocation19 + $0x140] sm:$0xff]
        %v5834 = vld [vmem:[#allocation19 + $0x148] sm:$0xff]
        %v5835 = vld [vmem:[#allocation19 + $0x150] sm:$0xf]
        %v5836 = vld [vmem:[#allocation19 + $0x154] sm:$0xff]
        %v5837 = vld [vmem:[#allocation19 + $0x15c] sm:$0xff]
        %v5838 = vld [vmem:[#allocation19 + $0x164] sm:$0xf]
        %v5839 = vld [vmem:[#allocation19 + $0x168] sm:$0xff]
        %v5840 = vld [vmem:[#allocation19 + $0x170] sm:$0xff]
        %v5841 = vld [vmem:[#allocation19 + $0x178] sm:$0xf]
        %v5842 = vld [vmem:[#allocation19 + $0x17c] sm:$0xff]
        %v5843 = vld [vmem:[#allocation19 + $0x184] sm:$0xff]
        %v5844 = vld [vmem:[#allocation19 + $0x18c] sm:$0xf]
        %v5845 = vld [vmem:[#allocation19 + $0x190] sm:$0xff]
        %v5846 = vld [vmem:[#allocation19 + $0x198] sm:$0xff]
        %v5847 = vld [vmem:[#allocation19 + $0x1a0] sm:$0xf]
        %v5848 = vld [vmem:[#allocation19 + $0x1a4] sm:$0xff]
        %v5849 = vld [vmem:[#allocation19 + $0x1ac] sm:$0xff]
        %v5850 = vld [vmem:[#allocation19 + $0x1b4] sm:$0xf]
        %v5851 = vld [vmem:[#allocation19 + $0x1b8] sm:$0xff]
        %v5852 = vld [vmem:[#allocation19 + $0x1c0] sm:$0xff]
        %v5853 = vld [vmem:[#allocation19 + $0x1c8] sm:$0xf]
        %v5854 = vld [vmem:[#allocation19 + $0x1cc] sm:$0xff]
        %v5855 = vld [vmem:[#allocation19 + $0x1d4] sm:$0xff]
        %v5856 = vld [vmem:[#allocation19 + $0x1dc] sm:$0xf]
        %v5857 = vld [vmem:[#allocation19 + $0x1e0] sm:$0xff]
        %v5858 = vld [vmem:[#allocation19 + $0x1e8] sm:$0xff]
        %v5859 = vld [vmem:[#allocation19 + $0x1f0] sm:$0xf]
        %v5860 = vld [vmem:[#allocation19 + $0x1f4] sm:$0xff]
        %v5861 = vld [vmem:[#allocation19 + $0x1fc] sm:$0xff]
        %v5862 = vld [vmem:[#allocation19 + $0x204] sm:$0xf]
        %v5863 = vld [vmem:[#allocation19 + $0x208] sm:$0xff]
        %v5864 = vld [vmem:[#allocation19 + $0x210] sm:$0xff]
        %v5865 = vld [vmem:[#allocation19 + $0x218] sm:$0xf]
        %v5866 = vld [vmem:[#allocation19 + $0x21c] sm:$0xff]
        %v5867 = vld [vmem:[#allocation19 + $0x224] sm:$0xff]
        %v5868 = vld [vmem:[#allocation19 + $0x22c] sm:$0xf]
        %v5869 = vld [vmem:[#allocation19 + $0x230] sm:$0xff]
        %v5870 = vld [vmem:[#allocation19 + $0x238] sm:$0xff]
        %v5871 = vld [vmem:[#allocation19 + $0x240] sm:$0xf]
        %v5872 = vld [vmem:[#allocation19 + $0x244] sm:$0xff]
        %v5873 = vld [vmem:[#allocation19 + $0x24c] sm:$0xff]
        %v5874 = vld [vmem:[#allocation19 + $0x254] sm:$0xf]
        %v5875 = vld [vmem:[#allocation19 + $0x258] sm:$0xff]
        %v5876 = vld [vmem:[#allocation19 + $0x260] sm:$0xff]
        %v5877 = vld [vmem:[#allocation19 + $0x268] sm:$0xf]
        %v5878 = vld [vmem:[#allocation19 + $0x26c] sm:$0xff]
        %v5879 = vld [vmem:[#allocation19 + $0x274] sm:$0xff]
        %v5880 = vld [vmem:[#allocation19 + $0x27c] sm:$0xf]
        %v5881 = vld [vmem:[#allocation19 + $0x280] sm:$0xff]
        %v5882 = vld [vmem:[#allocation19 + $0x288] sm:$0xff]
        %v5883 = vld [vmem:[#allocation19 + $0x290] sm:$0xf]
        %v5884 = vld [vmem:[#allocation19 + $0x294] sm:$0xff]
        %v5885 = vld [vmem:[#allocation19 + $0x29c] sm:$0xff]
        %v5886 = vld [vmem:[#allocation19 + $0x2a4] sm:$0xf]
        %v5887 = vld [vmem:[#allocation19 + $0x2a8] sm:$0xff]
        %v5888 = vld [vmem:[#allocation19 + $0x2b0] sm:$0xff]
        %v5889 = vld [vmem:[#allocation19 + $0x2b8] sm:$0xf]
        %v5890 = vld [vmem:[#allocation19 + $0x2bc] sm:$0xff]
        %v5891 = vld [vmem:[#allocation19 + $0x2c4] sm:$0xff]
        %v5892 = vld [vmem:[#allocation19 + $0x2cc] sm:$0xf]
        %v5893 = vld [vmem:[#allocation19 + $0x2d0] sm:$0xff]
        %v5894 = vld [vmem:[#allocation19 + $0x2d8] sm:$0xff]
        %v5895 = vld [vmem:[#allocation19 + $0x2e0] sm:$0xf]
        %v5896 = vld [vmem:[#allocation19 + $0x2e4] sm:$0xff]
        %v5897 = vld [vmem:[#allocation19 + $0x2ec] sm:$0xff]
        %v5898 = vld [vmem:[#allocation19 + $0x2f4] sm:$0xf]
        %v5899 = vld [vmem:[#allocation19 + $0x2f8] sm:$0xff]
        %v5900 = vld [vmem:[#allocation19 + $0x300] sm:$0xff]
        %v5901 = vld [vmem:[#allocation19 + $0x308] sm:$0xf]
        %v5902 = vld [vmem:[#allocation19 + $0x30c] sm:$0xff]
        %v5903 = vld [vmem:[#allocation19 + $0x314] sm:$0xff]
        %v5904 = vld [vmem:[#allocation19 + $0x31c] sm:$0xf]
        %v5905 = vld [vmem:[#allocation19 + $0x320] sm:$0xff]
        %v5906 = vld [vmem:[#allocation19 + $0x328] sm:$0xff]
        %v5907 = vld [vmem:[#allocation19 + $0x330] sm:$0xf]
        %v5908 = vld [vmem:[#allocation19 + $0x334] sm:$0xff]
        %v5909 = vld [vmem:[#allocation19 + $0x33c] sm:$0xff]
        %v5910 = vld [vmem:[#allocation19 + $0x344] sm:$0xf]
        %v5911 = vld [vmem:[#allocation19 + $0x348] sm:$0xff]
        %v5912 = vld [vmem:[#allocation19 + $0x350] sm:$0xff]
        %v5913 = vld [vmem:[#allocation19 + $0x358] sm:$0xf]
        %v5914 = vld [vmem:[#allocation19 + $0x35c] sm:$0xff]
        %v5915 = vld [vmem:[#allocation19 + $0x364] sm:$0xff]
        %v5916 = vld [vmem:[#allocation19 + $0x36c] sm:$0xf]
        %v5917 = vld [vmem:[#allocation19 + $0x370] sm:$0xff]
        %v5918 = vld [vmem:[#allocation19 + $0x378] sm:$0xff]
        %v5919 = vld [vmem:[#allocation19 + $0x380] sm:$0xf]
        %v5920 = vld [vmem:[#allocation19 + $0x384] sm:$0xff]
        %v5921 = vld [vmem:[#allocation19 + $0x38c] sm:$0xff]
        %v5922 = vld [vmem:[#allocation19 + $0x394] sm:$0xf]
        %v5923 = vld [vmem:[#allocation19 + $0x398] sm:$0xff]
        %v5924 = vld [vmem:[#allocation19 + $0x3a0] sm:$0xff]
        %v5925 = vld [vmem:[#allocation19 + $0x3a8] sm:$0xf]
        %v5926 = vld [vmem:[#allocation19 + $0x3ac] sm:$0xff]
        %v5927 = vld [vmem:[#allocation19 + $0x3b4] sm:$0xff]
        %v5928 = vld [vmem:[#allocation19 + $0x3bc] sm:$0xf]
        %v5929 = vld [vmem:[#allocation19 + $0x3c0] sm:$0xff]
        %v5930 = vld [vmem:[#allocation19 + $0x3c8] sm:$0xff]
        %v5931 = vld [vmem:[#allocation19 + $0x3d0] sm:$0xf]
        %v5932 = vld [vmem:[#allocation19 + $0x3d4] sm:$0xff]
        %v5933 = vld [vmem:[#allocation19 + $0x3dc] sm:$0xff]
        %v5934 = vld [vmem:[#allocation19 + $0x3e4] sm:$0xf]
        %v5935 = vld [vmem:[#allocation19 + $0x3e8] sm:$0xff]
        %v5936 = vld [vmem:[#allocation19 + $0x3f0] sm:$0xff]
        %v5937 = vld [vmem:[#allocation19 + $0x3f8] sm:$0xf]
        %v5938 = vld [vmem:[#allocation19 + $0x3fc] sm:$0xff]
        %v5939 = vld [vmem:[#allocation19 + $0x404] sm:$0xff]
        %v5940 = vld [vmem:[#allocation19 + $0x40c] sm:$0xf]
        %v5941 = vld [vmem:[#allocation19 + $0x410] sm:$0xff]
        %v5942 = vld [vmem:[#allocation19 + $0x418] sm:$0xff]
        %v5943 = vld [vmem:[#allocation19 + $0x420] sm:$0xf]
        %v5944 = vld [vmem:[#allocation19 + $0x424] sm:$0xff]
        %v5945 = vld [vmem:[#allocation19 + $0x42c] sm:$0xff]
        %v5946 = vld [vmem:[#allocation19 + $0x434] sm:$0xf]
        %v5947 = vld [vmem:[#allocation19 + $0x438] sm:$0xff]
        %v5948 = vld [vmem:[#allocation19 + $0x440] sm:$0xff]
        %v5949 = vld [vmem:[#allocation19 + $0x448] sm:$0xf]
        %v5950 = vld [vmem:[#allocation19 + $0x44c] sm:$0xff]
        %v5951 = vld [vmem:[#allocation19 + $0x454] sm:$0xff]
        %v5952 = vld [vmem:[#allocation19 + $0x45c] sm:$0xf]
        %v5953 = vld [vmem:[#allocation19 + $0x460] sm:$0xff]
        %v5954 = vld [vmem:[#allocation19 + $0x468] sm:$0xff]
        %v5955 = vld [vmem:[#allocation19 + $0x470] sm:$0xf]
        %v5956 = vld [vmem:[#allocation19 + $0x474] sm:$0xff]
        %v5957 = vld [vmem:[#allocation19 + $0x47c] sm:$0xff]
        %v5958 = vld [vmem:[#allocation19 + $0x484] sm:$0xf]
        %v5959 = vld [vmem:[#allocation19 + $0x488] sm:$0xff]
        %v5960 = vld [vmem:[#allocation19 + $0x490] sm:$0xff]
        %v5961 = vld [vmem:[#allocation19 + $0x498] sm:$0xf]
        %v5962 = vld [vmem:[#allocation19 + $0x49c] sm:$0xff]
        %v5963 = vld [vmem:[#allocation19 + $0x4a4] sm:$0xff]
        %v5964 = vld [vmem:[#allocation19 + $0x4ac] sm:$0xf]
        %v5965 = vld [vmem:[#allocation19 + $0x4b0] sm:$0xff]
        %v5966 = vld [vmem:[#allocation19 + $0x4b8] sm:$0xff]
        %v5967 = vld [vmem:[#allocation19 + $0x4c0] sm:$0xf]
        %v5968 = vld [vmem:[#allocation19 + $0x4c4] sm:$0xff]
        %v5969 = vld [vmem:[#allocation19 + $0x4cc] sm:$0xff]
        %v5970 = vld [vmem:[#allocation19 + $0x4d4] sm:$0xf]
        %v5971 = vld [vmem:[#allocation19 + $0x4d8] sm:$0xff]
        %v5972 = vld [vmem:[#allocation19 + $0x4e0] sm:$0xff]
        %v5973 = vld [vmem:[#allocation19 + $0x4e8] sm:$0xf]
        %v5974 = vld [vmem:[#allocation19 + $0x4ec] sm:$0xff]
        %v5975 = vld [vmem:[#allocation19 + $0x4f4] sm:$0xff]
        %v5976 = vld [vmem:[#allocation19 + $0x4fc] sm:$0xf]
        %v5977 = vld [vmem:[#allocation19 + $0x500] sm:$0xff]
        %v5978 = vld [vmem:[#allocation19 + $0x508] sm:$0xff]
        %v5979 = vld [vmem:[#allocation19 + $0x510] sm:$0xf]
        %v5980 = vld [vmem:[#allocation19 + $0x514] sm:$0xff]
        %v5981 = vld [vmem:[#allocation19 + $0x51c] sm:$0xff]
        %v5982 = vld [vmem:[#allocation19 + $0x524] sm:$0xf]
        %v5983 = vld [vmem:[#allocation19 + $0x528] sm:$0xff]
        %v5984 = vld [vmem:[#allocation19 + $0x530] sm:$0xff]
        %v5985 = vld [vmem:[#allocation19 + $0x538] sm:$0xf]
        %v5986 = vld [vmem:[#allocation19 + $0x53c] sm:$0xff]
        %v5987 = vld [vmem:[#allocation19 + $0x544] sm:$0xff]
        %v5988 = vld [vmem:[#allocation19 + $0x54c] sm:$0xf]
        %v5989 = vld [vmem:[#allocation19 + $0x550] sm:$0xff]
        %v5990 = vld [vmem:[#allocation19 + $0x558] sm:$0xff]
        %v5991 = vld [vmem:[#allocation19 + $0x560] sm:$0xf]
        %v5992 = vld [vmem:[#allocation19 + $0x564] sm:$0xff]
        %v5993 = vld [vmem:[#allocation19 + $0x56c] sm:$0xff]
        %v5994 = vld [vmem:[#allocation19 + $0x574] sm:$0xf]
        %v5995 = vld [vmem:[#allocation19 + $0x578] sm:$0xff]
        %v5996 = vld [vmem:[#allocation19 + $0x580] sm:$0xff]
        %v5997 = vld [vmem:[#allocation19 + $0x588] sm:$0xf]
        %v5998 = vld [vmem:[#allocation19 + $0x58c] sm:$0xff]
        %v5999 = vld [vmem:[#allocation19 + $0x594] sm:$0xff]
        %v6000 = vld [vmem:[#allocation19 + $0x59c] sm:$0xf]
        %v6001 = vld [vmem:[#allocation19 + $0x5a0] sm:$0xff]
        %v6002 = vld [vmem:[#allocation19 + $0x5a8] sm:$0xff]
        %v6003 = vld [vmem:[#allocation19 + $0x5b0] sm:$0xf]
        %v6004 = vld [vmem:[#allocation19 + $0x5b4] sm:$0xff]
        %v6005 = vld [vmem:[#allocation19 + $0x5bc] sm:$0xff]
        %v6006 = vld [vmem:[#allocation19 + $0x5c4] sm:$0xf]
        %v6007 = vld [vmem:[#allocation19 + $0x5c8] sm:$0xff]
        %v6008 = vld [vmem:[#allocation19 + $0x5d0] sm:$0xff]
        %v6009 = vld [vmem:[#allocation19 + $0x5d8] sm:$0xf]
        %v6010 = vld [vmem:[#allocation19 + $0x5dc] sm:$0xff]
        %v6011 = vld [vmem:[#allocation19 + $0x5e4] sm:$0xff]
        %v6012 = vld [vmem:[#allocation19 + $0x5ec] sm:$0xf]
        %v6013 = vld [vmem:[#allocation19 + $0x5f0] sm:$0xff]
        %v6014 = vld [vmem:[#allocation19 + $0x5f8] sm:$0xff]
        %v6015 = vld [vmem:[#allocation19 + $0x600] sm:$0xf]
        %v6016 = vld [vmem:[#allocation19 + $0x604] sm:$0xff]
        %v6017 = vld [vmem:[#allocation19 + $0x60c] sm:$0xff]
        %v6018 = vld [vmem:[#allocation19 + $0x614] sm:$0xf]
        %v6019 = vld [vmem:[#allocation19 + $0x618] sm:$0xff]
        %v6020 = vld [vmem:[#allocation19 + $0x620] sm:$0xff]
        %v6021 = vld [vmem:[#allocation19 + $0x628] sm:$0xf]
        %v6022 = vld [vmem:[#allocation19 + $0x62c] sm:$0xff]
        %v6023 = vld [vmem:[#allocation19 + $0x634] sm:$0xff]
        %v6024 = vld [vmem:[#allocation19 + $0x63c] sm:$0xf]
        %v6025 = vld [vmem:[#allocation20] sm:$0x1f]
        %v6027 = vlaneseq
        %v6028 = vshrl.u32 %v6027, 7
        %v6029 = vsub.s32 0, %v6028
        %v6030 = vrot.slane %v6025, %v6029
        %v6031 = vlaneseq
        %v6032 = vshrl.u32 %v6031, 7
        %v6033 = vsub.s32 1, %v6032
        %v6034 = vrot.slane %v6025, %v6033
        %v6035 = vlaneseq
        %v6036 = vshrl.u32 %v6035, 7
        %v6037 = vsub.s32 2, %v6036
        %v6038 = vrot.slane %v6025, %v6037
        %v6039 = vlaneseq
        %v6040 = vshrl.u32 %v6039, 7
        %v6041 = vsub.s32 3, %v6040
        %v6042 = vrot.slane %v6025, %v6041
        %v6043 = vlaneseq
        %v6044 = vshrl.u32 %v6043, 7
        %v6045 = vsub.s32 4, %v6044
        %v6046 = vrot.slane %v6025, %v6045
        %v6292 = vunpack.c.l.b16 %v5785
        %v6293 = vunpack.c.h.b16 %v5785
        %v6294 = vunpack.c.l.b16 %v5786
        %v6295 = vunpack.c.h.b16 %v5786
        %v6296 = vunpack.c.l.b16 %v5787
        %v6297 = vunpack.c.l.b16 %v5788
        %v6298 = vunpack.c.h.b16 %v5788
        %v6299 = vunpack.c.l.b16 %v5789
        %v6300 = vunpack.c.h.b16 %v5789
        %v6301 = vunpack.c.l.b16 %v5790
        %v6302 = vunpack.c.l.b16 %v5791
        %v6303 = vunpack.c.h.b16 %v5791
        %v6304 = vunpack.c.l.b16 %v5792
        %v6305 = vunpack.c.h.b16 %v5792
        %v6306 = vunpack.c.l.b16 %v5793
        %v6307 = vunpack.c.l.b16 %v5794
        %v6308 = vunpack.c.h.b16 %v5794
        %v6309 = vunpack.c.l.b16 %v5795
        %v6310 = vunpack.c.h.b16 %v5795
        %v6311 = vunpack.c.l.b16 %v5796
        %v6312 = vunpack.c.l.b16 %v5797
        %v6313 = vunpack.c.h.b16 %v5797
        %v6314 = vunpack.c.l.b16 %v5798
        %v6315 = vunpack.c.h.b16 %v5798
        %v6316 = vunpack.c.l.b16 %v5799
        %v6317 = vunpack.c.l.b16 %v5800
        %v6318 = vunpack.c.h.b16 %v5800
        %v6319 = vunpack.c.l.b16 %v5801
        %v6320 = vunpack.c.h.b16 %v5801
        %v6321 = vunpack.c.l.b16 %v5802
        %v6322 = vunpack.c.l.b16 %v5803
        %v6323 = vunpack.c.h.b16 %v5803
        %v6324 = vunpack.c.l.b16 %v5804
        %v6325 = vunpack.c.h.b16 %v5804
        %v6326 = vunpack.c.l.b16 %v5805
        %v6327 = vunpack.c.l.b16 %v5806
        %v6328 = vunpack.c.h.b16 %v5806
        %v6329 = vunpack.c.l.b16 %v5807
        %v6330 = vunpack.c.h.b16 %v5807
        %v6331 = vunpack.c.l.b16 %v5808
        %v6332 = vunpack.c.l.b16 %v5809
        %v6333 = vunpack.c.h.b16 %v5809
        %v6334 = vunpack.c.l.b16 %v5810
        %v6335 = vunpack.c.h.b16 %v5810
        %v6336 = vunpack.c.l.b16 %v5811
        %v6337 = vunpack.c.l.b16 %v5812
        %v6338 = vunpack.c.h.b16 %v5812
        %v6339 = vunpack.c.l.b16 %v5813
        %v6340 = vunpack.c.h.b16 %v5813
        %v6341 = vunpack.c.l.b16 %v5814
        %v6342 = vunpack.c.l.b16 %v5815
        %v6343 = vunpack.c.h.b16 %v5815
        %v6344 = vunpack.c.l.b16 %v5816
        %v6345 = vunpack.c.h.b16 %v5816
        %v6346 = vunpack.c.l.b16 %v5817
        %v6347 = vunpack.c.l.b16 %v5818
        %v6348 = vunpack.c.h.b16 %v5818
        %v6349 = vunpack.c.l.b16 %v5819
        %v6350 = vunpack.c.h.b16 %v5819
        %v6351 = vunpack.c.l.b16 %v5820
        %v6352 = vunpack.c.l.b16 %v5821
        %v6353 = vunpack.c.h.b16 %v5821
        %v6354 = vunpack.c.l.b16 %v5822
        %v6355 = vunpack.c.h.b16 %v5822
        %v6356 = vunpack.c.l.b16 %v5823
        %v6357 = vunpack.c.l.b16 %v5824
        %v6358 = vunpack.c.h.b16 %v5824
        %v6359 = vunpack.c.l.b16 %v5825
        %v6360 = vunpack.c.h.b16 %v5825
        %v6361 = vunpack.c.l.b16 %v5826
        %v6362 = vunpack.c.l.b16 %v5827
        %v6363 = vunpack.c.h.b16 %v5827
        %v6364 = vunpack.c.l.b16 %v5828
        %v6365 = vunpack.c.h.b16 %v5828
        %v6366 = vunpack.c.l.b16 %v5829
        %v6367 = vunpack.c.l.b16 %v5830
        %v6368 = vunpack.c.h.b16 %v5830
        %v6369 = vunpack.c.l.b16 %v5831
        %v6370 = vunpack.c.h.b16 %v5831
        %v6371 = vunpack.c.l.b16 %v5832
        %v6372 = vunpack.c.l.b16 %v5833
        %v6373 = vunpack.c.h.b16 %v5833
        %v6374 = vunpack.c.l.b16 %v5834
        %v6375 = vunpack.c.h.b16 %v5834
        %v6376 = vunpack.c.l.b16 %v5835
        %v6377 = vunpack.c.l.b16 %v5836
        %v6378 = vunpack.c.h.b16 %v5836
        %v6379 = vunpack.c.l.b16 %v5837
        %v6380 = vunpack.c.h.b16 %v5837
        %v6381 = vunpack.c.l.b16 %v5838
        %v6382 = vunpack.c.l.b16 %v5839
        %v6383 = vunpack.c.h.b16 %v5839
        %v6384 = vunpack.c.l.b16 %v5840
        %v6385 = vunpack.c.h.b16 %v5840
        %v6386 = vunpack.c.l.b16 %v5841
        %v6387 = vunpack.c.l.b16 %v5842
        %v6388 = vunpack.c.h.b16 %v5842
        %v6389 = vunpack.c.l.b16 %v5843
        %v6390 = vunpack.c.h.b16 %v5843
        %v6391 = vunpack.c.l.b16 %v5844
        %v6392 = vunpack.c.l.b16 %v5845
        %v6393 = vunpack.c.h.b16 %v5845
        %v6394 = vunpack.c.l.b16 %v5846
        %v6395 = vunpack.c.h.b16 %v5846
        %v6396 = vunpack.c.l.b16 %v5847
        %v6397 = vunpack.c.l.b16 %v5848
        %v6398 = vunpack.c.h.b16 %v5848
        %v6399 = vunpack.c.l.b16 %v5849
        %v6400 = vunpack.c.h.b16 %v5849
        %v6401 = vunpack.c.l.b16 %v5850
        %v6402 = vunpack.c.l.b16 %v5851
        %v6403 = vunpack.c.h.b16 %v5851
        %v6404 = vunpack.c.l.b16 %v5852
        %v6405 = vunpack.c.h.b16 %v5852
        %v6406 = vunpack.c.l.b16 %v5853
        %v6407 = vunpack.c.l.b16 %v5854
        %v6408 = vunpack.c.h.b16 %v5854
        %v6409 = vunpack.c.l.b16 %v5855
        %v6410 = vunpack.c.h.b16 %v5855
        %v6411 = vunpack.c.l.b16 %v5856
        %v6412 = vunpack.c.l.b16 %v5857
        %v6413 = vunpack.c.h.b16 %v5857
        %v6414 = vunpack.c.l.b16 %v5858
        %v6415 = vunpack.c.h.b16 %v5858
        %v6416 = vunpack.c.l.b16 %v5859
        %v6417 = vunpack.c.l.b16 %v5860
        %v6418 = vunpack.c.h.b16 %v5860
        %v6419 = vunpack.c.l.b16 %v5861
        %v6420 = vunpack.c.h.b16 %v5861
        %v6421 = vunpack.c.l.b16 %v5862
        %v6422 = vunpack.c.l.b16 %v5863
        %v6423 = vunpack.c.h.b16 %v5863
        %v6424 = vunpack.c.l.b16 %v5864
        %v6425 = vunpack.c.h.b16 %v5864
        %v6426 = vunpack.c.l.b16 %v5865
        %v6427 = vunpack.c.l.b16 %v5866
        %v6428 = vunpack.c.h.b16 %v5866
        %v6429 = vunpack.c.l.b16 %v5867
        %v6430 = vunpack.c.h.b16 %v5867
        %v6431 = vunpack.c.l.b16 %v5868
        %v6432 = vunpack.c.l.b16 %v5869
        %v6433 = vunpack.c.h.b16 %v5869
        %v6434 = vunpack.c.l.b16 %v5870
        %v6435 = vunpack.c.h.b16 %v5870
        %v6436 = vunpack.c.l.b16 %v5871
        %v6437 = vunpack.c.l.b16 %v5872
        %v6438 = vunpack.c.h.b16 %v5872
        %v6439 = vunpack.c.l.b16 %v5873
        %v6440 = vunpack.c.h.b16 %v5873
        %v6441 = vunpack.c.l.b16 %v5874
        %v6442 = vunpack.c.l.b16 %v5875
        %v6443 = vunpack.c.h.b16 %v5875
        %v6444 = vunpack.c.l.b16 %v5876
        %v6445 = vunpack.c.h.b16 %v5876
        %v6446 = vunpack.c.l.b16 %v5877
        %v6447 = vunpack.c.l.b16 %v5878
        %v6448 = vunpack.c.h.b16 %v5878
        %v6449 = vunpack.c.l.b16 %v5879
        %v6450 = vunpack.c.h.b16 %v5879
        %v6451 = vunpack.c.l.b16 %v5880
        %v6452 = vunpack.c.l.b16 %v5881
        %v6453 = vunpack.c.h.b16 %v5881
        %v6454 = vunpack.c.l.b16 %v5882
        %v6455 = vunpack.c.h.b16 %v5882
        %v6456 = vunpack.c.l.b16 %v5883
        %v6457 = vunpack.c.l.b16 %v5884
        %v6458 = vunpack.c.h.b16 %v5884
        %v6459 = vunpack.c.l.b16 %v5885
        %v6460 = vunpack.c.h.b16 %v5885
        %v6461 = vunpack.c.l.b16 %v5886
        %v6462 = vunpack.c.l.b16 %v5887
        %v6463 = vunpack.c.h.b16 %v5887
        %v6464 = vunpack.c.l.b16 %v5888
        %v6465 = vunpack.c.h.b16 %v5888
        %v6466 = vunpack.c.l.b16 %v5889
        %v6467 = vunpack.c.l.b16 %v5890
        %v6468 = vunpack.c.h.b16 %v5890
        %v6469 = vunpack.c.l.b16 %v5891
        %v6470 = vunpack.c.h.b16 %v5891
        %v6471 = vunpack.c.l.b16 %v5892
        %v6472 = vunpack.c.l.b16 %v5893
        %v6473 = vunpack.c.h.b16 %v5893
        %v6474 = vunpack.c.l.b16 %v5894
        %v6475 = vunpack.c.h.b16 %v5894
        %v6476 = vunpack.c.l.b16 %v5895
        %v6477 = vunpack.c.l.b16 %v5896
        %v6478 = vunpack.c.h.b16 %v5896
        %v6479 = vunpack.c.l.b16 %v5897
        %v6480 = vunpack.c.h.b16 %v5897
        %v6481 = vunpack.c.l.b16 %v5898
        %v6482 = vunpack.c.l.b16 %v5899
        %v6483 = vunpack.c.h.b16 %v5899
        %v6484 = vunpack.c.l.b16 %v5900
        %v6485 = vunpack.c.h.b16 %v5900
        %v6486 = vunpack.c.l.b16 %v5901
        %v6487 = vunpack.c.l.b16 %v5902
        %v6488 = vunpack.c.h.b16 %v5902
        %v6489 = vunpack.c.l.b16 %v5903
        %v6490 = vunpack.c.h.b16 %v5903
        %v6491 = vunpack.c.l.b16 %v5904
        %v6492 = vunpack.c.l.b16 %v5905
        %v6493 = vunpack.c.h.b16 %v5905
        %v6494 = vunpack.c.l.b16 %v5906
        %v6495 = vunpack.c.h.b16 %v5906
        %v6496 = vunpack.c.l.b16 %v5907
        %v6497 = vunpack.c.l.b16 %v5908
        %v6498 = vunpack.c.h.b16 %v5908
        %v6499 = vunpack.c.l.b16 %v5909
        %v6500 = vunpack.c.h.b16 %v5909
        %v6501 = vunpack.c.l.b16 %v5910
        %v6502 = vunpack.c.l.b16 %v5911
        %v6503 = vunpack.c.h.b16 %v5911
        %v6504 = vunpack.c.l.b16 %v5912
        %v6505 = vunpack.c.h.b16 %v5912
        %v6506 = vunpack.c.l.b16 %v5913
        %v6507 = vunpack.c.l.b16 %v5914
        %v6508 = vunpack.c.h.b16 %v5914
        %v6509 = vunpack.c.l.b16 %v5915
        %v6510 = vunpack.c.h.b16 %v5915
        %v6511 = vunpack.c.l.b16 %v5916
        %v6512 = vunpack.c.l.b16 %v5917
        %v6513 = vunpack.c.h.b16 %v5917
        %v6514 = vunpack.c.l.b16 %v5918
        %v6515 = vunpack.c.h.b16 %v5918
        %v6516 = vunpack.c.l.b16 %v5919
        %v6517 = vunpack.c.l.b16 %v5920
        %v6518 = vunpack.c.h.b16 %v5920
        %v6519 = vunpack.c.l.b16 %v5921
        %v6520 = vunpack.c.h.b16 %v5921
        %v6521 = vunpack.c.l.b16 %v5922
        %v6522 = vunpack.c.l.b16 %v5923
        %v6523 = vunpack.c.h.b16 %v5923
        %v6524 = vunpack.c.l.b16 %v5924
        %v6525 = vunpack.c.h.b16 %v5924
        %v6526 = vunpack.c.l.b16 %v5925
        %v6527 = vunpack.c.l.b16 %v5926
        %v6528 = vunpack.c.h.b16 %v5926
        %v6529 = vunpack.c.l.b16 %v5927
        %v6530 = vunpack.c.h.b16 %v5927
        %v6531 = vunpack.c.l.b16 %v5928
        %v6532 = vunpack.c.l.b16 %v5929
        %v6533 = vunpack.c.h.b16 %v5929
        %v6534 = vunpack.c.l.b16 %v5930
        %v6535 = vunpack.c.h.b16 %v5930
        %v6536 = vunpack.c.l.b16 %v5931
        %v6537 = vunpack.c.l.b16 %v5932
        %v6538 = vunpack.c.h.b16 %v5932
        %v6539 = vunpack.c.l.b16 %v5933
        %v6540 = vunpack.c.h.b16 %v5933
        %v6541 = vunpack.c.l.b16 %v5934
        %v6542 = vunpack.c.l.b16 %v5935
        %v6543 = vunpack.c.h.b16 %v5935
        %v6544 = vunpack.c.l.b16 %v5936
        %v6545 = vunpack.c.h.b16 %v5936
        %v6546 = vunpack.c.l.b16 %v5937
        %v6547 = vunpack.c.l.b16 %v5938
        %v6548 = vunpack.c.h.b16 %v5938
        %v6549 = vunpack.c.l.b16 %v5939
        %v6550 = vunpack.c.h.b16 %v5939
        %v6551 = vunpack.c.l.b16 %v5940
        %v6552 = vunpack.c.l.b16 %v5941
        %v6553 = vunpack.c.h.b16 %v5941
        %v6554 = vunpack.c.l.b16 %v5942
        %v6555 = vunpack.c.h.b16 %v5942
        %v6556 = vunpack.c.l.b16 %v5943
        %v6557 = vunpack.c.l.b16 %v5944
        %v6558 = vunpack.c.h.b16 %v5944
        %v6559 = vunpack.c.l.b16 %v5945
        %v6560 = vunpack.c.h.b16 %v5945
        %v6561 = vunpack.c.l.b16 %v5946
        %v6562 = vunpack.c.l.b16 %v5947
        %v6563 = vunpack.c.h.b16 %v5947
        %v6564 = vunpack.c.l.b16 %v5948
        %v6565 = vunpack.c.h.b16 %v5948
        %v6566 = vunpack.c.l.b16 %v5949
        %v6567 = vunpack.c.l.b16 %v5950
        %v6568 = vunpack.c.h.b16 %v5950
        %v6569 = vunpack.c.l.b16 %v5951
        %v6570 = vunpack.c.h.b16 %v5951
        %v6571 = vunpack.c.l.b16 %v5952
        %v6572 = vunpack.c.l.b16 %v5953
        %v6573 = vunpack.c.h.b16 %v5953
        %v6574 = vunpack.c.l.b16 %v5954
        %v6575 = vunpack.c.h.b16 %v5954
        %v6576 = vunpack.c.l.b16 %v5955
        %v6577 = vunpack.c.l.b16 %v5956
        %v6578 = vunpack.c.h.b16 %v5956
        %v6579 = vunpack.c.l.b16 %v5957
        %v6580 = vunpack.c.h.b16 %v5957
        %v6581 = vunpack.c.l.b16 %v5958
        %v6582 = vunpack.c.l.b16 %v5959
        %v6583 = vunpack.c.h.b16 %v5959
        %v6584 = vunpack.c.l.b16 %v5960
        %v6585 = vunpack.c.h.b16 %v5960
        %v6586 = vunpack.c.l.b16 %v5961
        %v6587 = vunpack.c.l.b16 %v5962
        %v6588 = vunpack.c.h.b16 %v5962
        %v6589 = vunpack.c.l.b16 %v5963
        %v6590 = vunpack.c.h.b16 %v5963
        %v6591 = vunpack.c.l.b16 %v5964
        %v6592 = vunpack.c.l.b16 %v5965
        %v6593 = vunpack.c.h.b16 %v5965
        %v6594 = vunpack.c.l.b16 %v5966
        %v6595 = vunpack.c.h.b16 %v5966
        %v6596 = vunpack.c.l.b16 %v5967
        %v6597 = vunpack.c.l.b16 %v5968
        %v6598 = vunpack.c.h.b16 %v5968
        %v6599 = vunpack.c.l.b16 %v5969
        %v6600 = vunpack.c.h.b16 %v5969
        %v6601 = vunpack.c.l.b16 %v5970
        %v6602 = vunpack.c.l.b16 %v5971
        %v6603 = vunpack.c.h.b16 %v5971
        %v6604 = vunpack.c.l.b16 %v5972
        %v6605 = vunpack.c.h.b16 %v5972
        %v6606 = vunpack.c.l.b16 %v5973
        %v6607 = vunpack.c.l.b16 %v5974
        %v6608 = vunpack.c.h.b16 %v5974
        %v6609 = vunpack.c.l.b16 %v5975
        %v6610 = vunpack.c.h.b16 %v5975
        %v6611 = vunpack.c.l.b16 %v5976
        %v6612 = vunpack.c.l.b16 %v5977
        %v6613 = vunpack.c.h.b16 %v5977
        %v6614 = vunpack.c.l.b16 %v5978
        %v6615 = vunpack.c.h.b16 %v5978
        %v6616 = vunpack.c.l.b16 %v5979
        %v6617 = vunpack.c.l.b16 %v5980
        %v6618 = vunpack.c.h.b16 %v5980
        %v6619 = vunpack.c.l.b16 %v5981
        %v6620 = vunpack.c.h.b16 %v5981
        %v6621 = vunpack.c.l.b16 %v5982
        %v6622 = vunpack.c.l.b16 %v5983
        %v6623 = vunpack.c.h.b16 %v5983
        %v6624 = vunpack.c.l.b16 %v5984
        %v6625 = vunpack.c.h.b16 %v5984
        %v6626 = vunpack.c.l.b16 %v5985
        %v6627 = vunpack.c.l.b16 %v5986
        %v6628 = vunpack.c.h.b16 %v5986
        %v6629 = vunpack.c.l.b16 %v5987
        %v6630 = vunpack.c.h.b16 %v5987
        %v6631 = vunpack.c.l.b16 %v5988
        %v6632 = vunpack.c.l.b16 %v5989
        %v6633 = vunpack.c.h.b16 %v5989
        %v6634 = vunpack.c.l.b16 %v5990
        %v6635 = vunpack.c.h.b16 %v5990
        %v6636 = vunpack.c.l.b16 %v5991
        %v6637 = vunpack.c.l.b16 %v5992
        %v6638 = vunpack.c.h.b16 %v5992
        %v6639 = vunpack.c.l.b16 %v5993
        %v6640 = vunpack.c.h.b16 %v5993
        %v6641 = vunpack.c.l.b16 %v5994
        %v6642 = vunpack.c.l.b16 %v5995
        %v6643 = vunpack.c.h.b16 %v5995
        %v6644 = vunpack.c.l.b16 %v5996
        %v6645 = vunpack.c.h.b16 %v5996
        %v6646 = vunpack.c.l.b16 %v5997
        %v6647 = vunpack.c.l.b16 %v5998
        %v6648 = vunpack.c.h.b16 %v5998
        %v6649 = vunpack.c.l.b16 %v5999
        %v6650 = vunpack.c.h.b16 %v5999
        %v6651 = vunpack.c.l.b16 %v6000
        %v6652 = vunpack.c.l.b16 %v6001
        %v6653 = vunpack.c.h.b16 %v6001
        %v6654 = vunpack.c.l.b16 %v6002
        %v6655 = vunpack.c.h.b16 %v6002
        %v6656 = vunpack.c.l.b16 %v6003
        %v6657 = vunpack.c.l.b16 %v6004
        %v6658 = vunpack.c.h.b16 %v6004
        %v6659 = vunpack.c.l.b16 %v6005
        %v6660 = vunpack.c.h.b16 %v6005
        %v6661 = vunpack.c.l.b16 %v6006
        %v6662 = vunpack.c.l.b16 %v6007
        %v6663 = vunpack.c.h.b16 %v6007
        %v6664 = vunpack.c.l.b16 %v6008
        %v6665 = vunpack.c.h.b16 %v6008
        %v6666 = vunpack.c.l.b16 %v6009
        %v6667 = vunpack.c.l.b16 %v6010
        %v6668 = vunpack.c.h.b16 %v6010
        %v6669 = vunpack.c.l.b16 %v6011
        %v6670 = vunpack.c.h.b16 %v6011
        %v6671 = vunpack.c.l.b16 %v6012
        %v6672 = vunpack.c.l.b16 %v6013
        %v6673 = vunpack.c.h.b16 %v6013
        %v6674 = vunpack.c.l.b16 %v6014
        %v6675 = vunpack.c.h.b16 %v6014
        %v6676 = vunpack.c.l.b16 %v6015
        %v6677 = vunpack.c.l.b16 %v6016
        %v6678 = vunpack.c.h.b16 %v6016
        %v6679 = vunpack.c.l.b16 %v6017
        %v6680 = vunpack.c.h.b16 %v6017
        %v6681 = vunpack.c.l.b16 %v6018
        %v6682 = vunpack.c.l.b16 %v6019
        %v6683 = vunpack.c.h.b16 %v6019
        %v6684 = vunpack.c.l.b16 %v6020
        %v6685 = vunpack.c.h.b16 %v6020
        %v6686 = vunpack.c.l.b16 %v6021
        %v6687 = vunpack.c.l.b16 %v6022
        %v6688 = vunpack.c.h.b16 %v6022
        %v6689 = vunpack.c.l.b16 %v6023
        %v6690 = vunpack.c.h.b16 %v6023
        %v6691 = vunpack.c.l.b16 %v6024
        %v6692 = vpack.c.b16 %v6297, %v6292
        %v6693 = vpack.c.b16 %v6298, %v6293
        %v6694 = vpack.c.b16 %v6299, %v6294
        %v6695 = vpack.c.b16 %v6300, %v6295
        %v6696 = vpack.c.b16 %v6301, %v6296
        %v6697 = vpack.c.b16 %v6307, %v6302
        %v6698 = vpack.c.b16 %v6308, %v6303
        %v6699 = vpack.c.b16 %v6309, %v6304
        %v6700 = vpack.c.b16 %v6310, %v6305
        %v6701 = vpack.c.b16 %v6311, %v6306
        %v6702 = vpack.c.b16 %v6317, %v6312
        %v6703 = vpack.c.b16 %v6318, %v6313
        %v6704 = vpack.c.b16 %v6319, %v6314
        %v6705 = vpack.c.b16 %v6320, %v6315
        %v6706 = vpack.c.b16 %v6321, %v6316
        %v6707 = vpack.c.b16 %v6327, %v6322
        %v6708 = vpack.c.b16 %v6328, %v6323
        %v6709 = vpack.c.b16 %v6329, %v6324
        %v6710 = vpack.c.b16 %v6330, %v6325
        %v6711 = vpack.c.b16 %v6331, %v6326
        %v6712 = vpack.c.b16 %v6337, %v6332
        %v6713 = vpack.c.b16 %v6338, %v6333
        %v6714 = vpack.c.b16 %v6339, %v6334
        %v6715 = vpack.c.b16 %v6340, %v6335
        %v6716 = vpack.c.b16 %v6341, %v6336
        %v6717 = vpack.c.b16 %v6347, %v6342
        %v6718 = vpack.c.b16 %v6348, %v6343
        %v6719 = vpack.c.b16 %v6349, %v6344
        %v6720 = vpack.c.b16 %v6350, %v6345
        %v6721 = vpack.c.b16 %v6351, %v6346
        %v6722 = vpack.c.b16 %v6357, %v6352
        %v6723 = vpack.c.b16 %v6358, %v6353
        %v6724 = vpack.c.b16 %v6359, %v6354
        %v6725 = vpack.c.b16 %v6360, %v6355
        %v6726 = vpack.c.b16 %v6361, %v6356
        %v6727 = vpack.c.b16 %v6367, %v6362
        %v6728 = vpack.c.b16 %v6368, %v6363
        %v6729 = vpack.c.b16 %v6369, %v6364
        %v6730 = vpack.c.b16 %v6370, %v6365
        %v6731 = vpack.c.b16 %v6371, %v6366
        %v6732 = vpack.c.b16 %v6377, %v6372
        %v6733 = vpack.c.b16 %v6378, %v6373
        %v6734 = vpack.c.b16 %v6379, %v6374
        %v6735 = vpack.c.b16 %v6380, %v6375
        %v6736 = vpack.c.b16 %v6381, %v6376
        %v6737 = vpack.c.b16 %v6387, %v6382
        %v6738 = vpack.c.b16 %v6388, %v6383
        %v6739 = vpack.c.b16 %v6389, %v6384
        %v6740 = vpack.c.b16 %v6390, %v6385
        %v6741 = vpack.c.b16 %v6391, %v6386
        %v6742 = vpack.c.b16 %v6397, %v6392
        %v6743 = vpack.c.b16 %v6398, %v6393
        %v6744 = vpack.c.b16 %v6399, %v6394
        %v6745 = vpack.c.b16 %v6400, %v6395
        %v6746 = vpack.c.b16 %v6401, %v6396
        %v6747 = vpack.c.b16 %v6407, %v6402
        %v6748 = vpack.c.b16 %v6408, %v6403
        %v6749 = vpack.c.b16 %v6409, %v6404
        %v6750 = vpack.c.b16 %v6410, %v6405
        %v6751 = vpack.c.b16 %v6411, %v6406
        %v6752 = vpack.c.b16 %v6417, %v6412
        %v6753 = vpack.c.b16 %v6418, %v6413
        %v6754 = vpack.c.b16 %v6419, %v6414
        %v6755 = vpack.c.b16 %v6420, %v6415
        %v6756 = vpack.c.b16 %v6421, %v6416
        %v6757 = vpack.c.b16 %v6427, %v6422
        %v6758 = vpack.c.b16 %v6428, %v6423
        %v6759 = vpack.c.b16 %v6429, %v6424
        %v6760 = vpack.c.b16 %v6430, %v6425
        %v6761 = vpack.c.b16 %v6431, %v6426
        %v6762 = vpack.c.b16 %v6437, %v6432
        %v6763 = vpack.c.b16 %v6438, %v6433
        %v6764 = vpack.c.b16 %v6439, %v6434
        %v6765 = vpack.c.b16 %v6440, %v6435
        %v6766 = vpack.c.b16 %v6441, %v6436
        %v6767 = vpack.c.b16 %v6447, %v6442
        %v6768 = vpack.c.b16 %v6448, %v6443
        %v6769 = vpack.c.b16 %v6449, %v6444
        %v6770 = vpack.c.b16 %v6450, %v6445
        %v6771 = vpack.c.b16 %v6451, %v6446
        %v6772 = vpack.c.b16 %v6457, %v6452
        %v6773 = vpack.c.b16 %v6458, %v6453
        %v6774 = vpack.c.b16 %v6459, %v6454
        %v6775 = vpack.c.b16 %v6460, %v6455
        %v6776 = vpack.c.b16 %v6461, %v6456
        %v6777 = vpack.c.b16 %v6467, %v6462
        %v6778 = vpack.c.b16 %v6468, %v6463
        %v6779 = vpack.c.b16 %v6469, %v6464
        %v6780 = vpack.c.b16 %v6470, %v6465
        %v6781 = vpack.c.b16 %v6471, %v6466
        %v6782 = vpack.c.b16 %v6477, %v6472
        %v6783 = vpack.c.b16 %v6478, %v6473
        %v6784 = vpack.c.b16 %v6479, %v6474
        %v6785 = vpack.c.b16 %v6480, %v6475
        %v6786 = vpack.c.b16 %v6481, %v6476
        %v6787 = vpack.c.b16 %v6487, %v6482
        %v6788 = vpack.c.b16 %v6488, %v6483
        %v6789 = vpack.c.b16 %v6489, %v6484
        %v6790 = vpack.c.b16 %v6490, %v6485
        %v6791 = vpack.c.b16 %v6491, %v6486
        %v6792 = vpack.c.b16 %v6497, %v6492
        %v6793 = vpack.c.b16 %v6498, %v6493
        %v6794 = vpack.c.b16 %v6499, %v6494
        %v6795 = vpack.c.b16 %v6500, %v6495
        %v6796 = vpack.c.b16 %v6501, %v6496
        %v6797 = vpack.c.b16 %v6507, %v6502
        %v6798 = vpack.c.b16 %v6508, %v6503
        %v6799 = vpack.c.b16 %v6509, %v6504
        %v6800 = vpack.c.b16 %v6510, %v6505
        %v6801 = vpack.c.b16 %v6511, %v6506
        %v6802 = vpack.c.b16 %v6517, %v6512
        %v6803 = vpack.c.b16 %v6518, %v6513
        %v6804 = vpack.c.b16 %v6519, %v6514
        %v6805 = vpack.c.b16 %v6520, %v6515
        %v6806 = vpack.c.b16 %v6521, %v6516
        %v6807 = vpack.c.b16 %v6527, %v6522
        %v6808 = vpack.c.b16 %v6528, %v6523
        %v6809 = vpack.c.b16 %v6529, %v6524
        %v6810 = vpack.c.b16 %v6530, %v6525
        %v6811 = vpack.c.b16 %v6531, %v6526
        %v6812 = vpack.c.b16 %v6537, %v6532
        %v6813 = vpack.c.b16 %v6538, %v6533
        %v6814 = vpack.c.b16 %v6539, %v6534
        %v6815 = vpack.c.b16 %v6540, %v6535
        %v6816 = vpack.c.b16 %v6541, %v6536
        %v6817 = vpack.c.b16 %v6547, %v6542
        %v6818 = vpack.c.b16 %v6548, %v6543
        %v6819 = vpack.c.b16 %v6549, %v6544
        %v6820 = vpack.c.b16 %v6550, %v6545
        %v6821 = vpack.c.b16 %v6551, %v6546
        %v6822 = vpack.c.b16 %v6557, %v6552
        %v6823 = vpack.c.b16 %v6558, %v6553
        %v6824 = vpack.c.b16 %v6559, %v6554
        %v6825 = vpack.c.b16 %v6560, %v6555
        %v6826 = vpack.c.b16 %v6561, %v6556
        %v6827 = vpack.c.b16 %v6567, %v6562
        %v6828 = vpack.c.b16 %v6568, %v6563
        %v6829 = vpack.c.b16 %v6569, %v6564
        %v6830 = vpack.c.b16 %v6570, %v6565
        %v6831 = vpack.c.b16 %v6571, %v6566
        %v6832 = vpack.c.b16 %v6577, %v6572
        %v6833 = vpack.c.b16 %v6578, %v6573
        %v6834 = vpack.c.b16 %v6579, %v6574
        %v6835 = vpack.c.b16 %v6580, %v6575
        %v6836 = vpack.c.b16 %v6581, %v6576
        %v6837 = vpack.c.b16 %v6587, %v6582
        %v6838 = vpack.c.b16 %v6588, %v6583
        %v6839 = vpack.c.b16 %v6589, %v6584
        %v6840 = vpack.c.b16 %v6590, %v6585
        %v6841 = vpack.c.b16 %v6591, %v6586
        %v6842 = vpack.c.b16 %v6597, %v6592
        %v6843 = vpack.c.b16 %v6598, %v6593
        %v6844 = vpack.c.b16 %v6599, %v6594
        %v6845 = vpack.c.b16 %v6600, %v6595
        %v6846 = vpack.c.b16 %v6601, %v6596
        %v6847 = vpack.c.b16 %v6607, %v6602
        %v6848 = vpack.c.b16 %v6608, %v6603
        %v6849 = vpack.c.b16 %v6609, %v6604
        %v6850 = vpack.c.b16 %v6610, %v6605
        %v6851 = vpack.c.b16 %v6611, %v6606
        %v6852 = vpack.c.b16 %v6617, %v6612
        %v6853 = vpack.c.b16 %v6618, %v6613
        %v6854 = vpack.c.b16 %v6619, %v6614
        %v6855 = vpack.c.b16 %v6620, %v6615
        %v6856 = vpack.c.b16 %v6621, %v6616
        %v6857 = vpack.c.b16 %v6627, %v6622
        %v6858 = vpack.c.b16 %v6628, %v6623
        %v6859 = vpack.c.b16 %v6629, %v6624
        %v6860 = vpack.c.b16 %v6630, %v6625
        %v6861 = vpack.c.b16 %v6631, %v6626
        %v6862 = vpack.c.b16 %v6637, %v6632
        %v6863 = vpack.c.b16 %v6638, %v6633
        %v6864 = vpack.c.b16 %v6639, %v6634
        %v6865 = vpack.c.b16 %v6640, %v6635
        %v6866 = vpack.c.b16 %v6641, %v6636
        %v6867 = vpack.c.b16 %v6647, %v6642
        %v6868 = vpack.c.b16 %v6648, %v6643
        %v6869 = vpack.c.b16 %v6649, %v6644
        %v6870 = vpack.c.b16 %v6650, %v6645
        %v6871 = vpack.c.b16 %v6651, %v6646
        %v6872 = vpack.c.b16 %v6657, %v6652
        %v6873 = vpack.c.b16 %v6658, %v6653
        %v6874 = vpack.c.b16 %v6659, %v6654
        %v6875 = vpack.c.b16 %v6660, %v6655
        %v6876 = vpack.c.b16 %v6661, %v6656
        %v6877 = vpack.c.b16 %v6667, %v6662
        %v6878 = vpack.c.b16 %v6668, %v6663
        %v6879 = vpack.c.b16 %v6669, %v6664
        %v6880 = vpack.c.b16 %v6670, %v6665
        %v6881 = vpack.c.b16 %v6671, %v6666
        %v6882 = vpack.c.b16 %v6677, %v6672
        %v6883 = vpack.c.b16 %v6678, %v6673
        %v6884 = vpack.c.b16 %v6679, %v6674
        %v6885 = vpack.c.b16 %v6680, %v6675
        %v6886 = vpack.c.b16 %v6681, %v6676
        %v6887 = vpack.c.b16 %v6687, %v6682
        %v6888 = vpack.c.b16 %v6688, %v6683
        %v6889 = vpack.c.b16 %v6689, %v6684
        %v6890 = vpack.c.b16 %v6690, %v6685
        %v6891 = vpack.c.b16 %v6691, %v6686
        %7092 = vmatprep.subr.bf16.mxu0 %v6693
        %7093 = vmatpush1.bf16.msra.mxu0 %v6692
        %7094 = vmatprep.subr.bf16.mxu0 %v6698
        %7095 = vmatpush1.bf16.msra.mxu0 %v6697
        %7096 = vmatprep.subr.bf16.mxu0 %v6703
        %7097 = vmatpush1.bf16.msra.mxu0 %v6702
        %7098 = vmatprep.subr.bf16.mxu0 %v6708
        %7099 = vmatpush1.bf16.msra.mxu0 %v6707
        %7100 = vmatprep.subr.bf16.mxu0 %v6713
        %7101 = vmatpush1.bf16.msra.mxu0 %v6712
        %7102 = vmatprep.subr.bf16.mxu0 %v6718
        %7103 = vmatpush1.bf16.msra.mxu0 %v6717
        %7104 = vmatprep.subr.bf16.mxu0 %v6723
        %7105 = vmatpush1.bf16.msra.mxu0 %v6722
        %7106 = vmatprep.subr.bf16.mxu0 %v6728
        %7107 = vmatpush1.bf16.msra.mxu0 %v6727
        %7108 = vmatprep.subr.bf16.mxu0 %v6733
        %7109 = vmatpush1.bf16.msra.mxu0 %v6732
        %7110 = vmatprep.subr.bf16.mxu0 %v6738
        %7111 = vmatpush1.bf16.msra.mxu0 %v6737
        %7112 = vmatprep.subr.bf16.mxu0 %v6743
        %7113 = vmatpush1.bf16.msra.mxu0 %v6742
        %7114 = vmatprep.subr.bf16.mxu0 %v6748
        %7115 = vmatpush1.bf16.msra.mxu0 %v6747
        %7116 = vmatprep.subr.bf16.mxu0 %v6753
        %7117 = vmatpush1.bf16.msra.mxu0 %v6752
        %7118 = vmatprep.subr.bf16.mxu0 %v6758
        %7119 = vmatpush1.bf16.msra.mxu0 %v6757
        %7120 = vmatprep.subr.bf16.mxu0 %v6763
        %7121 = vmatpush1.bf16.msra.mxu0 %v6762
        %7122 = vmatprep.subr.bf16.mxu0 %v6768
        %7123 = vmatpush1.bf16.msra.mxu0 %v6767
        %7124 = vmatprep.mubr.bf16.mxu0 %v5781
        %7125 = vmatmul.mubr.bf16.gmra.mrb[0].mxu0 %v5780
        %v7126 = vpop.f32.mrb[0].mxu0
        %v7127 = vadd.f32 %v6030, %v7126
        %v7128 = vpop.f32.mrb[0].mxu0
        %v7129 = vadd.f32 %v6034, %v7128
        %v7130 = vpop.f32.mrb[0].mxu0
        %v7131 = vadd.f32 %v6030, %v7130
        %v7132 = vpop.f32.mrb[0].mxu0
        %v7133 = vadd.f32 %v6034, %v7132
        %7134 = vdwg.mxu0
        %7135 = vmatprep.subr.bf16.mxu0 %v6773
        %7136 = vmatpush1.bf16.msra.mxu0 %v6772
        %7137 = vmatprep.subr.bf16.mxu0 %v6778
        %7138 = vmatpush1.bf16.msra.mxu0 %v6777
        %7139 = vmatprep.subr.bf16.mxu0 %v6783
        %7140 = vmatpush1.bf16.msra.mxu0 %v6782
        %7141 = vmatprep.subr.bf16.mxu0 %v6788
        %7142 = vmatpush1.bf16.msra.mxu0 %v6787
        %7143 = vmatprep.subr.bf16.mxu0 %v6793
        %7144 = vmatpush1.bf16.msra.mxu0 %v6792
        %7145 = vmatprep.subr.bf16.mxu0 %v6798
        %7146 = vmatpush1.bf16.msra.mxu0 %v6797
        %7147 = vmatprep.subr.bf16.mxu0 %v6803
        %7148 = vmatpush1.bf16.msra.mxu0 %v6802
        %7149 = vmatprep.subr.bf16.mxu0 %v6808
        %7150 = vmatpush1.bf16.msra.mxu0 %v6807
        %7151 = vmatprep.subr.bf16.mxu0 %v6813
        %7152 = vmatpush1.bf16.msra.mxu0 %v6812
        %7153 = vmatprep.subr.bf16.mxu0 %v6818
        %7154 = vmatpush1.bf16.msra.mxu0 %v6817
        %7155 = vmatprep.subr.bf16.mxu0 %v6823
        %7156 = vmatpush1.bf16.msra.mxu0 %v6822
        %7157 = vmatprep.subr.bf16.mxu0 %v6828
        %7158 = vmatpush1.bf16.msra.mxu0 %v6827
        %7159 = vmatprep.subr.bf16.mxu0 %v6833
        %7160 = vmatpush1.bf16.msra.mxu0 %v6832
        %7161 = vmatprep.subr.bf16.mxu0 %v6838
        %7162 = vmatpush1.bf16.msra.mxu0 %v6837
        %7163 = vmatprep.subr.bf16.mxu0 %v6843
        %7164 = vmatpush1.bf16.msra.mxu0 %v6842
        %7165 = vmatprep.subr.bf16.mxu0 %v6848
        %7166 = vmatpush1.bf16.msra.mxu0 %v6847
        %7167 = vmatprep.mubr.bf16.mxu0 %v5783
        %7168 = vmatmul.mubr.bf16.gmra.mrb[0].mxu0 %v5782
        %v7169 = vpop.f32.mrb[0].mxu0
        %v7170 = vadd.f32 %v7127, %v7169
        %v7171 = vpop.f32.mrb[0].mxu0
        %v7172 = vadd.f32 %v7129, %v7171
        %v7173 = vpop.f32.mrb[0].mxu0
        %v7174 = vadd.f32 %v7131, %v7173
        %v7175 = vpop.f32.mrb[0].mxu0
        %v7176 = vadd.f32 %v7133, %v7175
        %7177 = vdwg.mxu0
        %7178 = vmatprep.subr.bf16.mxu0 %v6853
        %7179 = vmatpush1.bf16.msra.mxu0 %v6852
        %7180 = vmatprep.subr.bf16.mxu0 %v6858
        %7181 = vmatpush1.bf16.msra.mxu0 %v6857
        %7182 = vmatprep.subr.bf16.mxu0 %v6863
        %7183 = vmatpush1.bf16.msra.mxu0 %v6862
        %7184 = vmatprep.subr.bf16.mxu0 %v6868
        %7185 = vmatpush1.bf16.msra.mxu0 %v6867
        %7186 = vmatprep.subr.bf16.mxu0 %v6873
        %7187 = vmatpush1.bf16.msra.mxu0 %v6872
        %7188 = vmatprep.subr.bf16.mxu0 %v6878
        %7189 = vmatpush1.bf16.msra.mxu0 %v6877
        %7190 = vmatprep.subr.bf16.mxu0 %v6883
        %7191 = vmatpush1.bf16.msra.mxu0 %v6882
        %7192 = vmatprep.subr.bf16.mxu0 %v6888
        %7193 = vmatpush1.bf16.msra.mxu0 %v6887
        %7194 = vmatprep.subr.bf16.mxu0 0
        %7195 = vmatpush1.bf16.msra.mxu0 0
        %7196 = vmatprep.subr.bf16.mxu0 0
        %7197 = vmatpush1.bf16.msra.mxu0 0
        %7198 = vmatprep.subr.bf16.mxu0 0
        %7199 = vmatpush1.bf16.msra.mxu0 0
        %7200 = vmatprep.subr.bf16.mxu0 0
        %7201 = vmatpush1.bf16.msra.mxu0 0
        %7202 = vmatprep.subr.bf16.mxu0 0
        %7203 = vmatpush1.bf16.msra.mxu0 0
        %7204 = vmatprep.subr.bf16.mxu0 0
        %7205 = vmatpush1.bf16.msra.mxu0 0
        %7206 = vmatprep.subr.bf16.mxu0 0
        %7207 = vmatpush1.bf16.msra.mxu0 0
        %7208 = vmatprep.subr.bf16.mxu0 0
        %7209 = vmatpush1.bf16.msra.mxu0 0
        %7210 = vmatprep.mubr.bf16.mxu0 0
        %7211 = vmatmul.mubr.bf16.gmra.mrb[0].mxu0 %v5784
        %v7212 = vpop.f32.mrb[0].mxu0
        %v7213 = vadd.f32 %v7170, %v7212
        %v7214 = vpop.f32.mrb[0].mxu0
        %v7215 = vadd.f32 %v7172, %v7214
        %v7216 = vpop.f32.mrb[0].mxu0
        %v7217 = vadd.f32 %v7174, %v7216
        %v7218 = vpop.f32.mrb[0].mxu0
        %v7219 = vadd.f32 %v7176, %v7218
        %7220 = vdwg.mxu0
        %7221 = vmatprep.subr.bf16.mxu0 %v6695
        %7222 = vmatpush1.bf16.msra.mxu0 %v6694
        %7223 = vmatprep.subr.bf16.mxu0 %v6700
        %7224 = vmatpush1.bf16.msra.mxu0 %v6699
        %7225 = vmatprep.subr.bf16.mxu0 %v6705
        %7226 = vmatpush1.bf16.msra.mxu0 %v6704
        %7227 = vmatprep.subr.bf16.mxu0 %v6710
        %7228 = vmatpush1.bf16.msra.mxu0 %v6709
        %7229 = vmatprep.subr.bf16.mxu0 %v6715
        %7230 = vmatpush1.bf16.msra.mxu0 %v6714
        %7231 = vmatprep.subr.bf16.mxu0 %v6720
        %7232 = vmatpush1.bf16.msra.mxu0 %v6719
        %7233 = vmatprep.subr.bf16.mxu0 %v6725
        %7234 = vmatpush1.bf16.msra.mxu0 %v6724
        %7235 = vmatprep.subr.bf16.mxu0 %v6730
        %7236 = vmatpush1.bf16.msra.mxu0 %v6729
        %7237 = vmatprep.subr.bf16.mxu0 %v6735
        %7238 = vmatpush1.bf16.msra.mxu0 %v6734
        %7239 = vmatprep.subr.bf16.mxu0 %v6740
        %7240 = vmatpush1.bf16.msra.mxu0 %v6739
        %7241 = vmatprep.subr.bf16.mxu0 %v6745
        %7242 = vmatpush1.bf16.msra.mxu0 %v6744
        %7243 = vmatprep.subr.bf16.mxu0 %v6750
        %7244 = vmatpush1.bf16.msra.mxu0 %v6749
        %7245 = vmatprep.subr.bf16.mxu0 %v6755
        %7246 = vmatpush1.bf16.msra.mxu0 %v6754
        %7247 = vmatprep.subr.bf16.mxu0 %v6760
        %7248 = vmatpush1.bf16.msra.mxu0 %v6759
        %7249 = vmatprep.subr.bf16.mxu0 %v6765
        %7250 = vmatpush1.bf16.msra.mxu0 %v6764
        %7251 = vmatprep.subr.bf16.mxu0 %v6770
        %7252 = vmatpush1.bf16.msra.mxu0 %v6769
        %7253 = vmatprep.mubr.bf16.mxu0 %v5781
        %7254 = vmatmul.mubr.bf16.gmra.mrb[0].mxu0 %v5780
        %v7255 = vpop.f32.mrb[0].mxu0
        %v7256 = vadd.f32 %v6038, %v7255
        %v7257 = vpop.f32.mrb[0].mxu0
        %v7258 = vadd.f32 %v6042, %v7257
        %v7259 = vpop.f32.mrb[0].mxu0
        %v7260 = vadd.f32 %v6038, %v7259
        %v7261 = vpop.f32.mrb[0].mxu0
        %v7262 = vadd.f32 %v6042, %v7261
        %7263 = vdwg.mxu0
        %7264 = vmatprep.subr.bf16.mxu0 %v6775
        %7265 = vmatpush1.bf16.msra.mxu0 %v6774
        %7266 = vmatprep.subr.bf16.mxu0 %v6780
        %7267 = vmatpush1.bf16.msra.mxu0 %v6779
        %7268 = vmatprep.subr.bf16.mxu0 %v6785
        %7269 = vmatpush1.bf16.msra.mxu0 %v6784
        %7270 = vmatprep.subr.bf16.mxu0 %v6790
        %7271 = vmatpush1.bf16.msra.mxu0 %v6789
        %7272 = vmatprep.subr.bf16.mxu0 %v6795
        %7273 = vmatpush1.bf16.msra.mxu0 %v6794
        %7274 = vmatprep.subr.bf16.mxu0 %v6800
        %7275 = vmatpush1.bf16.msra.mxu0 %v6799
        %7276 = vmatprep.subr.bf16.mxu0 %v6805
        %7277 = vmatpush1.bf16.msra.mxu0 %v6804
        %7278 = vmatprep.subr.bf16.mxu0 %v6810
        %7279 = vmatpush1.bf16.msra.mxu0 %v6809
        %7280 = vmatprep.subr.bf16.mxu0 %v6815
        %7281 = vmatpush1.bf16.msra.mxu0 %v6814
        %7282 = vmatprep.subr.bf16.mxu0 %v6820
        %7283 = vmatpush1.bf16.msra.mxu0 %v6819
        %7284 = vmatprep.subr.bf16.mxu0 %v6825
        %7285 = vmatpush1.bf16.msra.mxu0 %v6824
        %7286 = vmatprep.subr.bf16.mxu0 %v6830
        %7287 = vmatpush1.bf16.msra.mxu0 %v6829
        %7288 = vmatprep.subr.bf16.mxu0 %v6835
        %7289 = vmatpush1.bf16.msra.mxu0 %v6834
        %7290 = vmatprep.subr.bf16.mxu0 %v6840
        %7291 = vmatpush1.bf16.msra.mxu0 %v6839
        %7292 = vmatprep.subr.bf16.mxu0 %v6845
        %7293 = vmatpush1.bf16.msra.mxu0 %v6844
        %7294 = vmatprep.subr.bf16.mxu0 %v6850
        %7295 = vmatpush1.bf16.msra.mxu0 %v6849
        %7296 = vmatprep.mubr.bf16.mxu0 %v5783
        %7297 = vmatmul.mubr.bf16.gmra.mrb[0].mxu0 %v5782
        %v7298 = vpop.f32.mrb[0].mxu0
        %v7299 = vadd.f32 %v7256, %v7298
        %v7300 = vpop.f32.mrb[0].mxu0
        %v7301 = vadd.f32 %v7258, %v7300
        %v7302 = vpop.f32.mrb[0].mxu0
        %v7303 = vadd.f32 %v7260, %v7302
        %v7304 = vpop.f32.mrb[0].mxu0
        %v7305 = vadd.f32 %v7262, %v7304
        %7306 = vdwg.mxu0
        %7307 = vmatprep.subr.bf16.mxu0 %v6855
        %7308 = vmatpush1.bf16.msra.mxu0 %v6854
        %7309 = vmatprep.subr.bf16.mxu0 %v6860
        %7310 = vmatpush1.bf16.msra.mxu0 %v6859
        %7311 = vmatprep.subr.bf16.mxu0 %v6865
        %7312 = vmatpush1.bf16.msra.mxu0 %v6864
        %7313 = vmatprep.subr.bf16.mxu0 %v6870
        %7314 = vmatpush1.bf16.msra.mxu0 %v6869
        %7315 = vmatprep.subr.bf16.mxu0 %v6875
        %7316 = vmatpush1.bf16.msra.mxu0 %v6874
        %7317 = vmatprep.subr.bf16.mxu0 %v6880
        %7318 = vmatpush1.bf16.msra.mxu0 %v6879
        %7319 = vmatprep.subr.bf16.mxu0 %v6885
        %7320 = vmatpush1.bf16.msra.mxu0 %v6884
        %7321 = vmatprep.subr.bf16.mxu0 %v6890
        %7322 = vmatpush1.bf16.msra.mxu0 %v6889
        %7323 = vmatprep.subr.bf16.mxu0 0
        %7324 = vmatpush1.bf16.msra.mxu0 0
        %7325 = vmatprep.subr.bf16.mxu0 0
        %7326 = vmatpush1.bf16.msra.mxu0 0
        %7327 = vmatprep.subr.bf16.mxu0 0
        %7328 = vmatpush1.bf16.msra.mxu0 0
        %7329 = vmatprep.subr.bf16.mxu0 0
        %7330 = vmatpush1.bf16.msra.mxu0 0
        %7331 = vmatprep.subr.bf16.mxu0 0
        %7332 = vmatpush1.bf16.msra.mxu0 0
        %7333 = vmatprep.subr.bf16.mxu0 0
        %7334 = vmatpush1.bf16.msra.mxu0 0
        %7335 = vmatprep.subr.bf16.mxu0 0
        %7336 = vmatpush1.bf16.msra.mxu0 0
        %7337 = vmatprep.subr.bf16.mxu0 0
        %7338 = vmatpush1.bf16.msra.mxu0 0
        %7339 = vmatprep.mubr.bf16.mxu0 0
        %7340 = vmatmul.mubr.bf16.gmra.mrb[0].mxu0 %v5784
        %v7341 = vpop.f32.mrb[0].mxu0
        %v7342 = vadd.f32 %v7299, %v7341
        %v7343 = vpop.f32.mrb[0].mxu0
        %v7344 = vadd.f32 %v7301, %v7343
        %v7345 = vpop.f32.mrb[0].mxu0
        %v7346 = vadd.f32 %v7303, %v7345
        %v7347 = vpop.f32.mrb[0].mxu0
        %v7348 = vadd.f32 %v7305, %v7347
        %7349 = vdwg.mxu0
        %7350 = vmatprep.subr.bf16.mxu0 0
        %7351 = vmatpush1.bf16.msra.mxu0 %v6696
        %7352 = vmatprep.subr.bf16.mxu0 0
        %7353 = vmatpush1.bf16.msra.mxu0 %v6701
        %7354 = vmatprep.subr.bf16.mxu0 0
        %7355 = vmatpush1.bf16.msra.mxu0 %v6706
        %7356 = vmatprep.subr.bf16.mxu0 0
        %7357 = vmatpush1.bf16.msra.mxu0 %v6711
        %7358 = vmatprep.subr.bf16.mxu0 0
        %7359 = vmatpush1.bf16.msra.mxu0 %v6716
        %7360 = vmatprep.subr.bf16.mxu0 0
        %7361 = vmatpush1.bf16.msra.mxu0 %v6721
        %7362 = vmatprep.subr.bf16.mxu0 0
        %7363 = vmatpush1.bf16.msra.mxu0 %v6726
        %7364 = vmatprep.subr.bf16.mxu0 0
        %7365 = vmatpush1.bf16.msra.mxu0 %v6731
        %7366 = vmatprep.subr.bf16.mxu0 0
        %7367 = vmatpush1.bf16.msra.mxu0 %v6736
        %7368 = vmatprep.subr.bf16.mxu0 0
        %7369 = vmatpush1.bf16.msra.mxu0 %v6741
        %7370 = vmatprep.subr.bf16.mxu0 0
        %7371 = vmatpush1.bf16.msra.mxu0 %v6746
        %7372 = vmatprep.subr.bf16.mxu0 0
        %7373 = vmatpush1.bf16.msra.mxu0 %v6751
        %7374 = vmatprep.subr.bf16.mxu0 0
        %7375 = vmatpush1.bf16.msra.mxu0 %v6756
        %7376 = vmatprep.subr.bf16.mxu0 0
        %7377 = vmatpush1.bf16.msra.mxu0 %v6761
        %7378 = vmatprep.subr.bf16.mxu0 0
        %7379 = vmatpush1.bf16.msra.mxu0 %v6766
        %7380 = vmatprep.subr.bf16.mxu0 0
        %7381 = vmatpush1.bf16.msra.mxu0 %v6771
        %7382 = vmatprep.mubr.bf16.mxu0 %v5781
        %7383 = vmatmul.mubr.bf16.gmra.mrb[0].mxu0 %v5780
        %v7384 = vpop.f32.mrb[0].mxu0
        %v7385 = vadd.f32 %v6046, %v7384
        %v7386 = vpop.f32.mrb[0].mxu0
        %v7387 = vpop.f32.mrb[0].mxu0
        %v7388 = vadd.f32 %v6046, %v7387
        %v7389 = vpop.f32.mrb[0].mxu0
        %7390 = vdwg.mxu0
        %7391 = vmatprep.subr.bf16.mxu0 0
        %7392 = vmatpush1.bf16.msra.mxu0 %v6776
        %7393 = vmatprep.subr.bf16.mxu0 0
        %7394 = vmatpush1.bf16.msra.mxu0 %v6781
        %7395 = vmatprep.subr.bf16.mxu0 0
        %7396 = vmatpush1.bf16.msra.mxu0 %v6786
        %7397 = vmatprep.subr.bf16.mxu0 0
        %7398 = vmatpush1.bf16.msra.mxu0 %v6791
        %7399 = vmatprep.subr.bf16.mxu0 0
        %7400 = vmatpush1.bf16.msra.mxu0 %v6796
        %7401 = vmatprep.subr.bf16.mxu0 0
        %7402 = vmatpush1.bf16.msra.mxu0 %v6801
        %7403 = vmatprep.subr.bf16.mxu0 0
        %7404 = vmatpush1.bf16.msra.mxu0 %v6806
        %7405 = vmatprep.subr.bf16.mxu0 0
        %7406 = vmatpush1.bf16.msra.mxu0 %v6811
        %7407 = vmatprep.subr.bf16.mxu0 0
        %7408 = vmatpush1.bf16.msra.mxu0 %v6816
        %7409 = vmatprep.subr.bf16.mxu0 0
        %7410 = vmatpush1.bf16.msra.mxu0 %v6821
        %7411 = vmatprep.subr.bf16.mxu0 0
        %7412 = vmatpush1.bf16.msra.mxu0 %v6826
        %7413 = vmatprep.subr.bf16.mxu0 0
        %7414 = vmatpush1.bf16.msra.mxu0 %v6831
        %7415 = vmatprep.subr.bf16.mxu0 0
        %7416 = vmatpush1.bf16.msra.mxu0 %v6836
        %7417 = vmatprep.subr.bf16.mxu0 0
        %7418 = vmatpush1.bf16.msra.mxu0 %v6841
        %7419 = vmatprep.subr.bf16.mxu0 0
        %7420 = vmatpush1.bf16.msra.mxu0 %v6846
        %7421 = vmatprep.subr.bf16.mxu0 0
        %7422 = vmatpush1.bf16.msra.mxu0 %v6851
        %7423 = vmatprep.mubr.bf16.mxu0 %v5783
        %7424 = vmatmul.mubr.bf16.gmra.mrb[0].mxu0 %v5782
        %v7425 = vpop.f32.mrb[0].mxu0
        %v7426 = vadd.f32 %v7385, %v7425
        %v7427 = vpop.f32.mrb[0].mxu0
        %v7428 = vpop.f32.mrb[0].mxu0
        %v7429 = vadd.f32 %v7388, %v7428
        %v7430 = vpop.f32.mrb[0].mxu0
        %7431 = vdwg.mxu0
        %7432 = vmatprep.subr.bf16.mxu0 0
        %7433 = vmatpush1.bf16.msra.mxu0 %v6856
        %7434 = vmatprep.subr.bf16.mxu0 0
        %7435 = vmatpush1.bf16.msra.mxu0 %v6861
        %7436 = vmatprep.subr.bf16.mxu0 0
        %7437 = vmatpush1.bf16.msra.mxu0 %v6866
        %7438 = vmatprep.subr.bf16.mxu0 0
        %7439 = vmatpush1.bf16.msra.mxu0 %v6871
        %7440 = vmatprep.subr.bf16.mxu0 0
        %7441 = vmatpush1.bf16.msra.mxu0 %v6876
        %7442 = vmatprep.subr.bf16.mxu0 0
        %7443 = vmatpush1.bf16.msra.mxu0 %v6881
        %7444 = vmatprep.subr.bf16.mxu0 0
        %7445 = vmatpush1.bf16.msra.mxu0 %v6886
        %7446 = vmatprep.subr.bf16.mxu0 0
        %7447 = vmatpush1.bf16.msra.mxu0 %v6891
        %7448 = vmatprep.subr.bf16.mxu0 0
        %7449 = vmatpush1.bf16.msra.mxu0 0
        %7450 = vmatprep.subr.bf16.mxu0 0
        %7451 = vmatpush1.bf16.msra.mxu0 0
        %7452 = vmatprep.subr.bf16.mxu0 0
        %7453 = vmatpush1.bf16.msra.mxu0 0
        %7454 = vmatprep.subr.bf16.mxu0 0
        %7455 = vmatpush1.bf16.msra.mxu0 0
        %7456 = vmatprep.subr.bf16.mxu0 0
        %7457 = vmatpush1.bf16.msra.mxu0 0
        %7458 = vmatprep.subr.bf16.mxu0 0
        %7459 = vmatpush1.bf16.msra.mxu0 0
        %7460 = vmatprep.subr.bf16.mxu0 0
        %7461 = vmatpush1.bf16.msra.mxu0 0
        %7462 = vmatprep.subr.bf16.mxu0 0
        %7463 = vmatpush1.bf16.msra.mxu0 0
        %7464 = vmatprep.mubr.bf16.mxu0 0
        %7465 = vmatmul.mubr.bf16.gmra.mrb[0].mxu0 %v5784
        %v7466 = vpop.f32.mrb[0].mxu0
        %v7467 = vadd.f32 %v7426, %v7466
        %v7468 = vpop.f32.mrb[0].mxu0
        %v7469 = vpop.f32.mrb[0].mxu0
        %v7470 = vadd.f32 %v7429, %v7469
        %v7471 = vpop.f32.mrb[0].mxu0
        %7472 = vdwg.mxu0
        %vm7473 = vcmp.lt.s32.totalorder %v632, 588
        %vm7474 = vcmp.lt.s32.totalorder %v1277, 588
        %vm7475 = vcmp.lt.s32.totalorder %v1278, 588
        %vm7476 = vcmp.lt.s32.totalorder %v1279, 588
        %vm7477 = vcmp.lt.s32.totalorder %v1280, 588
        %v7478 = vsel %vm7473, %v7213, -1e+30
        %v7479 = vsel %vm7474, %v7215, -1e+30
        %v7480 = vsel %vm7475, %v7342, -1e+30
        %v7481 = vsel %vm7476, %v7344, -1e+30
        %v7482 = vsel %vm7477, %v7467, -1e+30
        %v7483 = vsel %vm7473, %v7217, -1e+30
        %v7484 = vsel %vm7474, %v7219, -1e+30
        %v7485 = vsel %vm7475, %v7346, -1e+30
        %v7486 = vsel %vm7476, %v7348, -1e+30
        %v7487 = vsel %vm7477, %v7470, -1e+30
        %v7488 = vmax.f32 %v7478, %v7480
        %v7489 = vmax.f32 %v7479, %v7481
        %v7490 = vmax.f32 %v7488, %v7482
        %v7491 = vmax.f32 %v7490, %v7489
        %7492 = vmax.xlane.f32.xlu0 %v7491
        %v7493 = vpop.xlane.xlu0 %7492
        %v7494 = vmax.f32 %v7483, %v7485
        %v7495 = vmax.f32 %v7484, %v7486
        %v7496 = vmax.f32 %v7494, %v7487
        %v7497 = vmax.f32 %v7496, %v7495
        %7498 = vmax.xlane.f32.xlu0 %v7497
        %v7499 = vpop.xlane.xlu0 %7498
        %v7500 = vsub.f32 %v7478, %v7493
        %v7501 = vsub.f32 %v7479, %v7493
        %v7502 = vsub.f32 %v7480, %v7493
        %v7503 = vsub.f32 %v7481, %v7493
        %v7504 = vsub.f32 %v7482, %v7493
        %v7505 = vsub.f32 %v7483, %v7499
        %v7506 = vsub.f32 %v7484, %v7499
        %v7507 = vsub.f32 %v7485, %v7499
        %v7508 = vsub.f32 %v7486, %v7499
        %v7509 = vsub.f32 %v7487, %v7499
        %v7510 = vmul.f32 %v7500, 1.442695
        %v7511 = vpow.pop %v7510
        %v7512 = vmul.f32 %v7501, 1.442695
        %v7513 = vpow.pop %v7512
        %v7514 = vmul.f32 %v7502, 1.442695
        %v7515 = vpow.pop %v7514
        %v7516 = vmul.f32 %v7503, 1.442695
        %v7517 = vpow.pop %v7516
        %v7518 = vmul.f32 %v7504, 1.442695
        %v7519 = vpow.pop %v7518
        %v7520 = vmul.f32 %v7505, 1.442695
        %v7521 = vpow.pop %v7520
        %v7522 = vmul.f32 %v7506, 1.442695
        %v7523 = vpow.pop %v7522
        %v7524 = vmul.f32 %v7507, 1.442695
        %v7525 = vpow.pop %v7524
        %v7526 = vmul.f32 %v7508, 1.442695
        %v7527 = vpow.pop %v7526
        %v7528 = vmul.f32 %v7509, 1.442695
        %v7529 = vpow.pop %v7528
        %v7530 = vadd.f32 %v7511, %v7513
        %v7531 = vadd.f32 %v7530, %v7515
        %v7532 = vadd.f32 %v7531, %v7517
        %v7533 = vadd.f32 %v7532, %v7519
        %7534 = vadd.xlane.f32.xlu0 %v7533
        %v7535 = vpop.xlane.xlu0 %7534
        %v7536 = vadd.f32 %v7521, %v7523
        %v7537 = vadd.f32 %v7536, %v7525
        %v7538 = vadd.f32 %v7537, %v7527
        %v7539 = vadd.f32 %v7538, %v7529
        %7540 = vadd.xlane.f32.xlu0 %v7539
        %v7541 = vpop.xlane.xlu0 %7540
        %v7542 = vrcp.pop %v7535
        %v7543 = vmul.f32 %v7511, %v7542
        %v7544 = vmul.f32 %v7513, %v7542
        %v7545 = vmul.f32 %v7515, %v7542
        %v7546 = vmul.f32 %v7517, %v7542
        %v7547 = vmul.f32 %v7519, %v7542
        %v7548 = vrcp.pop %v7541
        %v7549 = vmul.f32 %v7521, %v7548
        %v7550 = vmul.f32 %v7523, %v7548
        %v7551 = vmul.f32 %v7525, %v7548
        %v7552 = vmul.f32 %v7527, %v7548
        %v7553 = vmul.f32 %v7529, %v7548
        %7554 = vst [vmem:[%s620] sm:$0xff] %v7543
        %7555 = vst [vmem:[%s620 + $0x8] sm:$0xff] %v7544
        %7556 = vst [vmem:[%s620 + $0x10] sm:$0xff] %v7545
        %7557 = vst [vmem:[%s620 + $0x18] sm:$0xff] %v7546
        %7558 = vst [vmem:[%s620 + $0x20] sm:$0xff] %v7547
        %7559 = vst [vmem:[%s620 + $0x28] sm:$0xff] %v7549
        %7560 = vst [vmem:[%s620 + $0x30] sm:$0xff] %v7550
        %7561 = vst [vmem:[%s620 + $0x38] sm:$0xff] %v7551
        %7562 = vst [vmem:[%s620 + $0x40] sm:$0xff] %v7552
        %7563 = vst [vmem:[%s620 + $0x48] sm:$0xff] %v7553
        %s7564 = sand.u32 %s342, 1
        %s7565 = scalar_lea.sflag [#allocation4], %s7564
        %s7566 = sand.u32 %s342, 1
        %s7567 = smul.addr %s7566, 80
        %s7568 = scalar_lea.vmem [#allocation22], %s7567
        // Predicated region
        $region125: #{website_classifier_forward.1} parent=75 // pred_check
          %p7569 = pneg %p352
        $region126: #{website_classifier_forward.1} parent=75 // pred_check_branch
          %7571 = sbr.rel (%p7569) target = $region128
        $region127: #{website_classifier_forward.1} parent=75 // pred_region
          %s7572 = smul.u32 2, %s35
          %s7574 = ssub.s32 1280, 1280
          %7575 = vsyncadd %s7565, %s7574
          %s7576 = smul.addr %s7572, 5
          %s7577 = smul.addr %s7576, 128
          %s7578 = scalar_lea.hbm %s14, %s7577
          %s7579 = sshll.u32 %s7568, 4
          %s7580 = int_to_ptr.vmem [resolvable:$true] %s7579
          %7585 = dma.vmem_to_hbm [thread:$0]  %s7580, 1280, %s7578, %s7565, 640, 640, 40
        $region128: #{website_classifier_forward.1} parent=75 // pred_fallthru
          _
      $region76: #{website_classifier_forward.1} parent=5 // pred_fallthru
        _
      %p7586 = scmp.le.s32.totalorder 2, %s30
      // Predicated region
      $region129: #{website_classifier_forward.1} parent=5 // pred_check
        %p7587 = pneg %p7586
      $region130: #{website_classifier_forward.1} parent=5 // pred_check_branch
        %7589 = sbr.rel (%p7587) target = $region132
      $region131: #{website_classifier_forward.1} parent=5 // pred_region
        %s7590 = ssub.s32 %s30, 2
        // Predicated region
        $region133: #{website_classifier_forward.1} parent=131 // pred_check
          %p7591 = pneg %p358
        $region134: #{website_classifier_forward.1} parent=131 // pred_check_branch
          %7593 = sbr.rel (%p7591) target = $region136
        $region135: #{website_classifier_forward.1} parent=131 // pred_region
          %s7594 = sand.u32 %s343, 1
          %s7595 = scalar_lea.sflag [#allocation4], %s7594
          %s7596 = sand.u32 %s343, 1
          %s7597 = smul.addr %s7596, 80
          %s7598 = scalar_lea.vmem [#allocation22], %s7597
          %7599 = dma.done %s7595, 1280
        $region136: #{website_classifier_forward.1} parent=131 // pred_fallthru
          _
      $region132: #{website_classifier_forward.1} parent=5 // pred_fallthru
        _
    $region6: #{website_classifier_forward.1} parent=1 // loop_footer
      %s34 = sadd.s32 1, %s30
    $region7: #{website_classifier_forward.1} parent=1 // loop_footer_branch
      %29 = sbr.rel target = $region3
    $region8: #{website_classifier_forward.1} parent=1 // loop_exit
      _
    %7600 = vsyncpa [#allocation3], 1
    %s7601 = scalar_lea.sflag [#allocation3], 1
    %7602 = vsyncpa %s7601, 1
    %7603 = vsyncpa [#allocation6], 1
    %7604 = vsyncpa [#allocation9], 1
    %7605 = vsyncpa [#allocation12], 1
    %7606 = vsyncpa [#allocation15], 1
    %7607 = vsyncpa [#allocation18], 1
    %7608 = vsyncpa [#allocation21], 1
    %7609 = vsyncpa [#allocation4], 1
    %s7610 = scalar_lea.sflag [#allocation4], 1
    %7611 = vsyncpa %s7610, 1

</llo_original>
